<compile_context>
chip_gen: v6e
topology: v6e:2x2x1
jax: 0.10.0
libtpu: 0.0.40
codegen_flags: <defaults>
</compile_context>

<pallas_src>
import jax
import jax.numpy as jnp
from jax import lax
from jax.experimental import pallas as pl
from jax.experimental.pallas import tpu as pltpu

IN_EPS = 1e-5  # nn.InstanceNorm2d default


def _upconv_kernel(x_ref, w_ref, o_ref):
    # x_ref: (Ho+2, Wo+2, Cin) zero-padded, ReLU'd, 2x-upsampled activation
    # w_ref: (3, 3, Cin, Cout) conv weight laid out as (kh, kw, cin, cout)
    # o_ref: (Ho, Wo, Cout)
    Ho, Wo, Co = o_ref.shape
    Cin = x_ref.shape[-1]

    x = x_ref[...]
    w = w_ref[...]

    # 3x3 conv, stride 1, pad 1 (pad already applied): nine shifted-slice
    # matmuls accumulated on the MXU in f32.
    acc = jnp.zeros((Ho * Wo, Co), jnp.float32)
    for kh in range(3):
        for kw in range(3):
            patch = x[kh:kh + Ho, kw:kw + Wo, :].reshape(Ho * Wo, Cin)
            acc = acc + jnp.dot(patch, w[kh, kw],
                                preferred_element_type=jnp.float32)

    # Conv bias omitted: it cancels exactly under InstanceNorm2d(affine=False).
    # One-pass instance-norm statistics over the spatial axis.
    inv_n = 1.0 / (Ho * Wo)
    mean = jnp.sum(acc, axis=0, keepdims=True) * inv_n
    mean_sq = jnp.sum(acc * acc, axis=0, keepdims=True) * inv_n
    var = jnp.maximum(mean_sq - mean * mean, 0.0)
    y = (acc - mean) * jax.lax.rsqrt(var + IN_EPS)

    o_ref[...] = y.reshape(Ho, Wo, Co).astype(o_ref.dtype)


def _bilinear_up2x(x):
    """(N, H, W, C) -> (N, 2H, 2W, C), matching torch Upsample(bilinear,
    align_corners=False): half-pixel centers with edge clamping."""
    def up_axis(a, axis):
        n = a.shape[axis]
        first = lax.slice_in_dim(a, 0, 1, axis=axis)
        last = lax.slice_in_dim(a, n - 1, n, axis=axis)
        prev = jnp.concatenate([first, lax.slice_in_dim(a, 0, n - 1, axis=axis)], axis=axis)
        nxt = jnp.concatenate([lax.slice_in_dim(a, 1, n, axis=axis), last], axis=axis)
        even = 0.25 * prev + 0.75 * a
        odd = 0.75 * a + 0.25 * nxt
        out = jnp.stack([even, odd], axis=axis + 1)
        shape = list(a.shape)
        shape[axis] = 2 * n
        return out.reshape(shape)
    return up_axis(up_axis(x, 1), 2)


def upconv_pallas(x1, x2, weight, bias):
    """x1: (N, C1, H, W), x2: (N, C2, H, W) NCHW; weight: (Cout, C1+C2, 3, 3)
    OIHW; bias: (Cout,). bias is accepted for API parity but unused — it is a
    mathematical no-op under InstanceNorm2d(affine=False)."""
    del bias
    N, C1, H, W = x1.shape
    C2 = x2.shape[1]
    Cin = C1 + C2
    Cout = weight.shape[0]
    Ho, Wo = 2 * H, 2 * W

    # ---- glue (fused by XLA): concat (x2 first, as torch.cat((x2, x1), 1)),
    # NHWC layout, ReLU, bilinear 2x upsample, 1-pixel zero pad for the conv.
    x = jnp.concatenate([x2, x1], axis=1)
    x = jnp.transpose(x, (0, 2, 3, 1))                  # (N, H, W, Cin)
    x = jnp.maximum(x, 0.0)                             # ReLU before upsample
    x = _bilinear_up2x(x)                               # (N, Ho, Wo, Cin)
    xp = jnp.pad(x, ((0, 0), (1, 1), (1, 1), (0, 0)))   # (N, Ho+2, Wo+2, Cin)

    w_k = jnp.transpose(weight, (2, 3, 1, 0))           # (3, 3, Cin, Cout)

    out_nhwc = pl.pallas_call(
        _upconv_kernel,
        out_shape=jax.ShapeDtypeStruct((N, Ho, Wo, Cout), x1.dtype),
        grid=(N,),
        in_specs=[
            pl.BlockSpec((pl.Squeezed(), Ho + 2, Wo + 2, Cin),
                         lambda n: (n, 0, 0, 0)),
            pl.BlockSpec((3, 3, Cin, Cout), lambda n: (0, 0, 0, 0)),
        ],
        out_specs=pl.BlockSpec((pl.Squeezed(), Ho, Wo, Cout),
                               lambda n: (n, 0, 0, 0)),
        compiler_params=pltpu.CompilerParams(
            dimension_semantics=("parallel",),
            vmem_limit_bytes=64 * 1024 * 1024),
    )(xp, w_k)

    return jnp.transpose(out_nhwc, (0, 3, 1, 2))        # back to NCHW


def upconv_reference(x1, x2, weight, bias):
    """Pure-JAX reference matching the PyTorch module (default position)."""
    x = jnp.concatenate([x2, x1], axis=1)
    x = jnp.maximum(x, 0.0)
    N, C, H, W = x.shape
    x = jax.image.resize(x, (N, C, 2 * H, 2 * W), method="bilinear")
    y = lax.conv_general_dilated(
        x, weight, window_strides=(1, 1), padding=((1, 1), (1, 1)),
        dimension_numbers=("NCHW", "OIHW", "NCHW"))
    y = y + bias[None, :, None, None]
    mean = jnp.mean(y, axis=(2, 3), keepdims=True)
    var = jnp.mean((y - mean) ** 2, axis=(2, 3), keepdims=True)
    return (y - mean) / jnp.sqrt(var + IN_EPS)


if __name__ == "__main__":
    key = jax.random.PRNGKey(0)
    k1, k2, kw, kb = jax.random.split(key, 4)

    N, C1, C2, Cout, H, W = 2, 4, 4, 8, 16, 16
    Cin = C1 + C2

    x1 = jax.random.normal(k1, (N, C1, H, W), dtype=jnp.float32)
    x2 = jax.random.normal(k2, (N, C2, H, W), dtype=jnp.float32)
    fan_in = Cin * 3 * 3
    bound = 1.0 / (fan_in ** 0.5)
    weight = jax.random.uniform(kw, (Cout, Cin, 3, 3), jnp.float32, -bound, bound)
    bias = jax.random.uniform(kb, (Cout,), jnp.float32, -bound, bound)

    out = upconv_pallas(x1, x2, weight, bias)
    out = jax.block_until_ready(out)

    ref = upconv_reference(x1, x2, weight, bias)
    assert out.shape == (N, Cout, 2 * H, 2 * W), out.shape
    max_err = float(jnp.max(jnp.abs(out - ref)))
    assert jnp.allclose(out, ref, atol=1e-4, rtol=1e-4), max_err

    print("KERNEL_OK")
</pallas_src>

<mosaic_0001>
module attributes {stable_mosaic.version = 11 : i64} {
  func.func @_upconv_kernel(%arg0: i32, %arg1: memref<1x34x34x8xf32, #tpu.memory_space<vmem>>, %arg2: memref<3x3x8x8xf32, #tpu.memory_space<vmem>>, %arg3: memref<1x32x32x8xf32, #tpu.memory_space<vmem>>) attributes {dimension_semantics = [#tpu.dimension_semantics<parallel>], iteration_bounds = array<i64: 2>, scalar_prefetch = 0 : i64, scratch_operands = 0 : i64, tpu.core_type = #tpu.core_type<tc>, window_params = [{transform_indices = @transform_0, window_bounds = array<i64: 1, 34, 34, 8>}, {pipeline_mode = #tpu.pipeline_mode<synchronous>, transform_indices = @transform_1, window_bounds = array<i64: 3, 3, 8, 8>}, {transform_indices = @transform_2, window_bounds = array<i64: 1, 32, 32, 8>}]} {
    %c0 = arith.constant 0 : index
    %c0_0 = arith.constant 0 : index
    %c0_1 = arith.constant 0 : index
    %c0_2 = arith.constant 0 : index
    %0 = vector.load %arg1[%c0, %c0_0, %c0_1, %c0_2] : memref<1x34x34x8xf32, #tpu.memory_space<vmem>>, vector<1x34x34x8xf32>
    %1 = vector.shape_cast %0 : vector<1x34x34x8xf32> to vector<34x34x8xf32>
    %c0_3 = arith.constant 0 : index
    %c0_4 = arith.constant 0 : index
    %c0_5 = arith.constant 0 : index
    %c0_6 = arith.constant 0 : index
    %2 = vector.load %arg2[%c0_3, %c0_4, %c0_5, %c0_6] : memref<3x3x8x8xf32, #tpu.memory_space<vmem>>, vector<3x3x8x8xf32>
    %cst = arith.constant 0.000000e+00 : f32
    %3 = vector.broadcast %cst : f32 to vector<1024x8xf32>
    %4 = vector.extract_strided_slice %1 {offsets = [0, 0, 0], sizes = [32, 32, 8], strides = [1, 1, 1]} : vector<34x34x8xf32> to vector<32x32x8xf32>
    %5 = vector.shape_cast %4 : vector<32x32x8xf32> to vector<1024x8xf32>
    %6 = vector.extract_strided_slice %2 {offsets = [0, 0, 0, 0], sizes = [1, 1, 8, 8], strides = [1, 1, 1, 1]} : vector<3x3x8x8xf32> to vector<1x1x8x8xf32>
    %7 = vector.shape_cast %6 : vector<1x1x8x8xf32> to vector<8x8xf32>
    %cst_7 = arith.constant dense<0.000000e+00> : vector<1024x8xf32>
    %8 = tpu.matmul %5, %7, %cst_7 {dimension_numbers = #tpu.dot_dimension_numbers<[1], [0], [0], [1], [0, 0, 1, 1], [], []>} : vector<1024x8xf32>, vector<8x8xf32>, vector<1024x8xf32> -> vector<1024x8xf32>
    %9 = arith.addf %3, %8 : vector<1024x8xf32>
    %10 = vector.extract_strided_slice %1 {offsets = [0, 1, 0], sizes = [32, 32, 8], strides = [1, 1, 1]} : vector<34x34x8xf32> to vector<32x32x8xf32>
    %11 = vector.shape_cast %10 : vector<32x32x8xf32> to vector<1024x8xf32>
    %12 = vector.extract_strided_slice %2 {offsets = [0, 1, 0, 0], sizes = [1, 1, 8, 8], strides = [1, 1, 1, 1]} : vector<3x3x8x8xf32> to vector<1x1x8x8xf32>
    %13 = vector.shape_cast %12 : vector<1x1x8x8xf32> to vector<8x8xf32>
    %cst_8 = arith.constant dense<0.000000e+00> : vector<1024x8xf32>
    %14 = tpu.matmul %11, %13, %cst_8 {dimension_numbers = #tpu.dot_dimension_numbers<[1], [0], [0], [1], [0, 0, 1, 1], [], []>} : vector<1024x8xf32>, vector<8x8xf32>, vector<1024x8xf32> -> vector<1024x8xf32>
    %15 = arith.addf %9, %14 : vector<1024x8xf32>
    %16 = vector.extract_strided_slice %1 {offsets = [0, 2, 0], sizes = [32, 32, 8], strides = [1, 1, 1]} : vector<34x34x8xf32> to vector<32x32x8xf32>
    %17 = vector.shape_cast %16 : vector<32x32x8xf32> to vector<1024x8xf32>
    %18 = vector.extract_strided_slice %2 {offsets = [0, 2, 0, 0], sizes = [1, 1, 8, 8], strides = [1, 1, 1, 1]} : vector<3x3x8x8xf32> to vector<1x1x8x8xf32>
    %19 = vector.shape_cast %18 : vector<1x1x8x8xf32> to vector<8x8xf32>
    %cst_9 = arith.constant dense<0.000000e+00> : vector<1024x8xf32>
    %20 = tpu.matmul %17, %19, %cst_9 {dimension_numbers = #tpu.dot_dimension_numbers<[1], [0], [0], [1], [0, 0, 1, 1], [], []>} : vector<1024x8xf32>, vector<8x8xf32>, vector<1024x8xf32> -> vector<1024x8xf32>
    %21 = arith.addf %15, %20 : vector<1024x8xf32>
    %22 = vector.extract_strided_slice %1 {offsets = [1, 0, 0], sizes = [32, 32, 8], strides = [1, 1, 1]} : vector<34x34x8xf32> to vector<32x32x8xf32>
    %23 = vector.shape_cast %22 : vector<32x32x8xf32> to vector<1024x8xf32>
    %24 = vector.extract_strided_slice %2 {offsets = [1, 0, 0, 0], sizes = [1, 1, 8, 8], strides = [1, 1, 1, 1]} : vector<3x3x8x8xf32> to vector<1x1x8x8xf32>
    %25 = vector.shape_cast %24 : vector<1x1x8x8xf32> to vector<8x8xf32>
    %cst_10 = arith.constant dense<0.000000e+00> : vector<1024x8xf32>
    %26 = tpu.matmul %23, %25, %cst_10 {dimension_numbers = #tpu.dot_dimension_numbers<[1], [0], [0], [1], [0, 0, 1, 1], [], []>} : vector<1024x8xf32>, vector<8x8xf32>, vector<1024x8xf32> -> vector<1024x8xf32>
    %27 = arith.addf %21, %26 : vector<1024x8xf32>
    %28 = vector.extract_strided_slice %1 {offsets = [1, 1, 0], sizes = [32, 32, 8], strides = [1, 1, 1]} : vector<34x34x8xf32> to vector<32x32x8xf32>
    %29 = vector.shape_cast %28 : vector<32x32x8xf32> to vector<1024x8xf32>
    %30 = vector.extract_strided_slice %2 {offsets = [1, 1, 0, 0], sizes = [1, 1, 8, 8], strides = [1, 1, 1, 1]} : vector<3x3x8x8xf32> to vector<1x1x8x8xf32>
    %31 = vector.shape_cast %30 : vector<1x1x8x8xf32> to vector<8x8xf32>
    %cst_11 = arith.constant dense<0.000000e+00> : vector<1024x8xf32>
    %32 = tpu.matmul %29, %31, %cst_11 {dimension_numbers = #tpu.dot_dimension_numbers<[1], [0], [0], [1], [0, 0, 1, 1], [], []>} : vector<1024x8xf32>, vector<8x8xf32>, vector<1024x8xf32> -> vector<1024x8xf32>
    %33 = arith.addf %27, %32 : vector<1024x8xf32>
    %34 = vector.extract_strided_slice %1 {offsets = [1, 2, 0], sizes = [32, 32, 8], strides = [1, 1, 1]} : vector<34x34x8xf32> to vector<32x32x8xf32>
    %35 = vector.shape_cast %34 : vector<32x32x8xf32> to vector<1024x8xf32>
    %36 = vector.extract_strided_slice %2 {offsets = [1, 2, 0, 0], sizes = [1, 1, 8, 8], strides = [1, 1, 1, 1]} : vector<3x3x8x8xf32> to vector<1x1x8x8xf32>
    %37 = vector.shape_cast %36 : vector<1x1x8x8xf32> to vector<8x8xf32>
    %cst_12 = arith.constant dense<0.000000e+00> : vector<1024x8xf32>
    %38 = tpu.matmul %35, %37, %cst_12 {dimension_numbers = #tpu.dot_dimension_numbers<[1], [0], [0], [1], [0, 0, 1, 1], [], []>} : vector<1024x8xf32>, vector<8x8xf32>, vector<1024x8xf32> -> vector<1024x8xf32>
    %39 = arith.addf %33, %38 : vector<1024x8xf32>
    %40 = vector.extract_strided_slice %1 {offsets = [2, 0, 0], sizes = [32, 32, 8], strides = [1, 1, 1]} : vector<34x34x8xf32> to vector<32x32x8xf32>
    %41 = vector.shape_cast %40 : vector<32x32x8xf32> to vector<1024x8xf32>
    %42 = vector.extract_strided_slice %2 {offsets = [2, 0, 0, 0], sizes = [1, 1, 8, 8], strides = [1, 1, 1, 1]} : vector<3x3x8x8xf32> to vector<1x1x8x8xf32>
    %43 = vector.shape_cast %42 : vector<1x1x8x8xf32> to vector<8x8xf32>
    %cst_13 = arith.constant dense<0.000000e+00> : vector<1024x8xf32>
    %44 = tpu.matmul %41, %43, %cst_13 {dimension_numbers = #tpu.dot_dimension_numbers<[1], [0], [0], [1], [0, 0, 1, 1], [], []>} : vector<1024x8xf32>, vector<8x8xf32>, vector<1024x8xf32> -> vector<1024x8xf32>
    %45 = arith.addf %39, %44 : vector<1024x8xf32>
    %46 = vector.extract_strided_slice %1 {offsets = [2, 1, 0], sizes = [32, 32, 8], strides = [1, 1, 1]} : vector<34x34x8xf32> to vector<32x32x8xf32>
    %47 = vector.shape_cast %46 : vector<32x32x8xf32> to vector<1024x8xf32>
    %48 = vector.extract_strided_slice %2 {offsets = [2, 1, 0, 0], sizes = [1, 1, 8, 8], strides = [1, 1, 1, 1]} : vector<3x3x8x8xf32> to vector<1x1x8x8xf32>
    %49 = vector.shape_cast %48 : vector<1x1x8x8xf32> to vector<8x8xf32>
    %cst_14 = arith.constant dense<0.000000e+00> : vector<1024x8xf32>
    %50 = tpu.matmul %47, %49, %cst_14 {dimension_numbers = #tpu.dot_dimension_numbers<[1], [0], [0], [1], [0, 0, 1, 1], [], []>} : vector<1024x8xf32>, vector<8x8xf32>, vector<1024x8xf32> -> vector<1024x8xf32>
    %51 = arith.addf %45, %50 : vector<1024x8xf32>
    %52 = vector.extract_strided_slice %1 {offsets = [2, 2, 0], sizes = [32, 32, 8], strides = [1, 1, 1]} : vector<34x34x8xf32> to vector<32x32x8xf32>
    %53 = vector.shape_cast %52 : vector<32x32x8xf32> to vector<1024x8xf32>
    %54 = vector.extract_strided_slice %2 {offsets = [2, 2, 0, 0], sizes = [1, 1, 8, 8], strides = [1, 1, 1, 1]} : vector<3x3x8x8xf32> to vector<1x1x8x8xf32>
    %55 = vector.shape_cast %54 : vector<1x1x8x8xf32> to vector<8x8xf32>
    %cst_15 = arith.constant dense<0.000000e+00> : vector<1024x8xf32>
    %56 = tpu.matmul %53, %55, %cst_15 {dimension_numbers = #tpu.dot_dimension_numbers<[1], [0], [0], [1], [0, 0, 1, 1], [], []>} : vector<1024x8xf32>, vector<8x8xf32>, vector<1024x8xf32> -> vector<1024x8xf32>
    %57 = arith.addf %51, %56 : vector<1024x8xf32>
    %cst_16 = arith.constant dense<0.000000e+00> : vector<8xf32>
    %58 = vector.multi_reduction <add>, %57, %cst_16 [0] : vector<1024x8xf32> to vector<8xf32>
    %59 = vector.shape_cast %58 : vector<8xf32> to vector<1x8xf32>
    %cst_17 = arith.constant 9.765625E-4 : f32
    %60 = vector.broadcast %cst_17 : f32 to vector<1x8xf32>
    %61 = arith.mulf %59, %60 : vector<1x8xf32>
    %62 = arith.mulf %57, %57 : vector<1024x8xf32>
    %cst_18 = arith.constant dense<0.000000e+00> : vector<8xf32>
    %63 = vector.multi_reduction <add>, %62, %cst_18 [0] : vector<1024x8xf32> to vector<8xf32>
    %64 = vector.shape_cast %63 : vector<8xf32> to vector<1x8xf32>
    %cst_19 = arith.constant 9.765625E-4 : f32
    %65 = vector.broadcast %cst_19 : f32 to vector<1x8xf32>
    %66 = arith.mulf %64, %65 : vector<1x8xf32>
    %67 = arith.mulf %61, %61 : vector<1x8xf32>
    %68 = arith.subf %66, %67 : vector<1x8xf32>
    %cst_20 = arith.constant 0.000000e+00 : f32
    %69 = vector.broadcast %cst_20 : f32 to vector<1x8xf32>
    %70 = arith.maximumf %68, %69 : vector<1x8xf32>
    %71 = vector.broadcast %61 : vector<1x8xf32> to vector<1024x8xf32>
    %72 = arith.subf %57, %71 : vector<1024x8xf32>
    %cst_21 = arith.constant 9.99999974E-6 : f32
    %73 = vector.broadcast %cst_21 : f32 to vector<1x8xf32>
    %74 = arith.addf %70, %73 : vector<1x8xf32>
    %75 = math.rsqrt %74 : vector<1x8xf32>
    %76 = vector.broadcast %75 : vector<1x8xf32> to vector<1024x8xf32>
    %77 = arith.mulf %72, %76 : vector<1024x8xf32>
    %78 = vector.shape_cast %77 : vector<1024x8xf32> to vector<32x32x8xf32>
    %c0_22 = arith.constant 0 : index
    %c0_23 = arith.constant 0 : index
    %c0_24 = arith.constant 0 : index
    %c0_25 = arith.constant 0 : index
    %79 = vector.load %arg3[%c0_22, %c0_23, %c0_24, %c0_25] : memref<1x32x32x8xf32, #tpu.memory_space<vmem>>, vector<1x32x32x8xf32>
    %80 = vector.shape_cast %79 : vector<1x32x32x8xf32> to vector<32x32x8xf32>
    %81 = vector.shape_cast %78 : vector<32x32x8xf32> to vector<1x32x32x8xf32>
    tpu.vector_store %arg3[%c0_22, %c0_23, %c0_24, %c0_25], %81 {strides = array<i32>} : memref<1x32x32x8xf32, #tpu.memory_space<vmem>>, vector<1x32x32x8xf32>,
    return
  }
  func.func @transform_0(%arg0: i32) -> (i32, i32, i32, i32) {
    %c0_i32 = arith.constant 0 : i32
    %c0_i32_0 = arith.constant 0 : i32
    %c0_i32_1 = arith.constant 0 : i32
    %c0_i32_2 = arith.constant 0 : i32
    return %arg0, %c0_i32, %c0_i32_0, %c0_i32_1 : i32, i32, i32, i32
  }
  func.func @transform_1(%arg0: i32) -> (i32, i32, i32, i32) {
    %c0_i32 = arith.constant 0 : i32
    %c0_i32_0 = arith.constant 0 : i32
    %c0_i32_1 = arith.constant 0 : i32
    %c0_i32_2 = arith.constant 0 : i32
    %c0_i32_3 = arith.constant 0 : i32
    return %c0_i32, %c0_i32_0, %c0_i32_1, %c0_i32_2 : i32, i32, i32, i32
  }
  func.func @transform_2(%arg0: i32) -> (i32, i32, i32, i32) {
    %c0_i32 = arith.constant 0 : i32
    %c0_i32_0 = arith.constant 0 : i32
    %c0_i32_1 = arith.constant 0 : i32
    %c0_i32_2 = arith.constant 0 : i32
    return %arg0, %c0_i32, %c0_i32_0, %c0_i32_1 : i32, i32, i32, i32
  }
}

</mosaic_0001>

<llo_original>
// kernel: tpu_custom_call.1
$region0: #{tpu_custom_call.1}
  #allocation0 [shape = 'u32[]', space=smem, size = 0x4, offset = 0x4, fixed_abs, tag = 'smem constant byte address 0x4 - core index']
  #allocation1 [shape = 'u32[144,128]{1,0:T(1,128)}', space=vmem, size = 0x12000, scoped, tag = 'internal scratch']
  %s0 = inlined_call_operand.vmem [shape: f32[2,34,34,8], index: 0, kind: input, shape index: {}]
  %s1 = inlined_call_operand.vmem [shape: f32[3,3,8,8], index: 1, kind: input, shape index: {}]
  %s2 = inlined_call_operand.vmem [shape: f32[2,32,32,8], index: 2, kind: output, shape index: {}]
  %s3 = sld [smem:[#allocation0]]
  $region41: #{tpu_custom_call.1} parent=0
    _
  %s5 = ssub.s32 1, %s3
  %s6 = scalar_select 0, %s5, %s3
  loop: start=0, step=1, limit=4
  $region2: #{tpu_custom_call.1} parent=0 // loop_pre_header
    _
  $region3: #{tpu_custom_call.1} parent=0 // loop_header
    %s8 = sphi 0, %s12
    %p9 = scmp.ge.s32.totalorder %s8, 4
    %s18 = sphi 0, %s20
    %s21 = sphi 0, %s18
    %s22 = sphi 0, %s21
    %s38 = sphi 0, %s22
    %s42 = sphi 0, %s42
    %s44 = sphi 0, %s42
    %s45 = sphi 0, %s44
    %s59 = sphi 0, %s45
    %s65 = sphi 0, %s67
    %s68 = sphi 0, %s65
    %s69 = sphi 0, %s68
    %s85 = sphi 0, %s69
  $region4: #{tpu_custom_call.1} parent=0 // loop_header_branch
    %11 = sbr.rel (%p9) target = $region8
  $region5: #{tpu_custom_call.1} parent=0 // loop_body
    %s13 = ssub.s32 %s8, 1
    %s14 = ssub.s32 %s8, 2
    %s15 = sadd.s32 %s8, 1
    %s16 = ssub.s32 %s8, %s15
    %p17 = scmp.eq.s32.totalorder %s16, 0
    %s19 = sadd.s32 %s18, 1
    %s20 = scalar_select %p17, %s18, %s19
    %p23 = pneg %p17
    %p24 = scmp.eq.s32.totalorder %s8, 1
    %p25 = por %p23, %p24
    %p26 = scmp.ne.s32.totalorder %s18, %s21
    %p27 = scmp.eq.s32.totalorder %s8, 0
    %p28 = por %p26, %p27
    %p29 = scmp.ne.s32.totalorder %s18, %s21
    %p30 = scmp.eq.s32.totalorder %s13, 1
    %p31 = por %p29, %p30
    %p32 = scmp.ne.s32.totalorder %s21, %s22
    %p33 = scmp.eq.s32.totalorder %s13, 0
    %p34 = por %p32, %p33
    %p35 = scmp.ne.s32.totalorder %s21, %s22
    %p36 = scmp.eq.s32.totalorder %s14, 1
    %p37 = por %p35, %p36
    %p39 = scmp.ne.s32.totalorder %s22, %s38
    %p40 = scmp.eq.s32.totalorder %s14, 0
    %p41 = por %p39, %p40
    %s43 = sadd.s32 %s42, 1
    %p46 = scmp.eq.s32.totalorder %s8, 1
    %p47 = scmp.ne.s32.totalorder %s42, %s44
    %p48 = scmp.eq.s32.totalorder %s8, 0
    %p49 = por %p47, %p48
    %p50 = scmp.ne.s32.totalorder %s42, %s44
    %p51 = scmp.eq.s32.totalorder %s13, 1
    %p52 = por %p50, %p51
    %p53 = scmp.ne.s32.totalorder %s44, %s45
    %p54 = scmp.eq.s32.totalorder %s13, 0
    %p55 = por %p53, %p54
    %p56 = scmp.ne.s32.totalorder %s44, %s45
    %p57 = scmp.eq.s32.totalorder %s14, 1
    %p58 = por %p56, %p57
    %p60 = scmp.ne.s32.totalorder %s45, %s59
    %p61 = scmp.eq.s32.totalorder %s14, 0
    %p62 = por %p60, %p61
    %s63 = ssub.s32 %s8, %s15
    %p64 = scmp.eq.s32.totalorder %s63, 0
    %s66 = sadd.s32 %s65, 1
    %s67 = scalar_select %p64, %s65, %s66
    %p70 = pneg %p64
    %p71 = scmp.eq.s32.totalorder %s8, 1
    %p72 = por %p70, %p71
    %p73 = scmp.ne.s32.totalorder %s65, %s68
    %p74 = scmp.eq.s32.totalorder %s8, 0
    %p75 = por %p73, %p74
    %p76 = scmp.ne.s32.totalorder %s65, %s68
    %p77 = scmp.eq.s32.totalorder %s13, 1
    %p78 = por %p76, %p77
    %p79 = scmp.ne.s32.totalorder %s68, %s69
    %p80 = scmp.eq.s32.totalorder %s13, 0
    %p81 = por %p79, %p80
    %p82 = scmp.ne.s32.totalorder %s68, %s69
    %p83 = scmp.eq.s32.totalorder %s14, 1
    %p84 = por %p82, %p83
    %p86 = scmp.ne.s32.totalorder %s69, %s85
    %p87 = scmp.eq.s32.totalorder %s14, 0
    %p88 = por %p86, %p87
    %p89 = scmp.le.s32.totalorder 1, %s8
    %p90 = scmp.lt.s32.totalorder %s8, 3
    %p91 = pnand %p89, %p90
    %p92 = pneg %p91
    // Predicated region
    $region9: #{tpu_custom_call.1} parent=5 // pred_check
      _
    $region10: #{tpu_custom_call.1} parent=5 // pred_check_branch
      %94 = sbr.rel (%p91) target = $region12
    $region11: #{tpu_custom_call.1} parent=5 // pred_region
      %s95 = ssub.s32 %s8, 1
      // Predicated region
      $region13: #{tpu_custom_call.1} parent=11 // pred_check
        %p96 = pneg %p55
      $region14: #{tpu_custom_call.1} parent=11 // pred_check_branch
        %98 = sbr.rel (%p96) target = $region16
      $region15: #{tpu_custom_call.1} parent=11 // pred_region
        _
      $region16: #{tpu_custom_call.1} parent=11 // pred_fallthru
        _
    $region12: #{tpu_custom_call.1} parent=5 // pred_fallthru
      _
    %p99 = scmp.lt.s32.totalorder %s8, 2
    // Predicated region
    $region17: #{tpu_custom_call.1} parent=5 // pred_check
      %p100 = pneg %p99
    $region18: #{tpu_custom_call.1} parent=5 // pred_check_branch
      %102 = sbr.rel (%p100) target = $region20
    $region19: #{tpu_custom_call.1} parent=5 // pred_region
      // Predicated region
      $region21: #{tpu_custom_call.1} parent=19 // pred_check
        %p103 = pneg %p28
      $region22: #{tpu_custom_call.1} parent=19 // pred_check_branch
        %105 = sbr.rel (%p103) target = $region24
      $region23: #{tpu_custom_call.1} parent=19 // pred_region
        %p106 = scmp.lt.s32.totalorder %s8, 1
        %s107 = scalar_select %p106, %s8, 1
        %s108 = smul.addr %s107, 170
        %s109 = smul.addr %s108, 8
        %s110 = scalar_lea.vmem %s0, %s109
      $region24: #{tpu_custom_call.1} parent=19 // pred_fallthru
        _
    $region20: #{tpu_custom_call.1} parent=5 // pred_fallthru
      _
    %p111 = scmp.le.s32.totalorder 1, %s8
    %p112 = scmp.lt.s32.totalorder %s8, 3
    %p113 = pnand %p111, %p112
    %p114 = pneg %p113
    // Predicated region
    $region25: #{tpu_custom_call.1} parent=5 // pred_check
      _
    $region26: #{tpu_custom_call.1} parent=5 // pred_check_branch
      %116 = sbr.rel (%p113) target = $region28
    $region27: #{tpu_custom_call.1} parent=5 // pred_region
      %s117 = ssub.s32 %s8, 1
      %p118 = scmp.lt.s32.totalorder %s13, 1
      %s119 = scalar_select %p118, %s13, 1
      %s120 = smul.addr %s119, 170
      %s121 = smul.addr %s120, 8
      %s122 = scalar_lea.vmem %s0, %s121
      %p123 = pneg %p34
      %p124 = pneg %p31
      %p125 = pneg %p55
      %p126 = pneg %p52
      %p127 = pneg %p81
      %p128 = pneg %p78
      %p129 = scmp.lt.s32.totalorder %s13, 1
      %s130 = scalar_select %p129, %s13, 1
      %s131 = smul.addr %s130, 128
      %s132 = smul.addr %s131, 8
      %s133 = scalar_lea.vmem %s2, %s132
      %p134 = scmp.lt.s32.totalorder %s13, 1
      %s135 = scalar_select %p134, %s13, 1
      %s136 = smul.addr %s135, 170
      %s137 = smul.addr %s136, 8
      %s138 = scalar_lea.vmem %s0, %s137
      %p139 = scmp.lt.s32.totalorder %s13, 1
      %s140 = scalar_select %p139, %s13, 1
      %s141 = smul.addr %s140, 128
      %s142 = smul.addr %s141, 8
      %s143 = scalar_lea.vmem %s2, %s142
      %v144 = vld [vmem:[%s138] sm:$0xff]
      %v145 = vld [vmem:[%s138 + $0x8] sm:$0xff]
      %v146 = vld [vmem:[%s138 + $0x10] sm:$0xff]
      %v147 = vld [vmem:[%s138 + $0x18] sm:$0xff]
      %v148 = vld [vmem:[%s138 + $0x20] sm:$0x3]
      %v149 = vld [vmem:[%s138 + $0x28] sm:$0xff]
      %v150 = vld [vmem:[%s138 + $0x30] sm:$0xff]
      %v151 = vld [vmem:[%s138 + $0x38] sm:$0xff]
      %v152 = vld [vmem:[%s138 + $0x40] sm:$0xff]
      %v153 = vld [vmem:[%s138 + $0x48] sm:$0x3]
      %v154 = vld [vmem:[%s138 + $0x50] sm:$0xff]
      %v155 = vld [vmem:[%s138 + $0x58] sm:$0xff]
      %v156 = vld [vmem:[%s138 + $0x60] sm:$0xff]
      %v157 = vld [vmem:[%s138 + $0x68] sm:$0xff]
      %v158 = vld [vmem:[%s138 + $0x70] sm:$0x3]
      %v159 = vld [vmem:[%s138 + $0x78] sm:$0xff]
      %v160 = vld [vmem:[%s138 + $0x80] sm:$0xff]
      %v161 = vld [vmem:[%s138 + $0x88] sm:$0xff]
      %v162 = vld [vmem:[%s138 + $0x90] sm:$0xff]
      %v163 = vld [vmem:[%s138 + $0x98] sm:$0x3]
      %v164 = vld [vmem:[%s138 + $0xa0] sm:$0xff]
      %v165 = vld [vmem:[%s138 + $0xa8] sm:$0xff]
      %v166 = vld [vmem:[%s138 + $0xb0] sm:$0xff]
      %v167 = vld [vmem:[%s138 + $0xb8] sm:$0xff]
      %v168 = vld [vmem:[%s138 + $0xc0] sm:$0x3]
      %v169 = vld [vmem:[%s138 + $0xc8] sm:$0xff]
      %v170 = vld [vmem:[%s138 + $0xd0] sm:$0xff]
      %v171 = vld [vmem:[%s138 + $0xd8] sm:$0xff]
      %v172 = vld [vmem:[%s138 + $0xe0] sm:$0xff]
      %v173 = vld [vmem:[%s138 + $0xe8] sm:$0x3]
      %v174 = vld [vmem:[%s138 + $0xf0] sm:$0xff]
      %v175 = vld [vmem:[%s138 + $0xf8] sm:$0xff]
      %v176 = vld [vmem:[%s138 + $0x100] sm:$0xff]
      %v177 = vld [vmem:[%s138 + $0x108] sm:$0xff]
      %v178 = vld [vmem:[%s138 + $0x110] sm:$0x3]
      %v179 = vld [vmem:[%s138 + $0x118] sm:$0xff]
      %v180 = vld [vmem:[%s138 + $0x120] sm:$0xff]
      %v181 = vld [vmem:[%s138 + $0x128] sm:$0xff]
      %v182 = vld [vmem:[%s138 + $0x130] sm:$0xff]
      %v183 = vld [vmem:[%s138 + $0x138] sm:$0x3]
      %v184 = vld [vmem:[%s138 + $0x140] sm:$0xff]
      %v185 = vld [vmem:[%s138 + $0x148] sm:$0xff]
      %v186 = vld [vmem:[%s138 + $0x150] sm:$0xff]
      %v187 = vld [vmem:[%s138 + $0x158] sm:$0xff]
      %v188 = vld [vmem:[%s138 + $0x160] sm:$0x3]
      %v189 = vld [vmem:[%s138 + $0x168] sm:$0xff]
      %v190 = vld [vmem:[%s138 + $0x170] sm:$0xff]
      %v191 = vld [vmem:[%s138 + $0x178] sm:$0xff]
      %v192 = vld [vmem:[%s138 + $0x180] sm:$0xff]
      %v193 = vld [vmem:[%s138 + $0x188] sm:$0x3]
      %v194 = vld [vmem:[%s138 + $0x190] sm:$0xff]
      %v195 = vld [vmem:[%s138 + $0x198] sm:$0xff]
      %v196 = vld [vmem:[%s138 + $0x1a0] sm:$0xff]
      %v197 = vld [vmem:[%s138 + $0x1a8] sm:$0xff]
      %v198 = vld [vmem:[%s138 + $0x1b0] sm:$0x3]
      %v199 = vld [vmem:[%s138 + $0x1b8] sm:$0xff]
      %v200 = vld [vmem:[%s138 + $0x1c0] sm:$0xff]
      %v201 = vld [vmem:[%s138 + $0x1c8] sm:$0xff]
      %v202 = vld [vmem:[%s138 + $0x1d0] sm:$0xff]
      %v203 = vld [vmem:[%s138 + $0x1d8] sm:$0x3]
      %v204 = vld [vmem:[%s138 + $0x1e0] sm:$0xff]
      %v205 = vld [vmem:[%s138 + $0x1e8] sm:$0xff]
      %v206 = vld [vmem:[%s138 + $0x1f0] sm:$0xff]
      %v207 = vld [vmem:[%s138 + $0x1f8] sm:$0xff]
      %v208 = vld [vmem:[%s138 + $0x200] sm:$0x3]
      %v209 = vld [vmem:[%s138 + $0x208] sm:$0xff]
      %v210 = vld [vmem:[%s138 + $0x210] sm:$0xff]
      %v211 = vld [vmem:[%s138 + $0x218] sm:$0xff]
      %v212 = vld [vmem:[%s138 + $0x220] sm:$0xff]
      %v213 = vld [vmem:[%s138 + $0x228] sm:$0x3]
      %v214 = vld [vmem:[%s138 + $0x230] sm:$0xff]
      %v215 = vld [vmem:[%s138 + $0x238] sm:$0xff]
      %v216 = vld [vmem:[%s138 + $0x240] sm:$0xff]
      %v217 = vld [vmem:[%s138 + $0x248] sm:$0xff]
      %v218 = vld [vmem:[%s138 + $0x250] sm:$0x3]
      %v219 = vld [vmem:[%s138 + $0x258] sm:$0xff]
      %v220 = vld [vmem:[%s138 + $0x260] sm:$0xff]
      %v221 = vld [vmem:[%s138 + $0x268] sm:$0xff]
      %v222 = vld [vmem:[%s138 + $0x270] sm:$0xff]
      %v223 = vld [vmem:[%s138 + $0x278] sm:$0x3]
      %v224 = vld [vmem:[%s138 + $0x280] sm:$0xff]
      %v225 = vld [vmem:[%s138 + $0x288] sm:$0xff]
      %v226 = vld [vmem:[%s138 + $0x290] sm:$0xff]
      %v227 = vld [vmem:[%s138 + $0x298] sm:$0xff]
      %v228 = vld [vmem:[%s138 + $0x2a0] sm:$0x3]
      %v229 = vld [vmem:[%s138 + $0x2a8] sm:$0xff]
      %v230 = vld [vmem:[%s138 + $0x2b0] sm:$0xff]
      %v231 = vld [vmem:[%s138 + $0x2b8] sm:$0xff]
      %v232 = vld [vmem:[%s138 + $0x2c0] sm:$0xff]
      %v233 = vld [vmem:[%s138 + $0x2c8] sm:$0x3]
      %v234 = vld [vmem:[%s138 + $0x2d0] sm:$0xff]
      %v235 = vld [vmem:[%s138 + $0x2d8] sm:$0xff]
      %v236 = vld [vmem:[%s138 + $0x2e0] sm:$0xff]
      %v237 = vld [vmem:[%s138 + $0x2e8] sm:$0xff]
      %v238 = vld [vmem:[%s138 + $0x2f0] sm:$0x3]
      %v239 = vld [vmem:[%s138 + $0x2f8] sm:$0xff]
      %v240 = vld [vmem:[%s138 + $0x300] sm:$0xff]
      %v241 = vld [vmem:[%s138 + $0x308] sm:$0xff]
      %v242 = vld [vmem:[%s138 + $0x310] sm:$0xff]
      %v243 = vld [vmem:[%s138 + $0x318] sm:$0x3]
      %v244 = vld [vmem:[%s138 + $0x320] sm:$0xff]
      %v245 = vld [vmem:[%s138 + $0x328] sm:$0xff]
      %v246 = vld [vmem:[%s138 + $0x330] sm:$0xff]
      %v247 = vld [vmem:[%s138 + $0x338] sm:$0xff]
      %v248 = vld [vmem:[%s138 + $0x340] sm:$0x3]
      %v249 = vld [vmem:[%s138 + $0x348] sm:$0xff]
      %v250 = vld [vmem:[%s138 + $0x350] sm:$0xff]
      %v251 = vld [vmem:[%s138 + $0x358] sm:$0xff]
      %v252 = vld [vmem:[%s138 + $0x360] sm:$0xff]
      %v253 = vld [vmem:[%s138 + $0x368] sm:$0x3]
      %v254 = vld [vmem:[%s138 + $0x370] sm:$0xff]
      %v255 = vld [vmem:[%s138 + $0x378] sm:$0xff]
      %v256 = vld [vmem:[%s138 + $0x380] sm:$0xff]
      %v257 = vld [vmem:[%s138 + $0x388] sm:$0xff]
      %v258 = vld [vmem:[%s138 + $0x390] sm:$0x3]
      %v259 = vld [vmem:[%s138 + $0x398] sm:$0xff]
      %v260 = vld [vmem:[%s138 + $0x3a0] sm:$0xff]
      %v261 = vld [vmem:[%s138 + $0x3a8] sm:$0xff]
      %v262 = vld [vmem:[%s138 + $0x3b0] sm:$0xff]
      %v263 = vld [vmem:[%s138 + $0x3b8] sm:$0x3]
      %v264 = vld [vmem:[%s138 + $0x3c0] sm:$0xff]
      %v265 = vld [vmem:[%s138 + $0x3c8] sm:$0xff]
      %v266 = vld [vmem:[%s138 + $0x3d0] sm:$0xff]
      %v267 = vld [vmem:[%s138 + $0x3d8] sm:$0xff]
      %v268 = vld [vmem:[%s138 + $0x3e0] sm:$0x3]
      %v269 = vld [vmem:[%s138 + $0x3e8] sm:$0xff]
      %v270 = vld [vmem:[%s138 + $0x3f0] sm:$0xff]
      %v271 = vld [vmem:[%s138 + $0x3f8] sm:$0xff]
      %v272 = vld [vmem:[%s138 + $0x400] sm:$0xff]
      %v273 = vld [vmem:[%s138 + $0x408] sm:$0x3]
      %v274 = vld [vmem:[%s138 + $0x410] sm:$0xff]
      %v275 = vld [vmem:[%s138 + $0x418] sm:$0xff]
      %v276 = vld [vmem:[%s138 + $0x420] sm:$0xff]
      %v277 = vld [vmem:[%s138 + $0x428] sm:$0xff]
      %v278 = vld [vmem:[%s138 + $0x430] sm:$0x3]
      %v279 = vld [vmem:[%s138 + $0x438] sm:$0xff]
      %v280 = vld [vmem:[%s138 + $0x440] sm:$0xff]
      %v281 = vld [vmem:[%s138 + $0x448] sm:$0xff]
      %v282 = vld [vmem:[%s138 + $0x450] sm:$0xff]
      %v283 = vld [vmem:[%s138 + $0x458] sm:$0x3]
      %v284 = vld [vmem:[%s138 + $0x460] sm:$0xff]
      %v285 = vld [vmem:[%s138 + $0x468] sm:$0xff]
      %v286 = vld [vmem:[%s138 + $0x470] sm:$0xff]
      %v287 = vld [vmem:[%s138 + $0x478] sm:$0xff]
      %v288 = vld [vmem:[%s138 + $0x480] sm:$0x3]
      %v289 = vld [vmem:[%s138 + $0x488] sm:$0xff]
      %v290 = vld [vmem:[%s138 + $0x490] sm:$0xff]
      %v291 = vld [vmem:[%s138 + $0x498] sm:$0xff]
      %v292 = vld [vmem:[%s138 + $0x4a0] sm:$0xff]
      %v293 = vld [vmem:[%s138 + $0x4a8] sm:$0x3]
      %v294 = vld [vmem:[%s138 + $0x4b0] sm:$0xff]
      %v295 = vld [vmem:[%s138 + $0x4b8] sm:$0xff]
      %v296 = vld [vmem:[%s138 + $0x4c0] sm:$0xff]
      %v297 = vld [vmem:[%s138 + $0x4c8] sm:$0xff]
      %v298 = vld [vmem:[%s138 + $0x4d0] sm:$0x3]
      %v299 = vld [vmem:[%s138 + $0x4d8] sm:$0xff]
      %v300 = vld [vmem:[%s138 + $0x4e0] sm:$0xff]
      %v301 = vld [vmem:[%s138 + $0x4e8] sm:$0xff]
      %v302 = vld [vmem:[%s138 + $0x4f0] sm:$0xff]
      %v303 = vld [vmem:[%s138 + $0x4f8] sm:$0x3]
      %v304 = vld [vmem:[%s138 + $0x500] sm:$0xff]
      %v305 = vld [vmem:[%s138 + $0x508] sm:$0xff]
      %v306 = vld [vmem:[%s138 + $0x510] sm:$0xff]
      %v307 = vld [vmem:[%s138 + $0x518] sm:$0xff]
      %v308 = vld [vmem:[%s138 + $0x520] sm:$0x3]
      %v309 = vld [vmem:[%s138 + $0x528] sm:$0xff]
      %v310 = vld [vmem:[%s138 + $0x530] sm:$0xff]
      %v311 = vld [vmem:[%s138 + $0x538] sm:$0xff]
      %v312 = vld [vmem:[%s138 + $0x540] sm:$0xff]
      %v313 = vld [vmem:[%s138 + $0x548] sm:$0x3]
      %v314 = vld [vmem:[%s1] sm:$0xff]
      %v315 = vld [vmem:[%s1 + $0x8] sm:$0xff]
      %v316 = vld [vmem:[%s1 + $0x10] sm:$0xff]
      %v317 = vld [vmem:[%s1 + $0x18] sm:$0xff]
      %v318 = vld [vmem:[%s1 + $0x20] sm:$0xff]
      %v319 = vld [vmem:[%s1 + $0x28] sm:$0xff]
      %v320 = vld [vmem:[%s1 + $0x30] sm:$0xff]
      %v321 = vld [vmem:[%s1 + $0x38] sm:$0xff]
      %v322 = vld [vmem:[%s1 + $0x40] sm:$0xff]
      %vm483 = vcmask 1046528
      %v484 = vrot.slane %v144, 1
      %v485 = vrot.slane %v145, 1
      %v486 = vsel %vm483, %v484, %v485
      %v487 = vrot.slane %v146, 1
      %v488 = vsel %vm483, %v485, %v487
      %v489 = vrot.slane %v147, 1
      %v490 = vsel %vm483, %v487, %v489
      %v491 = vrot.slane %v148, 1
      %v492 = vsel %vm483, %v489, %v491
      %v493 = vrot.slane %v149, 1
      %v494 = vrot.slane %v150, 1
      %v495 = vsel %vm483, %v493, %v494
      %v496 = vrot.slane %v151, 1
      %v497 = vsel %vm483, %v494, %v496
      %v498 = vrot.slane %v152, 1
      %v499 = vsel %vm483, %v496, %v498
      %v500 = vrot.slane %v153, 1
      %v501 = vsel %vm483, %v498, %v500
      %v502 = vrot.slane %v154, 1
      %v503 = vrot.slane %v155, 1
      %v504 = vsel %vm483, %v502, %v503
      %v505 = vrot.slane %v156, 1
      %v506 = vsel %vm483, %v503, %v505
      %v507 = vrot.slane %v157, 1
      %v508 = vsel %vm483, %v505, %v507
      %v509 = vrot.slane %v158, 1
      %v510 = vsel %vm483, %v507, %v509
      %v511 = vrot.slane %v159, 1
      %v512 = vrot.slane %v160, 1
      %v513 = vsel %vm483, %v511, %v512
      %v514 = vrot.slane %v161, 1
      %v515 = vsel %vm483, %v512, %v514
      %v516 = vrot.slane %v162, 1
      %v517 = vsel %vm483, %v514, %v516
      %v518 = vrot.slane %v163, 1
      %v519 = vsel %vm483, %v516, %v518
      %v520 = vrot.slane %v164, 1
      %v521 = vrot.slane %v165, 1
      %v522 = vsel %vm483, %v520, %v521
      %v523 = vrot.slane %v166, 1
      %v524 = vsel %vm483, %v521, %v523
      %v525 = vrot.slane %v167, 1
      %v526 = vsel %vm483, %v523, %v525
      %v527 = vrot.slane %v168, 1
      %v528 = vsel %vm483, %v525, %v527
      %v529 = vrot.slane %v169, 1
      %v530 = vrot.slane %v170, 1
      %v531 = vsel %vm483, %v529, %v530
      %v532 = vrot.slane %v171, 1
      %v533 = vsel %vm483, %v530, %v532
      %v534 = vrot.slane %v172, 1
      %v535 = vsel %vm483, %v532, %v534
      %v536 = vrot.slane %v173, 1
      %v537 = vsel %vm483, %v534, %v536
      %v538 = vrot.slane %v174, 1
      %v539 = vrot.slane %v175, 1
      %v540 = vsel %vm483, %v538, %v539
      %v541 = vrot.slane %v176, 1
      %v542 = vsel %vm483, %v539, %v541
      %v543 = vrot.slane %v177, 1
      %v544 = vsel %vm483, %v541, %v543
      %v545 = vrot.slane %v178, 1
      %v546 = vsel %vm483, %v543, %v545
      %v547 = vrot.slane %v179, 1
      %v548 = vrot.slane %v180, 1
      %v549 = vsel %vm483, %v547, %v548
      %v550 = vrot.slane %v181, 1
      %v551 = vsel %vm483, %v548, %v550
      %v552 = vrot.slane %v182, 1
      %v553 = vsel %vm483, %v550, %v552
      %v554 = vrot.slane %v183, 1
      %v555 = vsel %vm483, %v552, %v554
      %v556 = vrot.slane %v184, 1
      %v557 = vrot.slane %v185, 1
      %v558 = vsel %vm483, %v556, %v557
      %v559 = vrot.slane %v186, 1
      %v560 = vsel %vm483, %v557, %v559
      %v561 = vrot.slane %v187, 1
      %v562 = vsel %vm483, %v559, %v561
      %v563 = vrot.slane %v188, 1
      %v564 = vsel %vm483, %v561, %v563
      %v565 = vrot.slane %v189, 1
      %v566 = vrot.slane %v190, 1
      %v567 = vsel %vm483, %v565, %v566
      %v568 = vrot.slane %v191, 1
      %v569 = vsel %vm483, %v566, %v568
      %v570 = vrot.slane %v192, 1
      %v571 = vsel %vm483, %v568, %v570
      %v572 = vrot.slane %v193, 1
      %v573 = vsel %vm483, %v570, %v572
      %v574 = vrot.slane %v194, 1
      %v575 = vrot.slane %v195, 1
      %v576 = vsel %vm483, %v574, %v575
      %v577 = vrot.slane %v196, 1
      %v578 = vsel %vm483, %v575, %v577
      %v579 = vrot.slane %v197, 1
      %v580 = vsel %vm483, %v577, %v579
      %v581 = vrot.slane %v198, 1
      %v582 = vsel %vm483, %v579, %v581
      %v583 = vrot.slane %v199, 1
      %v584 = vrot.slane %v200, 1
      %v585 = vsel %vm483, %v583, %v584
      %v586 = vrot.slane %v201, 1
      %v587 = vsel %vm483, %v584, %v586
      %v588 = vrot.slane %v202, 1
      %v589 = vsel %vm483, %v586, %v588
      %v590 = vrot.slane %v203, 1
      %v591 = vsel %vm483, %v588, %v590
      %v592 = vrot.slane %v204, 1
      %v593 = vrot.slane %v205, 1
      %v594 = vsel %vm483, %v592, %v593
      %v595 = vrot.slane %v206, 1
      %v596 = vsel %vm483, %v593, %v595
      %v597 = vrot.slane %v207, 1
      %v598 = vsel %vm483, %v595, %v597
      %v599 = vrot.slane %v208, 1
      %v600 = vsel %vm483, %v597, %v599
      %v601 = vrot.slane %v209, 1
      %v602 = vrot.slane %v210, 1
      %v603 = vsel %vm483, %v601, %v602
      %v604 = vrot.slane %v211, 1
      %v605 = vsel %vm483, %v602, %v604
      %v606 = vrot.slane %v212, 1
      %v607 = vsel %vm483, %v604, %v606
      %v608 = vrot.slane %v213, 1
      %v609 = vsel %vm483, %v606, %v608
      %v610 = vrot.slane %v214, 1
      %v611 = vrot.slane %v215, 1
      %v612 = vsel %vm483, %v610, %v611
      %v613 = vrot.slane %v216, 1
      %v614 = vsel %vm483, %v611, %v613
      %v615 = vrot.slane %v217, 1
      %v616 = vsel %vm483, %v613, %v615
      %v617 = vrot.slane %v218, 1
      %v618 = vsel %vm483, %v615, %v617
      %v619 = vrot.slane %v219, 1
      %v620 = vrot.slane %v220, 1
      %v621 = vsel %vm483, %v619, %v620
      %v622 = vrot.slane %v221, 1
      %v623 = vsel %vm483, %v620, %v622
      %v624 = vrot.slane %v222, 1
      %v625 = vsel %vm483, %v622, %v624
      %v626 = vrot.slane %v223, 1
      %v627 = vsel %vm483, %v624, %v626
      %v628 = vrot.slane %v224, 1
      %v629 = vrot.slane %v225, 1
      %v630 = vsel %vm483, %v628, %v629
      %v631 = vrot.slane %v226, 1
      %v632 = vsel %vm483, %v629, %v631
      %v633 = vrot.slane %v227, 1
      %v634 = vsel %vm483, %v631, %v633
      %v635 = vrot.slane %v228, 1
      %v636 = vsel %vm483, %v633, %v635
      %v637 = vrot.slane %v229, 1
      %v638 = vrot.slane %v230, 1
      %v639 = vsel %vm483, %v637, %v638
      %v640 = vrot.slane %v231, 1
      %v641 = vsel %vm483, %v638, %v640
      %v642 = vrot.slane %v232, 1
      %v643 = vsel %vm483, %v640, %v642
      %v644 = vrot.slane %v233, 1
      %v645 = vsel %vm483, %v642, %v644
      %v646 = vrot.slane %v234, 1
      %v647 = vrot.slane %v235, 1
      %v648 = vsel %vm483, %v646, %v647
      %v649 = vrot.slane %v236, 1
      %v650 = vsel %vm483, %v647, %v649
      %v651 = vrot.slane %v237, 1
      %v652 = vsel %vm483, %v649, %v651
      %v653 = vrot.slane %v238, 1
      %v654 = vsel %vm483, %v651, %v653
      %v655 = vrot.slane %v239, 1
      %v656 = vrot.slane %v240, 1
      %v657 = vsel %vm483, %v655, %v656
      %v658 = vrot.slane %v241, 1
      %v659 = vsel %vm483, %v656, %v658
      %v660 = vrot.slane %v242, 1
      %v661 = vsel %vm483, %v658, %v660
      %v662 = vrot.slane %v243, 1
      %v663 = vsel %vm483, %v660, %v662
      %v664 = vrot.slane %v244, 1
      %v665 = vrot.slane %v245, 1
      %v666 = vsel %vm483, %v664, %v665
      %v667 = vrot.slane %v246, 1
      %v668 = vsel %vm483, %v665, %v667
      %v669 = vrot.slane %v247, 1
      %v670 = vsel %vm483, %v667, %v669
      %v671 = vrot.slane %v248, 1
      %v672 = vsel %vm483, %v669, %v671
      %v673 = vrot.slane %v249, 1
      %v674 = vrot.slane %v250, 1
      %v675 = vsel %vm483, %v673, %v674
      %v676 = vrot.slane %v251, 1
      %v677 = vsel %vm483, %v674, %v676
      %v678 = vrot.slane %v252, 1
      %v679 = vsel %vm483, %v676, %v678
      %v680 = vrot.slane %v253, 1
      %v681 = vsel %vm483, %v678, %v680
      %v682 = vrot.slane %v254, 1
      %v683 = vrot.slane %v255, 1
      %v684 = vsel %vm483, %v682, %v683
      %v685 = vrot.slane %v256, 1
      %v686 = vsel %vm483, %v683, %v685
      %v687 = vrot.slane %v257, 1
      %v688 = vsel %vm483, %v685, %v687
      %v689 = vrot.slane %v258, 1
      %v690 = vsel %vm483, %v687, %v689
      %v691 = vrot.slane %v259, 1
      %v692 = vrot.slane %v260, 1
      %v693 = vsel %vm483, %v691, %v692
      %v694 = vrot.slane %v261, 1
      %v695 = vsel %vm483, %v692, %v694
      %v696 = vrot.slane %v262, 1
      %v697 = vsel %vm483, %v694, %v696
      %v698 = vrot.slane %v263, 1
      %v699 = vsel %vm483, %v696, %v698
      %v700 = vrot.slane %v264, 1
      %v701 = vrot.slane %v265, 1
      %v702 = vsel %vm483, %v700, %v701
      %v703 = vrot.slane %v266, 1
      %v704 = vsel %vm483, %v701, %v703
      %v705 = vrot.slane %v267, 1
      %v706 = vsel %vm483, %v703, %v705
      %v707 = vrot.slane %v268, 1
      %v708 = vsel %vm483, %v705, %v707
      %v709 = vrot.slane %v269, 1
      %v710 = vrot.slane %v270, 1
      %v711 = vsel %vm483, %v709, %v710
      %v712 = vrot.slane %v271, 1
      %v713 = vsel %vm483, %v710, %v712
      %v714 = vrot.slane %v272, 1
      %v715 = vsel %vm483, %v712, %v714
      %v716 = vrot.slane %v273, 1
      %v717 = vsel %vm483, %v714, %v716
      %v718 = vrot.slane %v274, 1
      %v719 = vrot.slane %v275, 1
      %v720 = vsel %vm483, %v718, %v719
      %v721 = vrot.slane %v276, 1
      %v722 = vsel %vm483, %v719, %v721
      %v723 = vrot.slane %v277, 1
      %v724 = vsel %vm483, %v721, %v723
      %v725 = vrot.slane %v278, 1
      %v726 = vsel %vm483, %v723, %v725
      %v727 = vrot.slane %v279, 1
      %v728 = vrot.slane %v280, 1
      %v729 = vsel %vm483, %v727, %v728
      %v730 = vrot.slane %v281, 1
      %v731 = vsel %vm483, %v728, %v730
      %v732 = vrot.slane %v282, 1
      %v733 = vsel %vm483, %v730, %v732
      %v734 = vrot.slane %v283, 1
      %v735 = vsel %vm483, %v732, %v734
      %v736 = vrot.slane %v284, 1
      %v737 = vrot.slane %v285, 1
      %v738 = vsel %vm483, %v736, %v737
      %v739 = vrot.slane %v286, 1
      %v740 = vsel %vm483, %v737, %v739
      %v741 = vrot.slane %v287, 1
      %v742 = vsel %vm483, %v739, %v741
      %v743 = vrot.slane %v288, 1
      %v744 = vsel %vm483, %v741, %v743
      %v745 = vrot.slane %v289, 1
      %v746 = vrot.slane %v290, 1
      %v747 = vsel %vm483, %v745, %v746
      %v748 = vrot.slane %v291, 1
      %v749 = vsel %vm483, %v746, %v748
      %v750 = vrot.slane %v292, 1
      %v751 = vsel %vm483, %v748, %v750
      %v752 = vrot.slane %v293, 1
      %v753 = vsel %vm483, %v750, %v752
      %v754 = vrot.slane %v294, 1
      %v755 = vrot.slane %v295, 1
      %v756 = vsel %vm483, %v754, %v755
      %v757 = vrot.slane %v296, 1
      %v758 = vsel %vm483, %v755, %v757
      %v759 = vrot.slane %v297, 1
      %v760 = vsel %vm483, %v757, %v759
      %v761 = vrot.slane %v298, 1
      %v762 = vsel %vm483, %v759, %v761
      %v763 = vrot.slane %v299, 1
      %v764 = vrot.slane %v300, 1
      %v765 = vsel %vm483, %v763, %v764
      %v766 = vrot.slane %v301, 1
      %v767 = vsel %vm483, %v764, %v766
      %v768 = vrot.slane %v302, 1
      %v769 = vsel %vm483, %v766, %v768
      %v770 = vrot.slane %v303, 1
      %v771 = vsel %vm483, %v768, %v770
      %vm772 = vcmask 64512
      %v773 = vsel %vm772, %v486, 0
      %v775 = vsel %vm772, %v488, 0
      %v777 = vsel %vm772, %v490, 0
      %v779 = vsel %vm772, %v492, 0
      %v781 = vsel %vm772, %v495, 0
      %v783 = vsel %vm772, %v497, 0
      %v785 = vsel %vm772, %v499, 0
      %v787 = vsel %vm772, %v501, 0
      %v789 = vsel %vm772, %v504, 0
      %v791 = vsel %vm772, %v506, 0
      %v793 = vsel %vm772, %v508, 0
      %v795 = vsel %vm772, %v510, 0
      %v797 = vsel %vm772, %v513, 0
      %v799 = vsel %vm772, %v515, 0
      %v801 = vsel %vm772, %v517, 0
      %v803 = vsel %vm772, %v519, 0
      %v805 = vsel %vm772, %v522, 0
      %v807 = vsel %vm772, %v524, 0
      %v809 = vsel %vm772, %v526, 0
      %v811 = vsel %vm772, %v528, 0
      %v813 = vsel %vm772, %v531, 0
      %v815 = vsel %vm772, %v533, 0
      %v817 = vsel %vm772, %v535, 0
      %v819 = vsel %vm772, %v537, 0
      %v821 = vsel %vm772, %v540, 0
      %v823 = vsel %vm772, %v542, 0
      %v825 = vsel %vm772, %v544, 0
      %v827 = vsel %vm772, %v546, 0
      %v829 = vsel %vm772, %v549, 0
      %v831 = vsel %vm772, %v551, 0
      %v833 = vsel %vm772, %v553, 0
      %v835 = vsel %vm772, %v555, 0
      %v837 = vsel %vm772, %v558, 0
      %v839 = vsel %vm772, %v560, 0
      %v841 = vsel %vm772, %v562, 0
      %v843 = vsel %vm772, %v564, 0
      %v845 = vsel %vm772, %v567, 0
      %v847 = vsel %vm772, %v569, 0
      %v849 = vsel %vm772, %v571, 0
      %v851 = vsel %vm772, %v573, 0
      %v853 = vsel %vm772, %v576, 0
      %v855 = vsel %vm772, %v578, 0
      %v857 = vsel %vm772, %v580, 0
      %v859 = vsel %vm772, %v582, 0
      %v861 = vsel %vm772, %v585, 0
      %v863 = vsel %vm772, %v587, 0
      %v865 = vsel %vm772, %v589, 0
      %v867 = vsel %vm772, %v591, 0
      %v869 = vsel %vm772, %v594, 0
      %v871 = vsel %vm772, %v596, 0
      %v873 = vsel %vm772, %v598, 0
      %v875 = vsel %vm772, %v600, 0
      %v877 = vsel %vm772, %v603, 0
      %v879 = vsel %vm772, %v605, 0
      %v881 = vsel %vm772, %v607, 0
      %v883 = vsel %vm772, %v609, 0
      %v885 = vsel %vm772, %v612, 0
      %v887 = vsel %vm772, %v614, 0
      %v889 = vsel %vm772, %v616, 0
      %v891 = vsel %vm772, %v618, 0
      %v893 = vsel %vm772, %v621, 0
      %v895 = vsel %vm772, %v623, 0
      %v897 = vsel %vm772, %v625, 0
      %v899 = vsel %vm772, %v627, 0
      %v901 = vsel %vm772, %v630, 0
      %v903 = vsel %vm772, %v632, 0
      %v905 = vsel %vm772, %v634, 0
      %v907 = vsel %vm772, %v636, 0
      %v909 = vsel %vm772, %v639, 0
      %v911 = vsel %vm772, %v641, 0
      %v913 = vsel %vm772, %v643, 0
      %v915 = vsel %vm772, %v645, 0
      %v917 = vsel %vm772, %v648, 0
      %v919 = vsel %vm772, %v650, 0
      %v921 = vsel %vm772, %v652, 0
      %v923 = vsel %vm772, %v654, 0
      %v925 = vsel %vm772, %v657, 0
      %v927 = vsel %vm772, %v659, 0
      %v929 = vsel %vm772, %v661, 0
      %v931 = vsel %vm772, %v663, 0
      %v933 = vsel %vm772, %v666, 0
      %v935 = vsel %vm772, %v668, 0
      %v937 = vsel %vm772, %v670, 0
      %v939 = vsel %vm772, %v672, 0
      %v941 = vsel %vm772, %v675, 0
      %v943 = vsel %vm772, %v677, 0
      %v945 = vsel %vm772, %v679, 0
      %v947 = vsel %vm772, %v681, 0
      %v949 = vsel %vm772, %v684, 0
      %v951 = vsel %vm772, %v686, 0
      %v953 = vsel %vm772, %v688, 0
      %v955 = vsel %vm772, %v690, 0
      %v957 = vsel %vm772, %v693, 0
      %v959 = vsel %vm772, %v695, 0
      %v961 = vsel %vm772, %v697, 0
      %v963 = vsel %vm772, %v699, 0
      %v965 = vsel %vm772, %v702, 0
      %v967 = vsel %vm772, %v704, 0
      %v969 = vsel %vm772, %v706, 0
      %v971 = vsel %vm772, %v708, 0
      %v973 = vsel %vm772, %v711, 0
      %v975 = vsel %vm772, %v713, 0
      %v977 = vsel %vm772, %v715, 0
      %v979 = vsel %vm772, %v717, 0
      %v981 = vsel %vm772, %v720, 0
      %v983 = vsel %vm772, %v722, 0
      %v985 = vsel %vm772, %v724, 0
      %v987 = vsel %vm772, %v726, 0
      %v989 = vsel %vm772, %v729, 0
      %v991 = vsel %vm772, %v731, 0
      %v993 = vsel %vm772, %v733, 0
      %v995 = vsel %vm772, %v735, 0
      %v997 = vsel %vm772, %v738, 0
      %v999 = vsel %vm772, %v740, 0
      %v1001 = vsel %vm772, %v742, 0
      %v1003 = vsel %vm772, %v744, 0
      %v1005 = vsel %vm772, %v747, 0
      %v1007 = vsel %vm772, %v749, 0
      %v1009 = vsel %vm772, %v751, 0
      %v1011 = vsel %vm772, %v753, 0
      %v1013 = vsel %vm772, %v756, 0
      %v1015 = vsel %vm772, %v758, 0
      %v1017 = vsel %vm772, %v760, 0
      %v1019 = vsel %vm772, %v762, 0
      %v1021 = vsel %vm772, %v765, 0
      %v1023 = vsel %vm772, %v767, 0
      %v1025 = vsel %vm772, %v769, 0
      %v1027 = vsel %vm772, %v771, 0
      %1029 = vmatprep.subr.mxu0 0.0
      %1030 = vmatpush1.msra.mxu0 0.0
      %1031 = vmatprep.subr.mxu0 0.0
      %1032 = vmatpush1.msra.mxu0 0.0
      %1033 = vmatprep.subr.mxu0 0.0
      %1034 = vmatpush1.msra.mxu0 0.0
      %1035 = vmatprep.subr.mxu0 0.0
      %1036 = vmatpush1.msra.mxu0 0.0
      %1037 = vmatprep.subr.mxu0 0.0
      %1038 = vmatpush1.msra.mxu0 0.0
      %1039 = vmatprep.subr.mxu0 0.0
      %1040 = vmatpush1.msra.mxu0 0.0
      %1041 = vmatprep.subr.mxu0 0.0
      %1042 = vmatpush1.msra.mxu0 0.0
      %1043 = vmatprep.subr.mxu0 0.0
      %1044 = vmatpush1.msra.mxu0 0.0
      %1045 = vmatprep.subr.mxu0 0.0
      %1046 = vmatpush1.msra.mxu0 0.0
      %1047 = vmatprep.subr.mxu0 0.0
      %1048 = vmatpush1.msra.mxu0 0.0
      %1049 = vmatprep.subr.mxu0 0.0
      %1050 = vmatpush1.msra.mxu0 0.0
      %1051 = vmatprep.subr.mxu0 0.0
      %1052 = vmatpush1.msra.mxu0 0.0
      %1053 = vmatprep.subr.mxu0 0.0
      %1054 = vmatpush1.msra.mxu0 0.0
      %1055 = vmatprep.subr.mxu0 0.0
      %1056 = vmatpush1.msra.mxu0 0.0
      %1057 = vmatprep.subr.mxu0 0.0
      %1058 = vmatpush1.msra.mxu0 0.0
      %1059 = vmatprep.subr.mxu0 0.0
      %1060 = vmatpush1.msra.mxu0 %v315
      %1061 = vmatprep.subr.mxu0 0.0
      %1062 = vmatpush2.msra.mxu0 0.0
      %1063 = vmatprep.subr.mxu0 0.0
      %1064 = vmatpush2.msra.mxu0 0.0
      %1065 = vmatprep.subr.mxu0 0.0
      %1066 = vmatpush2.msra.mxu0 0.0
      %1067 = vmatprep.subr.mxu0 0.0
      %1068 = vmatpush2.msra.mxu0 0.0
      %1069 = vmatprep.subr.mxu0 0.0
      %1070 = vmatpush2.msra.mxu0 0.0
      %1071 = vmatprep.subr.mxu0 0.0
      %1072 = vmatpush2.msra.mxu0 0.0
      %1073 = vmatprep.subr.mxu0 0.0
      %1074 = vmatpush2.msra.mxu0 0.0
      %1075 = vmatprep.subr.mxu0 0.0
      %1076 = vmatpush2.msra.mxu0 0.0
      %1077 = vmatprep.subr.mxu0 0.0
      %1078 = vmatpush2.msra.mxu0 0.0
      %1079 = vmatprep.subr.mxu0 0.0
      %1080 = vmatpush2.msra.mxu0 0.0
      %1081 = vmatprep.subr.mxu0 0.0
      %1082 = vmatpush2.msra.mxu0 0.0
      %1083 = vmatprep.subr.mxu0 0.0
      %1084 = vmatpush2.msra.mxu0 0.0
      %1085 = vmatprep.subr.mxu0 0.0
      %1086 = vmatpush2.msra.mxu0 0.0
      %1087 = vmatprep.subr.mxu0 0.0
      %1088 = vmatpush2.msra.mxu0 0.0
      %1089 = vmatprep.subr.mxu0 0.0
      %1090 = vmatpush2.msra.mxu0 0.0
      %1091 = vmatprep.subr.mxu0 0.0
      %1092 = vmatpush2.msra.mxu0 0.0
      %1093 = vmatprep.mubr.f32.mxu0 0.0
      %1094 = vmatmul.mubr.f32.gmra.mxu0 %v773
      %v1095 = vpop.f32.mrf.mxu0
      %v1096 = vadd.f32 0.0, %v1095
      %v1097 = vpop.f32.mrf.mxu0
      %1098 = vmatprep.mubr.f32.mxu0 0.0
      %1099 = vmatmul.mubr.f32.gmra.mxu0 %v775
      %v1100 = vpop.f32.mrf.mxu0
      %v1101 = vadd.f32 0.0, %v1100
      %v1102 = vpop.f32.mrf.mxu0
      %1103 = vmatprep.mubr.f32.mxu0 0.0
      %1104 = vmatmul.mubr.f32.gmra.mxu0 %v777
      %v1105 = vpop.f32.mrf.mxu0
      %v1106 = vadd.f32 0.0, %v1105
      %v1107 = vpop.f32.mrf.mxu0
      %1108 = vmatprep.mubr.f32.mxu0 0.0
      %1109 = vmatmul.mubr.f32.gmra.mxu0 %v779
      %v1110 = vpop.f32.mrf.mxu0
      %v1111 = vadd.f32 0.0, %v1110
      %v1112 = vpop.f32.mrf.mxu0
      %1113 = vmatprep.mubr.f32.mxu0 0.0
      %1114 = vmatmul.mubr.f32.gmra.mxu0 %v781
      %v1115 = vpop.f32.mrf.mxu0
      %v1116 = vadd.f32 0.0, %v1115
      %v1117 = vpop.f32.mrf.mxu0
      %1118 = vmatprep.mubr.f32.mxu0 0.0
      %1119 = vmatmul.mubr.f32.gmra.mxu0 %v783
      %v1120 = vpop.f32.mrf.mxu0
      %v1121 = vadd.f32 0.0, %v1120
      %v1122 = vpop.f32.mrf.mxu0
      %1123 = vmatprep.mubr.f32.mxu0 0.0
      %1124 = vmatmul.mubr.f32.gmra.mxu0 %v785
      %v1125 = vpop.f32.mrf.mxu0
      %v1126 = vadd.f32 0.0, %v1125
      %v1127 = vpop.f32.mrf.mxu0
      %1128 = vmatprep.mubr.f32.mxu0 0.0
      %1129 = vmatmul.mubr.f32.gmra.mxu0 %v787
      %v1130 = vpop.f32.mrf.mxu0
      %v1131 = vadd.f32 0.0, %v1130
      %v1132 = vpop.f32.mrf.mxu0
      %1133 = vmatprep.mubr.f32.mxu0 0.0
      %1134 = vmatmul.mubr.f32.gmra.mxu0 %v789
      %v1135 = vpop.f32.mrf.mxu0
      %v1136 = vadd.f32 0.0, %v1135
      %v1137 = vpop.f32.mrf.mxu0
      %1138 = vmatprep.mubr.f32.mxu0 0.0
      %1139 = vmatmul.mubr.f32.gmra.mxu0 %v791
      %v1140 = vpop.f32.mrf.mxu0
      %v1141 = vadd.f32 0.0, %v1140
      %v1142 = vpop.f32.mrf.mxu0
      %1143 = vmatprep.mubr.f32.mxu0 0.0
      %1144 = vmatmul.mubr.f32.gmra.mxu0 %v793
      %v1145 = vpop.f32.mrf.mxu0
      %v1146 = vadd.f32 0.0, %v1145
      %v1147 = vpop.f32.mrf.mxu0
      %1148 = vmatprep.mubr.f32.mxu0 0.0
      %1149 = vmatmul.mubr.f32.gmra.mxu0 %v795
      %v1150 = vpop.f32.mrf.mxu0
      %v1151 = vadd.f32 0.0, %v1150
      %v1152 = vpop.f32.mrf.mxu0
      %1153 = vmatprep.mubr.f32.mxu0 0.0
      %1154 = vmatmul.mubr.f32.gmra.mxu0 %v797
      %v1155 = vpop.f32.mrf.mxu0
      %v1156 = vadd.f32 0.0, %v1155
      %v1157 = vpop.f32.mrf.mxu0
      %1158 = vmatprep.mubr.f32.mxu0 0.0
      %1159 = vmatmul.mubr.f32.gmra.mxu0 %v799
      %v1160 = vpop.f32.mrf.mxu0
      %v1161 = vadd.f32 0.0, %v1160
      %v1162 = vpop.f32.mrf.mxu0
      %1163 = vmatprep.mubr.f32.mxu0 0.0
      %1164 = vmatmul.mubr.f32.gmra.mxu0 %v801
      %v1165 = vpop.f32.mrf.mxu0
      %v1166 = vadd.f32 0.0, %v1165
      %v1167 = vpop.f32.mrf.mxu0
      %1168 = vmatprep.mubr.f32.mxu0 0.0
      %1169 = vmatmul.mubr.f32.gmra.mxu0 %v803
      %v1170 = vpop.f32.mrf.mxu0
      %v1171 = vadd.f32 0.0, %v1170
      %v1172 = vpop.f32.mrf.mxu0
      %1173 = vmatprep.mubr.f32.mxu0 0.0
      %1174 = vmatmul.mubr.f32.gmra.mxu0 %v805
      %v1175 = vpop.f32.mrf.mxu0
      %v1176 = vadd.f32 0.0, %v1175
      %v1177 = vpop.f32.mrf.mxu0
      %1178 = vmatprep.mubr.f32.mxu0 0.0
      %1179 = vmatmul.mubr.f32.gmra.mxu0 %v807
      %v1180 = vpop.f32.mrf.mxu0
      %v1181 = vadd.f32 0.0, %v1180
      %v1182 = vpop.f32.mrf.mxu0
      %1183 = vmatprep.mubr.f32.mxu0 0.0
      %1184 = vmatmul.mubr.f32.gmra.mxu0 %v809
      %v1185 = vpop.f32.mrf.mxu0
      %v1186 = vadd.f32 0.0, %v1185
      %v1187 = vpop.f32.mrf.mxu0
      %1188 = vmatprep.mubr.f32.mxu0 0.0
      %1189 = vmatmul.mubr.f32.gmra.mxu0 %v811
      %v1190 = vpop.f32.mrf.mxu0
      %v1191 = vadd.f32 0.0, %v1190
      %v1192 = vpop.f32.mrf.mxu0
      %1193 = vmatprep.mubr.f32.mxu0 0.0
      %1194 = vmatmul.mubr.f32.gmra.mxu0 %v813
      %v1195 = vpop.f32.mrf.mxu0
      %v1196 = vadd.f32 0.0, %v1195
      %v1197 = vpop.f32.mrf.mxu0
      %1198 = vmatprep.mubr.f32.mxu0 0.0
      %1199 = vmatmul.mubr.f32.gmra.mxu0 %v815
      %v1200 = vpop.f32.mrf.mxu0
      %v1201 = vadd.f32 0.0, %v1200
      %v1202 = vpop.f32.mrf.mxu0
      %1203 = vmatprep.mubr.f32.mxu0 0.0
      %1204 = vmatmul.mubr.f32.gmra.mxu0 %v817
      %v1205 = vpop.f32.mrf.mxu0
      %v1206 = vadd.f32 0.0, %v1205
      %v1207 = vpop.f32.mrf.mxu0
      %1208 = vmatprep.mubr.f32.mxu0 0.0
      %1209 = vmatmul.mubr.f32.gmra.mxu0 %v819
      %v1210 = vpop.f32.mrf.mxu0
      %v1211 = vadd.f32 0.0, %v1210
      %v1212 = vpop.f32.mrf.mxu0
      %1213 = vmatprep.mubr.f32.mxu0 0.0
      %1214 = vmatmul.mubr.f32.gmra.mxu0 %v821
      %v1215 = vpop.f32.mrf.mxu0
      %v1216 = vadd.f32 0.0, %v1215
      %v1217 = vpop.f32.mrf.mxu0
      %1218 = vmatprep.mubr.f32.mxu0 0.0
      %1219 = vmatmul.mubr.f32.gmra.mxu0 %v823
      %v1220 = vpop.f32.mrf.mxu0
      %v1221 = vadd.f32 0.0, %v1220
      %v1222 = vpop.f32.mrf.mxu0
      %1223 = vmatprep.mubr.f32.mxu0 0.0
      %1224 = vmatmul.mubr.f32.gmra.mxu0 %v825
      %v1225 = vpop.f32.mrf.mxu0
      %v1226 = vadd.f32 0.0, %v1225
      %v1227 = vpop.f32.mrf.mxu0
      %1228 = vmatprep.mubr.f32.mxu0 0.0
      %1229 = vmatmul.mubr.f32.gmra.mxu0 %v827
      %v1230 = vpop.f32.mrf.mxu0
      %v1231 = vadd.f32 0.0, %v1230
      %v1232 = vpop.f32.mrf.mxu0
      %1233 = vmatprep.mubr.f32.mxu0 0.0
      %1234 = vmatmul.mubr.f32.gmra.mxu0 %v829
      %v1235 = vpop.f32.mrf.mxu0
      %v1236 = vadd.f32 0.0, %v1235
      %v1237 = vpop.f32.mrf.mxu0
      %1238 = vmatprep.mubr.f32.mxu0 0.0
      %1239 = vmatmul.mubr.f32.gmra.mxu0 %v831
      %v1240 = vpop.f32.mrf.mxu0
      %v1241 = vadd.f32 0.0, %v1240
      %v1242 = vpop.f32.mrf.mxu0
      %1243 = vmatprep.mubr.f32.mxu0 0.0
      %1244 = vmatmul.mubr.f32.gmra.mxu0 %v833
      %v1245 = vpop.f32.mrf.mxu0
      %v1246 = vadd.f32 0.0, %v1245
      %v1247 = vpop.f32.mrf.mxu0
      %1248 = vmatprep.mubr.f32.mxu0 0.0
      %1249 = vmatmul.mubr.f32.gmra.mxu0 %v835
      %v1250 = vpop.f32.mrf.mxu0
      %v1251 = vadd.f32 0.0, %v1250
      %v1252 = vpop.f32.mrf.mxu0
      %1253 = vmatprep.mubr.f32.mxu0 0.0
      %1254 = vmatmul.mubr.f32.gmra.mxu0 %v837
      %v1255 = vpop.f32.mrf.mxu0
      %v1256 = vadd.f32 0.0, %v1255
      %v1257 = vpop.f32.mrf.mxu0
      %1258 = vmatprep.mubr.f32.mxu0 0.0
      %1259 = vmatmul.mubr.f32.gmra.mxu0 %v839
      %v1260 = vpop.f32.mrf.mxu0
      %v1261 = vadd.f32 0.0, %v1260
      %v1262 = vpop.f32.mrf.mxu0
      %1263 = vmatprep.mubr.f32.mxu0 0.0
      %1264 = vmatmul.mubr.f32.gmra.mxu0 %v841
      %v1265 = vpop.f32.mrf.mxu0
      %v1266 = vadd.f32 0.0, %v1265
      %v1267 = vpop.f32.mrf.mxu0
      %1268 = vmatprep.mubr.f32.mxu0 0.0
      %1269 = vmatmul.mubr.f32.gmra.mxu0 %v843
      %v1270 = vpop.f32.mrf.mxu0
      %v1271 = vadd.f32 0.0, %v1270
      %v1272 = vpop.f32.mrf.mxu0
      %1273 = vmatprep.mubr.f32.mxu0 0.0
      %1274 = vmatmul.mubr.f32.gmra.mxu0 %v845
      %v1275 = vpop.f32.mrf.mxu0
      %v1276 = vadd.f32 0.0, %v1275
      %v1277 = vpop.f32.mrf.mxu0
      %1278 = vmatprep.mubr.f32.mxu0 0.0
      %1279 = vmatmul.mubr.f32.gmra.mxu0 %v847
      %v1280 = vpop.f32.mrf.mxu0
      %v1281 = vadd.f32 0.0, %v1280
      %v1282 = vpop.f32.mrf.mxu0
      %1283 = vmatprep.mubr.f32.mxu0 0.0
      %1284 = vmatmul.mubr.f32.gmra.mxu0 %v849
      %v1285 = vpop.f32.mrf.mxu0
      %v1286 = vadd.f32 0.0, %v1285
      %v1287 = vpop.f32.mrf.mxu0
      %1288 = vmatprep.mubr.f32.mxu0 0.0
      %1289 = vmatmul.mubr.f32.gmra.mxu0 %v851
      %v1290 = vpop.f32.mrf.mxu0
      %v1291 = vadd.f32 0.0, %v1290
      %v1292 = vpop.f32.mrf.mxu0
      %1293 = vmatprep.mubr.f32.mxu0 0.0
      %1294 = vmatmul.mubr.f32.gmra.mxu0 %v853
      %v1295 = vpop.f32.mrf.mxu0
      %v1296 = vadd.f32 0.0, %v1295
      %v1297 = vpop.f32.mrf.mxu0
      %1298 = vmatprep.mubr.f32.mxu0 0.0
      %1299 = vmatmul.mubr.f32.gmra.mxu0 %v855
      %v1300 = vpop.f32.mrf.mxu0
      %v1301 = vadd.f32 0.0, %v1300
      %v1302 = vpop.f32.mrf.mxu0
      %1303 = vmatprep.mubr.f32.mxu0 0.0
      %1304 = vmatmul.mubr.f32.gmra.mxu0 %v857
      %v1305 = vpop.f32.mrf.mxu0
      %v1306 = vadd.f32 0.0, %v1305
      %v1307 = vpop.f32.mrf.mxu0
      %1308 = vmatprep.mubr.f32.mxu0 0.0
      %1309 = vmatmul.mubr.f32.gmra.mxu0 %v859
      %v1310 = vpop.f32.mrf.mxu0
      %v1311 = vadd.f32 0.0, %v1310
      %v1312 = vpop.f32.mrf.mxu0
      %1313 = vmatprep.mubr.f32.mxu0 0.0
      %1314 = vmatmul.mubr.f32.gmra.mxu0 %v861
      %v1315 = vpop.f32.mrf.mxu0
      %v1316 = vadd.f32 0.0, %v1315
      %v1317 = vpop.f32.mrf.mxu0
      %1318 = vmatprep.mubr.f32.mxu0 0.0
      %1319 = vmatmul.mubr.f32.gmra.mxu0 %v863
      %v1320 = vpop.f32.mrf.mxu0
      %v1321 = vadd.f32 0.0, %v1320
      %v1322 = vpop.f32.mrf.mxu0
      %1323 = vmatprep.mubr.f32.mxu0 0.0
      %1324 = vmatmul.mubr.f32.gmra.mxu0 %v865
      %v1325 = vpop.f32.mrf.mxu0
      %v1326 = vadd.f32 0.0, %v1325
      %v1327 = vpop.f32.mrf.mxu0
      %1328 = vmatprep.mubr.f32.mxu0 0.0
      %1329 = vmatmul.mubr.f32.gmra.mxu0 %v867
      %v1330 = vpop.f32.mrf.mxu0
      %v1331 = vadd.f32 0.0, %v1330
      %v1332 = vpop.f32.mrf.mxu0
      %1333 = vmatprep.mubr.f32.mxu0 0.0
      %1334 = vmatmul.mubr.f32.gmra.mxu0 %v869
      %v1335 = vpop.f32.mrf.mxu0
      %v1336 = vadd.f32 0.0, %v1335
      %v1337 = vpop.f32.mrf.mxu0
      %1338 = vmatprep.mubr.f32.mxu0 0.0
      %1339 = vmatmul.mubr.f32.gmra.mxu0 %v871
      %v1340 = vpop.f32.mrf.mxu0
      %v1341 = vadd.f32 0.0, %v1340
      %v1342 = vpop.f32.mrf.mxu0
      %1343 = vmatprep.mubr.f32.mxu0 0.0
      %1344 = vmatmul.mubr.f32.gmra.mxu0 %v873
      %v1345 = vpop.f32.mrf.mxu0
      %v1346 = vadd.f32 0.0, %v1345
      %v1347 = vpop.f32.mrf.mxu0
      %1348 = vmatprep.mubr.f32.mxu0 0.0
      %1349 = vmatmul.mubr.f32.gmra.mxu0 %v875
      %v1350 = vpop.f32.mrf.mxu0
      %v1351 = vadd.f32 0.0, %v1350
      %v1352 = vpop.f32.mrf.mxu0
      %1353 = vmatprep.mubr.f32.mxu0 0.0
      %1354 = vmatmul.mubr.f32.gmra.mxu0 %v877
      %v1355 = vpop.f32.mrf.mxu0
      %v1356 = vadd.f32 0.0, %v1355
      %v1357 = vpop.f32.mrf.mxu0
      %1358 = vmatprep.mubr.f32.mxu0 0.0
      %1359 = vmatmul.mubr.f32.gmra.mxu0 %v879
      %v1360 = vpop.f32.mrf.mxu0
      %v1361 = vadd.f32 0.0, %v1360
      %v1362 = vpop.f32.mrf.mxu0
      %1363 = vmatprep.mubr.f32.mxu0 0.0
      %1364 = vmatmul.mubr.f32.gmra.mxu0 %v881
      %v1365 = vpop.f32.mrf.mxu0
      %v1366 = vadd.f32 0.0, %v1365
      %v1367 = vpop.f32.mrf.mxu0
      %1368 = vmatprep.mubr.f32.mxu0 0.0
      %1369 = vmatmul.mubr.f32.gmra.mxu0 %v883
      %v1370 = vpop.f32.mrf.mxu0
      %v1371 = vadd.f32 0.0, %v1370
      %v1372 = vpop.f32.mrf.mxu0
      %1373 = vmatprep.mubr.f32.mxu0 0.0
      %1374 = vmatmul.mubr.f32.gmra.mxu0 %v885
      %v1375 = vpop.f32.mrf.mxu0
      %v1376 = vadd.f32 0.0, %v1375
      %v1377 = vpop.f32.mrf.mxu0
      %1378 = vmatprep.mubr.f32.mxu0 0.0
      %1379 = vmatmul.mubr.f32.gmra.mxu0 %v887
      %v1380 = vpop.f32.mrf.mxu0
      %v1381 = vadd.f32 0.0, %v1380
      %v1382 = vpop.f32.mrf.mxu0
      %1383 = vmatprep.mubr.f32.mxu0 0.0
      %1384 = vmatmul.mubr.f32.gmra.mxu0 %v889
      %v1385 = vpop.f32.mrf.mxu0
      %v1386 = vadd.f32 0.0, %v1385
      %v1387 = vpop.f32.mrf.mxu0
      %1388 = vmatprep.mubr.f32.mxu0 0.0
      %1389 = vmatmul.mubr.f32.gmra.mxu0 %v891
      %v1390 = vpop.f32.mrf.mxu0
      %v1391 = vadd.f32 0.0, %v1390
      %v1392 = vpop.f32.mrf.mxu0
      %1393 = vmatprep.mubr.f32.mxu0 0.0
      %1394 = vmatmul.mubr.f32.gmra.mxu0 %v893
      %v1395 = vpop.f32.mrf.mxu0
      %v1396 = vadd.f32 0.0, %v1395
      %v1397 = vpop.f32.mrf.mxu0
      %1398 = vmatprep.mubr.f32.mxu0 0.0
      %1399 = vmatmul.mubr.f32.gmra.mxu0 %v895
      %v1400 = vpop.f32.mrf.mxu0
      %v1401 = vadd.f32 0.0, %v1400
      %v1402 = vpop.f32.mrf.mxu0
      %1403 = vmatprep.mubr.f32.mxu0 0.0
      %1404 = vmatmul.mubr.f32.gmra.mxu0 %v897
      %v1405 = vpop.f32.mrf.mxu0
      %v1406 = vadd.f32 0.0, %v1405
      %v1407 = vpop.f32.mrf.mxu0
      %1408 = vmatprep.mubr.f32.mxu0 0.0
      %1409 = vmatmul.mubr.f32.gmra.mxu0 %v899
      %v1410 = vpop.f32.mrf.mxu0
      %v1411 = vadd.f32 0.0, %v1410
      %v1412 = vpop.f32.mrf.mxu0
      %1413 = vmatprep.mubr.f32.mxu0 0.0
      %1414 = vmatmul.mubr.f32.gmra.mxu0 %v901
      %v1415 = vpop.f32.mrf.mxu0
      %v1416 = vadd.f32 0.0, %v1415
      %v1417 = vpop.f32.mrf.mxu0
      %1418 = vmatprep.mubr.f32.mxu0 0.0
      %1419 = vmatmul.mubr.f32.gmra.mxu0 %v903
      %v1420 = vpop.f32.mrf.mxu0
      %v1421 = vadd.f32 0.0, %v1420
      %v1422 = vpop.f32.mrf.mxu0
      %1423 = vmatprep.mubr.f32.mxu0 0.0
      %1424 = vmatmul.mubr.f32.gmra.mxu0 %v905
      %v1425 = vpop.f32.mrf.mxu0
      %v1426 = vadd.f32 0.0, %v1425
      %v1427 = vpop.f32.mrf.mxu0
      %1428 = vmatprep.mubr.f32.mxu0 0.0
      %1429 = vmatmul.mubr.f32.gmra.mxu0 %v907
      %v1430 = vpop.f32.mrf.mxu0
      %v1431 = vadd.f32 0.0, %v1430
      %v1432 = vpop.f32.mrf.mxu0
      %1433 = vmatprep.mubr.f32.mxu0 0.0
      %1434 = vmatmul.mubr.f32.gmra.mxu0 %v909
      %v1435 = vpop.f32.mrf.mxu0
      %v1436 = vadd.f32 0.0, %v1435
      %v1437 = vpop.f32.mrf.mxu0
      %1438 = vmatprep.mubr.f32.mxu0 0.0
      %1439 = vmatmul.mubr.f32.gmra.mxu0 %v911
      %v1440 = vpop.f32.mrf.mxu0
      %v1441 = vadd.f32 0.0, %v1440
      %v1442 = vpop.f32.mrf.mxu0
      %1443 = vmatprep.mubr.f32.mxu0 0.0
      %1444 = vmatmul.mubr.f32.gmra.mxu0 %v913
      %v1445 = vpop.f32.mrf.mxu0
      %v1446 = vadd.f32 0.0, %v1445
      %v1447 = vpop.f32.mrf.mxu0
      %1448 = vmatprep.mubr.f32.mxu0 0.0
      %1449 = vmatmul.mubr.f32.gmra.mxu0 %v915
      %v1450 = vpop.f32.mrf.mxu0
      %v1451 = vadd.f32 0.0, %v1450
      %v1452 = vpop.f32.mrf.mxu0
      %1453 = vmatprep.mubr.f32.mxu0 0.0
      %1454 = vmatmul.mubr.f32.gmra.mxu0 %v917
      %v1455 = vpop.f32.mrf.mxu0
      %v1456 = vadd.f32 0.0, %v1455
      %v1457 = vpop.f32.mrf.mxu0
      %1458 = vmatprep.mubr.f32.mxu0 0.0
      %1459 = vmatmul.mubr.f32.gmra.mxu0 %v919
      %v1460 = vpop.f32.mrf.mxu0
      %v1461 = vadd.f32 0.0, %v1460
      %v1462 = vpop.f32.mrf.mxu0
      %1463 = vmatprep.mubr.f32.mxu0 0.0
      %1464 = vmatmul.mubr.f32.gmra.mxu0 %v921
      %v1465 = vpop.f32.mrf.mxu0
      %v1466 = vadd.f32 0.0, %v1465
      %v1467 = vpop.f32.mrf.mxu0
      %1468 = vmatprep.mubr.f32.mxu0 0.0
      %1469 = vmatmul.mubr.f32.gmra.mxu0 %v923
      %v1470 = vpop.f32.mrf.mxu0
      %v1471 = vadd.f32 0.0, %v1470
      %v1472 = vpop.f32.mrf.mxu0
      %1473 = vmatprep.mubr.f32.mxu0 0.0
      %1474 = vmatmul.mubr.f32.gmra.mxu0 %v925
      %v1475 = vpop.f32.mrf.mxu0
      %v1476 = vadd.f32 0.0, %v1475
      %v1477 = vpop.f32.mrf.mxu0
      %1478 = vmatprep.mubr.f32.mxu0 0.0
      %1479 = vmatmul.mubr.f32.gmra.mxu0 %v927
      %v1480 = vpop.f32.mrf.mxu0
      %v1481 = vadd.f32 0.0, %v1480
      %v1482 = vpop.f32.mrf.mxu0
      %1483 = vmatprep.mubr.f32.mxu0 0.0
      %1484 = vmatmul.mubr.f32.gmra.mxu0 %v929
      %v1485 = vpop.f32.mrf.mxu0
      %v1486 = vadd.f32 0.0, %v1485
      %v1487 = vpop.f32.mrf.mxu0
      %1488 = vmatprep.mubr.f32.mxu0 0.0
      %1489 = vmatmul.mubr.f32.gmra.mxu0 %v931
      %v1490 = vpop.f32.mrf.mxu0
      %v1491 = vadd.f32 0.0, %v1490
      %v1492 = vpop.f32.mrf.mxu0
      %1493 = vmatprep.mubr.f32.mxu0 0.0
      %1494 = vmatmul.mubr.f32.gmra.mxu0 %v933
      %v1495 = vpop.f32.mrf.mxu0
      %v1496 = vadd.f32 0.0, %v1495
      %v1497 = vpop.f32.mrf.mxu0
      %1498 = vmatprep.mubr.f32.mxu0 0.0
      %1499 = vmatmul.mubr.f32.gmra.mxu0 %v935
      %v1500 = vpop.f32.mrf.mxu0
      %v1501 = vadd.f32 0.0, %v1500
      %v1502 = vpop.f32.mrf.mxu0
      %1503 = vmatprep.mubr.f32.mxu0 0.0
      %1504 = vmatmul.mubr.f32.gmra.mxu0 %v937
      %v1505 = vpop.f32.mrf.mxu0
      %v1506 = vadd.f32 0.0, %v1505
      %v1507 = vpop.f32.mrf.mxu0
      %1508 = vmatprep.mubr.f32.mxu0 0.0
      %1509 = vmatmul.mubr.f32.gmra.mxu0 %v939
      %v1510 = vpop.f32.mrf.mxu0
      %v1511 = vadd.f32 0.0, %v1510
      %v1512 = vpop.f32.mrf.mxu0
      %1513 = vmatprep.mubr.f32.mxu0 0.0
      %1514 = vmatmul.mubr.f32.gmra.mxu0 %v941
      %v1515 = vpop.f32.mrf.mxu0
      %v1516 = vadd.f32 0.0, %v1515
      %v1517 = vpop.f32.mrf.mxu0
      %1518 = vmatprep.mubr.f32.mxu0 0.0
      %1519 = vmatmul.mubr.f32.gmra.mxu0 %v943
      %v1520 = vpop.f32.mrf.mxu0
      %v1521 = vadd.f32 0.0, %v1520
      %v1522 = vpop.f32.mrf.mxu0
      %1523 = vmatprep.mubr.f32.mxu0 0.0
      %1524 = vmatmul.mubr.f32.gmra.mxu0 %v945
      %v1525 = vpop.f32.mrf.mxu0
      %v1526 = vadd.f32 0.0, %v1525
      %v1527 = vpop.f32.mrf.mxu0
      %1528 = vmatprep.mubr.f32.mxu0 0.0
      %1529 = vmatmul.mubr.f32.gmra.mxu0 %v947
      %v1530 = vpop.f32.mrf.mxu0
      %v1531 = vadd.f32 0.0, %v1530
      %v1532 = vpop.f32.mrf.mxu0
      %1533 = vmatprep.mubr.f32.mxu0 0.0
      %1534 = vmatmul.mubr.f32.gmra.mxu0 %v949
      %v1535 = vpop.f32.mrf.mxu0
      %v1536 = vadd.f32 0.0, %v1535
      %v1537 = vpop.f32.mrf.mxu0
      %1538 = vmatprep.mubr.f32.mxu0 0.0
      %1539 = vmatmul.mubr.f32.gmra.mxu0 %v951
      %v1540 = vpop.f32.mrf.mxu0
      %v1541 = vadd.f32 0.0, %v1540
      %v1542 = vpop.f32.mrf.mxu0
      %1543 = vmatprep.mubr.f32.mxu0 0.0
      %1544 = vmatmul.mubr.f32.gmra.mxu0 %v953
      %v1545 = vpop.f32.mrf.mxu0
      %v1546 = vadd.f32 0.0, %v1545
      %v1547 = vpop.f32.mrf.mxu0
      %1548 = vmatprep.mubr.f32.mxu0 0.0
      %1549 = vmatmul.mubr.f32.gmra.mxu0 %v955
      %v1550 = vpop.f32.mrf.mxu0
      %v1551 = vadd.f32 0.0, %v1550
      %v1552 = vpop.f32.mrf.mxu0
      %1553 = vmatprep.mubr.f32.mxu0 0.0
      %1554 = vmatmul.mubr.f32.gmra.mxu0 %v957
      %v1555 = vpop.f32.mrf.mxu0
      %v1556 = vadd.f32 0.0, %v1555
      %v1557 = vpop.f32.mrf.mxu0
      %1558 = vmatprep.mubr.f32.mxu0 0.0
      %1559 = vmatmul.mubr.f32.gmra.mxu0 %v959
      %v1560 = vpop.f32.mrf.mxu0
      %v1561 = vadd.f32 0.0, %v1560
      %v1562 = vpop.f32.mrf.mxu0
      %1563 = vmatprep.mubr.f32.mxu0 0.0
      %1564 = vmatmul.mubr.f32.gmra.mxu0 %v961
      %v1565 = vpop.f32.mrf.mxu0
      %v1566 = vadd.f32 0.0, %v1565
      %v1567 = vpop.f32.mrf.mxu0
      %1568 = vmatprep.mubr.f32.mxu0 0.0
      %1569 = vmatmul.mubr.f32.gmra.mxu0 %v963
      %v1570 = vpop.f32.mrf.mxu0
      %v1571 = vadd.f32 0.0, %v1570
      %v1572 = vpop.f32.mrf.mxu0
      %1573 = vmatprep.mubr.f32.mxu0 0.0
      %1574 = vmatmul.mubr.f32.gmra.mxu0 %v965
      %v1575 = vpop.f32.mrf.mxu0
      %v1576 = vadd.f32 0.0, %v1575
      %v1577 = vpop.f32.mrf.mxu0
      %1578 = vmatprep.mubr.f32.mxu0 0.0
      %1579 = vmatmul.mubr.f32.gmra.mxu0 %v967
      %v1580 = vpop.f32.mrf.mxu0
      %v1581 = vadd.f32 0.0, %v1580
      %v1582 = vpop.f32.mrf.mxu0
      %1583 = vmatprep.mubr.f32.mxu0 0.0
      %1584 = vmatmul.mubr.f32.gmra.mxu0 %v969
      %v1585 = vpop.f32.mrf.mxu0
      %v1586 = vadd.f32 0.0, %v1585
      %v1587 = vpop.f32.mrf.mxu0
      %1588 = vmatprep.mubr.f32.mxu0 0.0
      %1589 = vmatmul.mubr.f32.gmra.mxu0 %v971
      %v1590 = vpop.f32.mrf.mxu0
      %v1591 = vadd.f32 0.0, %v1590
      %v1592 = vpop.f32.mrf.mxu0
      %1593 = vmatprep.mubr.f32.mxu0 0.0
      %1594 = vmatmul.mubr.f32.gmra.mxu0 %v973
      %v1595 = vpop.f32.mrf.mxu0
      %v1596 = vadd.f32 0.0, %v1595
      %v1597 = vpop.f32.mrf.mxu0
      %1598 = vmatprep.mubr.f32.mxu0 0.0
      %1599 = vmatmul.mubr.f32.gmra.mxu0 %v975
      %v1600 = vpop.f32.mrf.mxu0
      %v1601 = vadd.f32 0.0, %v1600
      %v1602 = vpop.f32.mrf.mxu0
      %1603 = vmatprep.mubr.f32.mxu0 0.0
      %1604 = vmatmul.mubr.f32.gmra.mxu0 %v977
      %v1605 = vpop.f32.mrf.mxu0
      %v1606 = vadd.f32 0.0, %v1605
      %v1607 = vpop.f32.mrf.mxu0
      %1608 = vmatprep.mubr.f32.mxu0 0.0
      %1609 = vmatmul.mubr.f32.gmra.mxu0 %v979
      %v1610 = vpop.f32.mrf.mxu0
      %v1611 = vadd.f32 0.0, %v1610
      %v1612 = vpop.f32.mrf.mxu0
      %1613 = vmatprep.mubr.f32.mxu0 0.0
      %1614 = vmatmul.mubr.f32.gmra.mxu0 %v981
      %v1615 = vpop.f32.mrf.mxu0
      %v1616 = vadd.f32 0.0, %v1615
      %v1617 = vpop.f32.mrf.mxu0
      %1618 = vmatprep.mubr.f32.mxu0 0.0
      %1619 = vmatmul.mubr.f32.gmra.mxu0 %v983
      %v1620 = vpop.f32.mrf.mxu0
      %v1621 = vadd.f32 0.0, %v1620
      %v1622 = vpop.f32.mrf.mxu0
      %1623 = vmatprep.mubr.f32.mxu0 0.0
      %1624 = vmatmul.mubr.f32.gmra.mxu0 %v985
      %v1625 = vpop.f32.mrf.mxu0
      %v1626 = vadd.f32 0.0, %v1625
      %v1627 = vpop.f32.mrf.mxu0
      %1628 = vmatprep.mubr.f32.mxu0 0.0
      %1629 = vmatmul.mubr.f32.gmra.mxu0 %v987
      %v1630 = vpop.f32.mrf.mxu0
      %v1631 = vadd.f32 0.0, %v1630
      %v1632 = vpop.f32.mrf.mxu0
      %1633 = vmatprep.mubr.f32.mxu0 0.0
      %1634 = vmatmul.mubr.f32.gmra.mxu0 %v989
      %v1635 = vpop.f32.mrf.mxu0
      %v1636 = vadd.f32 0.0, %v1635
      %v1637 = vpop.f32.mrf.mxu0
      %1638 = vmatprep.mubr.f32.mxu0 0.0
      %1639 = vmatmul.mubr.f32.gmra.mxu0 %v991
      %v1640 = vpop.f32.mrf.mxu0
      %v1641 = vadd.f32 0.0, %v1640
      %v1642 = vpop.f32.mrf.mxu0
      %1643 = vmatprep.mubr.f32.mxu0 0.0
      %1644 = vmatmul.mubr.f32.gmra.mxu0 %v993
      %v1645 = vpop.f32.mrf.mxu0
      %v1646 = vadd.f32 0.0, %v1645
      %v1647 = vpop.f32.mrf.mxu0
      %1648 = vmatprep.mubr.f32.mxu0 0.0
      %1649 = vmatmul.mubr.f32.gmra.mxu0 %v995
      %v1650 = vpop.f32.mrf.mxu0
      %v1651 = vadd.f32 0.0, %v1650
      %v1652 = vpop.f32.mrf.mxu0
      %1653 = vmatprep.mubr.f32.mxu0 0.0
      %1654 = vmatmul.mubr.f32.gmra.mxu0 %v997
      %v1655 = vpop.f32.mrf.mxu0
      %v1656 = vadd.f32 0.0, %v1655
      %v1657 = vpop.f32.mrf.mxu0
      %1658 = vmatprep.mubr.f32.mxu0 0.0
      %1659 = vmatmul.mubr.f32.gmra.mxu0 %v999
      %v1660 = vpop.f32.mrf.mxu0
      %v1661 = vadd.f32 0.0, %v1660
      %v1662 = vpop.f32.mrf.mxu0
      %1663 = vmatprep.mubr.f32.mxu0 0.0
      %1664 = vmatmul.mubr.f32.gmra.mxu0 %v1001
      %v1665 = vpop.f32.mrf.mxu0
      %v1666 = vadd.f32 0.0, %v1665
      %v1667 = vpop.f32.mrf.mxu0
      %1668 = vmatprep.mubr.f32.mxu0 0.0
      %1669 = vmatmul.mubr.f32.gmra.mxu0 %v1003
      %v1670 = vpop.f32.mrf.mxu0
      %v1671 = vadd.f32 0.0, %v1670
      %v1672 = vpop.f32.mrf.mxu0
      %1673 = vmatprep.mubr.f32.mxu0 0.0
      %1674 = vmatmul.mubr.f32.gmra.mxu0 %v1005
      %v1675 = vpop.f32.mrf.mxu0
      %v1676 = vadd.f32 0.0, %v1675
      %v1677 = vpop.f32.mrf.mxu0
      %1678 = vmatprep.mubr.f32.mxu0 0.0
      %1679 = vmatmul.mubr.f32.gmra.mxu0 %v1007
      %v1680 = vpop.f32.mrf.mxu0
      %v1681 = vadd.f32 0.0, %v1680
      %v1682 = vpop.f32.mrf.mxu0
      %1683 = vmatprep.mubr.f32.mxu0 0.0
      %1684 = vmatmul.mubr.f32.gmra.mxu0 %v1009
      %v1685 = vpop.f32.mrf.mxu0
      %v1686 = vadd.f32 0.0, %v1685
      %v1687 = vpop.f32.mrf.mxu0
      %1688 = vmatprep.mubr.f32.mxu0 0.0
      %1689 = vmatmul.mubr.f32.gmra.mxu0 %v1011
      %v1690 = vpop.f32.mrf.mxu0
      %v1691 = vadd.f32 0.0, %v1690
      %v1692 = vpop.f32.mrf.mxu0
      %1693 = vmatprep.mubr.f32.mxu0 0.0
      %1694 = vmatmul.mubr.f32.gmra.mxu0 %v1013
      %v1695 = vpop.f32.mrf.mxu0
      %v1696 = vadd.f32 0.0, %v1695
      %v1697 = vpop.f32.mrf.mxu0
      %1698 = vmatprep.mubr.f32.mxu0 0.0
      %1699 = vmatmul.mubr.f32.gmra.mxu0 %v1015
      %v1700 = vpop.f32.mrf.mxu0
      %v1701 = vadd.f32 0.0, %v1700
      %v1702 = vpop.f32.mrf.mxu0
      %1703 = vmatprep.mubr.f32.mxu0 0.0
      %1704 = vmatmul.mubr.f32.gmra.mxu0 %v1017
      %v1705 = vpop.f32.mrf.mxu0
      %v1706 = vadd.f32 0.0, %v1705
      %v1707 = vpop.f32.mrf.mxu0
      %1708 = vmatprep.mubr.f32.mxu0 0.0
      %1709 = vmatmul.mubr.f32.gmra.mxu0 %v1019
      %v1710 = vpop.f32.mrf.mxu0
      %v1711 = vadd.f32 0.0, %v1710
      %v1712 = vpop.f32.mrf.mxu0
      %1713 = vmatprep.mubr.f32.mxu0 0.0
      %1714 = vmatmul.mubr.f32.gmra.mxu0 %v1021
      %v1715 = vpop.f32.mrf.mxu0
      %v1716 = vadd.f32 0.0, %v1715
      %v1717 = vpop.f32.mrf.mxu0
      %1718 = vmatprep.mubr.f32.mxu0 0.0
      %1719 = vmatmul.mubr.f32.gmra.mxu0 %v1023
      %v1720 = vpop.f32.mrf.mxu0
      %v1721 = vadd.f32 0.0, %v1720
      %v1722 = vpop.f32.mrf.mxu0
      %1723 = vmatprep.mubr.f32.mxu0 0.0
      %1724 = vmatmul.mubr.f32.gmra.mxu0 %v1025
      %v1725 = vpop.f32.mrf.mxu0
      %v1726 = vadd.f32 0.0, %v1725
      %v1727 = vpop.f32.mrf.mxu0
      %1728 = vmatprep.mubr.f32.mxu0 0.0
      %1729 = vmatmul.mubr.f32.gmra.mxu0 %v1027
      %v1730 = vpop.f32.mrf.mxu0
      %v1731 = vadd.f32 0.0, %v1730
      %v1732 = vpop.f32.mrf.mxu0
      %1733 = vdwg.mxu0
      %v1734 = vsel %vm772, %v144, 0
      %v1736 = vsel %vm772, %v145, 0
      %v1738 = vsel %vm772, %v146, 0
      %v1740 = vsel %vm772, %v147, 0
      %v1742 = vsel %vm772, %v149, 0
      %v1744 = vsel %vm772, %v150, 0
      %v1746 = vsel %vm772, %v151, 0
      %v1748 = vsel %vm772, %v152, 0
      %v1750 = vsel %vm772, %v154, 0
      %v1752 = vsel %vm772, %v155, 0
      %v1754 = vsel %vm772, %v156, 0
      %v1756 = vsel %vm772, %v157, 0
      %v1758 = vsel %vm772, %v159, 0
      %v1760 = vsel %vm772, %v160, 0
      %v1762 = vsel %vm772, %v161, 0
      %v1764 = vsel %vm772, %v162, 0
      %v1766 = vsel %vm772, %v164, 0
      %v1768 = vsel %vm772, %v165, 0
      %v1770 = vsel %vm772, %v166, 0
      %v1772 = vsel %vm772, %v167, 0
      %v1774 = vsel %vm772, %v169, 0
      %v1776 = vsel %vm772, %v170, 0
      %v1778 = vsel %vm772, %v171, 0
      %v1780 = vsel %vm772, %v172, 0
      %v1782 = vsel %vm772, %v174, 0
      %v1784 = vsel %vm772, %v175, 0
      %v1786 = vsel %vm772, %v176, 0
      %v1788 = vsel %vm772, %v177, 0
      %v1790 = vsel %vm772, %v179, 0
      %v1792 = vsel %vm772, %v180, 0
      %v1794 = vsel %vm772, %v181, 0
      %v1796 = vsel %vm772, %v182, 0
      %v1798 = vsel %vm772, %v184, 0
      %v1800 = vsel %vm772, %v185, 0
      %v1802 = vsel %vm772, %v186, 0
      %v1804 = vsel %vm772, %v187, 0
      %v1806 = vsel %vm772, %v189, 0
      %v1808 = vsel %vm772, %v190, 0
      %v1810 = vsel %vm772, %v191, 0
      %v1812 = vsel %vm772, %v192, 0
      %v1814 = vsel %vm772, %v194, 0
      %v1816 = vsel %vm772, %v195, 0
      %v1818 = vsel %vm772, %v196, 0
      %v1820 = vsel %vm772, %v197, 0
      %v1822 = vsel %vm772, %v199, 0
      %v1824 = vsel %vm772, %v200, 0
      %v1826 = vsel %vm772, %v201, 0
      %v1828 = vsel %vm772, %v202, 0
      %v1830 = vsel %vm772, %v204, 0
      %v1832 = vsel %vm772, %v205, 0
      %v1834 = vsel %vm772, %v206, 0
      %v1836 = vsel %vm772, %v207, 0
      %v1838 = vsel %vm772, %v209, 0
      %v1840 = vsel %vm772, %v210, 0
      %v1842 = vsel %vm772, %v211, 0
      %v1844 = vsel %vm772, %v212, 0
      %v1846 = vsel %vm772, %v214, 0
      %v1848 = vsel %vm772, %v215, 0
      %v1850 = vsel %vm772, %v216, 0
      %v1852 = vsel %vm772, %v217, 0
      %v1854 = vsel %vm772, %v219, 0
      %v1856 = vsel %vm772, %v220, 0
      %v1858 = vsel %vm772, %v221, 0
      %v1860 = vsel %vm772, %v222, 0
      %v1862 = vsel %vm772, %v224, 0
      %v1864 = vsel %vm772, %v225, 0
      %v1866 = vsel %vm772, %v226, 0
      %v1868 = vsel %vm772, %v227, 0
      %v1870 = vsel %vm772, %v229, 0
      %v1872 = vsel %vm772, %v230, 0
      %v1874 = vsel %vm772, %v231, 0
      %v1876 = vsel %vm772, %v232, 0
      %v1878 = vsel %vm772, %v234, 0
      %v1880 = vsel %vm772, %v235, 0
      %v1882 = vsel %vm772, %v236, 0
      %v1884 = vsel %vm772, %v237, 0
      %v1886 = vsel %vm772, %v239, 0
      %v1888 = vsel %vm772, %v240, 0
      %v1890 = vsel %vm772, %v241, 0
      %v1892 = vsel %vm772, %v242, 0
      %v1894 = vsel %vm772, %v244, 0
      %v1896 = vsel %vm772, %v245, 0
      %v1898 = vsel %vm772, %v246, 0
      %v1900 = vsel %vm772, %v247, 0
      %v1902 = vsel %vm772, %v249, 0
      %v1904 = vsel %vm772, %v250, 0
      %v1906 = vsel %vm772, %v251, 0
      %v1908 = vsel %vm772, %v252, 0
      %v1910 = vsel %vm772, %v254, 0
      %v1912 = vsel %vm772, %v255, 0
      %v1914 = vsel %vm772, %v256, 0
      %v1916 = vsel %vm772, %v257, 0
      %v1918 = vsel %vm772, %v259, 0
      %v1920 = vsel %vm772, %v260, 0
      %v1922 = vsel %vm772, %v261, 0
      %v1924 = vsel %vm772, %v262, 0
      %v1926 = vsel %vm772, %v264, 0
      %v1928 = vsel %vm772, %v265, 0
      %v1930 = vsel %vm772, %v266, 0
      %v1932 = vsel %vm772, %v267, 0
      %v1934 = vsel %vm772, %v269, 0
      %v1936 = vsel %vm772, %v270, 0
      %v1938 = vsel %vm772, %v271, 0
      %v1940 = vsel %vm772, %v272, 0
      %v1942 = vsel %vm772, %v274, 0
      %v1944 = vsel %vm772, %v275, 0
      %v1946 = vsel %vm772, %v276, 0
      %v1948 = vsel %vm772, %v277, 0
      %v1950 = vsel %vm772, %v279, 0
      %v1952 = vsel %vm772, %v280, 0
      %v1954 = vsel %vm772, %v281, 0
      %v1956 = vsel %vm772, %v282, 0
      %v1958 = vsel %vm772, %v284, 0
      %v1960 = vsel %vm772, %v285, 0
      %v1962 = vsel %vm772, %v286, 0
      %v1964 = vsel %vm772, %v287, 0
      %v1966 = vsel %vm772, %v289, 0
      %v1968 = vsel %vm772, %v290, 0
      %v1970 = vsel %vm772, %v291, 0
      %v1972 = vsel %vm772, %v292, 0
      %v1974 = vsel %vm772, %v294, 0
      %v1976 = vsel %vm772, %v295, 0
      %v1978 = vsel %vm772, %v296, 0
      %v1980 = vsel %vm772, %v297, 0
      %v1982 = vsel %vm772, %v299, 0
      %v1984 = vsel %vm772, %v300, 0
      %v1986 = vsel %vm772, %v301, 0
      %v1988 = vsel %vm772, %v302, 0
      %1990 = vmatprep.subr.mxu0 0.0
      %1991 = vmatpush1.msra.mxu0 0.0
      %1992 = vmatprep.subr.mxu0 0.0
      %1993 = vmatpush1.msra.mxu0 0.0
      %1994 = vmatprep.subr.mxu0 0.0
      %1995 = vmatpush1.msra.mxu0 0.0
      %1996 = vmatprep.subr.mxu0 0.0
      %1997 = vmatpush1.msra.mxu0 0.0
      %1998 = vmatprep.subr.mxu0 0.0
      %1999 = vmatpush1.msra.mxu0 0.0
      %2000 = vmatprep.subr.mxu0 0.0
      %2001 = vmatpush1.msra.mxu0 0.0
      %2002 = vmatprep.subr.mxu0 0.0
      %2003 = vmatpush1.msra.mxu0 0.0
      %2004 = vmatprep.subr.mxu0 0.0
      %2005 = vmatpush1.msra.mxu0 0.0
      %2006 = vmatprep.subr.mxu0 0.0
      %2007 = vmatpush1.msra.mxu0 0.0
      %2008 = vmatprep.subr.mxu0 0.0
      %2009 = vmatpush1.msra.mxu0 0.0
      %2010 = vmatprep.subr.mxu0 0.0
      %2011 = vmatpush1.msra.mxu0 0.0
      %2012 = vmatprep.subr.mxu0 0.0
      %2013 = vmatpush1.msra.mxu0 0.0
      %2014 = vmatprep.subr.mxu0 0.0
      %2015 = vmatpush1.msra.mxu0 0.0
      %2016 = vmatprep.subr.mxu0 0.0
      %2017 = vmatpush1.msra.mxu0 0.0
      %2018 = vmatprep.subr.mxu0 0.0
      %2019 = vmatpush1.msra.mxu0 0.0
      %2020 = vmatprep.subr.mxu0 0.0
      %2021 = vmatpush1.msra.mxu0 %v314
      %2022 = vmatprep.subr.mxu0 0.0
      %2023 = vmatpush2.msra.mxu0 0.0
      %2024 = vmatprep.subr.mxu0 0.0
      %2025 = vmatpush2.msra.mxu0 0.0
      %2026 = vmatprep.subr.mxu0 0.0
      %2027 = vmatpush2.msra.mxu0 0.0
      %2028 = vmatprep.subr.mxu0 0.0
      %2029 = vmatpush2.msra.mxu0 0.0
      %2030 = vmatprep.subr.mxu0 0.0
      %2031 = vmatpush2.msra.mxu0 0.0
      %2032 = vmatprep.subr.mxu0 0.0
      %2033 = vmatpush2.msra.mxu0 0.0
      %2034 = vmatprep.subr.mxu0 0.0
      %2035 = vmatpush2.msra.mxu0 0.0
      %2036 = vmatprep.subr.mxu0 0.0
      %2037 = vmatpush2.msra.mxu0 0.0
      %2038 = vmatprep.subr.mxu0 0.0
      %2039 = vmatpush2.msra.mxu0 0.0
      %2040 = vmatprep.subr.mxu0 0.0
      %2041 = vmatpush2.msra.mxu0 0.0
      %2042 = vmatprep.subr.mxu0 0.0
      %2043 = vmatpush2.msra.mxu0 0.0
      %2044 = vmatprep.subr.mxu0 0.0
      %2045 = vmatpush2.msra.mxu0 0.0
      %2046 = vmatprep.subr.mxu0 0.0
      %2047 = vmatpush2.msra.mxu0 0.0
      %2048 = vmatprep.subr.mxu0 0.0
      %2049 = vmatpush2.msra.mxu0 0.0
      %2050 = vmatprep.subr.mxu0 0.0
      %2051 = vmatpush2.msra.mxu0 0.0
      %2052 = vmatprep.subr.mxu0 0.0
      %2053 = vmatpush2.msra.mxu0 0.0
      %2054 = vmatprep.mubr.f32.mxu0 0.0
      %2055 = vmatmul.mubr.f32.gmra.mxu0 %v1734
      %v2056 = vpop.f32.mrf.mxu0
      %v2057 = vadd.f32 %v1096, %v2056
      %v2058 = vpop.f32.mrf.mxu0
      %2059 = vmatprep.mubr.f32.mxu0 0.0
      %2060 = vmatmul.mubr.f32.gmra.mxu0 %v1736
      %v2061 = vpop.f32.mrf.mxu0
      %v2062 = vadd.f32 %v1101, %v2061
      %v2063 = vpop.f32.mrf.mxu0
      %2064 = vmatprep.mubr.f32.mxu0 0.0
      %2065 = vmatmul.mubr.f32.gmra.mxu0 %v1738
      %v2066 = vpop.f32.mrf.mxu0
      %v2067 = vadd.f32 %v1106, %v2066
      %v2068 = vpop.f32.mrf.mxu0
      %2069 = vmatprep.mubr.f32.mxu0 0.0
      %2070 = vmatmul.mubr.f32.gmra.mxu0 %v1740
      %v2071 = vpop.f32.mrf.mxu0
      %v2072 = vadd.f32 %v1111, %v2071
      %v2073 = vpop.f32.mrf.mxu0
      %2074 = vmatprep.mubr.f32.mxu0 0.0
      %2075 = vmatmul.mubr.f32.gmra.mxu0 %v1742
      %v2076 = vpop.f32.mrf.mxu0
      %v2077 = vadd.f32 %v1116, %v2076
      %v2078 = vpop.f32.mrf.mxu0
      %2079 = vmatprep.mubr.f32.mxu0 0.0
      %2080 = vmatmul.mubr.f32.gmra.mxu0 %v1744
      %v2081 = vpop.f32.mrf.mxu0
      %v2082 = vadd.f32 %v1121, %v2081
      %v2083 = vpop.f32.mrf.mxu0
      %2084 = vmatprep.mubr.f32.mxu0 0.0
      %2085 = vmatmul.mubr.f32.gmra.mxu0 %v1746
      %v2086 = vpop.f32.mrf.mxu0
      %v2087 = vadd.f32 %v1126, %v2086
      %v2088 = vpop.f32.mrf.mxu0
      %2089 = vmatprep.mubr.f32.mxu0 0.0
      %2090 = vmatmul.mubr.f32.gmra.mxu0 %v1748
      %v2091 = vpop.f32.mrf.mxu0
      %v2092 = vadd.f32 %v1131, %v2091
      %v2093 = vpop.f32.mrf.mxu0
      %2094 = vmatprep.mubr.f32.mxu0 0.0
      %2095 = vmatmul.mubr.f32.gmra.mxu0 %v1750
      %v2096 = vpop.f32.mrf.mxu0
      %v2097 = vadd.f32 %v1136, %v2096
      %v2098 = vpop.f32.mrf.mxu0
      %2099 = vmatprep.mubr.f32.mxu0 0.0
      %2100 = vmatmul.mubr.f32.gmra.mxu0 %v1752
      %v2101 = vpop.f32.mrf.mxu0
      %v2102 = vadd.f32 %v1141, %v2101
      %v2103 = vpop.f32.mrf.mxu0
      %2104 = vmatprep.mubr.f32.mxu0 0.0
      %2105 = vmatmul.mubr.f32.gmra.mxu0 %v1754
      %v2106 = vpop.f32.mrf.mxu0
      %v2107 = vadd.f32 %v1146, %v2106
      %v2108 = vpop.f32.mrf.mxu0
      %2109 = vmatprep.mubr.f32.mxu0 0.0
      %2110 = vmatmul.mubr.f32.gmra.mxu0 %v1756
      %v2111 = vpop.f32.mrf.mxu0
      %v2112 = vadd.f32 %v1151, %v2111
      %v2113 = vpop.f32.mrf.mxu0
      %2114 = vmatprep.mubr.f32.mxu0 0.0
      %2115 = vmatmul.mubr.f32.gmra.mxu0 %v1758
      %v2116 = vpop.f32.mrf.mxu0
      %v2117 = vadd.f32 %v1156, %v2116
      %v2118 = vpop.f32.mrf.mxu0
      %2119 = vmatprep.mubr.f32.mxu0 0.0
      %2120 = vmatmul.mubr.f32.gmra.mxu0 %v1760
      %v2121 = vpop.f32.mrf.mxu0
      %v2122 = vadd.f32 %v1161, %v2121
      %v2123 = vpop.f32.mrf.mxu0
      %2124 = vmatprep.mubr.f32.mxu0 0.0
      %2125 = vmatmul.mubr.f32.gmra.mxu0 %v1762
      %v2126 = vpop.f32.mrf.mxu0
      %v2127 = vadd.f32 %v1166, %v2126
      %v2128 = vpop.f32.mrf.mxu0
      %2129 = vmatprep.mubr.f32.mxu0 0.0
      %2130 = vmatmul.mubr.f32.gmra.mxu0 %v1764
      %v2131 = vpop.f32.mrf.mxu0
      %v2132 = vadd.f32 %v1171, %v2131
      %v2133 = vpop.f32.mrf.mxu0
      %2134 = vmatprep.mubr.f32.mxu0 0.0
      %2135 = vmatmul.mubr.f32.gmra.mxu0 %v1766
      %v2136 = vpop.f32.mrf.mxu0
      %v2137 = vadd.f32 %v1176, %v2136
      %v2138 = vpop.f32.mrf.mxu0
      %2139 = vmatprep.mubr.f32.mxu0 0.0
      %2140 = vmatmul.mubr.f32.gmra.mxu0 %v1768
      %v2141 = vpop.f32.mrf.mxu0
      %v2142 = vadd.f32 %v1181, %v2141
      %v2143 = vpop.f32.mrf.mxu0
      %2144 = vmatprep.mubr.f32.mxu0 0.0
      %2145 = vmatmul.mubr.f32.gmra.mxu0 %v1770
      %v2146 = vpop.f32.mrf.mxu0
      %v2147 = vadd.f32 %v1186, %v2146
      %v2148 = vpop.f32.mrf.mxu0
      %2149 = vmatprep.mubr.f32.mxu0 0.0
      %2150 = vmatmul.mubr.f32.gmra.mxu0 %v1772
      %v2151 = vpop.f32.mrf.mxu0
      %v2152 = vadd.f32 %v1191, %v2151
      %v2153 = vpop.f32.mrf.mxu0
      %2154 = vmatprep.mubr.f32.mxu0 0.0
      %2155 = vmatmul.mubr.f32.gmra.mxu0 %v1774
      %v2156 = vpop.f32.mrf.mxu0
      %v2157 = vadd.f32 %v1196, %v2156
      %v2158 = vpop.f32.mrf.mxu0
      %2159 = vmatprep.mubr.f32.mxu0 0.0
      %2160 = vmatmul.mubr.f32.gmra.mxu0 %v1776
      %v2161 = vpop.f32.mrf.mxu0
      %v2162 = vadd.f32 %v1201, %v2161
      %v2163 = vpop.f32.mrf.mxu0
      %2164 = vmatprep.mubr.f32.mxu0 0.0
      %2165 = vmatmul.mubr.f32.gmra.mxu0 %v1778
      %v2166 = vpop.f32.mrf.mxu0
      %v2167 = vadd.f32 %v1206, %v2166
      %v2168 = vpop.f32.mrf.mxu0
      %2169 = vmatprep.mubr.f32.mxu0 0.0
      %2170 = vmatmul.mubr.f32.gmra.mxu0 %v1780
      %v2171 = vpop.f32.mrf.mxu0
      %v2172 = vadd.f32 %v1211, %v2171
      %v2173 = vpop.f32.mrf.mxu0
      %2174 = vmatprep.mubr.f32.mxu0 0.0
      %2175 = vmatmul.mubr.f32.gmra.mxu0 %v1782
      %v2176 = vpop.f32.mrf.mxu0
      %v2177 = vadd.f32 %v1216, %v2176
      %v2178 = vpop.f32.mrf.mxu0
      %2179 = vmatprep.mubr.f32.mxu0 0.0
      %2180 = vmatmul.mubr.f32.gmra.mxu0 %v1784
      %v2181 = vpop.f32.mrf.mxu0
      %v2182 = vadd.f32 %v1221, %v2181
      %v2183 = vpop.f32.mrf.mxu0
      %2184 = vmatprep.mubr.f32.mxu0 0.0
      %2185 = vmatmul.mubr.f32.gmra.mxu0 %v1786
      %v2186 = vpop.f32.mrf.mxu0
      %v2187 = vadd.f32 %v1226, %v2186
      %v2188 = vpop.f32.mrf.mxu0
      %2189 = vmatprep.mubr.f32.mxu0 0.0
      %2190 = vmatmul.mubr.f32.gmra.mxu0 %v1788
      %v2191 = vpop.f32.mrf.mxu0
      %v2192 = vadd.f32 %v1231, %v2191
      %v2193 = vpop.f32.mrf.mxu0
      %2194 = vmatprep.mubr.f32.mxu0 0.0
      %2195 = vmatmul.mubr.f32.gmra.mxu0 %v1790
      %v2196 = vpop.f32.mrf.mxu0
      %v2197 = vadd.f32 %v1236, %v2196
      %v2198 = vpop.f32.mrf.mxu0
      %2199 = vmatprep.mubr.f32.mxu0 0.0
      %2200 = vmatmul.mubr.f32.gmra.mxu0 %v1792
      %v2201 = vpop.f32.mrf.mxu0
      %v2202 = vadd.f32 %v1241, %v2201
      %v2203 = vpop.f32.mrf.mxu0
      %2204 = vmatprep.mubr.f32.mxu0 0.0
      %2205 = vmatmul.mubr.f32.gmra.mxu0 %v1794
      %v2206 = vpop.f32.mrf.mxu0
      %v2207 = vadd.f32 %v1246, %v2206
      %v2208 = vpop.f32.mrf.mxu0
      %2209 = vmatprep.mubr.f32.mxu0 0.0
      %2210 = vmatmul.mubr.f32.gmra.mxu0 %v1796
      %v2211 = vpop.f32.mrf.mxu0
      %v2212 = vadd.f32 %v1251, %v2211
      %v2213 = vpop.f32.mrf.mxu0
      %2214 = vmatprep.mubr.f32.mxu0 0.0
      %2215 = vmatmul.mubr.f32.gmra.mxu0 %v1798
      %v2216 = vpop.f32.mrf.mxu0
      %v2217 = vadd.f32 %v1256, %v2216
      %v2218 = vpop.f32.mrf.mxu0
      %2219 = vmatprep.mubr.f32.mxu0 0.0
      %2220 = vmatmul.mubr.f32.gmra.mxu0 %v1800
      %v2221 = vpop.f32.mrf.mxu0
      %v2222 = vadd.f32 %v1261, %v2221
      %v2223 = vpop.f32.mrf.mxu0
      %2224 = vmatprep.mubr.f32.mxu0 0.0
      %2225 = vmatmul.mubr.f32.gmra.mxu0 %v1802
      %v2226 = vpop.f32.mrf.mxu0
      %v2227 = vadd.f32 %v1266, %v2226
      %v2228 = vpop.f32.mrf.mxu0
      %2229 = vmatprep.mubr.f32.mxu0 0.0
      %2230 = vmatmul.mubr.f32.gmra.mxu0 %v1804
      %v2231 = vpop.f32.mrf.mxu0
      %v2232 = vadd.f32 %v1271, %v2231
      %v2233 = vpop.f32.mrf.mxu0
      %2234 = vmatprep.mubr.f32.mxu0 0.0
      %2235 = vmatmul.mubr.f32.gmra.mxu0 %v1806
      %v2236 = vpop.f32.mrf.mxu0
      %v2237 = vadd.f32 %v1276, %v2236
      %v2238 = vpop.f32.mrf.mxu0
      %2239 = vmatprep.mubr.f32.mxu0 0.0
      %2240 = vmatmul.mubr.f32.gmra.mxu0 %v1808
      %v2241 = vpop.f32.mrf.mxu0
      %v2242 = vadd.f32 %v1281, %v2241
      %v2243 = vpop.f32.mrf.mxu0
      %2244 = vmatprep.mubr.f32.mxu0 0.0
      %2245 = vmatmul.mubr.f32.gmra.mxu0 %v1810
      %v2246 = vpop.f32.mrf.mxu0
      %v2247 = vadd.f32 %v1286, %v2246
      %v2248 = vpop.f32.mrf.mxu0
      %2249 = vmatprep.mubr.f32.mxu0 0.0
      %2250 = vmatmul.mubr.f32.gmra.mxu0 %v1812
      %v2251 = vpop.f32.mrf.mxu0
      %v2252 = vadd.f32 %v1291, %v2251
      %v2253 = vpop.f32.mrf.mxu0
      %2254 = vmatprep.mubr.f32.mxu0 0.0
      %2255 = vmatmul.mubr.f32.gmra.mxu0 %v1814
      %v2256 = vpop.f32.mrf.mxu0
      %v2257 = vadd.f32 %v1296, %v2256
      %v2258 = vpop.f32.mrf.mxu0
      %2259 = vmatprep.mubr.f32.mxu0 0.0
      %2260 = vmatmul.mubr.f32.gmra.mxu0 %v1816
      %v2261 = vpop.f32.mrf.mxu0
      %v2262 = vadd.f32 %v1301, %v2261
      %v2263 = vpop.f32.mrf.mxu0
      %2264 = vmatprep.mubr.f32.mxu0 0.0
      %2265 = vmatmul.mubr.f32.gmra.mxu0 %v1818
      %v2266 = vpop.f32.mrf.mxu0
      %v2267 = vadd.f32 %v1306, %v2266
      %v2268 = vpop.f32.mrf.mxu0
      %2269 = vmatprep.mubr.f32.mxu0 0.0
      %2270 = vmatmul.mubr.f32.gmra.mxu0 %v1820
      %v2271 = vpop.f32.mrf.mxu0
      %v2272 = vadd.f32 %v1311, %v2271
      %v2273 = vpop.f32.mrf.mxu0
      %2274 = vmatprep.mubr.f32.mxu0 0.0
      %2275 = vmatmul.mubr.f32.gmra.mxu0 %v1822
      %v2276 = vpop.f32.mrf.mxu0
      %v2277 = vadd.f32 %v1316, %v2276
      %v2278 = vpop.f32.mrf.mxu0
      %2279 = vmatprep.mubr.f32.mxu0 0.0
      %2280 = vmatmul.mubr.f32.gmra.mxu0 %v1824
      %v2281 = vpop.f32.mrf.mxu0
      %v2282 = vadd.f32 %v1321, %v2281
      %v2283 = vpop.f32.mrf.mxu0
      %2284 = vmatprep.mubr.f32.mxu0 0.0
      %2285 = vmatmul.mubr.f32.gmra.mxu0 %v1826
      %v2286 = vpop.f32.mrf.mxu0
      %v2287 = vadd.f32 %v1326, %v2286
      %v2288 = vpop.f32.mrf.mxu0
      %2289 = vmatprep.mubr.f32.mxu0 0.0
      %2290 = vmatmul.mubr.f32.gmra.mxu0 %v1828
      %v2291 = vpop.f32.mrf.mxu0
      %v2292 = vadd.f32 %v1331, %v2291
      %v2293 = vpop.f32.mrf.mxu0
      %2294 = vmatprep.mubr.f32.mxu0 0.0
      %2295 = vmatmul.mubr.f32.gmra.mxu0 %v1830
      %v2296 = vpop.f32.mrf.mxu0
      %v2297 = vadd.f32 %v1336, %v2296
      %v2298 = vpop.f32.mrf.mxu0
      %2299 = vmatprep.mubr.f32.mxu0 0.0
      %2300 = vmatmul.mubr.f32.gmra.mxu0 %v1832
      %v2301 = vpop.f32.mrf.mxu0
      %v2302 = vadd.f32 %v1341, %v2301
      %v2303 = vpop.f32.mrf.mxu0
      %2304 = vmatprep.mubr.f32.mxu0 0.0
      %2305 = vmatmul.mubr.f32.gmra.mxu0 %v1834
      %v2306 = vpop.f32.mrf.mxu0
      %v2307 = vadd.f32 %v1346, %v2306
      %v2308 = vpop.f32.mrf.mxu0
      %2309 = vmatprep.mubr.f32.mxu0 0.0
      %2310 = vmatmul.mubr.f32.gmra.mxu0 %v1836
      %v2311 = vpop.f32.mrf.mxu0
      %v2312 = vadd.f32 %v1351, %v2311
      %v2313 = vpop.f32.mrf.mxu0
      %2314 = vmatprep.mubr.f32.mxu0 0.0
      %2315 = vmatmul.mubr.f32.gmra.mxu0 %v1838
      %v2316 = vpop.f32.mrf.mxu0
      %v2317 = vadd.f32 %v1356, %v2316
      %v2318 = vpop.f32.mrf.mxu0
      %2319 = vmatprep.mubr.f32.mxu0 0.0
      %2320 = vmatmul.mubr.f32.gmra.mxu0 %v1840
      %v2321 = vpop.f32.mrf.mxu0
      %v2322 = vadd.f32 %v1361, %v2321
      %v2323 = vpop.f32.mrf.mxu0
      %2324 = vmatprep.mubr.f32.mxu0 0.0
      %2325 = vmatmul.mubr.f32.gmra.mxu0 %v1842
      %v2326 = vpop.f32.mrf.mxu0
      %v2327 = vadd.f32 %v1366, %v2326
      %v2328 = vpop.f32.mrf.mxu0
      %2329 = vmatprep.mubr.f32.mxu0 0.0
      %2330 = vmatmul.mubr.f32.gmra.mxu0 %v1844
      %v2331 = vpop.f32.mrf.mxu0
      %v2332 = vadd.f32 %v1371, %v2331
      %v2333 = vpop.f32.mrf.mxu0
      %2334 = vmatprep.mubr.f32.mxu0 0.0
      %2335 = vmatmul.mubr.f32.gmra.mxu0 %v1846
      %v2336 = vpop.f32.mrf.mxu0
      %v2337 = vadd.f32 %v1376, %v2336
      %v2338 = vpop.f32.mrf.mxu0
      %2339 = vmatprep.mubr.f32.mxu0 0.0
      %2340 = vmatmul.mubr.f32.gmra.mxu0 %v1848
      %v2341 = vpop.f32.mrf.mxu0
      %v2342 = vadd.f32 %v1381, %v2341
      %v2343 = vpop.f32.mrf.mxu0
      %2344 = vmatprep.mubr.f32.mxu0 0.0
      %2345 = vmatmul.mubr.f32.gmra.mxu0 %v1850
      %v2346 = vpop.f32.mrf.mxu0
      %v2347 = vadd.f32 %v1386, %v2346
      %v2348 = vpop.f32.mrf.mxu0
      %2349 = vmatprep.mubr.f32.mxu0 0.0
      %2350 = vmatmul.mubr.f32.gmra.mxu0 %v1852
      %v2351 = vpop.f32.mrf.mxu0
      %v2352 = vadd.f32 %v1391, %v2351
      %v2353 = vpop.f32.mrf.mxu0
      %2354 = vmatprep.mubr.f32.mxu0 0.0
      %2355 = vmatmul.mubr.f32.gmra.mxu0 %v1854
      %v2356 = vpop.f32.mrf.mxu0
      %v2357 = vadd.f32 %v1396, %v2356
      %v2358 = vpop.f32.mrf.mxu0
      %2359 = vmatprep.mubr.f32.mxu0 0.0
      %2360 = vmatmul.mubr.f32.gmra.mxu0 %v1856
      %v2361 = vpop.f32.mrf.mxu0
      %v2362 = vadd.f32 %v1401, %v2361
      %v2363 = vpop.f32.mrf.mxu0
      %2364 = vmatprep.mubr.f32.mxu0 0.0
      %2365 = vmatmul.mubr.f32.gmra.mxu0 %v1858
      %v2366 = vpop.f32.mrf.mxu0
      %v2367 = vadd.f32 %v1406, %v2366
      %v2368 = vpop.f32.mrf.mxu0
      %2369 = vmatprep.mubr.f32.mxu0 0.0
      %2370 = vmatmul.mubr.f32.gmra.mxu0 %v1860
      %v2371 = vpop.f32.mrf.mxu0
      %v2372 = vadd.f32 %v1411, %v2371
      %v2373 = vpop.f32.mrf.mxu0
      %2374 = vmatprep.mubr.f32.mxu0 0.0
      %2375 = vmatmul.mubr.f32.gmra.mxu0 %v1862
      %v2376 = vpop.f32.mrf.mxu0
      %v2377 = vadd.f32 %v1416, %v2376
      %v2378 = vpop.f32.mrf.mxu0
      %2379 = vmatprep.mubr.f32.mxu0 0.0
      %2380 = vmatmul.mubr.f32.gmra.mxu0 %v1864
      %v2381 = vpop.f32.mrf.mxu0
      %v2382 = vadd.f32 %v1421, %v2381
      %v2383 = vpop.f32.mrf.mxu0
      %2384 = vmatprep.mubr.f32.mxu0 0.0
      %2385 = vmatmul.mubr.f32.gmra.mxu0 %v1866
      %v2386 = vpop.f32.mrf.mxu0
      %v2387 = vadd.f32 %v1426, %v2386
      %v2388 = vpop.f32.mrf.mxu0
      %2389 = vmatprep.mubr.f32.mxu0 0.0
      %2390 = vmatmul.mubr.f32.gmra.mxu0 %v1868
      %v2391 = vpop.f32.mrf.mxu0
      %v2392 = vadd.f32 %v1431, %v2391
      %v2393 = vpop.f32.mrf.mxu0
      %2394 = vmatprep.mubr.f32.mxu0 0.0
      %2395 = vmatmul.mubr.f32.gmra.mxu0 %v1870
      %v2396 = vpop.f32.mrf.mxu0
      %v2397 = vadd.f32 %v1436, %v2396
      %v2398 = vpop.f32.mrf.mxu0
      %2399 = vmatprep.mubr.f32.mxu0 0.0
      %2400 = vmatmul.mubr.f32.gmra.mxu0 %v1872
      %v2401 = vpop.f32.mrf.mxu0
      %v2402 = vadd.f32 %v1441, %v2401
      %v2403 = vpop.f32.mrf.mxu0
      %2404 = vmatprep.mubr.f32.mxu0 0.0
      %2405 = vmatmul.mubr.f32.gmra.mxu0 %v1874
      %v2406 = vpop.f32.mrf.mxu0
      %v2407 = vadd.f32 %v1446, %v2406
      %v2408 = vpop.f32.mrf.mxu0
      %2409 = vmatprep.mubr.f32.mxu0 0.0
      %2410 = vmatmul.mubr.f32.gmra.mxu0 %v1876
      %v2411 = vpop.f32.mrf.mxu0
      %v2412 = vadd.f32 %v1451, %v2411
      %v2413 = vpop.f32.mrf.mxu0
      %2414 = vmatprep.mubr.f32.mxu0 0.0
      %2415 = vmatmul.mubr.f32.gmra.mxu0 %v1878
      %v2416 = vpop.f32.mrf.mxu0
      %v2417 = vadd.f32 %v1456, %v2416
      %v2418 = vpop.f32.mrf.mxu0
      %2419 = vmatprep.mubr.f32.mxu0 0.0
      %2420 = vmatmul.mubr.f32.gmra.mxu0 %v1880
      %v2421 = vpop.f32.mrf.mxu0
      %v2422 = vadd.f32 %v1461, %v2421
      %v2423 = vpop.f32.mrf.mxu0
      %2424 = vmatprep.mubr.f32.mxu0 0.0
      %2425 = vmatmul.mubr.f32.gmra.mxu0 %v1882
      %v2426 = vpop.f32.mrf.mxu0
      %v2427 = vadd.f32 %v1466, %v2426
      %v2428 = vpop.f32.mrf.mxu0
      %2429 = vmatprep.mubr.f32.mxu0 0.0
      %2430 = vmatmul.mubr.f32.gmra.mxu0 %v1884
      %v2431 = vpop.f32.mrf.mxu0
      %v2432 = vadd.f32 %v1471, %v2431
      %v2433 = vpop.f32.mrf.mxu0
      %2434 = vmatprep.mubr.f32.mxu0 0.0
      %2435 = vmatmul.mubr.f32.gmra.mxu0 %v1886
      %v2436 = vpop.f32.mrf.mxu0
      %v2437 = vadd.f32 %v1476, %v2436
      %v2438 = vpop.f32.mrf.mxu0
      %2439 = vmatprep.mubr.f32.mxu0 0.0
      %2440 = vmatmul.mubr.f32.gmra.mxu0 %v1888
      %v2441 = vpop.f32.mrf.mxu0
      %v2442 = vadd.f32 %v1481, %v2441
      %v2443 = vpop.f32.mrf.mxu0
      %2444 = vmatprep.mubr.f32.mxu0 0.0
      %2445 = vmatmul.mubr.f32.gmra.mxu0 %v1890
      %v2446 = vpop.f32.mrf.mxu0
      %v2447 = vadd.f32 %v1486, %v2446
      %v2448 = vpop.f32.mrf.mxu0
      %2449 = vmatprep.mubr.f32.mxu0 0.0
      %2450 = vmatmul.mubr.f32.gmra.mxu0 %v1892
      %v2451 = vpop.f32.mrf.mxu0
      %v2452 = vadd.f32 %v1491, %v2451
      %v2453 = vpop.f32.mrf.mxu0
      %2454 = vmatprep.mubr.f32.mxu0 0.0
      %2455 = vmatmul.mubr.f32.gmra.mxu0 %v1894
      %v2456 = vpop.f32.mrf.mxu0
      %v2457 = vadd.f32 %v1496, %v2456
      %v2458 = vpop.f32.mrf.mxu0
      %2459 = vmatprep.mubr.f32.mxu0 0.0
      %2460 = vmatmul.mubr.f32.gmra.mxu0 %v1896
      %v2461 = vpop.f32.mrf.mxu0
      %v2462 = vadd.f32 %v1501, %v2461
      %v2463 = vpop.f32.mrf.mxu0
      %2464 = vmatprep.mubr.f32.mxu0 0.0
      %2465 = vmatmul.mubr.f32.gmra.mxu0 %v1898
      %v2466 = vpop.f32.mrf.mxu0
      %v2467 = vadd.f32 %v1506, %v2466
      %v2468 = vpop.f32.mrf.mxu0
      %2469 = vmatprep.mubr.f32.mxu0 0.0
      %2470 = vmatmul.mubr.f32.gmra.mxu0 %v1900
      %v2471 = vpop.f32.mrf.mxu0
      %v2472 = vadd.f32 %v1511, %v2471
      %v2473 = vpop.f32.mrf.mxu0
      %2474 = vmatprep.mubr.f32.mxu0 0.0
      %2475 = vmatmul.mubr.f32.gmra.mxu0 %v1902
      %v2476 = vpop.f32.mrf.mxu0
      %v2477 = vadd.f32 %v1516, %v2476
      %v2478 = vpop.f32.mrf.mxu0
      %2479 = vmatprep.mubr.f32.mxu0 0.0
      %2480 = vmatmul.mubr.f32.gmra.mxu0 %v1904
      %v2481 = vpop.f32.mrf.mxu0
      %v2482 = vadd.f32 %v1521, %v2481
      %v2483 = vpop.f32.mrf.mxu0
      %2484 = vmatprep.mubr.f32.mxu0 0.0
      %2485 = vmatmul.mubr.f32.gmra.mxu0 %v1906
      %v2486 = vpop.f32.mrf.mxu0
      %v2487 = vadd.f32 %v1526, %v2486
      %v2488 = vpop.f32.mrf.mxu0
      %2489 = vmatprep.mubr.f32.mxu0 0.0
      %2490 = vmatmul.mubr.f32.gmra.mxu0 %v1908
      %v2491 = vpop.f32.mrf.mxu0
      %v2492 = vadd.f32 %v1531, %v2491
      %v2493 = vpop.f32.mrf.mxu0
      %2494 = vmatprep.mubr.f32.mxu0 0.0
      %2495 = vmatmul.mubr.f32.gmra.mxu0 %v1910
      %v2496 = vpop.f32.mrf.mxu0
      %v2497 = vadd.f32 %v1536, %v2496
      %v2498 = vpop.f32.mrf.mxu0
      %2499 = vmatprep.mubr.f32.mxu0 0.0
      %2500 = vmatmul.mubr.f32.gmra.mxu0 %v1912
      %v2501 = vpop.f32.mrf.mxu0
      %v2502 = vadd.f32 %v1541, %v2501
      %v2503 = vpop.f32.mrf.mxu0
      %2504 = vmatprep.mubr.f32.mxu0 0.0
      %2505 = vmatmul.mubr.f32.gmra.mxu0 %v1914
      %v2506 = vpop.f32.mrf.mxu0
      %v2507 = vadd.f32 %v1546, %v2506
      %v2508 = vpop.f32.mrf.mxu0
      %2509 = vmatprep.mubr.f32.mxu0 0.0
      %2510 = vmatmul.mubr.f32.gmra.mxu0 %v1916
      %v2511 = vpop.f32.mrf.mxu0
      %v2512 = vadd.f32 %v1551, %v2511
      %v2513 = vpop.f32.mrf.mxu0
      %2514 = vmatprep.mubr.f32.mxu0 0.0
      %2515 = vmatmul.mubr.f32.gmra.mxu0 %v1918
      %v2516 = vpop.f32.mrf.mxu0
      %v2517 = vadd.f32 %v1556, %v2516
      %v2518 = vpop.f32.mrf.mxu0
      %2519 = vmatprep.mubr.f32.mxu0 0.0
      %2520 = vmatmul.mubr.f32.gmra.mxu0 %v1920
      %v2521 = vpop.f32.mrf.mxu0
      %v2522 = vadd.f32 %v1561, %v2521
      %v2523 = vpop.f32.mrf.mxu0
      %2524 = vmatprep.mubr.f32.mxu0 0.0
      %2525 = vmatmul.mubr.f32.gmra.mxu0 %v1922
      %v2526 = vpop.f32.mrf.mxu0
      %v2527 = vadd.f32 %v1566, %v2526
      %v2528 = vpop.f32.mrf.mxu0
      %2529 = vmatprep.mubr.f32.mxu0 0.0
      %2530 = vmatmul.mubr.f32.gmra.mxu0 %v1924
      %v2531 = vpop.f32.mrf.mxu0
      %v2532 = vadd.f32 %v1571, %v2531
      %v2533 = vpop.f32.mrf.mxu0
      %2534 = vmatprep.mubr.f32.mxu0 0.0
      %2535 = vmatmul.mubr.f32.gmra.mxu0 %v1926
      %v2536 = vpop.f32.mrf.mxu0
      %v2537 = vadd.f32 %v1576, %v2536
      %v2538 = vpop.f32.mrf.mxu0
      %2539 = vmatprep.mubr.f32.mxu0 0.0
      %2540 = vmatmul.mubr.f32.gmra.mxu0 %v1928
      %v2541 = vpop.f32.mrf.mxu0
      %v2542 = vadd.f32 %v1581, %v2541
      %v2543 = vpop.f32.mrf.mxu0
      %2544 = vmatprep.mubr.f32.mxu0 0.0
      %2545 = vmatmul.mubr.f32.gmra.mxu0 %v1930
      %v2546 = vpop.f32.mrf.mxu0
      %v2547 = vadd.f32 %v1586, %v2546
      %v2548 = vpop.f32.mrf.mxu0
      %2549 = vmatprep.mubr.f32.mxu0 0.0
      %2550 = vmatmul.mubr.f32.gmra.mxu0 %v1932
      %v2551 = vpop.f32.mrf.mxu0
      %v2552 = vadd.f32 %v1591, %v2551
      %v2553 = vpop.f32.mrf.mxu0
      %2554 = vmatprep.mubr.f32.mxu0 0.0
      %2555 = vmatmul.mubr.f32.gmra.mxu0 %v1934
      %v2556 = vpop.f32.mrf.mxu0
      %v2557 = vadd.f32 %v1596, %v2556
      %v2558 = vpop.f32.mrf.mxu0
      %2559 = vmatprep.mubr.f32.mxu0 0.0
      %2560 = vmatmul.mubr.f32.gmra.mxu0 %v1936
      %v2561 = vpop.f32.mrf.mxu0
      %v2562 = vadd.f32 %v1601, %v2561
      %v2563 = vpop.f32.mrf.mxu0
      %2564 = vmatprep.mubr.f32.mxu0 0.0
      %2565 = vmatmul.mubr.f32.gmra.mxu0 %v1938
      %v2566 = vpop.f32.mrf.mxu0
      %v2567 = vadd.f32 %v1606, %v2566
      %v2568 = vpop.f32.mrf.mxu0
      %2569 = vmatprep.mubr.f32.mxu0 0.0
      %2570 = vmatmul.mubr.f32.gmra.mxu0 %v1940
      %v2571 = vpop.f32.mrf.mxu0
      %v2572 = vadd.f32 %v1611, %v2571
      %v2573 = vpop.f32.mrf.mxu0
      %2574 = vmatprep.mubr.f32.mxu0 0.0
      %2575 = vmatmul.mubr.f32.gmra.mxu0 %v1942
      %v2576 = vpop.f32.mrf.mxu0
      %v2577 = vadd.f32 %v1616, %v2576
      %v2578 = vpop.f32.mrf.mxu0
      %2579 = vmatprep.mubr.f32.mxu0 0.0
      %2580 = vmatmul.mubr.f32.gmra.mxu0 %v1944
      %v2581 = vpop.f32.mrf.mxu0
      %v2582 = vadd.f32 %v1621, %v2581
      %v2583 = vpop.f32.mrf.mxu0
      %2584 = vmatprep.mubr.f32.mxu0 0.0
      %2585 = vmatmul.mubr.f32.gmra.mxu0 %v1946
      %v2586 = vpop.f32.mrf.mxu0
      %v2587 = vadd.f32 %v1626, %v2586
      %v2588 = vpop.f32.mrf.mxu0
      %2589 = vmatprep.mubr.f32.mxu0 0.0
      %2590 = vmatmul.mubr.f32.gmra.mxu0 %v1948
      %v2591 = vpop.f32.mrf.mxu0
      %v2592 = vadd.f32 %v1631, %v2591
      %v2593 = vpop.f32.mrf.mxu0
      %2594 = vmatprep.mubr.f32.mxu0 0.0
      %2595 = vmatmul.mubr.f32.gmra.mxu0 %v1950
      %v2596 = vpop.f32.mrf.mxu0
      %v2597 = vadd.f32 %v1636, %v2596
      %v2598 = vpop.f32.mrf.mxu0
      %2599 = vmatprep.mubr.f32.mxu0 0.0
      %2600 = vmatmul.mubr.f32.gmra.mxu0 %v1952
      %v2601 = vpop.f32.mrf.mxu0
      %v2602 = vadd.f32 %v1641, %v2601
      %v2603 = vpop.f32.mrf.mxu0
      %2604 = vmatprep.mubr.f32.mxu0 0.0
      %2605 = vmatmul.mubr.f32.gmra.mxu0 %v1954
      %v2606 = vpop.f32.mrf.mxu0
      %v2607 = vadd.f32 %v1646, %v2606
      %v2608 = vpop.f32.mrf.mxu0
      %2609 = vmatprep.mubr.f32.mxu0 0.0
      %2610 = vmatmul.mubr.f32.gmra.mxu0 %v1956
      %v2611 = vpop.f32.mrf.mxu0
      %v2612 = vadd.f32 %v1651, %v2611
      %v2613 = vpop.f32.mrf.mxu0
      %2614 = vmatprep.mubr.f32.mxu0 0.0
      %2615 = vmatmul.mubr.f32.gmra.mxu0 %v1958
      %v2616 = vpop.f32.mrf.mxu0
      %v2617 = vadd.f32 %v1656, %v2616
      %v2618 = vpop.f32.mrf.mxu0
      %2619 = vmatprep.mubr.f32.mxu0 0.0
      %2620 = vmatmul.mubr.f32.gmra.mxu0 %v1960
      %v2621 = vpop.f32.mrf.mxu0
      %v2622 = vadd.f32 %v1661, %v2621
      %v2623 = vpop.f32.mrf.mxu0
      %2624 = vmatprep.mubr.f32.mxu0 0.0
      %2625 = vmatmul.mubr.f32.gmra.mxu0 %v1962
      %v2626 = vpop.f32.mrf.mxu0
      %v2627 = vadd.f32 %v1666, %v2626
      %v2628 = vpop.f32.mrf.mxu0
      %2629 = vmatprep.mubr.f32.mxu0 0.0
      %2630 = vmatmul.mubr.f32.gmra.mxu0 %v1964
      %v2631 = vpop.f32.mrf.mxu0
      %v2632 = vadd.f32 %v1671, %v2631
      %v2633 = vpop.f32.mrf.mxu0
      %2634 = vmatprep.mubr.f32.mxu0 0.0
      %2635 = vmatmul.mubr.f32.gmra.mxu0 %v1966
      %v2636 = vpop.f32.mrf.mxu0
      %v2637 = vadd.f32 %v1676, %v2636
      %v2638 = vpop.f32.mrf.mxu0
      %2639 = vmatprep.mubr.f32.mxu0 0.0
      %2640 = vmatmul.mubr.f32.gmra.mxu0 %v1968
      %v2641 = vpop.f32.mrf.mxu0
      %v2642 = vadd.f32 %v1681, %v2641
      %v2643 = vpop.f32.mrf.mxu0
      %2644 = vmatprep.mubr.f32.mxu0 0.0
      %2645 = vmatmul.mubr.f32.gmra.mxu0 %v1970
      %v2646 = vpop.f32.mrf.mxu0
      %v2647 = vadd.f32 %v1686, %v2646
      %v2648 = vpop.f32.mrf.mxu0
      %2649 = vmatprep.mubr.f32.mxu0 0.0
      %2650 = vmatmul.mubr.f32.gmra.mxu0 %v1972
      %v2651 = vpop.f32.mrf.mxu0
      %v2652 = vadd.f32 %v1691, %v2651
      %v2653 = vpop.f32.mrf.mxu0
      %2654 = vmatprep.mubr.f32.mxu0 0.0
      %2655 = vmatmul.mubr.f32.gmra.mxu0 %v1974
      %v2656 = vpop.f32.mrf.mxu0
      %v2657 = vadd.f32 %v1696, %v2656
      %v2658 = vpop.f32.mrf.mxu0
      %2659 = vmatprep.mubr.f32.mxu0 0.0
      %2660 = vmatmul.mubr.f32.gmra.mxu0 %v1976
      %v2661 = vpop.f32.mrf.mxu0
      %v2662 = vadd.f32 %v1701, %v2661
      %v2663 = vpop.f32.mrf.mxu0
      %2664 = vmatprep.mubr.f32.mxu0 0.0
      %2665 = vmatmul.mubr.f32.gmra.mxu0 %v1978
      %v2666 = vpop.f32.mrf.mxu0
      %v2667 = vadd.f32 %v1706, %v2666
      %v2668 = vpop.f32.mrf.mxu0
      %2669 = vmatprep.mubr.f32.mxu0 0.0
      %2670 = vmatmul.mubr.f32.gmra.mxu0 %v1980
      %v2671 = vpop.f32.mrf.mxu0
      %v2672 = vadd.f32 %v1711, %v2671
      %v2673 = vpop.f32.mrf.mxu0
      %2674 = vmatprep.mubr.f32.mxu0 0.0
      %2675 = vmatmul.mubr.f32.gmra.mxu0 %v1982
      %v2676 = vpop.f32.mrf.mxu0
      %v2677 = vadd.f32 %v1716, %v2676
      %v2678 = vpop.f32.mrf.mxu0
      %2679 = vmatprep.mubr.f32.mxu0 0.0
      %2680 = vmatmul.mubr.f32.gmra.mxu0 %v1984
      %v2681 = vpop.f32.mrf.mxu0
      %v2682 = vadd.f32 %v1721, %v2681
      %v2683 = vpop.f32.mrf.mxu0
      %2684 = vmatprep.mubr.f32.mxu0 0.0
      %2685 = vmatmul.mubr.f32.gmra.mxu0 %v1986
      %v2686 = vpop.f32.mrf.mxu0
      %v2687 = vadd.f32 %v1726, %v2686
      %v2688 = vpop.f32.mrf.mxu0
      %2689 = vmatprep.mubr.f32.mxu0 0.0
      %2690 = vmatmul.mubr.f32.gmra.mxu0 %v1988
      %v2691 = vpop.f32.mrf.mxu0
      %v2692 = vadd.f32 %v1731, %v2691
      %v2693 = vpop.f32.mrf.mxu0
      %2694 = vdwg.mxu0
      %vm2695 = vcmask 1045504
      %v2696 = vrot.slane %v144, 2
      %v2697 = vrot.slane %v145, 2
      %v2698 = vsel %vm2695, %v2696, %v2697
      %v2699 = vrot.slane %v146, 2
      %v2700 = vsel %vm2695, %v2697, %v2699
      %v2701 = vrot.slane %v147, 2
      %v2702 = vsel %vm2695, %v2699, %v2701
      %v2703 = vrot.slane %v148, 2
      %v2704 = vsel %vm2695, %v2701, %v2703
      %v2705 = vrot.slane %v149, 2
      %v2706 = vrot.slane %v150, 2
      %v2707 = vsel %vm2695, %v2705, %v2706
      %v2708 = vrot.slane %v151, 2
      %v2709 = vsel %vm2695, %v2706, %v2708
      %v2710 = vrot.slane %v152, 2
      %v2711 = vsel %vm2695, %v2708, %v2710
      %v2712 = vrot.slane %v153, 2
      %v2713 = vsel %vm2695, %v2710, %v2712
      %v2714 = vrot.slane %v154, 2
      %v2715 = vrot.slane %v155, 2
      %v2716 = vsel %vm2695, %v2714, %v2715
      %v2717 = vrot.slane %v156, 2
      %v2718 = vsel %vm2695, %v2715, %v2717
      %v2719 = vrot.slane %v157, 2
      %v2720 = vsel %vm2695, %v2717, %v2719
      %v2721 = vrot.slane %v158, 2
      %v2722 = vsel %vm2695, %v2719, %v2721
      %v2723 = vrot.slane %v159, 2
      %v2724 = vrot.slane %v160, 2
      %v2725 = vsel %vm2695, %v2723, %v2724
      %v2726 = vrot.slane %v161, 2
      %v2727 = vsel %vm2695, %v2724, %v2726
      %v2728 = vrot.slane %v162, 2
      %v2729 = vsel %vm2695, %v2726, %v2728
      %v2730 = vrot.slane %v163, 2
      %v2731 = vsel %vm2695, %v2728, %v2730
      %v2732 = vrot.slane %v164, 2
      %v2733 = vrot.slane %v165, 2
      %v2734 = vsel %vm2695, %v2732, %v2733
      %v2735 = vrot.slane %v166, 2
      %v2736 = vsel %vm2695, %v2733, %v2735
      %v2737 = vrot.slane %v167, 2
      %v2738 = vsel %vm2695, %v2735, %v2737
      %v2739 = vrot.slane %v168, 2
      %v2740 = vsel %vm2695, %v2737, %v2739
      %v2741 = vrot.slane %v169, 2
      %v2742 = vrot.slane %v170, 2
      %v2743 = vsel %vm2695, %v2741, %v2742
      %v2744 = vrot.slane %v171, 2
      %v2745 = vsel %vm2695, %v2742, %v2744
      %v2746 = vrot.slane %v172, 2
      %v2747 = vsel %vm2695, %v2744, %v2746
      %v2748 = vrot.slane %v173, 2
      %v2749 = vsel %vm2695, %v2746, %v2748
      %v2750 = vrot.slane %v174, 2
      %v2751 = vrot.slane %v175, 2
      %v2752 = vsel %vm2695, %v2750, %v2751
      %v2753 = vrot.slane %v176, 2
      %v2754 = vsel %vm2695, %v2751, %v2753
      %v2755 = vrot.slane %v177, 2
      %v2756 = vsel %vm2695, %v2753, %v2755
      %v2757 = vrot.slane %v178, 2
      %v2758 = vsel %vm2695, %v2755, %v2757
      %v2759 = vrot.slane %v179, 2
      %v2760 = vrot.slane %v180, 2
      %v2761 = vsel %vm2695, %v2759, %v2760
      %v2762 = vrot.slane %v181, 2
      %v2763 = vsel %vm2695, %v2760, %v2762
      %v2764 = vrot.slane %v182, 2
      %v2765 = vsel %vm2695, %v2762, %v2764
      %v2766 = vrot.slane %v183, 2
      %v2767 = vsel %vm2695, %v2764, %v2766
      %v2768 = vrot.slane %v184, 2
      %v2769 = vrot.slane %v185, 2
      %v2770 = vsel %vm2695, %v2768, %v2769
      %v2771 = vrot.slane %v186, 2
      %v2772 = vsel %vm2695, %v2769, %v2771
      %v2773 = vrot.slane %v187, 2
      %v2774 = vsel %vm2695, %v2771, %v2773
      %v2775 = vrot.slane %v188, 2
      %v2776 = vsel %vm2695, %v2773, %v2775
      %v2777 = vrot.slane %v189, 2
      %v2778 = vrot.slane %v190, 2
      %v2779 = vsel %vm2695, %v2777, %v2778
      %v2780 = vrot.slane %v191, 2
      %v2781 = vsel %vm2695, %v2778, %v2780
      %v2782 = vrot.slane %v192, 2
      %v2783 = vsel %vm2695, %v2780, %v2782
      %v2784 = vrot.slane %v193, 2
      %v2785 = vsel %vm2695, %v2782, %v2784
      %v2786 = vrot.slane %v194, 2
      %v2787 = vrot.slane %v195, 2
      %v2788 = vsel %vm2695, %v2786, %v2787
      %v2789 = vrot.slane %v196, 2
      %v2790 = vsel %vm2695, %v2787, %v2789
      %v2791 = vrot.slane %v197, 2
      %v2792 = vsel %vm2695, %v2789, %v2791
      %v2793 = vrot.slane %v198, 2
      %v2794 = vsel %vm2695, %v2791, %v2793
      %v2795 = vrot.slane %v199, 2
      %v2796 = vrot.slane %v200, 2
      %v2797 = vsel %vm2695, %v2795, %v2796
      %v2798 = vrot.slane %v201, 2
      %v2799 = vsel %vm2695, %v2796, %v2798
      %v2800 = vrot.slane %v202, 2
      %v2801 = vsel %vm2695, %v2798, %v2800
      %v2802 = vrot.slane %v203, 2
      %v2803 = vsel %vm2695, %v2800, %v2802
      %v2804 = vrot.slane %v204, 2
      %v2805 = vrot.slane %v205, 2
      %v2806 = vsel %vm2695, %v2804, %v2805
      %v2807 = vrot.slane %v206, 2
      %v2808 = vsel %vm2695, %v2805, %v2807
      %v2809 = vrot.slane %v207, 2
      %v2810 = vsel %vm2695, %v2807, %v2809
      %v2811 = vrot.slane %v208, 2
      %v2812 = vsel %vm2695, %v2809, %v2811
      %v2813 = vrot.slane %v209, 2
      %v2814 = vrot.slane %v210, 2
      %v2815 = vsel %vm2695, %v2813, %v2814
      %v2816 = vrot.slane %v211, 2
      %v2817 = vsel %vm2695, %v2814, %v2816
      %v2818 = vrot.slane %v212, 2
      %v2819 = vsel %vm2695, %v2816, %v2818
      %v2820 = vrot.slane %v213, 2
      %v2821 = vsel %vm2695, %v2818, %v2820
      %v2822 = vrot.slane %v214, 2
      %v2823 = vrot.slane %v215, 2
      %v2824 = vsel %vm2695, %v2822, %v2823
      %v2825 = vrot.slane %v216, 2
      %v2826 = vsel %vm2695, %v2823, %v2825
      %v2827 = vrot.slane %v217, 2
      %v2828 = vsel %vm2695, %v2825, %v2827
      %v2829 = vrot.slane %v218, 2
      %v2830 = vsel %vm2695, %v2827, %v2829
      %v2831 = vrot.slane %v219, 2
      %v2832 = vrot.slane %v220, 2
      %v2833 = vsel %vm2695, %v2831, %v2832
      %v2834 = vrot.slane %v221, 2
      %v2835 = vsel %vm2695, %v2832, %v2834
      %v2836 = vrot.slane %v222, 2
      %v2837 = vsel %vm2695, %v2834, %v2836
      %v2838 = vrot.slane %v223, 2
      %v2839 = vsel %vm2695, %v2836, %v2838
      %v2840 = vrot.slane %v224, 2
      %v2841 = vrot.slane %v225, 2
      %v2842 = vsel %vm2695, %v2840, %v2841
      %v2843 = vrot.slane %v226, 2
      %v2844 = vsel %vm2695, %v2841, %v2843
      %v2845 = vrot.slane %v227, 2
      %v2846 = vsel %vm2695, %v2843, %v2845
      %v2847 = vrot.slane %v228, 2
      %v2848 = vsel %vm2695, %v2845, %v2847
      %v2849 = vrot.slane %v229, 2
      %v2850 = vrot.slane %v230, 2
      %v2851 = vsel %vm2695, %v2849, %v2850
      %v2852 = vrot.slane %v231, 2
      %v2853 = vsel %vm2695, %v2850, %v2852
      %v2854 = vrot.slane %v232, 2
      %v2855 = vsel %vm2695, %v2852, %v2854
      %v2856 = vrot.slane %v233, 2
      %v2857 = vsel %vm2695, %v2854, %v2856
      %v2858 = vrot.slane %v234, 2
      %v2859 = vrot.slane %v235, 2
      %v2860 = vsel %vm2695, %v2858, %v2859
      %v2861 = vrot.slane %v236, 2
      %v2862 = vsel %vm2695, %v2859, %v2861
      %v2863 = vrot.slane %v237, 2
      %v2864 = vsel %vm2695, %v2861, %v2863
      %v2865 = vrot.slane %v238, 2
      %v2866 = vsel %vm2695, %v2863, %v2865
      %v2867 = vrot.slane %v239, 2
      %v2868 = vrot.slane %v240, 2
      %v2869 = vsel %vm2695, %v2867, %v2868
      %v2870 = vrot.slane %v241, 2
      %v2871 = vsel %vm2695, %v2868, %v2870
      %v2872 = vrot.slane %v242, 2
      %v2873 = vsel %vm2695, %v2870, %v2872
      %v2874 = vrot.slane %v243, 2
      %v2875 = vsel %vm2695, %v2872, %v2874
      %v2876 = vrot.slane %v244, 2
      %v2877 = vrot.slane %v245, 2
      %v2878 = vsel %vm2695, %v2876, %v2877
      %v2879 = vrot.slane %v246, 2
      %v2880 = vsel %vm2695, %v2877, %v2879
      %v2881 = vrot.slane %v247, 2
      %v2882 = vsel %vm2695, %v2879, %v2881
      %v2883 = vrot.slane %v248, 2
      %v2884 = vsel %vm2695, %v2881, %v2883
      %v2885 = vrot.slane %v249, 2
      %v2886 = vrot.slane %v250, 2
      %v2887 = vsel %vm2695, %v2885, %v2886
      %v2888 = vrot.slane %v251, 2
      %v2889 = vsel %vm2695, %v2886, %v2888
      %v2890 = vrot.slane %v252, 2
      %v2891 = vsel %vm2695, %v2888, %v2890
      %v2892 = vrot.slane %v253, 2
      %v2893 = vsel %vm2695, %v2890, %v2892
      %v2894 = vrot.slane %v254, 2
      %v2895 = vrot.slane %v255, 2
      %v2896 = vsel %vm2695, %v2894, %v2895
      %v2897 = vrot.slane %v256, 2
      %v2898 = vsel %vm2695, %v2895, %v2897
      %v2899 = vrot.slane %v257, 2
      %v2900 = vsel %vm2695, %v2897, %v2899
      %v2901 = vrot.slane %v258, 2
      %v2902 = vsel %vm2695, %v2899, %v2901
      %v2903 = vrot.slane %v259, 2
      %v2904 = vrot.slane %v260, 2
      %v2905 = vsel %vm2695, %v2903, %v2904
      %v2906 = vrot.slane %v261, 2
      %v2907 = vsel %vm2695, %v2904, %v2906
      %v2908 = vrot.slane %v262, 2
      %v2909 = vsel %vm2695, %v2906, %v2908
      %v2910 = vrot.slane %v263, 2
      %v2911 = vsel %vm2695, %v2908, %v2910
      %v2912 = vrot.slane %v264, 2
      %v2913 = vrot.slane %v265, 2
      %v2914 = vsel %vm2695, %v2912, %v2913
      %v2915 = vrot.slane %v266, 2
      %v2916 = vsel %vm2695, %v2913, %v2915
      %v2917 = vrot.slane %v267, 2
      %v2918 = vsel %vm2695, %v2915, %v2917
      %v2919 = vrot.slane %v268, 2
      %v2920 = vsel %vm2695, %v2917, %v2919
      %v2921 = vrot.slane %v269, 2
      %v2922 = vrot.slane %v270, 2
      %v2923 = vsel %vm2695, %v2921, %v2922
      %v2924 = vrot.slane %v271, 2
      %v2925 = vsel %vm2695, %v2922, %v2924
      %v2926 = vrot.slane %v272, 2
      %v2927 = vsel %vm2695, %v2924, %v2926
      %v2928 = vrot.slane %v273, 2
      %v2929 = vsel %vm2695, %v2926, %v2928
      %v2930 = vrot.slane %v274, 2
      %v2931 = vrot.slane %v275, 2
      %v2932 = vsel %vm2695, %v2930, %v2931
      %v2933 = vrot.slane %v276, 2
      %v2934 = vsel %vm2695, %v2931, %v2933
      %v2935 = vrot.slane %v277, 2
      %v2936 = vsel %vm2695, %v2933, %v2935
      %v2937 = vrot.slane %v278, 2
      %v2938 = vsel %vm2695, %v2935, %v2937
      %v2939 = vrot.slane %v279, 2
      %v2940 = vrot.slane %v280, 2
      %v2941 = vsel %vm2695, %v2939, %v2940
      %v2942 = vrot.slane %v281, 2
      %v2943 = vsel %vm2695, %v2940, %v2942
      %v2944 = vrot.slane %v282, 2
      %v2945 = vsel %vm2695, %v2942, %v2944
      %v2946 = vrot.slane %v283, 2
      %v2947 = vsel %vm2695, %v2944, %v2946
      %v2948 = vrot.slane %v284, 2
      %v2949 = vrot.slane %v285, 2
      %v2950 = vsel %vm2695, %v2948, %v2949
      %v2951 = vrot.slane %v286, 2
      %v2952 = vsel %vm2695, %v2949, %v2951
      %v2953 = vrot.slane %v287, 2
      %v2954 = vsel %vm2695, %v2951, %v2953
      %v2955 = vrot.slane %v288, 2
      %v2956 = vsel %vm2695, %v2953, %v2955
      %v2957 = vrot.slane %v289, 2
      %v2958 = vrot.slane %v290, 2
      %v2959 = vsel %vm2695, %v2957, %v2958
      %v2960 = vrot.slane %v291, 2
      %v2961 = vsel %vm2695, %v2958, %v2960
      %v2962 = vrot.slane %v292, 2
      %v2963 = vsel %vm2695, %v2960, %v2962
      %v2964 = vrot.slane %v293, 2
      %v2965 = vsel %vm2695, %v2962, %v2964
      %v2966 = vrot.slane %v294, 2
      %v2967 = vrot.slane %v295, 2
      %v2968 = vsel %vm2695, %v2966, %v2967
      %v2969 = vrot.slane %v296, 2
      %v2970 = vsel %vm2695, %v2967, %v2969
      %v2971 = vrot.slane %v297, 2
      %v2972 = vsel %vm2695, %v2969, %v2971
      %v2973 = vrot.slane %v298, 2
      %v2974 = vsel %vm2695, %v2971, %v2973
      %v2975 = vrot.slane %v299, 2
      %v2976 = vrot.slane %v300, 2
      %v2977 = vsel %vm2695, %v2975, %v2976
      %v2978 = vrot.slane %v301, 2
      %v2979 = vsel %vm2695, %v2976, %v2978
      %v2980 = vrot.slane %v302, 2
      %v2981 = vsel %vm2695, %v2978, %v2980
      %v2982 = vrot.slane %v303, 2
      %v2983 = vsel %vm2695, %v2980, %v2982
      %v2984 = vsel %vm772, %v2698, 0
      %v2986 = vsel %vm772, %v2700, 0
      %v2988 = vsel %vm772, %v2702, 0
      %v2990 = vsel %vm772, %v2704, 0
      %v2992 = vsel %vm772, %v2707, 0
      %v2994 = vsel %vm772, %v2709, 0
      %v2996 = vsel %vm772, %v2711, 0
      %v2998 = vsel %vm772, %v2713, 0
      %v3000 = vsel %vm772, %v2716, 0
      %v3002 = vsel %vm772, %v2718, 0
      %v3004 = vsel %vm772, %v2720, 0
      %v3006 = vsel %vm772, %v2722, 0
      %v3008 = vsel %vm772, %v2725, 0
      %v3010 = vsel %vm772, %v2727, 0
      %v3012 = vsel %vm772, %v2729, 0
      %v3014 = vsel %vm772, %v2731, 0
      %v3016 = vsel %vm772, %v2734, 0
      %v3018 = vsel %vm772, %v2736, 0
      %v3020 = vsel %vm772, %v2738, 0
      %v3022 = vsel %vm772, %v2740, 0
      %v3024 = vsel %vm772, %v2743, 0
      %v3026 = vsel %vm772, %v2745, 0
      %v3028 = vsel %vm772, %v2747, 0
      %v3030 = vsel %vm772, %v2749, 0
      %v3032 = vsel %vm772, %v2752, 0
      %v3034 = vsel %vm772, %v2754, 0
      %v3036 = vsel %vm772, %v2756, 0
      %v3038 = vsel %vm772, %v2758, 0
      %v3040 = vsel %vm772, %v2761, 0
      %v3042 = vsel %vm772, %v2763, 0
      %v3044 = vsel %vm772, %v2765, 0
      %v3046 = vsel %vm772, %v2767, 0
      %v3048 = vsel %vm772, %v2770, 0
      %v3050 = vsel %vm772, %v2772, 0
      %v3052 = vsel %vm772, %v2774, 0
      %v3054 = vsel %vm772, %v2776, 0
      %v3056 = vsel %vm772, %v2779, 0
      %v3058 = vsel %vm772, %v2781, 0
      %v3060 = vsel %vm772, %v2783, 0
      %v3062 = vsel %vm772, %v2785, 0
      %v3064 = vsel %vm772, %v2788, 0
      %v3066 = vsel %vm772, %v2790, 0
      %v3068 = vsel %vm772, %v2792, 0
      %v3070 = vsel %vm772, %v2794, 0
      %v3072 = vsel %vm772, %v2797, 0
      %v3074 = vsel %vm772, %v2799, 0
      %v3076 = vsel %vm772, %v2801, 0
      %v3078 = vsel %vm772, %v2803, 0
      %v3080 = vsel %vm772, %v2806, 0
      %v3082 = vsel %vm772, %v2808, 0
      %v3084 = vsel %vm772, %v2810, 0
      %v3086 = vsel %vm772, %v2812, 0
      %v3088 = vsel %vm772, %v2815, 0
      %v3090 = vsel %vm772, %v2817, 0
      %v3092 = vsel %vm772, %v2819, 0
      %v3094 = vsel %vm772, %v2821, 0
      %v3096 = vsel %vm772, %v2824, 0
      %v3098 = vsel %vm772, %v2826, 0
      %v3100 = vsel %vm772, %v2828, 0
      %v3102 = vsel %vm772, %v2830, 0
      %v3104 = vsel %vm772, %v2833, 0
      %v3106 = vsel %vm772, %v2835, 0
      %v3108 = vsel %vm772, %v2837, 0
      %v3110 = vsel %vm772, %v2839, 0
      %v3112 = vsel %vm772, %v2842, 0
      %v3114 = vsel %vm772, %v2844, 0
      %v3116 = vsel %vm772, %v2846, 0
      %v3118 = vsel %vm772, %v2848, 0
      %v3120 = vsel %vm772, %v2851, 0
      %v3122 = vsel %vm772, %v2853, 0
      %v3124 = vsel %vm772, %v2855, 0
      %v3126 = vsel %vm772, %v2857, 0
      %v3128 = vsel %vm772, %v2860, 0
      %v3130 = vsel %vm772, %v2862, 0
      %v3132 = vsel %vm772, %v2864, 0
      %v3134 = vsel %vm772, %v2866, 0
      %v3136 = vsel %vm772, %v2869, 0
      %v3138 = vsel %vm772, %v2871, 0
      %v3140 = vsel %vm772, %v2873, 0
      %v3142 = vsel %vm772, %v2875, 0
      %v3144 = vsel %vm772, %v2878, 0
      %v3146 = vsel %vm772, %v2880, 0
      %v3148 = vsel %vm772, %v2882, 0
      %v3150 = vsel %vm772, %v2884, 0
      %v3152 = vsel %vm772, %v2887, 0
      %v3154 = vsel %vm772, %v2889, 0
      %v3156 = vsel %vm772, %v2891, 0
      %v3158 = vsel %vm772, %v2893, 0
      %v3160 = vsel %vm772, %v2896, 0
      %v3162 = vsel %vm772, %v2898, 0
      %v3164 = vsel %vm772, %v2900, 0
      %v3166 = vsel %vm772, %v2902, 0
      %v3168 = vsel %vm772, %v2905, 0
      %v3170 = vsel %vm772, %v2907, 0
      %v3172 = vsel %vm772, %v2909, 0
      %v3174 = vsel %vm772, %v2911, 0
      %v3176 = vsel %vm772, %v2914, 0
      %v3178 = vsel %vm772, %v2916, 0
      %v3180 = vsel %vm772, %v2918, 0
      %v3182 = vsel %vm772, %v2920, 0
      %v3184 = vsel %vm772, %v2923, 0
      %v3186 = vsel %vm772, %v2925, 0
      %v3188 = vsel %vm772, %v2927, 0
      %v3190 = vsel %vm772, %v2929, 0
      %v3192 = vsel %vm772, %v2932, 0
      %v3194 = vsel %vm772, %v2934, 0
      %v3196 = vsel %vm772, %v2936, 0
      %v3198 = vsel %vm772, %v2938, 0
      %v3200 = vsel %vm772, %v2941, 0
      %v3202 = vsel %vm772, %v2943, 0
      %v3204 = vsel %vm772, %v2945, 0
      %v3206 = vsel %vm772, %v2947, 0
      %v3208 = vsel %vm772, %v2950, 0
      %v3210 = vsel %vm772, %v2952, 0
      %v3212 = vsel %vm772, %v2954, 0
      %v3214 = vsel %vm772, %v2956, 0
      %v3216 = vsel %vm772, %v2959, 0
      %v3218 = vsel %vm772, %v2961, 0
      %v3220 = vsel %vm772, %v2963, 0
      %v3222 = vsel %vm772, %v2965, 0
      %v3224 = vsel %vm772, %v2968, 0
      %v3226 = vsel %vm772, %v2970, 0
      %v3228 = vsel %vm772, %v2972, 0
      %v3230 = vsel %vm772, %v2974, 0
      %v3232 = vsel %vm772, %v2977, 0
      %v3234 = vsel %vm772, %v2979, 0
      %v3236 = vsel %vm772, %v2981, 0
      %v3238 = vsel %vm772, %v2983, 0
      %3240 = vmatprep.subr.mxu0 0.0
      %3241 = vmatpush1.msra.mxu0 0.0
      %3242 = vmatprep.subr.mxu0 0.0
      %3243 = vmatpush1.msra.mxu0 0.0
      %3244 = vmatprep.subr.mxu0 0.0
      %3245 = vmatpush1.msra.mxu0 0.0
      %3246 = vmatprep.subr.mxu0 0.0
      %3247 = vmatpush1.msra.mxu0 0.0
      %3248 = vmatprep.subr.mxu0 0.0
      %3249 = vmatpush1.msra.mxu0 0.0
      %3250 = vmatprep.subr.mxu0 0.0
      %3251 = vmatpush1.msra.mxu0 0.0
      %3252 = vmatprep.subr.mxu0 0.0
      %3253 = vmatpush1.msra.mxu0 0.0
      %3254 = vmatprep.subr.mxu0 0.0
      %3255 = vmatpush1.msra.mxu0 0.0
      %3256 = vmatprep.subr.mxu0 0.0
      %3257 = vmatpush1.msra.mxu0 0.0
      %3258 = vmatprep.subr.mxu0 0.0
      %3259 = vmatpush1.msra.mxu0 0.0
      %3260 = vmatprep.subr.mxu0 0.0
      %3261 = vmatpush1.msra.mxu0 0.0
      %3262 = vmatprep.subr.mxu0 0.0
      %3263 = vmatpush1.msra.mxu0 0.0
      %3264 = vmatprep.subr.mxu0 0.0
      %3265 = vmatpush1.msra.mxu0 0.0
      %3266 = vmatprep.subr.mxu0 0.0
      %3267 = vmatpush1.msra.mxu0 0.0
      %3268 = vmatprep.subr.mxu0 0.0
      %3269 = vmatpush1.msra.mxu0 0.0
      %3270 = vmatprep.subr.mxu0 0.0
      %3271 = vmatpush1.msra.mxu0 %v316
      %3272 = vmatprep.subr.mxu0 0.0
      %3273 = vmatpush2.msra.mxu0 0.0
      %3274 = vmatprep.subr.mxu0 0.0
      %3275 = vmatpush2.msra.mxu0 0.0
      %3276 = vmatprep.subr.mxu0 0.0
      %3277 = vmatpush2.msra.mxu0 0.0
      %3278 = vmatprep.subr.mxu0 0.0
      %3279 = vmatpush2.msra.mxu0 0.0
      %3280 = vmatprep.subr.mxu0 0.0
      %3281 = vmatpush2.msra.mxu0 0.0
      %3282 = vmatprep.subr.mxu0 0.0
      %3283 = vmatpush2.msra.mxu0 0.0
      %3284 = vmatprep.subr.mxu0 0.0
      %3285 = vmatpush2.msra.mxu0 0.0
      %3286 = vmatprep.subr.mxu0 0.0
      %3287 = vmatpush2.msra.mxu0 0.0
      %3288 = vmatprep.subr.mxu0 0.0
      %3289 = vmatpush2.msra.mxu0 0.0
      %3290 = vmatprep.subr.mxu0 0.0
      %3291 = vmatpush2.msra.mxu0 0.0
      %3292 = vmatprep.subr.mxu0 0.0
      %3293 = vmatpush2.msra.mxu0 0.0
      %3294 = vmatprep.subr.mxu0 0.0
      %3295 = vmatpush2.msra.mxu0 0.0
      %3296 = vmatprep.subr.mxu0 0.0
      %3297 = vmatpush2.msra.mxu0 0.0
      %3298 = vmatprep.subr.mxu0 0.0
      %3299 = vmatpush2.msra.mxu0 0.0
      %3300 = vmatprep.subr.mxu0 0.0
      %3301 = vmatpush2.msra.mxu0 0.0
      %3302 = vmatprep.subr.mxu0 0.0
      %3303 = vmatpush2.msra.mxu0 0.0
      %3304 = vmatprep.mubr.f32.mxu0 0.0
      %3305 = vmatmul.mubr.f32.gmra.mxu0 %v2984
      %v3306 = vpop.f32.mrf.mxu0
      %v3307 = vadd.f32 0.0, %v3306
      %v3308 = vpop.f32.mrf.mxu0
      %3309 = vmatprep.mubr.f32.mxu0 0.0
      %3310 = vmatmul.mubr.f32.gmra.mxu0 %v2986
      %v3311 = vpop.f32.mrf.mxu0
      %v3312 = vadd.f32 0.0, %v3311
      %v3313 = vpop.f32.mrf.mxu0
      %3314 = vmatprep.mubr.f32.mxu0 0.0
      %3315 = vmatmul.mubr.f32.gmra.mxu0 %v2988
      %v3316 = vpop.f32.mrf.mxu0
      %v3317 = vadd.f32 0.0, %v3316
      %v3318 = vpop.f32.mrf.mxu0
      %3319 = vmatprep.mubr.f32.mxu0 0.0
      %3320 = vmatmul.mubr.f32.gmra.mxu0 %v2990
      %v3321 = vpop.f32.mrf.mxu0
      %v3322 = vadd.f32 0.0, %v3321
      %v3323 = vpop.f32.mrf.mxu0
      %3324 = vmatprep.mubr.f32.mxu0 0.0
      %3325 = vmatmul.mubr.f32.gmra.mxu0 %v2992
      %v3326 = vpop.f32.mrf.mxu0
      %v3327 = vadd.f32 0.0, %v3326
      %v3328 = vpop.f32.mrf.mxu0
      %3329 = vmatprep.mubr.f32.mxu0 0.0
      %3330 = vmatmul.mubr.f32.gmra.mxu0 %v2994
      %v3331 = vpop.f32.mrf.mxu0
      %v3332 = vadd.f32 0.0, %v3331
      %v3333 = vpop.f32.mrf.mxu0
      %3334 = vmatprep.mubr.f32.mxu0 0.0
      %3335 = vmatmul.mubr.f32.gmra.mxu0 %v2996
      %v3336 = vpop.f32.mrf.mxu0
      %v3337 = vadd.f32 0.0, %v3336
      %v3338 = vpop.f32.mrf.mxu0
      %3339 = vmatprep.mubr.f32.mxu0 0.0
      %3340 = vmatmul.mubr.f32.gmra.mxu0 %v2998
      %v3341 = vpop.f32.mrf.mxu0
      %v3342 = vadd.f32 0.0, %v3341
      %v3343 = vpop.f32.mrf.mxu0
      %3344 = vmatprep.mubr.f32.mxu0 0.0
      %3345 = vmatmul.mubr.f32.gmra.mxu0 %v3000
      %v3346 = vpop.f32.mrf.mxu0
      %v3347 = vadd.f32 0.0, %v3346
      %v3348 = vpop.f32.mrf.mxu0
      %3349 = vmatprep.mubr.f32.mxu0 0.0
      %3350 = vmatmul.mubr.f32.gmra.mxu0 %v3002
      %v3351 = vpop.f32.mrf.mxu0
      %v3352 = vadd.f32 0.0, %v3351
      %v3353 = vpop.f32.mrf.mxu0
      %3354 = vmatprep.mubr.f32.mxu0 0.0
      %3355 = vmatmul.mubr.f32.gmra.mxu0 %v3004
      %v3356 = vpop.f32.mrf.mxu0
      %v3357 = vadd.f32 0.0, %v3356
      %v3358 = vpop.f32.mrf.mxu0
      %3359 = vmatprep.mubr.f32.mxu0 0.0
      %3360 = vmatmul.mubr.f32.gmra.mxu0 %v3006
      %v3361 = vpop.f32.mrf.mxu0
      %v3362 = vadd.f32 0.0, %v3361
      %v3363 = vpop.f32.mrf.mxu0
      %3364 = vmatprep.mubr.f32.mxu0 0.0
      %3365 = vmatmul.mubr.f32.gmra.mxu0 %v3008
      %v3366 = vpop.f32.mrf.mxu0
      %v3367 = vadd.f32 0.0, %v3366
      %v3368 = vpop.f32.mrf.mxu0
      %3369 = vmatprep.mubr.f32.mxu0 0.0
      %3370 = vmatmul.mubr.f32.gmra.mxu0 %v3010
      %v3371 = vpop.f32.mrf.mxu0
      %v3372 = vadd.f32 0.0, %v3371
      %v3373 = vpop.f32.mrf.mxu0
      %3374 = vmatprep.mubr.f32.mxu0 0.0
      %3375 = vmatmul.mubr.f32.gmra.mxu0 %v3012
      %v3376 = vpop.f32.mrf.mxu0
      %v3377 = vadd.f32 0.0, %v3376
      %v3378 = vpop.f32.mrf.mxu0
      %3379 = vmatprep.mubr.f32.mxu0 0.0
      %3380 = vmatmul.mubr.f32.gmra.mxu0 %v3014
      %v3381 = vpop.f32.mrf.mxu0
      %v3382 = vadd.f32 0.0, %v3381
      %v3383 = vpop.f32.mrf.mxu0
      %3384 = vmatprep.mubr.f32.mxu0 0.0
      %3385 = vmatmul.mubr.f32.gmra.mxu0 %v3016
      %v3386 = vpop.f32.mrf.mxu0
      %v3387 = vadd.f32 0.0, %v3386
      %v3388 = vpop.f32.mrf.mxu0
      %3389 = vmatprep.mubr.f32.mxu0 0.0
      %3390 = vmatmul.mubr.f32.gmra.mxu0 %v3018
      %v3391 = vpop.f32.mrf.mxu0
      %v3392 = vadd.f32 0.0, %v3391
      %v3393 = vpop.f32.mrf.mxu0
      %3394 = vmatprep.mubr.f32.mxu0 0.0
      %3395 = vmatmul.mubr.f32.gmra.mxu0 %v3020
      %v3396 = vpop.f32.mrf.mxu0
      %v3397 = vadd.f32 0.0, %v3396
      %v3398 = vpop.f32.mrf.mxu0
      %3399 = vmatprep.mubr.f32.mxu0 0.0
      %3400 = vmatmul.mubr.f32.gmra.mxu0 %v3022
      %v3401 = vpop.f32.mrf.mxu0
      %v3402 = vadd.f32 0.0, %v3401
      %v3403 = vpop.f32.mrf.mxu0
      %3404 = vmatprep.mubr.f32.mxu0 0.0
      %3405 = vmatmul.mubr.f32.gmra.mxu0 %v3024
      %v3406 = vpop.f32.mrf.mxu0
      %v3407 = vadd.f32 0.0, %v3406
      %v3408 = vpop.f32.mrf.mxu0
      %3409 = vmatprep.mubr.f32.mxu0 0.0
      %3410 = vmatmul.mubr.f32.gmra.mxu0 %v3026
      %v3411 = vpop.f32.mrf.mxu0
      %v3412 = vadd.f32 0.0, %v3411
      %v3413 = vpop.f32.mrf.mxu0
      %3414 = vmatprep.mubr.f32.mxu0 0.0
      %3415 = vmatmul.mubr.f32.gmra.mxu0 %v3028
      %v3416 = vpop.f32.mrf.mxu0
      %v3417 = vadd.f32 0.0, %v3416
      %v3418 = vpop.f32.mrf.mxu0
      %3419 = vmatprep.mubr.f32.mxu0 0.0
      %3420 = vmatmul.mubr.f32.gmra.mxu0 %v3030
      %v3421 = vpop.f32.mrf.mxu0
      %v3422 = vadd.f32 0.0, %v3421
      %v3423 = vpop.f32.mrf.mxu0
      %3424 = vmatprep.mubr.f32.mxu0 0.0
      %3425 = vmatmul.mubr.f32.gmra.mxu0 %v3032
      %v3426 = vpop.f32.mrf.mxu0
      %v3427 = vadd.f32 0.0, %v3426
      %v3428 = vpop.f32.mrf.mxu0
      %3429 = vmatprep.mubr.f32.mxu0 0.0
      %3430 = vmatmul.mubr.f32.gmra.mxu0 %v3034
      %v3431 = vpop.f32.mrf.mxu0
      %v3432 = vadd.f32 0.0, %v3431
      %v3433 = vpop.f32.mrf.mxu0
      %3434 = vmatprep.mubr.f32.mxu0 0.0
      %3435 = vmatmul.mubr.f32.gmra.mxu0 %v3036
      %v3436 = vpop.f32.mrf.mxu0
      %v3437 = vadd.f32 0.0, %v3436
      %v3438 = vpop.f32.mrf.mxu0
      %3439 = vmatprep.mubr.f32.mxu0 0.0
      %3440 = vmatmul.mubr.f32.gmra.mxu0 %v3038
      %v3441 = vpop.f32.mrf.mxu0
      %v3442 = vadd.f32 0.0, %v3441
      %v3443 = vpop.f32.mrf.mxu0
      %3444 = vmatprep.mubr.f32.mxu0 0.0
      %3445 = vmatmul.mubr.f32.gmra.mxu0 %v3040
      %v3446 = vpop.f32.mrf.mxu0
      %v3447 = vadd.f32 0.0, %v3446
      %v3448 = vpop.f32.mrf.mxu0
      %3449 = vmatprep.mubr.f32.mxu0 0.0
      %3450 = vmatmul.mubr.f32.gmra.mxu0 %v3042
      %v3451 = vpop.f32.mrf.mxu0
      %v3452 = vadd.f32 0.0, %v3451
      %v3453 = vpop.f32.mrf.mxu0
      %3454 = vmatprep.mubr.f32.mxu0 0.0
      %3455 = vmatmul.mubr.f32.gmra.mxu0 %v3044
      %v3456 = vpop.f32.mrf.mxu0
      %v3457 = vadd.f32 0.0, %v3456
      %v3458 = vpop.f32.mrf.mxu0
      %3459 = vmatprep.mubr.f32.mxu0 0.0
      %3460 = vmatmul.mubr.f32.gmra.mxu0 %v3046
      %v3461 = vpop.f32.mrf.mxu0
      %v3462 = vadd.f32 0.0, %v3461
      %v3463 = vpop.f32.mrf.mxu0
      %3464 = vmatprep.mubr.f32.mxu0 0.0
      %3465 = vmatmul.mubr.f32.gmra.mxu0 %v3048
      %v3466 = vpop.f32.mrf.mxu0
      %v3467 = vadd.f32 0.0, %v3466
      %v3468 = vpop.f32.mrf.mxu0
      %3469 = vmatprep.mubr.f32.mxu0 0.0
      %3470 = vmatmul.mubr.f32.gmra.mxu0 %v3050
      %v3471 = vpop.f32.mrf.mxu0
      %v3472 = vadd.f32 0.0, %v3471
      %v3473 = vpop.f32.mrf.mxu0
      %3474 = vmatprep.mubr.f32.mxu0 0.0
      %3475 = vmatmul.mubr.f32.gmra.mxu0 %v3052
      %v3476 = vpop.f32.mrf.mxu0
      %v3477 = vadd.f32 0.0, %v3476
      %v3478 = vpop.f32.mrf.mxu0
      %3479 = vmatprep.mubr.f32.mxu0 0.0
      %3480 = vmatmul.mubr.f32.gmra.mxu0 %v3054
      %v3481 = vpop.f32.mrf.mxu0
      %v3482 = vadd.f32 0.0, %v3481
      %v3483 = vpop.f32.mrf.mxu0
      %3484 = vmatprep.mubr.f32.mxu0 0.0
      %3485 = vmatmul.mubr.f32.gmra.mxu0 %v3056
      %v3486 = vpop.f32.mrf.mxu0
      %v3487 = vadd.f32 0.0, %v3486
      %v3488 = vpop.f32.mrf.mxu0
      %3489 = vmatprep.mubr.f32.mxu0 0.0
      %3490 = vmatmul.mubr.f32.gmra.mxu0 %v3058
      %v3491 = vpop.f32.mrf.mxu0
      %v3492 = vadd.f32 0.0, %v3491
      %v3493 = vpop.f32.mrf.mxu0
      %3494 = vmatprep.mubr.f32.mxu0 0.0
      %3495 = vmatmul.mubr.f32.gmra.mxu0 %v3060
      %v3496 = vpop.f32.mrf.mxu0
      %v3497 = vadd.f32 0.0, %v3496
      %v3498 = vpop.f32.mrf.mxu0
      %3499 = vmatprep.mubr.f32.mxu0 0.0
      %3500 = vmatmul.mubr.f32.gmra.mxu0 %v3062
      %v3501 = vpop.f32.mrf.mxu0
      %v3502 = vadd.f32 0.0, %v3501
      %v3503 = vpop.f32.mrf.mxu0
      %3504 = vmatprep.mubr.f32.mxu0 0.0
      %3505 = vmatmul.mubr.f32.gmra.mxu0 %v3064
      %v3506 = vpop.f32.mrf.mxu0
      %v3507 = vadd.f32 0.0, %v3506
      %v3508 = vpop.f32.mrf.mxu0
      %3509 = vmatprep.mubr.f32.mxu0 0.0
      %3510 = vmatmul.mubr.f32.gmra.mxu0 %v3066
      %v3511 = vpop.f32.mrf.mxu0
      %v3512 = vadd.f32 0.0, %v3511
      %v3513 = vpop.f32.mrf.mxu0
      %3514 = vmatprep.mubr.f32.mxu0 0.0
      %3515 = vmatmul.mubr.f32.gmra.mxu0 %v3068
      %v3516 = vpop.f32.mrf.mxu0
      %v3517 = vadd.f32 0.0, %v3516
      %v3518 = vpop.f32.mrf.mxu0
      %3519 = vmatprep.mubr.f32.mxu0 0.0
      %3520 = vmatmul.mubr.f32.gmra.mxu0 %v3070
      %v3521 = vpop.f32.mrf.mxu0
      %v3522 = vadd.f32 0.0, %v3521
      %v3523 = vpop.f32.mrf.mxu0
      %3524 = vmatprep.mubr.f32.mxu0 0.0
      %3525 = vmatmul.mubr.f32.gmra.mxu0 %v3072
      %v3526 = vpop.f32.mrf.mxu0
      %v3527 = vadd.f32 0.0, %v3526
      %v3528 = vpop.f32.mrf.mxu0
      %3529 = vmatprep.mubr.f32.mxu0 0.0
      %3530 = vmatmul.mubr.f32.gmra.mxu0 %v3074
      %v3531 = vpop.f32.mrf.mxu0
      %v3532 = vadd.f32 0.0, %v3531
      %v3533 = vpop.f32.mrf.mxu0
      %3534 = vmatprep.mubr.f32.mxu0 0.0
      %3535 = vmatmul.mubr.f32.gmra.mxu0 %v3076
      %v3536 = vpop.f32.mrf.mxu0
      %v3537 = vadd.f32 0.0, %v3536
      %v3538 = vpop.f32.mrf.mxu0
      %3539 = vmatprep.mubr.f32.mxu0 0.0
      %3540 = vmatmul.mubr.f32.gmra.mxu0 %v3078
      %v3541 = vpop.f32.mrf.mxu0
      %v3542 = vadd.f32 0.0, %v3541
      %v3543 = vpop.f32.mrf.mxu0
      %3544 = vmatprep.mubr.f32.mxu0 0.0
      %3545 = vmatmul.mubr.f32.gmra.mxu0 %v3080
      %v3546 = vpop.f32.mrf.mxu0
      %v3547 = vadd.f32 0.0, %v3546
      %v3548 = vpop.f32.mrf.mxu0
      %3549 = vmatprep.mubr.f32.mxu0 0.0
      %3550 = vmatmul.mubr.f32.gmra.mxu0 %v3082
      %v3551 = vpop.f32.mrf.mxu0
      %v3552 = vadd.f32 0.0, %v3551
      %v3553 = vpop.f32.mrf.mxu0
      %3554 = vmatprep.mubr.f32.mxu0 0.0
      %3555 = vmatmul.mubr.f32.gmra.mxu0 %v3084
      %v3556 = vpop.f32.mrf.mxu0
      %v3557 = vadd.f32 0.0, %v3556
      %v3558 = vpop.f32.mrf.mxu0
      %3559 = vmatprep.mubr.f32.mxu0 0.0
      %3560 = vmatmul.mubr.f32.gmra.mxu0 %v3086
      %v3561 = vpop.f32.mrf.mxu0
      %v3562 = vadd.f32 0.0, %v3561
      %v3563 = vpop.f32.mrf.mxu0
      %3564 = vmatprep.mubr.f32.mxu0 0.0
      %3565 = vmatmul.mubr.f32.gmra.mxu0 %v3088
      %v3566 = vpop.f32.mrf.mxu0
      %v3567 = vadd.f32 0.0, %v3566
      %v3568 = vpop.f32.mrf.mxu0
      %3569 = vmatprep.mubr.f32.mxu0 0.0
      %3570 = vmatmul.mubr.f32.gmra.mxu0 %v3090
      %v3571 = vpop.f32.mrf.mxu0
      %v3572 = vadd.f32 0.0, %v3571
      %v3573 = vpop.f32.mrf.mxu0
      %3574 = vmatprep.mubr.f32.mxu0 0.0
      %3575 = vmatmul.mubr.f32.gmra.mxu0 %v3092
      %v3576 = vpop.f32.mrf.mxu0
      %v3577 = vadd.f32 0.0, %v3576
      %v3578 = vpop.f32.mrf.mxu0
      %3579 = vmatprep.mubr.f32.mxu0 0.0
      %3580 = vmatmul.mubr.f32.gmra.mxu0 %v3094
      %v3581 = vpop.f32.mrf.mxu0
      %v3582 = vadd.f32 0.0, %v3581
      %v3583 = vpop.f32.mrf.mxu0
      %3584 = vmatprep.mubr.f32.mxu0 0.0
      %3585 = vmatmul.mubr.f32.gmra.mxu0 %v3096
      %v3586 = vpop.f32.mrf.mxu0
      %v3587 = vadd.f32 0.0, %v3586
      %v3588 = vpop.f32.mrf.mxu0
      %3589 = vmatprep.mubr.f32.mxu0 0.0
      %3590 = vmatmul.mubr.f32.gmra.mxu0 %v3098
      %v3591 = vpop.f32.mrf.mxu0
      %v3592 = vadd.f32 0.0, %v3591
      %v3593 = vpop.f32.mrf.mxu0
      %3594 = vmatprep.mubr.f32.mxu0 0.0
      %3595 = vmatmul.mubr.f32.gmra.mxu0 %v3100
      %v3596 = vpop.f32.mrf.mxu0
      %v3597 = vadd.f32 0.0, %v3596
      %v3598 = vpop.f32.mrf.mxu0
      %3599 = vmatprep.mubr.f32.mxu0 0.0
      %3600 = vmatmul.mubr.f32.gmra.mxu0 %v3102
      %v3601 = vpop.f32.mrf.mxu0
      %v3602 = vadd.f32 0.0, %v3601
      %v3603 = vpop.f32.mrf.mxu0
      %3604 = vmatprep.mubr.f32.mxu0 0.0
      %3605 = vmatmul.mubr.f32.gmra.mxu0 %v3104
      %v3606 = vpop.f32.mrf.mxu0
      %v3607 = vadd.f32 0.0, %v3606
      %v3608 = vpop.f32.mrf.mxu0
      %3609 = vmatprep.mubr.f32.mxu0 0.0
      %3610 = vmatmul.mubr.f32.gmra.mxu0 %v3106
      %v3611 = vpop.f32.mrf.mxu0
      %v3612 = vadd.f32 0.0, %v3611
      %v3613 = vpop.f32.mrf.mxu0
      %3614 = vmatprep.mubr.f32.mxu0 0.0
      %3615 = vmatmul.mubr.f32.gmra.mxu0 %v3108
      %v3616 = vpop.f32.mrf.mxu0
      %v3617 = vadd.f32 0.0, %v3616
      %v3618 = vpop.f32.mrf.mxu0
      %3619 = vmatprep.mubr.f32.mxu0 0.0
      %3620 = vmatmul.mubr.f32.gmra.mxu0 %v3110
      %v3621 = vpop.f32.mrf.mxu0
      %v3622 = vadd.f32 0.0, %v3621
      %v3623 = vpop.f32.mrf.mxu0
      %3624 = vmatprep.mubr.f32.mxu0 0.0
      %3625 = vmatmul.mubr.f32.gmra.mxu0 %v3112
      %v3626 = vpop.f32.mrf.mxu0
      %v3627 = vadd.f32 0.0, %v3626
      %v3628 = vpop.f32.mrf.mxu0
      %3629 = vmatprep.mubr.f32.mxu0 0.0
      %3630 = vmatmul.mubr.f32.gmra.mxu0 %v3114
      %v3631 = vpop.f32.mrf.mxu0
      %v3632 = vadd.f32 0.0, %v3631
      %v3633 = vpop.f32.mrf.mxu0
      %3634 = vmatprep.mubr.f32.mxu0 0.0
      %3635 = vmatmul.mubr.f32.gmra.mxu0 %v3116
      %v3636 = vpop.f32.mrf.mxu0
      %v3637 = vadd.f32 0.0, %v3636
      %v3638 = vpop.f32.mrf.mxu0
      %3639 = vmatprep.mubr.f32.mxu0 0.0
      %3640 = vmatmul.mubr.f32.gmra.mxu0 %v3118
      %v3641 = vpop.f32.mrf.mxu0
      %v3642 = vadd.f32 0.0, %v3641
      %v3643 = vpop.f32.mrf.mxu0
      %3644 = vmatprep.mubr.f32.mxu0 0.0
      %3645 = vmatmul.mubr.f32.gmra.mxu0 %v3120
      %v3646 = vpop.f32.mrf.mxu0
      %v3647 = vadd.f32 0.0, %v3646
      %v3648 = vpop.f32.mrf.mxu0
      %3649 = vmatprep.mubr.f32.mxu0 0.0
      %3650 = vmatmul.mubr.f32.gmra.mxu0 %v3122
      %v3651 = vpop.f32.mrf.mxu0
      %v3652 = vadd.f32 0.0, %v3651
      %v3653 = vpop.f32.mrf.mxu0
      %3654 = vmatprep.mubr.f32.mxu0 0.0
      %3655 = vmatmul.mubr.f32.gmra.mxu0 %v3124
      %v3656 = vpop.f32.mrf.mxu0
      %v3657 = vadd.f32 0.0, %v3656
      %v3658 = vpop.f32.mrf.mxu0
      %3659 = vmatprep.mubr.f32.mxu0 0.0
      %3660 = vmatmul.mubr.f32.gmra.mxu0 %v3126
      %v3661 = vpop.f32.mrf.mxu0
      %v3662 = vadd.f32 0.0, %v3661
      %v3663 = vpop.f32.mrf.mxu0
      %3664 = vmatprep.mubr.f32.mxu0 0.0
      %3665 = vmatmul.mubr.f32.gmra.mxu0 %v3128
      %v3666 = vpop.f32.mrf.mxu0
      %v3667 = vadd.f32 0.0, %v3666
      %v3668 = vpop.f32.mrf.mxu0
      %3669 = vmatprep.mubr.f32.mxu0 0.0
      %3670 = vmatmul.mubr.f32.gmra.mxu0 %v3130
      %v3671 = vpop.f32.mrf.mxu0
      %v3672 = vadd.f32 0.0, %v3671
      %v3673 = vpop.f32.mrf.mxu0
      %3674 = vmatprep.mubr.f32.mxu0 0.0
      %3675 = vmatmul.mubr.f32.gmra.mxu0 %v3132
      %v3676 = vpop.f32.mrf.mxu0
      %v3677 = vadd.f32 0.0, %v3676
      %v3678 = vpop.f32.mrf.mxu0
      %3679 = vmatprep.mubr.f32.mxu0 0.0
      %3680 = vmatmul.mubr.f32.gmra.mxu0 %v3134
      %v3681 = vpop.f32.mrf.mxu0
      %v3682 = vadd.f32 0.0, %v3681
      %v3683 = vpop.f32.mrf.mxu0
      %3684 = vmatprep.mubr.f32.mxu0 0.0
      %3685 = vmatmul.mubr.f32.gmra.mxu0 %v3136
      %v3686 = vpop.f32.mrf.mxu0
      %v3687 = vadd.f32 0.0, %v3686
      %v3688 = vpop.f32.mrf.mxu0
      %3689 = vmatprep.mubr.f32.mxu0 0.0
      %3690 = vmatmul.mubr.f32.gmra.mxu0 %v3138
      %v3691 = vpop.f32.mrf.mxu0
      %v3692 = vadd.f32 0.0, %v3691
      %v3693 = vpop.f32.mrf.mxu0
      %3694 = vmatprep.mubr.f32.mxu0 0.0
      %3695 = vmatmul.mubr.f32.gmra.mxu0 %v3140
      %v3696 = vpop.f32.mrf.mxu0
      %v3697 = vadd.f32 0.0, %v3696
      %v3698 = vpop.f32.mrf.mxu0
      %3699 = vmatprep.mubr.f32.mxu0 0.0
      %3700 = vmatmul.mubr.f32.gmra.mxu0 %v3142
      %v3701 = vpop.f32.mrf.mxu0
      %v3702 = vadd.f32 0.0, %v3701
      %v3703 = vpop.f32.mrf.mxu0
      %3704 = vmatprep.mubr.f32.mxu0 0.0
      %3705 = vmatmul.mubr.f32.gmra.mxu0 %v3144
      %v3706 = vpop.f32.mrf.mxu0
      %v3707 = vadd.f32 0.0, %v3706
      %v3708 = vpop.f32.mrf.mxu0
      %3709 = vmatprep.mubr.f32.mxu0 0.0
      %3710 = vmatmul.mubr.f32.gmra.mxu0 %v3146
      %v3711 = vpop.f32.mrf.mxu0
      %v3712 = vadd.f32 0.0, %v3711
      %v3713 = vpop.f32.mrf.mxu0
      %3714 = vmatprep.mubr.f32.mxu0 0.0
      %3715 = vmatmul.mubr.f32.gmra.mxu0 %v3148
      %v3716 = vpop.f32.mrf.mxu0
      %v3717 = vadd.f32 0.0, %v3716
      %v3718 = vpop.f32.mrf.mxu0
      %3719 = vmatprep.mubr.f32.mxu0 0.0
      %3720 = vmatmul.mubr.f32.gmra.mxu0 %v3150
      %v3721 = vpop.f32.mrf.mxu0
      %v3722 = vadd.f32 0.0, %v3721
      %v3723 = vpop.f32.mrf.mxu0
      %3724 = vmatprep.mubr.f32.mxu0 0.0
      %3725 = vmatmul.mubr.f32.gmra.mxu0 %v3152
      %v3726 = vpop.f32.mrf.mxu0
      %v3727 = vadd.f32 0.0, %v3726
      %v3728 = vpop.f32.mrf.mxu0
      %3729 = vmatprep.mubr.f32.mxu0 0.0
      %3730 = vmatmul.mubr.f32.gmra.mxu0 %v3154
      %v3731 = vpop.f32.mrf.mxu0
      %v3732 = vadd.f32 0.0, %v3731
      %v3733 = vpop.f32.mrf.mxu0
      %3734 = vmatprep.mubr.f32.mxu0 0.0
      %3735 = vmatmul.mubr.f32.gmra.mxu0 %v3156
      %v3736 = vpop.f32.mrf.mxu0
      %v3737 = vadd.f32 0.0, %v3736
      %v3738 = vpop.f32.mrf.mxu0
      %3739 = vmatprep.mubr.f32.mxu0 0.0
      %3740 = vmatmul.mubr.f32.gmra.mxu0 %v3158
      %v3741 = vpop.f32.mrf.mxu0
      %v3742 = vadd.f32 0.0, %v3741
      %v3743 = vpop.f32.mrf.mxu0
      %3744 = vmatprep.mubr.f32.mxu0 0.0
      %3745 = vmatmul.mubr.f32.gmra.mxu0 %v3160
      %v3746 = vpop.f32.mrf.mxu0
      %v3747 = vadd.f32 0.0, %v3746
      %v3748 = vpop.f32.mrf.mxu0
      %3749 = vmatprep.mubr.f32.mxu0 0.0
      %3750 = vmatmul.mubr.f32.gmra.mxu0 %v3162
      %v3751 = vpop.f32.mrf.mxu0
      %v3752 = vadd.f32 0.0, %v3751
      %v3753 = vpop.f32.mrf.mxu0
      %3754 = vmatprep.mubr.f32.mxu0 0.0
      %3755 = vmatmul.mubr.f32.gmra.mxu0 %v3164
      %v3756 = vpop.f32.mrf.mxu0
      %v3757 = vadd.f32 0.0, %v3756
      %v3758 = vpop.f32.mrf.mxu0
      %3759 = vmatprep.mubr.f32.mxu0 0.0
      %3760 = vmatmul.mubr.f32.gmra.mxu0 %v3166
      %v3761 = vpop.f32.mrf.mxu0
      %v3762 = vadd.f32 0.0, %v3761
      %v3763 = vpop.f32.mrf.mxu0
      %3764 = vmatprep.mubr.f32.mxu0 0.0
      %3765 = vmatmul.mubr.f32.gmra.mxu0 %v3168
      %v3766 = vpop.f32.mrf.mxu0
      %v3767 = vadd.f32 0.0, %v3766
      %v3768 = vpop.f32.mrf.mxu0
      %3769 = vmatprep.mubr.f32.mxu0 0.0
      %3770 = vmatmul.mubr.f32.gmra.mxu0 %v3170
      %v3771 = vpop.f32.mrf.mxu0
      %v3772 = vadd.f32 0.0, %v3771
      %v3773 = vpop.f32.mrf.mxu0
      %3774 = vmatprep.mubr.f32.mxu0 0.0
      %3775 = vmatmul.mubr.f32.gmra.mxu0 %v3172
      %v3776 = vpop.f32.mrf.mxu0
      %v3777 = vadd.f32 0.0, %v3776
      %v3778 = vpop.f32.mrf.mxu0
      %3779 = vmatprep.mubr.f32.mxu0 0.0
      %3780 = vmatmul.mubr.f32.gmra.mxu0 %v3174
      %v3781 = vpop.f32.mrf.mxu0
      %v3782 = vadd.f32 0.0, %v3781
      %v3783 = vpop.f32.mrf.mxu0
      %3784 = vmatprep.mubr.f32.mxu0 0.0
      %3785 = vmatmul.mubr.f32.gmra.mxu0 %v3176
      %v3786 = vpop.f32.mrf.mxu0
      %v3787 = vadd.f32 0.0, %v3786
      %v3788 = vpop.f32.mrf.mxu0
      %3789 = vmatprep.mubr.f32.mxu0 0.0
      %3790 = vmatmul.mubr.f32.gmra.mxu0 %v3178
      %v3791 = vpop.f32.mrf.mxu0
      %v3792 = vadd.f32 0.0, %v3791
      %v3793 = vpop.f32.mrf.mxu0
      %3794 = vmatprep.mubr.f32.mxu0 0.0
      %3795 = vmatmul.mubr.f32.gmra.mxu0 %v3180
      %v3796 = vpop.f32.mrf.mxu0
      %v3797 = vadd.f32 0.0, %v3796
      %v3798 = vpop.f32.mrf.mxu0
      %3799 = vmatprep.mubr.f32.mxu0 0.0
      %3800 = vmatmul.mubr.f32.gmra.mxu0 %v3182
      %v3801 = vpop.f32.mrf.mxu0
      %v3802 = vadd.f32 0.0, %v3801
      %v3803 = vpop.f32.mrf.mxu0
      %3804 = vmatprep.mubr.f32.mxu0 0.0
      %3805 = vmatmul.mubr.f32.gmra.mxu0 %v3184
      %v3806 = vpop.f32.mrf.mxu0
      %v3807 = vadd.f32 0.0, %v3806
      %v3808 = vpop.f32.mrf.mxu0
      %3809 = vmatprep.mubr.f32.mxu0 0.0
      %3810 = vmatmul.mubr.f32.gmra.mxu0 %v3186
      %v3811 = vpop.f32.mrf.mxu0
      %v3812 = vadd.f32 0.0, %v3811
      %v3813 = vpop.f32.mrf.mxu0
      %3814 = vmatprep.mubr.f32.mxu0 0.0
      %3815 = vmatmul.mubr.f32.gmra.mxu0 %v3188
      %v3816 = vpop.f32.mrf.mxu0
      %v3817 = vadd.f32 0.0, %v3816
      %v3818 = vpop.f32.mrf.mxu0
      %3819 = vmatprep.mubr.f32.mxu0 0.0
      %3820 = vmatmul.mubr.f32.gmra.mxu0 %v3190
      %v3821 = vpop.f32.mrf.mxu0
      %v3822 = vadd.f32 0.0, %v3821
      %v3823 = vpop.f32.mrf.mxu0
      %3824 = vmatprep.mubr.f32.mxu0 0.0
      %3825 = vmatmul.mubr.f32.gmra.mxu0 %v3192
      %v3826 = vpop.f32.mrf.mxu0
      %v3827 = vadd.f32 0.0, %v3826
      %v3828 = vpop.f32.mrf.mxu0
      %3829 = vmatprep.mubr.f32.mxu0 0.0
      %3830 = vmatmul.mubr.f32.gmra.mxu0 %v3194
      %v3831 = vpop.f32.mrf.mxu0
      %v3832 = vadd.f32 0.0, %v3831
      %v3833 = vpop.f32.mrf.mxu0
      %3834 = vmatprep.mubr.f32.mxu0 0.0
      %3835 = vmatmul.mubr.f32.gmra.mxu0 %v3196
      %v3836 = vpop.f32.mrf.mxu0
      %v3837 = vadd.f32 0.0, %v3836
      %v3838 = vpop.f32.mrf.mxu0
      %3839 = vmatprep.mubr.f32.mxu0 0.0
      %3840 = vmatmul.mubr.f32.gmra.mxu0 %v3198
      %v3841 = vpop.f32.mrf.mxu0
      %v3842 = vadd.f32 0.0, %v3841
      %v3843 = vpop.f32.mrf.mxu0
      %3844 = vmatprep.mubr.f32.mxu0 0.0
      %3845 = vmatmul.mubr.f32.gmra.mxu0 %v3200
      %v3846 = vpop.f32.mrf.mxu0
      %v3847 = vadd.f32 0.0, %v3846
      %v3848 = vpop.f32.mrf.mxu0
      %3849 = vmatprep.mubr.f32.mxu0 0.0
      %3850 = vmatmul.mubr.f32.gmra.mxu0 %v3202
      %v3851 = vpop.f32.mrf.mxu0
      %v3852 = vadd.f32 0.0, %v3851
      %v3853 = vpop.f32.mrf.mxu0
      %3854 = vmatprep.mubr.f32.mxu0 0.0
      %3855 = vmatmul.mubr.f32.gmra.mxu0 %v3204
      %v3856 = vpop.f32.mrf.mxu0
      %v3857 = vadd.f32 0.0, %v3856
      %v3858 = vpop.f32.mrf.mxu0
      %3859 = vmatprep.mubr.f32.mxu0 0.0
      %3860 = vmatmul.mubr.f32.gmra.mxu0 %v3206
      %v3861 = vpop.f32.mrf.mxu0
      %v3862 = vadd.f32 0.0, %v3861
      %v3863 = vpop.f32.mrf.mxu0
      %3864 = vmatprep.mubr.f32.mxu0 0.0
      %3865 = vmatmul.mubr.f32.gmra.mxu0 %v3208
      %v3866 = vpop.f32.mrf.mxu0
      %v3867 = vadd.f32 0.0, %v3866
      %v3868 = vpop.f32.mrf.mxu0
      %3869 = vmatprep.mubr.f32.mxu0 0.0
      %3870 = vmatmul.mubr.f32.gmra.mxu0 %v3210
      %v3871 = vpop.f32.mrf.mxu0
      %v3872 = vadd.f32 0.0, %v3871
      %v3873 = vpop.f32.mrf.mxu0
      %3874 = vmatprep.mubr.f32.mxu0 0.0
      %3875 = vmatmul.mubr.f32.gmra.mxu0 %v3212
      %v3876 = vpop.f32.mrf.mxu0
      %v3877 = vadd.f32 0.0, %v3876
      %v3878 = vpop.f32.mrf.mxu0
      %3879 = vmatprep.mubr.f32.mxu0 0.0
      %3880 = vmatmul.mubr.f32.gmra.mxu0 %v3214
      %v3881 = vpop.f32.mrf.mxu0
      %v3882 = vadd.f32 0.0, %v3881
      %v3883 = vpop.f32.mrf.mxu0
      %3884 = vmatprep.mubr.f32.mxu0 0.0
      %3885 = vmatmul.mubr.f32.gmra.mxu0 %v3216
      %v3886 = vpop.f32.mrf.mxu0
      %v3887 = vadd.f32 0.0, %v3886
      %v3888 = vpop.f32.mrf.mxu0
      %3889 = vmatprep.mubr.f32.mxu0 0.0
      %3890 = vmatmul.mubr.f32.gmra.mxu0 %v3218
      %v3891 = vpop.f32.mrf.mxu0
      %v3892 = vadd.f32 0.0, %v3891
      %v3893 = vpop.f32.mrf.mxu0
      %3894 = vmatprep.mubr.f32.mxu0 0.0
      %3895 = vmatmul.mubr.f32.gmra.mxu0 %v3220
      %v3896 = vpop.f32.mrf.mxu0
      %v3897 = vadd.f32 0.0, %v3896
      %v3898 = vpop.f32.mrf.mxu0
      %3899 = vmatprep.mubr.f32.mxu0 0.0
      %3900 = vmatmul.mubr.f32.gmra.mxu0 %v3222
      %v3901 = vpop.f32.mrf.mxu0
      %v3902 = vadd.f32 0.0, %v3901
      %v3903 = vpop.f32.mrf.mxu0
      %3904 = vmatprep.mubr.f32.mxu0 0.0
      %3905 = vmatmul.mubr.f32.gmra.mxu0 %v3224
      %v3906 = vpop.f32.mrf.mxu0
      %v3907 = vadd.f32 0.0, %v3906
      %v3908 = vpop.f32.mrf.mxu0
      %3909 = vmatprep.mubr.f32.mxu0 0.0
      %3910 = vmatmul.mubr.f32.gmra.mxu0 %v3226
      %v3911 = vpop.f32.mrf.mxu0
      %v3912 = vadd.f32 0.0, %v3911
      %v3913 = vpop.f32.mrf.mxu0
      %3914 = vmatprep.mubr.f32.mxu0 0.0
      %3915 = vmatmul.mubr.f32.gmra.mxu0 %v3228
      %v3916 = vpop.f32.mrf.mxu0
      %v3917 = vadd.f32 0.0, %v3916
      %v3918 = vpop.f32.mrf.mxu0
      %3919 = vmatprep.mubr.f32.mxu0 0.0
      %3920 = vmatmul.mubr.f32.gmra.mxu0 %v3230
      %v3921 = vpop.f32.mrf.mxu0
      %v3922 = vadd.f32 0.0, %v3921
      %v3923 = vpop.f32.mrf.mxu0
      %3924 = vmatprep.mubr.f32.mxu0 0.0
      %3925 = vmatmul.mubr.f32.gmra.mxu0 %v3232
      %v3926 = vpop.f32.mrf.mxu0
      %v3927 = vadd.f32 0.0, %v3926
      %v3928 = vpop.f32.mrf.mxu0
      %3929 = vmatprep.mubr.f32.mxu0 0.0
      %3930 = vmatmul.mubr.f32.gmra.mxu0 %v3234
      %v3931 = vpop.f32.mrf.mxu0
      %v3932 = vadd.f32 0.0, %v3931
      %v3933 = vpop.f32.mrf.mxu0
      %3934 = vmatprep.mubr.f32.mxu0 0.0
      %3935 = vmatmul.mubr.f32.gmra.mxu0 %v3236
      %v3936 = vpop.f32.mrf.mxu0
      %v3937 = vadd.f32 0.0, %v3936
      %v3938 = vpop.f32.mrf.mxu0
      %3939 = vmatprep.mubr.f32.mxu0 0.0
      %3940 = vmatmul.mubr.f32.gmra.mxu0 %v3238
      %v3941 = vpop.f32.mrf.mxu0
      %v3942 = vadd.f32 0.0, %v3941
      %v3943 = vpop.f32.mrf.mxu0
      %3944 = vdwg.mxu0
      %v3945 = vadd.f32 %v2057, %v3307
      %v3946 = vadd.f32 %v2062, %v3312
      %v3947 = vadd.f32 %v2067, %v3317
      %v3948 = vadd.f32 %v2072, %v3322
      %v3949 = vadd.f32 %v2077, %v3327
      %v3950 = vadd.f32 %v2082, %v3332
      %v3951 = vadd.f32 %v2087, %v3337
      %v3952 = vadd.f32 %v2092, %v3342
      %v3953 = vadd.f32 %v2097, %v3347
      %v3954 = vadd.f32 %v2102, %v3352
      %v3955 = vadd.f32 %v2107, %v3357
      %v3956 = vadd.f32 %v2112, %v3362
      %v3957 = vadd.f32 %v2117, %v3367
      %v3958 = vadd.f32 %v2122, %v3372
      %v3959 = vadd.f32 %v2127, %v3377
      %v3960 = vadd.f32 %v2132, %v3382
      %v3961 = vadd.f32 %v2137, %v3387
      %v3962 = vadd.f32 %v2142, %v3392
      %v3963 = vadd.f32 %v2147, %v3397
      %v3964 = vadd.f32 %v2152, %v3402
      %v3965 = vadd.f32 %v2157, %v3407
      %v3966 = vadd.f32 %v2162, %v3412
      %v3967 = vadd.f32 %v2167, %v3417
      %v3968 = vadd.f32 %v2172, %v3422
      %v3969 = vadd.f32 %v2177, %v3427
      %v3970 = vadd.f32 %v2182, %v3432
      %v3971 = vadd.f32 %v2187, %v3437
      %v3972 = vadd.f32 %v2192, %v3442
      %v3973 = vadd.f32 %v2197, %v3447
      %v3974 = vadd.f32 %v2202, %v3452
      %v3975 = vadd.f32 %v2207, %v3457
      %v3976 = vadd.f32 %v2212, %v3462
      %v3977 = vadd.f32 %v2217, %v3467
      %v3978 = vadd.f32 %v2222, %v3472
      %v3979 = vadd.f32 %v2227, %v3477
      %v3980 = vadd.f32 %v2232, %v3482
      %v3981 = vadd.f32 %v2237, %v3487
      %v3982 = vadd.f32 %v2242, %v3492
      %v3983 = vadd.f32 %v2247, %v3497
      %v3984 = vadd.f32 %v2252, %v3502
      %v3985 = vadd.f32 %v2257, %v3507
      %v3986 = vadd.f32 %v2262, %v3512
      %v3987 = vadd.f32 %v2267, %v3517
      %v3988 = vadd.f32 %v2272, %v3522
      %v3989 = vadd.f32 %v2277, %v3527
      %v3990 = vadd.f32 %v2282, %v3532
      %v3991 = vadd.f32 %v2287, %v3537
      %v3992 = vadd.f32 %v2292, %v3542
      %v3993 = vadd.f32 %v2297, %v3547
      %v3994 = vadd.f32 %v2302, %v3552
      %v3995 = vadd.f32 %v2307, %v3557
      %v3996 = vadd.f32 %v2312, %v3562
      %v3997 = vadd.f32 %v2317, %v3567
      %v3998 = vadd.f32 %v2322, %v3572
      %v3999 = vadd.f32 %v2327, %v3577
      %v4000 = vadd.f32 %v2332, %v3582
      %v4001 = vadd.f32 %v2337, %v3587
      %v4002 = vadd.f32 %v2342, %v3592
      %v4003 = vadd.f32 %v2347, %v3597
      %v4004 = vadd.f32 %v2352, %v3602
      %v4005 = vadd.f32 %v2357, %v3607
      %v4006 = vadd.f32 %v2362, %v3612
      %v4007 = vadd.f32 %v2367, %v3617
      %v4008 = vadd.f32 %v2372, %v3622
      %v4009 = vadd.f32 %v2377, %v3627
      %v4010 = vadd.f32 %v2382, %v3632
      %v4011 = vadd.f32 %v2387, %v3637
      %v4012 = vadd.f32 %v2392, %v3642
      %v4013 = vadd.f32 %v2397, %v3647
      %v4014 = vadd.f32 %v2402, %v3652
      %v4015 = vadd.f32 %v2407, %v3657
      %v4016 = vadd.f32 %v2412, %v3662
      %v4017 = vadd.f32 %v2417, %v3667
      %v4018 = vadd.f32 %v2422, %v3672
      %v4019 = vadd.f32 %v2427, %v3677
      %v4020 = vadd.f32 %v2432, %v3682
      %v4021 = vadd.f32 %v2437, %v3687
      %v4022 = vadd.f32 %v2442, %v3692
      %v4023 = vadd.f32 %v2447, %v3697
      %v4024 = vadd.f32 %v2452, %v3702
      %v4025 = vadd.f32 %v2457, %v3707
      %v4026 = vadd.f32 %v2462, %v3712
      %v4027 = vadd.f32 %v2467, %v3717
      %v4028 = vadd.f32 %v2472, %v3722
      %v4029 = vadd.f32 %v2477, %v3727
      %v4030 = vadd.f32 %v2482, %v3732
      %v4031 = vadd.f32 %v2487, %v3737
      %v4032 = vadd.f32 %v2492, %v3742
      %v4033 = vadd.f32 %v2497, %v3747
      %v4034 = vadd.f32 %v2502, %v3752
      %v4035 = vadd.f32 %v2507, %v3757
      %v4036 = vadd.f32 %v2512, %v3762
      %v4037 = vadd.f32 %v2517, %v3767
      %v4038 = vadd.f32 %v2522, %v3772
      %v4039 = vadd.f32 %v2527, %v3777
      %v4040 = vadd.f32 %v2532, %v3782
      %v4041 = vadd.f32 %v2537, %v3787
      %v4042 = vadd.f32 %v2542, %v3792
      %v4043 = vadd.f32 %v2547, %v3797
      %v4044 = vadd.f32 %v2552, %v3802
      %v4045 = vadd.f32 %v2557, %v3807
      %v4046 = vadd.f32 %v2562, %v3812
      %v4047 = vadd.f32 %v2567, %v3817
      %v4048 = vadd.f32 %v2572, %v3822
      %v4049 = vadd.f32 %v2577, %v3827
      %v4050 = vadd.f32 %v2582, %v3832
      %v4051 = vadd.f32 %v2587, %v3837
      %v4052 = vadd.f32 %v2592, %v3842
      %v4053 = vadd.f32 %v2597, %v3847
      %v4054 = vadd.f32 %v2602, %v3852
      %v4055 = vadd.f32 %v2607, %v3857
      %v4056 = vadd.f32 %v2612, %v3862
      %v4057 = vadd.f32 %v2617, %v3867
      %v4058 = vadd.f32 %v2622, %v3872
      %v4059 = vadd.f32 %v2627, %v3877
      %v4060 = vadd.f32 %v2632, %v3882
      %v4061 = vadd.f32 %v2637, %v3887
      %v4062 = vadd.f32 %v2642, %v3892
      %v4063 = vadd.f32 %v2647, %v3897
      %v4064 = vadd.f32 %v2652, %v3902
      %v4065 = vadd.f32 %v2657, %v3907
      %v4066 = vadd.f32 %v2662, %v3912
      %v4067 = vadd.f32 %v2667, %v3917
      %v4068 = vadd.f32 %v2672, %v3922
      %v4069 = vadd.f32 %v2677, %v3927
      %v4070 = vadd.f32 %v2682, %v3932
      %v4071 = vadd.f32 %v2687, %v3937
      %v4072 = vadd.f32 %v2692, %v3942
      %v4074 = vsel %vm772, %v304, 0
      %v4077 = vsel %vm772, %v305, 0
      %v4080 = vsel %vm772, %v306, 0
      %v4083 = vsel %vm772, %v307, 0
      %4085 = vmatprep.subr.mxu0 0.0
      %4086 = vmatpush1.msra.mxu0 0.0
      %4087 = vmatprep.subr.mxu0 0.0
      %4088 = vmatpush1.msra.mxu0 0.0
      %4089 = vmatprep.subr.mxu0 0.0
      %4090 = vmatpush1.msra.mxu0 0.0
      %4091 = vmatprep.subr.mxu0 0.0
      %4092 = vmatpush1.msra.mxu0 0.0
      %4093 = vmatprep.subr.mxu0 0.0
      %4094 = vmatpush1.msra.mxu0 0.0
      %4095 = vmatprep.subr.mxu0 0.0
      %4096 = vmatpush1.msra.mxu0 0.0
      %4097 = vmatprep.subr.mxu0 0.0
      %4098 = vmatpush1.msra.mxu0 0.0
      %4099 = vmatprep.subr.mxu0 0.0
      %4100 = vmatpush1.msra.mxu0 0.0
      %4101 = vmatprep.subr.mxu0 0.0
      %4102 = vmatpush1.msra.mxu0 0.0
      %4103 = vmatprep.subr.mxu0 0.0
      %4104 = vmatpush1.msra.mxu0 0.0
      %4105 = vmatprep.subr.mxu0 0.0
      %4106 = vmatpush1.msra.mxu0 0.0
      %4107 = vmatprep.subr.mxu0 0.0
      %4108 = vmatpush1.msra.mxu0 0.0
      %4109 = vmatprep.subr.mxu0 0.0
      %4110 = vmatpush1.msra.mxu0 0.0
      %4111 = vmatprep.subr.mxu0 0.0
      %4112 = vmatpush1.msra.mxu0 0.0
      %4113 = vmatprep.subr.mxu0 0.0
      %4114 = vmatpush1.msra.mxu0 0.0
      %4115 = vmatprep.subr.mxu0 0.0
      %4116 = vmatpush1.msra.mxu0 %v317
      %4117 = vmatprep.subr.mxu0 0.0
      %4118 = vmatpush2.msra.mxu0 0.0
      %4119 = vmatprep.subr.mxu0 0.0
      %4120 = vmatpush2.msra.mxu0 0.0
      %4121 = vmatprep.subr.mxu0 0.0
      %4122 = vmatpush2.msra.mxu0 0.0
      %4123 = vmatprep.subr.mxu0 0.0
      %4124 = vmatpush2.msra.mxu0 0.0
      %4125 = vmatprep.subr.mxu0 0.0
      %4126 = vmatpush2.msra.mxu0 0.0
      %4127 = vmatprep.subr.mxu0 0.0
      %4128 = vmatpush2.msra.mxu0 0.0
      %4129 = vmatprep.subr.mxu0 0.0
      %4130 = vmatpush2.msra.mxu0 0.0
      %4131 = vmatprep.subr.mxu0 0.0
      %4132 = vmatpush2.msra.mxu0 0.0
      %4133 = vmatprep.subr.mxu0 0.0
      %4134 = vmatpush2.msra.mxu0 0.0
      %4135 = vmatprep.subr.mxu0 0.0
      %4136 = vmatpush2.msra.mxu0 0.0
      %4137 = vmatprep.subr.mxu0 0.0
      %4138 = vmatpush2.msra.mxu0 0.0
      %4139 = vmatprep.subr.mxu0 0.0
      %4140 = vmatpush2.msra.mxu0 0.0
      %4141 = vmatprep.subr.mxu0 0.0
      %4142 = vmatpush2.msra.mxu0 0.0
      %4143 = vmatprep.subr.mxu0 0.0
      %4144 = vmatpush2.msra.mxu0 0.0
      %4145 = vmatprep.subr.mxu0 0.0
      %4146 = vmatpush2.msra.mxu0 0.0
      %4147 = vmatprep.subr.mxu0 0.0
      %4148 = vmatpush2.msra.mxu0 0.0
      %4149 = vmatprep.mubr.f32.mxu0 0.0
      %4150 = vmatmul.mubr.f32.gmra.mxu0 %v1742
      %v4151 = vpop.f32.mrf.mxu0
      %v4152 = vadd.f32 0.0, %v4151
      %v4153 = vpop.f32.mrf.mxu0
      %4154 = vmatprep.mubr.f32.mxu0 0.0
      %4155 = vmatmul.mubr.f32.gmra.mxu0 %v1744
      %v4156 = vpop.f32.mrf.mxu0
      %v4157 = vadd.f32 0.0, %v4156
      %v4158 = vpop.f32.mrf.mxu0
      %4159 = vmatprep.mubr.f32.mxu0 0.0
      %4160 = vmatmul.mubr.f32.gmra.mxu0 %v1746
      %v4161 = vpop.f32.mrf.mxu0
      %v4162 = vadd.f32 0.0, %v4161
      %v4163 = vpop.f32.mrf.mxu0
      %4164 = vmatprep.mubr.f32.mxu0 0.0
      %4165 = vmatmul.mubr.f32.gmra.mxu0 %v1748
      %v4166 = vpop.f32.mrf.mxu0
      %v4167 = vadd.f32 0.0, %v4166
      %v4168 = vpop.f32.mrf.mxu0
      %4169 = vmatprep.mubr.f32.mxu0 0.0
      %4170 = vmatmul.mubr.f32.gmra.mxu0 %v1750
      %v4171 = vpop.f32.mrf.mxu0
      %v4172 = vadd.f32 0.0, %v4171
      %v4173 = vpop.f32.mrf.mxu0
      %4174 = vmatprep.mubr.f32.mxu0 0.0
      %4175 = vmatmul.mubr.f32.gmra.mxu0 %v1752
      %v4176 = vpop.f32.mrf.mxu0
      %v4177 = vadd.f32 0.0, %v4176
      %v4178 = vpop.f32.mrf.mxu0
      %4179 = vmatprep.mubr.f32.mxu0 0.0
      %4180 = vmatmul.mubr.f32.gmra.mxu0 %v1754
      %v4181 = vpop.f32.mrf.mxu0
      %v4182 = vadd.f32 0.0, %v4181
      %v4183 = vpop.f32.mrf.mxu0
      %4184 = vmatprep.mubr.f32.mxu0 0.0
      %4185 = vmatmul.mubr.f32.gmra.mxu0 %v1756
      %v4186 = vpop.f32.mrf.mxu0
      %v4187 = vadd.f32 0.0, %v4186
      %v4188 = vpop.f32.mrf.mxu0
      %4189 = vmatprep.mubr.f32.mxu0 0.0
      %4190 = vmatmul.mubr.f32.gmra.mxu0 %v1758
      %v4191 = vpop.f32.mrf.mxu0
      %v4192 = vadd.f32 0.0, %v4191
      %v4193 = vpop.f32.mrf.mxu0
      %4194 = vmatprep.mubr.f32.mxu0 0.0
      %4195 = vmatmul.mubr.f32.gmra.mxu0 %v1760
      %v4196 = vpop.f32.mrf.mxu0
      %v4197 = vadd.f32 0.0, %v4196
      %v4198 = vpop.f32.mrf.mxu0
      %4199 = vmatprep.mubr.f32.mxu0 0.0
      %4200 = vmatmul.mubr.f32.gmra.mxu0 %v1762
      %v4201 = vpop.f32.mrf.mxu0
      %v4202 = vadd.f32 0.0, %v4201
      %v4203 = vpop.f32.mrf.mxu0
      %4204 = vmatprep.mubr.f32.mxu0 0.0
      %4205 = vmatmul.mubr.f32.gmra.mxu0 %v1764
      %v4206 = vpop.f32.mrf.mxu0
      %v4207 = vadd.f32 0.0, %v4206
      %v4208 = vpop.f32.mrf.mxu0
      %4209 = vmatprep.mubr.f32.mxu0 0.0
      %4210 = vmatmul.mubr.f32.gmra.mxu0 %v1766
      %v4211 = vpop.f32.mrf.mxu0
      %v4212 = vadd.f32 0.0, %v4211
      %v4213 = vpop.f32.mrf.mxu0
      %4214 = vmatprep.mubr.f32.mxu0 0.0
      %4215 = vmatmul.mubr.f32.gmra.mxu0 %v1768
      %v4216 = vpop.f32.mrf.mxu0
      %v4217 = vadd.f32 0.0, %v4216
      %v4218 = vpop.f32.mrf.mxu0
      %4219 = vmatprep.mubr.f32.mxu0 0.0
      %4220 = vmatmul.mubr.f32.gmra.mxu0 %v1770
      %v4221 = vpop.f32.mrf.mxu0
      %v4222 = vadd.f32 0.0, %v4221
      %v4223 = vpop.f32.mrf.mxu0
      %4224 = vmatprep.mubr.f32.mxu0 0.0
      %4225 = vmatmul.mubr.f32.gmra.mxu0 %v1772
      %v4226 = vpop.f32.mrf.mxu0
      %v4227 = vadd.f32 0.0, %v4226
      %v4228 = vpop.f32.mrf.mxu0
      %4229 = vmatprep.mubr.f32.mxu0 0.0
      %4230 = vmatmul.mubr.f32.gmra.mxu0 %v1774
      %v4231 = vpop.f32.mrf.mxu0
      %v4232 = vadd.f32 0.0, %v4231
      %v4233 = vpop.f32.mrf.mxu0
      %4234 = vmatprep.mubr.f32.mxu0 0.0
      %4235 = vmatmul.mubr.f32.gmra.mxu0 %v1776
      %v4236 = vpop.f32.mrf.mxu0
      %v4237 = vadd.f32 0.0, %v4236
      %v4238 = vpop.f32.mrf.mxu0
      %4239 = vmatprep.mubr.f32.mxu0 0.0
      %4240 = vmatmul.mubr.f32.gmra.mxu0 %v1778
      %v4241 = vpop.f32.mrf.mxu0
      %v4242 = vadd.f32 0.0, %v4241
      %v4243 = vpop.f32.mrf.mxu0
      %4244 = vmatprep.mubr.f32.mxu0 0.0
      %4245 = vmatmul.mubr.f32.gmra.mxu0 %v1780
      %v4246 = vpop.f32.mrf.mxu0
      %v4247 = vadd.f32 0.0, %v4246
      %v4248 = vpop.f32.mrf.mxu0
      %4249 = vmatprep.mubr.f32.mxu0 0.0
      %4250 = vmatmul.mubr.f32.gmra.mxu0 %v1782
      %v4251 = vpop.f32.mrf.mxu0
      %v4252 = vadd.f32 0.0, %v4251
      %v4253 = vpop.f32.mrf.mxu0
      %4254 = vmatprep.mubr.f32.mxu0 0.0
      %4255 = vmatmul.mubr.f32.gmra.mxu0 %v1784
      %v4256 = vpop.f32.mrf.mxu0
      %v4257 = vadd.f32 0.0, %v4256
      %v4258 = vpop.f32.mrf.mxu0
      %4259 = vmatprep.mubr.f32.mxu0 0.0
      %4260 = vmatmul.mubr.f32.gmra.mxu0 %v1786
      %v4261 = vpop.f32.mrf.mxu0
      %v4262 = vadd.f32 0.0, %v4261
      %v4263 = vpop.f32.mrf.mxu0
      %4264 = vmatprep.mubr.f32.mxu0 0.0
      %4265 = vmatmul.mubr.f32.gmra.mxu0 %v1788
      %v4266 = vpop.f32.mrf.mxu0
      %v4267 = vadd.f32 0.0, %v4266
      %v4268 = vpop.f32.mrf.mxu0
      %4269 = vmatprep.mubr.f32.mxu0 0.0
      %4270 = vmatmul.mubr.f32.gmra.mxu0 %v1790
      %v4271 = vpop.f32.mrf.mxu0
      %v4272 = vadd.f32 0.0, %v4271
      %v4273 = vpop.f32.mrf.mxu0
      %4274 = vmatprep.mubr.f32.mxu0 0.0
      %4275 = vmatmul.mubr.f32.gmra.mxu0 %v1792
      %v4276 = vpop.f32.mrf.mxu0
      %v4277 = vadd.f32 0.0, %v4276
      %v4278 = vpop.f32.mrf.mxu0
      %4279 = vmatprep.mubr.f32.mxu0 0.0
      %4280 = vmatmul.mubr.f32.gmra.mxu0 %v1794
      %v4281 = vpop.f32.mrf.mxu0
      %v4282 = vadd.f32 0.0, %v4281
      %v4283 = vpop.f32.mrf.mxu0
      %4284 = vmatprep.mubr.f32.mxu0 0.0
      %4285 = vmatmul.mubr.f32.gmra.mxu0 %v1796
      %v4286 = vpop.f32.mrf.mxu0
      %v4287 = vadd.f32 0.0, %v4286
      %v4288 = vpop.f32.mrf.mxu0
      %4289 = vmatprep.mubr.f32.mxu0 0.0
      %4290 = vmatmul.mubr.f32.gmra.mxu0 %v1798
      %v4291 = vpop.f32.mrf.mxu0
      %v4292 = vadd.f32 0.0, %v4291
      %v4293 = vpop.f32.mrf.mxu0
      %4294 = vmatprep.mubr.f32.mxu0 0.0
      %4295 = vmatmul.mubr.f32.gmra.mxu0 %v1800
      %v4296 = vpop.f32.mrf.mxu0
      %v4297 = vadd.f32 0.0, %v4296
      %v4298 = vpop.f32.mrf.mxu0
      %4299 = vmatprep.mubr.f32.mxu0 0.0
      %4300 = vmatmul.mubr.f32.gmra.mxu0 %v1802
      %v4301 = vpop.f32.mrf.mxu0
      %v4302 = vadd.f32 0.0, %v4301
      %v4303 = vpop.f32.mrf.mxu0
      %4304 = vmatprep.mubr.f32.mxu0 0.0
      %4305 = vmatmul.mubr.f32.gmra.mxu0 %v1804
      %v4306 = vpop.f32.mrf.mxu0
      %v4307 = vadd.f32 0.0, %v4306
      %v4308 = vpop.f32.mrf.mxu0
      %4309 = vmatprep.mubr.f32.mxu0 0.0
      %4310 = vmatmul.mubr.f32.gmra.mxu0 %v1806
      %v4311 = vpop.f32.mrf.mxu0
      %v4312 = vadd.f32 0.0, %v4311
      %v4313 = vpop.f32.mrf.mxu0
      %4314 = vmatprep.mubr.f32.mxu0 0.0
      %4315 = vmatmul.mubr.f32.gmra.mxu0 %v1808
      %v4316 = vpop.f32.mrf.mxu0
      %v4317 = vadd.f32 0.0, %v4316
      %v4318 = vpop.f32.mrf.mxu0
      %4319 = vmatprep.mubr.f32.mxu0 0.0
      %4320 = vmatmul.mubr.f32.gmra.mxu0 %v1810
      %v4321 = vpop.f32.mrf.mxu0
      %v4322 = vadd.f32 0.0, %v4321
      %v4323 = vpop.f32.mrf.mxu0
      %4324 = vmatprep.mubr.f32.mxu0 0.0
      %4325 = vmatmul.mubr.f32.gmra.mxu0 %v1812
      %v4326 = vpop.f32.mrf.mxu0
      %v4327 = vadd.f32 0.0, %v4326
      %v4328 = vpop.f32.mrf.mxu0
      %4329 = vmatprep.mubr.f32.mxu0 0.0
      %4330 = vmatmul.mubr.f32.gmra.mxu0 %v1814
      %v4331 = vpop.f32.mrf.mxu0
      %v4332 = vadd.f32 0.0, %v4331
      %v4333 = vpop.f32.mrf.mxu0
      %4334 = vmatprep.mubr.f32.mxu0 0.0
      %4335 = vmatmul.mubr.f32.gmra.mxu0 %v1816
      %v4336 = vpop.f32.mrf.mxu0
      %v4337 = vadd.f32 0.0, %v4336
      %v4338 = vpop.f32.mrf.mxu0
      %4339 = vmatprep.mubr.f32.mxu0 0.0
      %4340 = vmatmul.mubr.f32.gmra.mxu0 %v1818
      %v4341 = vpop.f32.mrf.mxu0
      %v4342 = vadd.f32 0.0, %v4341
      %v4343 = vpop.f32.mrf.mxu0
      %4344 = vmatprep.mubr.f32.mxu0 0.0
      %4345 = vmatmul.mubr.f32.gmra.mxu0 %v1820
      %v4346 = vpop.f32.mrf.mxu0
      %v4347 = vadd.f32 0.0, %v4346
      %v4348 = vpop.f32.mrf.mxu0
      %4349 = vmatprep.mubr.f32.mxu0 0.0
      %4350 = vmatmul.mubr.f32.gmra.mxu0 %v1822
      %v4351 = vpop.f32.mrf.mxu0
      %v4352 = vadd.f32 0.0, %v4351
      %v4353 = vpop.f32.mrf.mxu0
      %4354 = vmatprep.mubr.f32.mxu0 0.0
      %4355 = vmatmul.mubr.f32.gmra.mxu0 %v1824
      %v4356 = vpop.f32.mrf.mxu0
      %v4357 = vadd.f32 0.0, %v4356
      %v4358 = vpop.f32.mrf.mxu0
      %4359 = vmatprep.mubr.f32.mxu0 0.0
      %4360 = vmatmul.mubr.f32.gmra.mxu0 %v1826
      %v4361 = vpop.f32.mrf.mxu0
      %v4362 = vadd.f32 0.0, %v4361
      %v4363 = vpop.f32.mrf.mxu0
      %4364 = vmatprep.mubr.f32.mxu0 0.0
      %4365 = vmatmul.mubr.f32.gmra.mxu0 %v1828
      %v4366 = vpop.f32.mrf.mxu0
      %v4367 = vadd.f32 0.0, %v4366
      %v4368 = vpop.f32.mrf.mxu0
      %4369 = vmatprep.mubr.f32.mxu0 0.0
      %4370 = vmatmul.mubr.f32.gmra.mxu0 %v1830
      %v4371 = vpop.f32.mrf.mxu0
      %v4372 = vadd.f32 0.0, %v4371
      %v4373 = vpop.f32.mrf.mxu0
      %4374 = vmatprep.mubr.f32.mxu0 0.0
      %4375 = vmatmul.mubr.f32.gmra.mxu0 %v1832
      %v4376 = vpop.f32.mrf.mxu0
      %v4377 = vadd.f32 0.0, %v4376
      %v4378 = vpop.f32.mrf.mxu0
      %4379 = vmatprep.mubr.f32.mxu0 0.0
      %4380 = vmatmul.mubr.f32.gmra.mxu0 %v1834
      %v4381 = vpop.f32.mrf.mxu0
      %v4382 = vadd.f32 0.0, %v4381
      %v4383 = vpop.f32.mrf.mxu0
      %4384 = vmatprep.mubr.f32.mxu0 0.0
      %4385 = vmatmul.mubr.f32.gmra.mxu0 %v1836
      %v4386 = vpop.f32.mrf.mxu0
      %v4387 = vadd.f32 0.0, %v4386
      %v4388 = vpop.f32.mrf.mxu0
      %4389 = vmatprep.mubr.f32.mxu0 0.0
      %4390 = vmatmul.mubr.f32.gmra.mxu0 %v1838
      %v4391 = vpop.f32.mrf.mxu0
      %v4392 = vadd.f32 0.0, %v4391
      %v4393 = vpop.f32.mrf.mxu0
      %4394 = vmatprep.mubr.f32.mxu0 0.0
      %4395 = vmatmul.mubr.f32.gmra.mxu0 %v1840
      %v4396 = vpop.f32.mrf.mxu0
      %v4397 = vadd.f32 0.0, %v4396
      %v4398 = vpop.f32.mrf.mxu0
      %4399 = vmatprep.mubr.f32.mxu0 0.0
      %4400 = vmatmul.mubr.f32.gmra.mxu0 %v1842
      %v4401 = vpop.f32.mrf.mxu0
      %v4402 = vadd.f32 0.0, %v4401
      %v4403 = vpop.f32.mrf.mxu0
      %4404 = vmatprep.mubr.f32.mxu0 0.0
      %4405 = vmatmul.mubr.f32.gmra.mxu0 %v1844
      %v4406 = vpop.f32.mrf.mxu0
      %v4407 = vadd.f32 0.0, %v4406
      %v4408 = vpop.f32.mrf.mxu0
      %4409 = vmatprep.mubr.f32.mxu0 0.0
      %4410 = vmatmul.mubr.f32.gmra.mxu0 %v1846
      %v4411 = vpop.f32.mrf.mxu0
      %v4412 = vadd.f32 0.0, %v4411
      %v4413 = vpop.f32.mrf.mxu0
      %4414 = vmatprep.mubr.f32.mxu0 0.0
      %4415 = vmatmul.mubr.f32.gmra.mxu0 %v1848
      %v4416 = vpop.f32.mrf.mxu0
      %v4417 = vadd.f32 0.0, %v4416
      %v4418 = vpop.f32.mrf.mxu0
      %4419 = vmatprep.mubr.f32.mxu0 0.0
      %4420 = vmatmul.mubr.f32.gmra.mxu0 %v1850
      %v4421 = vpop.f32.mrf.mxu0
      %v4422 = vadd.f32 0.0, %v4421
      %v4423 = vpop.f32.mrf.mxu0
      %4424 = vmatprep.mubr.f32.mxu0 0.0
      %4425 = vmatmul.mubr.f32.gmra.mxu0 %v1852
      %v4426 = vpop.f32.mrf.mxu0
      %v4427 = vadd.f32 0.0, %v4426
      %v4428 = vpop.f32.mrf.mxu0
      %4429 = vmatprep.mubr.f32.mxu0 0.0
      %4430 = vmatmul.mubr.f32.gmra.mxu0 %v1854
      %v4431 = vpop.f32.mrf.mxu0
      %v4432 = vadd.f32 0.0, %v4431
      %v4433 = vpop.f32.mrf.mxu0
      %4434 = vmatprep.mubr.f32.mxu0 0.0
      %4435 = vmatmul.mubr.f32.gmra.mxu0 %v1856
      %v4436 = vpop.f32.mrf.mxu0
      %v4437 = vadd.f32 0.0, %v4436
      %v4438 = vpop.f32.mrf.mxu0
      %4439 = vmatprep.mubr.f32.mxu0 0.0
      %4440 = vmatmul.mubr.f32.gmra.mxu0 %v1858
      %v4441 = vpop.f32.mrf.mxu0
      %v4442 = vadd.f32 0.0, %v4441
      %v4443 = vpop.f32.mrf.mxu0
      %4444 = vmatprep.mubr.f32.mxu0 0.0
      %4445 = vmatmul.mubr.f32.gmra.mxu0 %v1860
      %v4446 = vpop.f32.mrf.mxu0
      %v4447 = vadd.f32 0.0, %v4446
      %v4448 = vpop.f32.mrf.mxu0
      %4449 = vmatprep.mubr.f32.mxu0 0.0
      %4450 = vmatmul.mubr.f32.gmra.mxu0 %v1862
      %v4451 = vpop.f32.mrf.mxu0
      %v4452 = vadd.f32 0.0, %v4451
      %v4453 = vpop.f32.mrf.mxu0
      %4454 = vmatprep.mubr.f32.mxu0 0.0
      %4455 = vmatmul.mubr.f32.gmra.mxu0 %v1864
      %v4456 = vpop.f32.mrf.mxu0
      %v4457 = vadd.f32 0.0, %v4456
      %v4458 = vpop.f32.mrf.mxu0
      %4459 = vmatprep.mubr.f32.mxu0 0.0
      %4460 = vmatmul.mubr.f32.gmra.mxu0 %v1866
      %v4461 = vpop.f32.mrf.mxu0
      %v4462 = vadd.f32 0.0, %v4461
      %v4463 = vpop.f32.mrf.mxu0
      %4464 = vmatprep.mubr.f32.mxu0 0.0
      %4465 = vmatmul.mubr.f32.gmra.mxu0 %v1868
      %v4466 = vpop.f32.mrf.mxu0
      %v4467 = vadd.f32 0.0, %v4466
      %v4468 = vpop.f32.mrf.mxu0
      %4469 = vmatprep.mubr.f32.mxu0 0.0
      %4470 = vmatmul.mubr.f32.gmra.mxu0 %v1870
      %v4471 = vpop.f32.mrf.mxu0
      %v4472 = vadd.f32 0.0, %v4471
      %v4473 = vpop.f32.mrf.mxu0
      %4474 = vmatprep.mubr.f32.mxu0 0.0
      %4475 = vmatmul.mubr.f32.gmra.mxu0 %v1872
      %v4476 = vpop.f32.mrf.mxu0
      %v4477 = vadd.f32 0.0, %v4476
      %v4478 = vpop.f32.mrf.mxu0
      %4479 = vmatprep.mubr.f32.mxu0 0.0
      %4480 = vmatmul.mubr.f32.gmra.mxu0 %v1874
      %v4481 = vpop.f32.mrf.mxu0
      %v4482 = vadd.f32 0.0, %v4481
      %v4483 = vpop.f32.mrf.mxu0
      %4484 = vmatprep.mubr.f32.mxu0 0.0
      %4485 = vmatmul.mubr.f32.gmra.mxu0 %v1876
      %v4486 = vpop.f32.mrf.mxu0
      %v4487 = vadd.f32 0.0, %v4486
      %v4488 = vpop.f32.mrf.mxu0
      %4489 = vmatprep.mubr.f32.mxu0 0.0
      %4490 = vmatmul.mubr.f32.gmra.mxu0 %v1878
      %v4491 = vpop.f32.mrf.mxu0
      %v4492 = vadd.f32 0.0, %v4491
      %v4493 = vpop.f32.mrf.mxu0
      %4494 = vmatprep.mubr.f32.mxu0 0.0
      %4495 = vmatmul.mubr.f32.gmra.mxu0 %v1880
      %v4496 = vpop.f32.mrf.mxu0
      %v4497 = vadd.f32 0.0, %v4496
      %v4498 = vpop.f32.mrf.mxu0
      %4499 = vmatprep.mubr.f32.mxu0 0.0
      %4500 = vmatmul.mubr.f32.gmra.mxu0 %v1882
      %v4501 = vpop.f32.mrf.mxu0
      %v4502 = vadd.f32 0.0, %v4501
      %v4503 = vpop.f32.mrf.mxu0
      %4504 = vmatprep.mubr.f32.mxu0 0.0
      %4505 = vmatmul.mubr.f32.gmra.mxu0 %v1884
      %v4506 = vpop.f32.mrf.mxu0
      %v4507 = vadd.f32 0.0, %v4506
      %v4508 = vpop.f32.mrf.mxu0
      %4509 = vmatprep.mubr.f32.mxu0 0.0
      %4510 = vmatmul.mubr.f32.gmra.mxu0 %v1886
      %v4511 = vpop.f32.mrf.mxu0
      %v4512 = vadd.f32 0.0, %v4511
      %v4513 = vpop.f32.mrf.mxu0
      %4514 = vmatprep.mubr.f32.mxu0 0.0
      %4515 = vmatmul.mubr.f32.gmra.mxu0 %v1888
      %v4516 = vpop.f32.mrf.mxu0
      %v4517 = vadd.f32 0.0, %v4516
      %v4518 = vpop.f32.mrf.mxu0
      %4519 = vmatprep.mubr.f32.mxu0 0.0
      %4520 = vmatmul.mubr.f32.gmra.mxu0 %v1890
      %v4521 = vpop.f32.mrf.mxu0
      %v4522 = vadd.f32 0.0, %v4521
      %v4523 = vpop.f32.mrf.mxu0
      %4524 = vmatprep.mubr.f32.mxu0 0.0
      %4525 = vmatmul.mubr.f32.gmra.mxu0 %v1892
      %v4526 = vpop.f32.mrf.mxu0
      %v4527 = vadd.f32 0.0, %v4526
      %v4528 = vpop.f32.mrf.mxu0
      %4529 = vmatprep.mubr.f32.mxu0 0.0
      %4530 = vmatmul.mubr.f32.gmra.mxu0 %v1894
      %v4531 = vpop.f32.mrf.mxu0
      %v4532 = vadd.f32 0.0, %v4531
      %v4533 = vpop.f32.mrf.mxu0
      %4534 = vmatprep.mubr.f32.mxu0 0.0
      %4535 = vmatmul.mubr.f32.gmra.mxu0 %v1896
      %v4536 = vpop.f32.mrf.mxu0
      %v4537 = vadd.f32 0.0, %v4536
      %v4538 = vpop.f32.mrf.mxu0
      %4539 = vmatprep.mubr.f32.mxu0 0.0
      %4540 = vmatmul.mubr.f32.gmra.mxu0 %v1898
      %v4541 = vpop.f32.mrf.mxu0
      %v4542 = vadd.f32 0.0, %v4541
      %v4543 = vpop.f32.mrf.mxu0
      %4544 = vmatprep.mubr.f32.mxu0 0.0
      %4545 = vmatmul.mubr.f32.gmra.mxu0 %v1900
      %v4546 = vpop.f32.mrf.mxu0
      %v4547 = vadd.f32 0.0, %v4546
      %v4548 = vpop.f32.mrf.mxu0
      %4549 = vmatprep.mubr.f32.mxu0 0.0
      %4550 = vmatmul.mubr.f32.gmra.mxu0 %v1902
      %v4551 = vpop.f32.mrf.mxu0
      %v4552 = vadd.f32 0.0, %v4551
      %v4553 = vpop.f32.mrf.mxu0
      %4554 = vmatprep.mubr.f32.mxu0 0.0
      %4555 = vmatmul.mubr.f32.gmra.mxu0 %v1904
      %v4556 = vpop.f32.mrf.mxu0
      %v4557 = vadd.f32 0.0, %v4556
      %v4558 = vpop.f32.mrf.mxu0
      %4559 = vmatprep.mubr.f32.mxu0 0.0
      %4560 = vmatmul.mubr.f32.gmra.mxu0 %v1906
      %v4561 = vpop.f32.mrf.mxu0
      %v4562 = vadd.f32 0.0, %v4561
      %v4563 = vpop.f32.mrf.mxu0
      %4564 = vmatprep.mubr.f32.mxu0 0.0
      %4565 = vmatmul.mubr.f32.gmra.mxu0 %v1908
      %v4566 = vpop.f32.mrf.mxu0
      %v4567 = vadd.f32 0.0, %v4566
      %v4568 = vpop.f32.mrf.mxu0
      %4569 = vmatprep.mubr.f32.mxu0 0.0
      %4570 = vmatmul.mubr.f32.gmra.mxu0 %v1910
      %v4571 = vpop.f32.mrf.mxu0
      %v4572 = vadd.f32 0.0, %v4571
      %v4573 = vpop.f32.mrf.mxu0
      %4574 = vmatprep.mubr.f32.mxu0 0.0
      %4575 = vmatmul.mubr.f32.gmra.mxu0 %v1912
      %v4576 = vpop.f32.mrf.mxu0
      %v4577 = vadd.f32 0.0, %v4576
      %v4578 = vpop.f32.mrf.mxu0
      %4579 = vmatprep.mubr.f32.mxu0 0.0
      %4580 = vmatmul.mubr.f32.gmra.mxu0 %v1914
      %v4581 = vpop.f32.mrf.mxu0
      %v4582 = vadd.f32 0.0, %v4581
      %v4583 = vpop.f32.mrf.mxu0
      %4584 = vmatprep.mubr.f32.mxu0 0.0
      %4585 = vmatmul.mubr.f32.gmra.mxu0 %v1916
      %v4586 = vpop.f32.mrf.mxu0
      %v4587 = vadd.f32 0.0, %v4586
      %v4588 = vpop.f32.mrf.mxu0
      %4589 = vmatprep.mubr.f32.mxu0 0.0
      %4590 = vmatmul.mubr.f32.gmra.mxu0 %v1918
      %v4591 = vpop.f32.mrf.mxu0
      %v4592 = vadd.f32 0.0, %v4591
      %v4593 = vpop.f32.mrf.mxu0
      %4594 = vmatprep.mubr.f32.mxu0 0.0
      %4595 = vmatmul.mubr.f32.gmra.mxu0 %v1920
      %v4596 = vpop.f32.mrf.mxu0
      %v4597 = vadd.f32 0.0, %v4596
      %v4598 = vpop.f32.mrf.mxu0
      %4599 = vmatprep.mubr.f32.mxu0 0.0
      %4600 = vmatmul.mubr.f32.gmra.mxu0 %v1922
      %v4601 = vpop.f32.mrf.mxu0
      %v4602 = vadd.f32 0.0, %v4601
      %v4603 = vpop.f32.mrf.mxu0
      %4604 = vmatprep.mubr.f32.mxu0 0.0
      %4605 = vmatmul.mubr.f32.gmra.mxu0 %v1924
      %v4606 = vpop.f32.mrf.mxu0
      %v4607 = vadd.f32 0.0, %v4606
      %v4608 = vpop.f32.mrf.mxu0
      %4609 = vmatprep.mubr.f32.mxu0 0.0
      %4610 = vmatmul.mubr.f32.gmra.mxu0 %v1926
      %v4611 = vpop.f32.mrf.mxu0
      %v4612 = vadd.f32 0.0, %v4611
      %v4613 = vpop.f32.mrf.mxu0
      %4614 = vmatprep.mubr.f32.mxu0 0.0
      %4615 = vmatmul.mubr.f32.gmra.mxu0 %v1928
      %v4616 = vpop.f32.mrf.mxu0
      %v4617 = vadd.f32 0.0, %v4616
      %v4618 = vpop.f32.mrf.mxu0
      %4619 = vmatprep.mubr.f32.mxu0 0.0
      %4620 = vmatmul.mubr.f32.gmra.mxu0 %v1930
      %v4621 = vpop.f32.mrf.mxu0
      %v4622 = vadd.f32 0.0, %v4621
      %v4623 = vpop.f32.mrf.mxu0
      %4624 = vmatprep.mubr.f32.mxu0 0.0
      %4625 = vmatmul.mubr.f32.gmra.mxu0 %v1932
      %v4626 = vpop.f32.mrf.mxu0
      %v4627 = vadd.f32 0.0, %v4626
      %v4628 = vpop.f32.mrf.mxu0
      %4629 = vmatprep.mubr.f32.mxu0 0.0
      %4630 = vmatmul.mubr.f32.gmra.mxu0 %v1934
      %v4631 = vpop.f32.mrf.mxu0
      %v4632 = vadd.f32 0.0, %v4631
      %v4633 = vpop.f32.mrf.mxu0
      %4634 = vmatprep.mubr.f32.mxu0 0.0
      %4635 = vmatmul.mubr.f32.gmra.mxu0 %v1936
      %v4636 = vpop.f32.mrf.mxu0
      %v4637 = vadd.f32 0.0, %v4636
      %v4638 = vpop.f32.mrf.mxu0
      %4639 = vmatprep.mubr.f32.mxu0 0.0
      %4640 = vmatmul.mubr.f32.gmra.mxu0 %v1938
      %v4641 = vpop.f32.mrf.mxu0
      %v4642 = vadd.f32 0.0, %v4641
      %v4643 = vpop.f32.mrf.mxu0
      %4644 = vmatprep.mubr.f32.mxu0 0.0
      %4645 = vmatmul.mubr.f32.gmra.mxu0 %v1940
      %v4646 = vpop.f32.mrf.mxu0
      %v4647 = vadd.f32 0.0, %v4646
      %v4648 = vpop.f32.mrf.mxu0
      %4649 = vmatprep.mubr.f32.mxu0 0.0
      %4650 = vmatmul.mubr.f32.gmra.mxu0 %v1942
      %v4651 = vpop.f32.mrf.mxu0
      %v4652 = vadd.f32 0.0, %v4651
      %v4653 = vpop.f32.mrf.mxu0
      %4654 = vmatprep.mubr.f32.mxu0 0.0
      %4655 = vmatmul.mubr.f32.gmra.mxu0 %v1944
      %v4656 = vpop.f32.mrf.mxu0
      %v4657 = vadd.f32 0.0, %v4656
      %v4658 = vpop.f32.mrf.mxu0
      %4659 = vmatprep.mubr.f32.mxu0 0.0
      %4660 = vmatmul.mubr.f32.gmra.mxu0 %v1946
      %v4661 = vpop.f32.mrf.mxu0
      %v4662 = vadd.f32 0.0, %v4661
      %v4663 = vpop.f32.mrf.mxu0
      %4664 = vmatprep.mubr.f32.mxu0 0.0
      %4665 = vmatmul.mubr.f32.gmra.mxu0 %v1948
      %v4666 = vpop.f32.mrf.mxu0
      %v4667 = vadd.f32 0.0, %v4666
      %v4668 = vpop.f32.mrf.mxu0
      %4669 = vmatprep.mubr.f32.mxu0 0.0
      %4670 = vmatmul.mubr.f32.gmra.mxu0 %v1950
      %v4671 = vpop.f32.mrf.mxu0
      %v4672 = vadd.f32 0.0, %v4671
      %v4673 = vpop.f32.mrf.mxu0
      %4674 = vmatprep.mubr.f32.mxu0 0.0
      %4675 = vmatmul.mubr.f32.gmra.mxu0 %v1952
      %v4676 = vpop.f32.mrf.mxu0
      %v4677 = vadd.f32 0.0, %v4676
      %v4678 = vpop.f32.mrf.mxu0
      %4679 = vmatprep.mubr.f32.mxu0 0.0
      %4680 = vmatmul.mubr.f32.gmra.mxu0 %v1954
      %v4681 = vpop.f32.mrf.mxu0
      %v4682 = vadd.f32 0.0, %v4681
      %v4683 = vpop.f32.mrf.mxu0
      %4684 = vmatprep.mubr.f32.mxu0 0.0
      %4685 = vmatmul.mubr.f32.gmra.mxu0 %v1956
      %v4686 = vpop.f32.mrf.mxu0
      %v4687 = vadd.f32 0.0, %v4686
      %v4688 = vpop.f32.mrf.mxu0
      %4689 = vmatprep.mubr.f32.mxu0 0.0
      %4690 = vmatmul.mubr.f32.gmra.mxu0 %v1958
      %v4691 = vpop.f32.mrf.mxu0
      %v4692 = vadd.f32 0.0, %v4691
      %v4693 = vpop.f32.mrf.mxu0
      %4694 = vmatprep.mubr.f32.mxu0 0.0
      %4695 = vmatmul.mubr.f32.gmra.mxu0 %v1960
      %v4696 = vpop.f32.mrf.mxu0
      %v4697 = vadd.f32 0.0, %v4696
      %v4698 = vpop.f32.mrf.mxu0
      %4699 = vmatprep.mubr.f32.mxu0 0.0
      %4700 = vmatmul.mubr.f32.gmra.mxu0 %v1962
      %v4701 = vpop.f32.mrf.mxu0
      %v4702 = vadd.f32 0.0, %v4701
      %v4703 = vpop.f32.mrf.mxu0
      %4704 = vmatprep.mubr.f32.mxu0 0.0
      %4705 = vmatmul.mubr.f32.gmra.mxu0 %v1964
      %v4706 = vpop.f32.mrf.mxu0
      %v4707 = vadd.f32 0.0, %v4706
      %v4708 = vpop.f32.mrf.mxu0
      %4709 = vmatprep.mubr.f32.mxu0 0.0
      %4710 = vmatmul.mubr.f32.gmra.mxu0 %v1966
      %v4711 = vpop.f32.mrf.mxu0
      %v4712 = vadd.f32 0.0, %v4711
      %v4713 = vpop.f32.mrf.mxu0
      %4714 = vmatprep.mubr.f32.mxu0 0.0
      %4715 = vmatmul.mubr.f32.gmra.mxu0 %v1968
      %v4716 = vpop.f32.mrf.mxu0
      %v4717 = vadd.f32 0.0, %v4716
      %v4718 = vpop.f32.mrf.mxu0
      %4719 = vmatprep.mubr.f32.mxu0 0.0
      %4720 = vmatmul.mubr.f32.gmra.mxu0 %v1970
      %v4721 = vpop.f32.mrf.mxu0
      %v4722 = vadd.f32 0.0, %v4721
      %v4723 = vpop.f32.mrf.mxu0
      %4724 = vmatprep.mubr.f32.mxu0 0.0
      %4725 = vmatmul.mubr.f32.gmra.mxu0 %v1972
      %v4726 = vpop.f32.mrf.mxu0
      %v4727 = vadd.f32 0.0, %v4726
      %v4728 = vpop.f32.mrf.mxu0
      %4729 = vmatprep.mubr.f32.mxu0 0.0
      %4730 = vmatmul.mubr.f32.gmra.mxu0 %v1974
      %v4731 = vpop.f32.mrf.mxu0
      %v4732 = vadd.f32 0.0, %v4731
      %v4733 = vpop.f32.mrf.mxu0
      %4734 = vmatprep.mubr.f32.mxu0 0.0
      %4735 = vmatmul.mubr.f32.gmra.mxu0 %v1976
      %v4736 = vpop.f32.mrf.mxu0
      %v4737 = vadd.f32 0.0, %v4736
      %v4738 = vpop.f32.mrf.mxu0
      %4739 = vmatprep.mubr.f32.mxu0 0.0
      %4740 = vmatmul.mubr.f32.gmra.mxu0 %v1978
      %v4741 = vpop.f32.mrf.mxu0
      %v4742 = vadd.f32 0.0, %v4741
      %v4743 = vpop.f32.mrf.mxu0
      %4744 = vmatprep.mubr.f32.mxu0 0.0
      %4745 = vmatmul.mubr.f32.gmra.mxu0 %v1980
      %v4746 = vpop.f32.mrf.mxu0
      %v4747 = vadd.f32 0.0, %v4746
      %v4748 = vpop.f32.mrf.mxu0
      %4749 = vmatprep.mubr.f32.mxu0 0.0
      %4750 = vmatmul.mubr.f32.gmra.mxu0 %v1982
      %v4751 = vpop.f32.mrf.mxu0
      %v4752 = vadd.f32 0.0, %v4751
      %v4753 = vpop.f32.mrf.mxu0
      %4754 = vmatprep.mubr.f32.mxu0 0.0
      %4755 = vmatmul.mubr.f32.gmra.mxu0 %v1984
      %v4756 = vpop.f32.mrf.mxu0
      %v4757 = vadd.f32 0.0, %v4756
      %v4758 = vpop.f32.mrf.mxu0
      %4759 = vmatprep.mubr.f32.mxu0 0.0
      %4760 = vmatmul.mubr.f32.gmra.mxu0 %v1986
      %v4761 = vpop.f32.mrf.mxu0
      %v4762 = vadd.f32 0.0, %v4761
      %v4763 = vpop.f32.mrf.mxu0
      %4764 = vmatprep.mubr.f32.mxu0 0.0
      %4765 = vmatmul.mubr.f32.gmra.mxu0 %v1988
      %v4766 = vpop.f32.mrf.mxu0
      %v4767 = vadd.f32 0.0, %v4766
      %v4768 = vpop.f32.mrf.mxu0
      %4769 = vmatprep.mubr.f32.mxu0 0.0
      %4770 = vmatmul.mubr.f32.gmra.mxu0 %v4074
      %v4771 = vpop.f32.mrf.mxu0
      %v4772 = vadd.f32 0.0, %v4771
      %v4773 = vpop.f32.mrf.mxu0
      %4774 = vmatprep.mubr.f32.mxu0 0.0
      %4775 = vmatmul.mubr.f32.gmra.mxu0 %v4077
      %v4776 = vpop.f32.mrf.mxu0
      %v4777 = vadd.f32 0.0, %v4776
      %v4778 = vpop.f32.mrf.mxu0
      %4779 = vmatprep.mubr.f32.mxu0 0.0
      %4780 = vmatmul.mubr.f32.gmra.mxu0 %v4080
      %v4781 = vpop.f32.mrf.mxu0
      %v4782 = vadd.f32 0.0, %v4781
      %v4783 = vpop.f32.mrf.mxu0
      %4784 = vmatprep.mubr.f32.mxu0 0.0
      %4785 = vmatmul.mubr.f32.gmra.mxu0 %v4083
      %v4786 = vpop.f32.mrf.mxu0
      %v4787 = vadd.f32 0.0, %v4786
      %v4788 = vpop.f32.mrf.mxu0
      %4789 = vdwg.mxu0
      %v4790 = vadd.f32 %v3945, %v4152
      %v4791 = vadd.f32 %v3946, %v4157
      %v4792 = vadd.f32 %v3947, %v4162
      %v4793 = vadd.f32 %v3948, %v4167
      %v4794 = vadd.f32 %v3949, %v4172
      %v4795 = vadd.f32 %v3950, %v4177
      %v4796 = vadd.f32 %v3951, %v4182
      %v4797 = vadd.f32 %v3952, %v4187
      %v4798 = vadd.f32 %v3953, %v4192
      %v4799 = vadd.f32 %v3954, %v4197
      %v4800 = vadd.f32 %v3955, %v4202
      %v4801 = vadd.f32 %v3956, %v4207
      %v4802 = vadd.f32 %v3957, %v4212
      %v4803 = vadd.f32 %v3958, %v4217
      %v4804 = vadd.f32 %v3959, %v4222
      %v4805 = vadd.f32 %v3960, %v4227
      %v4806 = vadd.f32 %v3961, %v4232
      %v4807 = vadd.f32 %v3962, %v4237
      %v4808 = vadd.f32 %v3963, %v4242
      %v4809 = vadd.f32 %v3964, %v4247
      %v4810 = vadd.f32 %v3965, %v4252
      %v4811 = vadd.f32 %v3966, %v4257
      %v4812 = vadd.f32 %v3967, %v4262
      %v4813 = vadd.f32 %v3968, %v4267
      %v4814 = vadd.f32 %v3969, %v4272
      %v4815 = vadd.f32 %v3970, %v4277
      %v4816 = vadd.f32 %v3971, %v4282
      %v4817 = vadd.f32 %v3972, %v4287
      %v4818 = vadd.f32 %v3973, %v4292
      %v4819 = vadd.f32 %v3974, %v4297
      %v4820 = vadd.f32 %v3975, %v4302
      %v4821 = vadd.f32 %v3976, %v4307
      %v4822 = vadd.f32 %v3977, %v4312
      %v4823 = vadd.f32 %v3978, %v4317
      %v4824 = vadd.f32 %v3979, %v4322
      %v4825 = vadd.f32 %v3980, %v4327
      %v4826 = vadd.f32 %v3981, %v4332
      %v4827 = vadd.f32 %v3982, %v4337
      %v4828 = vadd.f32 %v3983, %v4342
      %v4829 = vadd.f32 %v3984, %v4347
      %v4830 = vadd.f32 %v3985, %v4352
      %v4831 = vadd.f32 %v3986, %v4357
      %v4832 = vadd.f32 %v3987, %v4362
      %v4833 = vadd.f32 %v3988, %v4367
      %v4834 = vadd.f32 %v3989, %v4372
      %v4835 = vadd.f32 %v3990, %v4377
      %v4836 = vadd.f32 %v3991, %v4382
      %v4837 = vadd.f32 %v3992, %v4387
      %v4838 = vadd.f32 %v3993, %v4392
      %v4839 = vadd.f32 %v3994, %v4397
      %v4840 = vadd.f32 %v3995, %v4402
      %v4841 = vadd.f32 %v3996, %v4407
      %v4842 = vadd.f32 %v3997, %v4412
      %v4843 = vadd.f32 %v3998, %v4417
      %v4844 = vadd.f32 %v3999, %v4422
      %v4845 = vadd.f32 %v4000, %v4427
      %v4846 = vadd.f32 %v4001, %v4432
      %v4847 = vadd.f32 %v4002, %v4437
      %v4848 = vadd.f32 %v4003, %v4442
      %v4849 = vadd.f32 %v4004, %v4447
      %v4850 = vadd.f32 %v4005, %v4452
      %v4851 = vadd.f32 %v4006, %v4457
      %v4852 = vadd.f32 %v4007, %v4462
      %v4853 = vadd.f32 %v4008, %v4467
      %v4854 = vadd.f32 %v4009, %v4472
      %v4855 = vadd.f32 %v4010, %v4477
      %v4856 = vadd.f32 %v4011, %v4482
      %v4857 = vadd.f32 %v4012, %v4487
      %v4858 = vadd.f32 %v4013, %v4492
      %v4859 = vadd.f32 %v4014, %v4497
      %v4860 = vadd.f32 %v4015, %v4502
      %v4861 = vadd.f32 %v4016, %v4507
      %v4862 = vadd.f32 %v4017, %v4512
      %v4863 = vadd.f32 %v4018, %v4517
      %v4864 = vadd.f32 %v4019, %v4522
      %v4865 = vadd.f32 %v4020, %v4527
      %v4866 = vadd.f32 %v4021, %v4532
      %v4867 = vadd.f32 %v4022, %v4537
      %v4868 = vadd.f32 %v4023, %v4542
      %v4869 = vadd.f32 %v4024, %v4547
      %v4870 = vadd.f32 %v4025, %v4552
      %v4871 = vadd.f32 %v4026, %v4557
      %v4872 = vadd.f32 %v4027, %v4562
      %v4873 = vadd.f32 %v4028, %v4567
      %v4874 = vadd.f32 %v4029, %v4572
      %v4875 = vadd.f32 %v4030, %v4577
      %v4876 = vadd.f32 %v4031, %v4582
      %v4877 = vadd.f32 %v4032, %v4587
      %v4878 = vadd.f32 %v4033, %v4592
      %v4879 = vadd.f32 %v4034, %v4597
      %v4880 = vadd.f32 %v4035, %v4602
      %v4881 = vadd.f32 %v4036, %v4607
      %v4882 = vadd.f32 %v4037, %v4612
      %v4883 = vadd.f32 %v4038, %v4617
      %v4884 = vadd.f32 %v4039, %v4622
      %v4885 = vadd.f32 %v4040, %v4627
      %v4886 = vadd.f32 %v4041, %v4632
      %v4887 = vadd.f32 %v4042, %v4637
      %v4888 = vadd.f32 %v4043, %v4642
      %v4889 = vadd.f32 %v4044, %v4647
      %v4890 = vadd.f32 %v4045, %v4652
      %v4891 = vadd.f32 %v4046, %v4657
      %v4892 = vadd.f32 %v4047, %v4662
      %v4893 = vadd.f32 %v4048, %v4667
      %v4894 = vadd.f32 %v4049, %v4672
      %v4895 = vadd.f32 %v4050, %v4677
      %v4896 = vadd.f32 %v4051, %v4682
      %v4897 = vadd.f32 %v4052, %v4687
      %v4898 = vadd.f32 %v4053, %v4692
      %v4899 = vadd.f32 %v4054, %v4697
      %v4900 = vadd.f32 %v4055, %v4702
      %v4901 = vadd.f32 %v4056, %v4707
      %v4902 = vadd.f32 %v4057, %v4712
      %v4903 = vadd.f32 %v4058, %v4717
      %v4904 = vadd.f32 %v4059, %v4722
      %v4905 = vadd.f32 %v4060, %v4727
      %v4906 = vadd.f32 %v4061, %v4732
      %v4907 = vadd.f32 %v4062, %v4737
      %v4908 = vadd.f32 %v4063, %v4742
      %v4909 = vadd.f32 %v4064, %v4747
      %v4910 = vadd.f32 %v4065, %v4752
      %v4911 = vadd.f32 %v4066, %v4757
      %v4912 = vadd.f32 %v4067, %v4762
      %v4913 = vadd.f32 %v4068, %v4767
      %v4914 = vadd.f32 %v4069, %v4772
      %v4915 = vadd.f32 %v4070, %v4777
      %v4916 = vadd.f32 %v4071, %v4782
      %v4917 = vadd.f32 %v4072, %v4787
      %v4919 = vrot.slane %v304, 1
      %v4920 = vrot.slane %v305, 1
      %v4921 = vsel %vm483, %v4919, %v4920
      %v4922 = vrot.slane %v306, 1
      %v4923 = vsel %vm483, %v4920, %v4922
      %v4924 = vrot.slane %v307, 1
      %v4925 = vsel %vm483, %v4922, %v4924
      %v4926 = vrot.slane %v308, 1
      %v4927 = vsel %vm483, %v4924, %v4926
      %v4928 = vsel %vm772, %v4921, 0
      %v4930 = vsel %vm772, %v4923, 0
      %v4932 = vsel %vm772, %v4925, 0
      %v4934 = vsel %vm772, %v4927, 0
      %4936 = vmatprep.subr.mxu0 0.0
      %4937 = vmatpush1.msra.mxu0 0.0
      %4938 = vmatprep.subr.mxu0 0.0
      %4939 = vmatpush1.msra.mxu0 0.0
      %4940 = vmatprep.subr.mxu0 0.0
      %4941 = vmatpush1.msra.mxu0 0.0
      %4942 = vmatprep.subr.mxu0 0.0
      %4943 = vmatpush1.msra.mxu0 0.0
      %4944 = vmatprep.subr.mxu0 0.0
      %4945 = vmatpush1.msra.mxu0 0.0
      %4946 = vmatprep.subr.mxu0 0.0
      %4947 = vmatpush1.msra.mxu0 0.0
      %4948 = vmatprep.subr.mxu0 0.0
      %4949 = vmatpush1.msra.mxu0 0.0
      %4950 = vmatprep.subr.mxu0 0.0
      %4951 = vmatpush1.msra.mxu0 0.0
      %4952 = vmatprep.subr.mxu0 0.0
      %4953 = vmatpush1.msra.mxu0 0.0
      %4954 = vmatprep.subr.mxu0 0.0
      %4955 = vmatpush1.msra.mxu0 0.0
      %4956 = vmatprep.subr.mxu0 0.0
      %4957 = vmatpush1.msra.mxu0 0.0
      %4958 = vmatprep.subr.mxu0 0.0
      %4959 = vmatpush1.msra.mxu0 0.0
      %4960 = vmatprep.subr.mxu0 0.0
      %4961 = vmatpush1.msra.mxu0 0.0
      %4962 = vmatprep.subr.mxu0 0.0
      %4963 = vmatpush1.msra.mxu0 0.0
      %4964 = vmatprep.subr.mxu0 0.0
      %4965 = vmatpush1.msra.mxu0 0.0
      %4966 = vmatprep.subr.mxu0 0.0
      %4967 = vmatpush1.msra.mxu0 %v318
      %4968 = vmatprep.subr.mxu0 0.0
      %4969 = vmatpush2.msra.mxu0 0.0
      %4970 = vmatprep.subr.mxu0 0.0
      %4971 = vmatpush2.msra.mxu0 0.0
      %4972 = vmatprep.subr.mxu0 0.0
      %4973 = vmatpush2.msra.mxu0 0.0
      %4974 = vmatprep.subr.mxu0 0.0
      %4975 = vmatpush2.msra.mxu0 0.0
      %4976 = vmatprep.subr.mxu0 0.0
      %4977 = vmatpush2.msra.mxu0 0.0
      %4978 = vmatprep.subr.mxu0 0.0
      %4979 = vmatpush2.msra.mxu0 0.0
      %4980 = vmatprep.subr.mxu0 0.0
      %4981 = vmatpush2.msra.mxu0 0.0
      %4982 = vmatprep.subr.mxu0 0.0
      %4983 = vmatpush2.msra.mxu0 0.0
      %4984 = vmatprep.subr.mxu0 0.0
      %4985 = vmatpush2.msra.mxu0 0.0
      %4986 = vmatprep.subr.mxu0 0.0
      %4987 = vmatpush2.msra.mxu0 0.0
      %4988 = vmatprep.subr.mxu0 0.0
      %4989 = vmatpush2.msra.mxu0 0.0
      %4990 = vmatprep.subr.mxu0 0.0
      %4991 = vmatpush2.msra.mxu0 0.0
      %4992 = vmatprep.subr.mxu0 0.0
      %4993 = vmatpush2.msra.mxu0 0.0
      %4994 = vmatprep.subr.mxu0 0.0
      %4995 = vmatpush2.msra.mxu0 0.0
      %4996 = vmatprep.subr.mxu0 0.0
      %4997 = vmatpush2.msra.mxu0 0.0
      %4998 = vmatprep.subr.mxu0 0.0
      %4999 = vmatpush2.msra.mxu0 0.0
      %5000 = vmatprep.mubr.f32.mxu0 0.0
      %5001 = vmatmul.mubr.f32.gmra.mxu0 %v781
      %v5002 = vpop.f32.mrf.mxu0
      %v5003 = vadd.f32 0.0, %v5002
      %v5004 = vpop.f32.mrf.mxu0
      %5005 = vmatprep.mubr.f32.mxu0 0.0
      %5006 = vmatmul.mubr.f32.gmra.mxu0 %v783
      %v5007 = vpop.f32.mrf.mxu0
      %v5008 = vadd.f32 0.0, %v5007
      %v5009 = vpop.f32.mrf.mxu0
      %5010 = vmatprep.mubr.f32.mxu0 0.0
      %5011 = vmatmul.mubr.f32.gmra.mxu0 %v785
      %v5012 = vpop.f32.mrf.mxu0
      %v5013 = vadd.f32 0.0, %v5012
      %v5014 = vpop.f32.mrf.mxu0
      %5015 = vmatprep.mubr.f32.mxu0 0.0
      %5016 = vmatmul.mubr.f32.gmra.mxu0 %v787
      %v5017 = vpop.f32.mrf.mxu0
      %v5018 = vadd.f32 0.0, %v5017
      %v5019 = vpop.f32.mrf.mxu0
      %5020 = vmatprep.mubr.f32.mxu0 0.0
      %5021 = vmatmul.mubr.f32.gmra.mxu0 %v789
      %v5022 = vpop.f32.mrf.mxu0
      %v5023 = vadd.f32 0.0, %v5022
      %v5024 = vpop.f32.mrf.mxu0
      %5025 = vmatprep.mubr.f32.mxu0 0.0
      %5026 = vmatmul.mubr.f32.gmra.mxu0 %v791
      %v5027 = vpop.f32.mrf.mxu0
      %v5028 = vadd.f32 0.0, %v5027
      %v5029 = vpop.f32.mrf.mxu0
      %5030 = vmatprep.mubr.f32.mxu0 0.0
      %5031 = vmatmul.mubr.f32.gmra.mxu0 %v793
      %v5032 = vpop.f32.mrf.mxu0
      %v5033 = vadd.f32 0.0, %v5032
      %v5034 = vpop.f32.mrf.mxu0
      %5035 = vmatprep.mubr.f32.mxu0 0.0
      %5036 = vmatmul.mubr.f32.gmra.mxu0 %v795
      %v5037 = vpop.f32.mrf.mxu0
      %v5038 = vadd.f32 0.0, %v5037
      %v5039 = vpop.f32.mrf.mxu0
      %5040 = vmatprep.mubr.f32.mxu0 0.0
      %5041 = vmatmul.mubr.f32.gmra.mxu0 %v797
      %v5042 = vpop.f32.mrf.mxu0
      %v5043 = vadd.f32 0.0, %v5042
      %v5044 = vpop.f32.mrf.mxu0
      %5045 = vmatprep.mubr.f32.mxu0 0.0
      %5046 = vmatmul.mubr.f32.gmra.mxu0 %v799
      %v5047 = vpop.f32.mrf.mxu0
      %v5048 = vadd.f32 0.0, %v5047
      %v5049 = vpop.f32.mrf.mxu0
      %5050 = vmatprep.mubr.f32.mxu0 0.0
      %5051 = vmatmul.mubr.f32.gmra.mxu0 %v801
      %v5052 = vpop.f32.mrf.mxu0
      %v5053 = vadd.f32 0.0, %v5052
      %v5054 = vpop.f32.mrf.mxu0
      %5055 = vmatprep.mubr.f32.mxu0 0.0
      %5056 = vmatmul.mubr.f32.gmra.mxu0 %v803
      %v5057 = vpop.f32.mrf.mxu0
      %v5058 = vadd.f32 0.0, %v5057
      %v5059 = vpop.f32.mrf.mxu0
      %5060 = vmatprep.mubr.f32.mxu0 0.0
      %5061 = vmatmul.mubr.f32.gmra.mxu0 %v805
      %v5062 = vpop.f32.mrf.mxu0
      %v5063 = vadd.f32 0.0, %v5062
      %v5064 = vpop.f32.mrf.mxu0
      %5065 = vmatprep.mubr.f32.mxu0 0.0
      %5066 = vmatmul.mubr.f32.gmra.mxu0 %v807
      %v5067 = vpop.f32.mrf.mxu0
      %v5068 = vadd.f32 0.0, %v5067
      %v5069 = vpop.f32.mrf.mxu0
      %5070 = vmatprep.mubr.f32.mxu0 0.0
      %5071 = vmatmul.mubr.f32.gmra.mxu0 %v809
      %v5072 = vpop.f32.mrf.mxu0
      %v5073 = vadd.f32 0.0, %v5072
      %v5074 = vpop.f32.mrf.mxu0
      %5075 = vmatprep.mubr.f32.mxu0 0.0
      %5076 = vmatmul.mubr.f32.gmra.mxu0 %v811
      %v5077 = vpop.f32.mrf.mxu0
      %v5078 = vadd.f32 0.0, %v5077
      %v5079 = vpop.f32.mrf.mxu0
      %5080 = vmatprep.mubr.f32.mxu0 0.0
      %5081 = vmatmul.mubr.f32.gmra.mxu0 %v813
      %v5082 = vpop.f32.mrf.mxu0
      %v5083 = vadd.f32 0.0, %v5082
      %v5084 = vpop.f32.mrf.mxu0
      %5085 = vmatprep.mubr.f32.mxu0 0.0
      %5086 = vmatmul.mubr.f32.gmra.mxu0 %v815
      %v5087 = vpop.f32.mrf.mxu0
      %v5088 = vadd.f32 0.0, %v5087
      %v5089 = vpop.f32.mrf.mxu0
      %5090 = vmatprep.mubr.f32.mxu0 0.0
      %5091 = vmatmul.mubr.f32.gmra.mxu0 %v817
      %v5092 = vpop.f32.mrf.mxu0
      %v5093 = vadd.f32 0.0, %v5092
      %v5094 = vpop.f32.mrf.mxu0
      %5095 = vmatprep.mubr.f32.mxu0 0.0
      %5096 = vmatmul.mubr.f32.gmra.mxu0 %v819
      %v5097 = vpop.f32.mrf.mxu0
      %v5098 = vadd.f32 0.0, %v5097
      %v5099 = vpop.f32.mrf.mxu0
      %5100 = vmatprep.mubr.f32.mxu0 0.0
      %5101 = vmatmul.mubr.f32.gmra.mxu0 %v821
      %v5102 = vpop.f32.mrf.mxu0
      %v5103 = vadd.f32 0.0, %v5102
      %v5104 = vpop.f32.mrf.mxu0
      %5105 = vmatprep.mubr.f32.mxu0 0.0
      %5106 = vmatmul.mubr.f32.gmra.mxu0 %v823
      %v5107 = vpop.f32.mrf.mxu0
      %v5108 = vadd.f32 0.0, %v5107
      %v5109 = vpop.f32.mrf.mxu0
      %5110 = vmatprep.mubr.f32.mxu0 0.0
      %5111 = vmatmul.mubr.f32.gmra.mxu0 %v825
      %v5112 = vpop.f32.mrf.mxu0
      %v5113 = vadd.f32 0.0, %v5112
      %v5114 = vpop.f32.mrf.mxu0
      %5115 = vmatprep.mubr.f32.mxu0 0.0
      %5116 = vmatmul.mubr.f32.gmra.mxu0 %v827
      %v5117 = vpop.f32.mrf.mxu0
      %v5118 = vadd.f32 0.0, %v5117
      %v5119 = vpop.f32.mrf.mxu0
      %5120 = vmatprep.mubr.f32.mxu0 0.0
      %5121 = vmatmul.mubr.f32.gmra.mxu0 %v829
      %v5122 = vpop.f32.mrf.mxu0
      %v5123 = vadd.f32 0.0, %v5122
      %v5124 = vpop.f32.mrf.mxu0
      %5125 = vmatprep.mubr.f32.mxu0 0.0
      %5126 = vmatmul.mubr.f32.gmra.mxu0 %v831
      %v5127 = vpop.f32.mrf.mxu0
      %v5128 = vadd.f32 0.0, %v5127
      %v5129 = vpop.f32.mrf.mxu0
      %5130 = vmatprep.mubr.f32.mxu0 0.0
      %5131 = vmatmul.mubr.f32.gmra.mxu0 %v833
      %v5132 = vpop.f32.mrf.mxu0
      %v5133 = vadd.f32 0.0, %v5132
      %v5134 = vpop.f32.mrf.mxu0
      %5135 = vmatprep.mubr.f32.mxu0 0.0
      %5136 = vmatmul.mubr.f32.gmra.mxu0 %v835
      %v5137 = vpop.f32.mrf.mxu0
      %v5138 = vadd.f32 0.0, %v5137
      %v5139 = vpop.f32.mrf.mxu0
      %5140 = vmatprep.mubr.f32.mxu0 0.0
      %5141 = vmatmul.mubr.f32.gmra.mxu0 %v837
      %v5142 = vpop.f32.mrf.mxu0
      %v5143 = vadd.f32 0.0, %v5142
      %v5144 = vpop.f32.mrf.mxu0
      %5145 = vmatprep.mubr.f32.mxu0 0.0
      %5146 = vmatmul.mubr.f32.gmra.mxu0 %v839
      %v5147 = vpop.f32.mrf.mxu0
      %v5148 = vadd.f32 0.0, %v5147
      %v5149 = vpop.f32.mrf.mxu0
      %5150 = vmatprep.mubr.f32.mxu0 0.0
      %5151 = vmatmul.mubr.f32.gmra.mxu0 %v841
      %v5152 = vpop.f32.mrf.mxu0
      %v5153 = vadd.f32 0.0, %v5152
      %v5154 = vpop.f32.mrf.mxu0
      %5155 = vmatprep.mubr.f32.mxu0 0.0
      %5156 = vmatmul.mubr.f32.gmra.mxu0 %v843
      %v5157 = vpop.f32.mrf.mxu0
      %v5158 = vadd.f32 0.0, %v5157
      %v5159 = vpop.f32.mrf.mxu0
      %5160 = vmatprep.mubr.f32.mxu0 0.0
      %5161 = vmatmul.mubr.f32.gmra.mxu0 %v845
      %v5162 = vpop.f32.mrf.mxu0
      %v5163 = vadd.f32 0.0, %v5162
      %v5164 = vpop.f32.mrf.mxu0
      %5165 = vmatprep.mubr.f32.mxu0 0.0
      %5166 = vmatmul.mubr.f32.gmra.mxu0 %v847
      %v5167 = vpop.f32.mrf.mxu0
      %v5168 = vadd.f32 0.0, %v5167
      %v5169 = vpop.f32.mrf.mxu0
      %5170 = vmatprep.mubr.f32.mxu0 0.0
      %5171 = vmatmul.mubr.f32.gmra.mxu0 %v849
      %v5172 = vpop.f32.mrf.mxu0
      %v5173 = vadd.f32 0.0, %v5172
      %v5174 = vpop.f32.mrf.mxu0
      %5175 = vmatprep.mubr.f32.mxu0 0.0
      %5176 = vmatmul.mubr.f32.gmra.mxu0 %v851
      %v5177 = vpop.f32.mrf.mxu0
      %v5178 = vadd.f32 0.0, %v5177
      %v5179 = vpop.f32.mrf.mxu0
      %5180 = vmatprep.mubr.f32.mxu0 0.0
      %5181 = vmatmul.mubr.f32.gmra.mxu0 %v853
      %v5182 = vpop.f32.mrf.mxu0
      %v5183 = vadd.f32 0.0, %v5182
      %v5184 = vpop.f32.mrf.mxu0
      %5185 = vmatprep.mubr.f32.mxu0 0.0
      %5186 = vmatmul.mubr.f32.gmra.mxu0 %v855
      %v5187 = vpop.f32.mrf.mxu0
      %v5188 = vadd.f32 0.0, %v5187
      %v5189 = vpop.f32.mrf.mxu0
      %5190 = vmatprep.mubr.f32.mxu0 0.0
      %5191 = vmatmul.mubr.f32.gmra.mxu0 %v857
      %v5192 = vpop.f32.mrf.mxu0
      %v5193 = vadd.f32 0.0, %v5192
      %v5194 = vpop.f32.mrf.mxu0
      %5195 = vmatprep.mubr.f32.mxu0 0.0
      %5196 = vmatmul.mubr.f32.gmra.mxu0 %v859
      %v5197 = vpop.f32.mrf.mxu0
      %v5198 = vadd.f32 0.0, %v5197
      %v5199 = vpop.f32.mrf.mxu0
      %5200 = vmatprep.mubr.f32.mxu0 0.0
      %5201 = vmatmul.mubr.f32.gmra.mxu0 %v861
      %v5202 = vpop.f32.mrf.mxu0
      %v5203 = vadd.f32 0.0, %v5202
      %v5204 = vpop.f32.mrf.mxu0
      %5205 = vmatprep.mubr.f32.mxu0 0.0
      %5206 = vmatmul.mubr.f32.gmra.mxu0 %v863
      %v5207 = vpop.f32.mrf.mxu0
      %v5208 = vadd.f32 0.0, %v5207
      %v5209 = vpop.f32.mrf.mxu0
      %5210 = vmatprep.mubr.f32.mxu0 0.0
      %5211 = vmatmul.mubr.f32.gmra.mxu0 %v865
      %v5212 = vpop.f32.mrf.mxu0
      %v5213 = vadd.f32 0.0, %v5212
      %v5214 = vpop.f32.mrf.mxu0
      %5215 = vmatprep.mubr.f32.mxu0 0.0
      %5216 = vmatmul.mubr.f32.gmra.mxu0 %v867
      %v5217 = vpop.f32.mrf.mxu0
      %v5218 = vadd.f32 0.0, %v5217
      %v5219 = vpop.f32.mrf.mxu0
      %5220 = vmatprep.mubr.f32.mxu0 0.0
      %5221 = vmatmul.mubr.f32.gmra.mxu0 %v869
      %v5222 = vpop.f32.mrf.mxu0
      %v5223 = vadd.f32 0.0, %v5222
      %v5224 = vpop.f32.mrf.mxu0
      %5225 = vmatprep.mubr.f32.mxu0 0.0
      %5226 = vmatmul.mubr.f32.gmra.mxu0 %v871
      %v5227 = vpop.f32.mrf.mxu0
      %v5228 = vadd.f32 0.0, %v5227
      %v5229 = vpop.f32.mrf.mxu0
      %5230 = vmatprep.mubr.f32.mxu0 0.0
      %5231 = vmatmul.mubr.f32.gmra.mxu0 %v873
      %v5232 = vpop.f32.mrf.mxu0
      %v5233 = vadd.f32 0.0, %v5232
      %v5234 = vpop.f32.mrf.mxu0
      %5235 = vmatprep.mubr.f32.mxu0 0.0
      %5236 = vmatmul.mubr.f32.gmra.mxu0 %v875
      %v5237 = vpop.f32.mrf.mxu0
      %v5238 = vadd.f32 0.0, %v5237
      %v5239 = vpop.f32.mrf.mxu0
      %5240 = vmatprep.mubr.f32.mxu0 0.0
      %5241 = vmatmul.mubr.f32.gmra.mxu0 %v877
      %v5242 = vpop.f32.mrf.mxu0
      %v5243 = vadd.f32 0.0, %v5242
      %v5244 = vpop.f32.mrf.mxu0
      %5245 = vmatprep.mubr.f32.mxu0 0.0
      %5246 = vmatmul.mubr.f32.gmra.mxu0 %v879
      %v5247 = vpop.f32.mrf.mxu0
      %v5248 = vadd.f32 0.0, %v5247
      %v5249 = vpop.f32.mrf.mxu0
      %5250 = vmatprep.mubr.f32.mxu0 0.0
      %5251 = vmatmul.mubr.f32.gmra.mxu0 %v881
      %v5252 = vpop.f32.mrf.mxu0
      %v5253 = vadd.f32 0.0, %v5252
      %v5254 = vpop.f32.mrf.mxu0
      %5255 = vmatprep.mubr.f32.mxu0 0.0
      %5256 = vmatmul.mubr.f32.gmra.mxu0 %v883
      %v5257 = vpop.f32.mrf.mxu0
      %v5258 = vadd.f32 0.0, %v5257
      %v5259 = vpop.f32.mrf.mxu0
      %5260 = vmatprep.mubr.f32.mxu0 0.0
      %5261 = vmatmul.mubr.f32.gmra.mxu0 %v885
      %v5262 = vpop.f32.mrf.mxu0
      %v5263 = vadd.f32 0.0, %v5262
      %v5264 = vpop.f32.mrf.mxu0
      %5265 = vmatprep.mubr.f32.mxu0 0.0
      %5266 = vmatmul.mubr.f32.gmra.mxu0 %v887
      %v5267 = vpop.f32.mrf.mxu0
      %v5268 = vadd.f32 0.0, %v5267
      %v5269 = vpop.f32.mrf.mxu0
      %5270 = vmatprep.mubr.f32.mxu0 0.0
      %5271 = vmatmul.mubr.f32.gmra.mxu0 %v889
      %v5272 = vpop.f32.mrf.mxu0
      %v5273 = vadd.f32 0.0, %v5272
      %v5274 = vpop.f32.mrf.mxu0
      %5275 = vmatprep.mubr.f32.mxu0 0.0
      %5276 = vmatmul.mubr.f32.gmra.mxu0 %v891
      %v5277 = vpop.f32.mrf.mxu0
      %v5278 = vadd.f32 0.0, %v5277
      %v5279 = vpop.f32.mrf.mxu0
      %5280 = vmatprep.mubr.f32.mxu0 0.0
      %5281 = vmatmul.mubr.f32.gmra.mxu0 %v893
      %v5282 = vpop.f32.mrf.mxu0
      %v5283 = vadd.f32 0.0, %v5282
      %v5284 = vpop.f32.mrf.mxu0
      %5285 = vmatprep.mubr.f32.mxu0 0.0
      %5286 = vmatmul.mubr.f32.gmra.mxu0 %v895
      %v5287 = vpop.f32.mrf.mxu0
      %v5288 = vadd.f32 0.0, %v5287
      %v5289 = vpop.f32.mrf.mxu0
      %5290 = vmatprep.mubr.f32.mxu0 0.0
      %5291 = vmatmul.mubr.f32.gmra.mxu0 %v897
      %v5292 = vpop.f32.mrf.mxu0
      %v5293 = vadd.f32 0.0, %v5292
      %v5294 = vpop.f32.mrf.mxu0
      %5295 = vmatprep.mubr.f32.mxu0 0.0
      %5296 = vmatmul.mubr.f32.gmra.mxu0 %v899
      %v5297 = vpop.f32.mrf.mxu0
      %v5298 = vadd.f32 0.0, %v5297
      %v5299 = vpop.f32.mrf.mxu0
      %5300 = vmatprep.mubr.f32.mxu0 0.0
      %5301 = vmatmul.mubr.f32.gmra.mxu0 %v901
      %v5302 = vpop.f32.mrf.mxu0
      %v5303 = vadd.f32 0.0, %v5302
      %v5304 = vpop.f32.mrf.mxu0
      %5305 = vmatprep.mubr.f32.mxu0 0.0
      %5306 = vmatmul.mubr.f32.gmra.mxu0 %v903
      %v5307 = vpop.f32.mrf.mxu0
      %v5308 = vadd.f32 0.0, %v5307
      %v5309 = vpop.f32.mrf.mxu0
      %5310 = vmatprep.mubr.f32.mxu0 0.0
      %5311 = vmatmul.mubr.f32.gmra.mxu0 %v905
      %v5312 = vpop.f32.mrf.mxu0
      %v5313 = vadd.f32 0.0, %v5312
      %v5314 = vpop.f32.mrf.mxu0
      %5315 = vmatprep.mubr.f32.mxu0 0.0
      %5316 = vmatmul.mubr.f32.gmra.mxu0 %v907
      %v5317 = vpop.f32.mrf.mxu0
      %v5318 = vadd.f32 0.0, %v5317
      %v5319 = vpop.f32.mrf.mxu0
      %5320 = vmatprep.mubr.f32.mxu0 0.0
      %5321 = vmatmul.mubr.f32.gmra.mxu0 %v909
      %v5322 = vpop.f32.mrf.mxu0
      %v5323 = vadd.f32 0.0, %v5322
      %v5324 = vpop.f32.mrf.mxu0
      %5325 = vmatprep.mubr.f32.mxu0 0.0
      %5326 = vmatmul.mubr.f32.gmra.mxu0 %v911
      %v5327 = vpop.f32.mrf.mxu0
      %v5328 = vadd.f32 0.0, %v5327
      %v5329 = vpop.f32.mrf.mxu0
      %5330 = vmatprep.mubr.f32.mxu0 0.0
      %5331 = vmatmul.mubr.f32.gmra.mxu0 %v913
      %v5332 = vpop.f32.mrf.mxu0
      %v5333 = vadd.f32 0.0, %v5332
      %v5334 = vpop.f32.mrf.mxu0
      %5335 = vmatprep.mubr.f32.mxu0 0.0
      %5336 = vmatmul.mubr.f32.gmra.mxu0 %v915
      %v5337 = vpop.f32.mrf.mxu0
      %v5338 = vadd.f32 0.0, %v5337
      %v5339 = vpop.f32.mrf.mxu0
      %5340 = vmatprep.mubr.f32.mxu0 0.0
      %5341 = vmatmul.mubr.f32.gmra.mxu0 %v917
      %v5342 = vpop.f32.mrf.mxu0
      %v5343 = vadd.f32 0.0, %v5342
      %v5344 = vpop.f32.mrf.mxu0
      %5345 = vmatprep.mubr.f32.mxu0 0.0
      %5346 = vmatmul.mubr.f32.gmra.mxu0 %v919
      %v5347 = vpop.f32.mrf.mxu0
      %v5348 = vadd.f32 0.0, %v5347
      %v5349 = vpop.f32.mrf.mxu0
      %5350 = vmatprep.mubr.f32.mxu0 0.0
      %5351 = vmatmul.mubr.f32.gmra.mxu0 %v921
      %v5352 = vpop.f32.mrf.mxu0
      %v5353 = vadd.f32 0.0, %v5352
      %v5354 = vpop.f32.mrf.mxu0
      %5355 = vmatprep.mubr.f32.mxu0 0.0
      %5356 = vmatmul.mubr.f32.gmra.mxu0 %v923
      %v5357 = vpop.f32.mrf.mxu0
      %v5358 = vadd.f32 0.0, %v5357
      %v5359 = vpop.f32.mrf.mxu0
      %5360 = vmatprep.mubr.f32.mxu0 0.0
      %5361 = vmatmul.mubr.f32.gmra.mxu0 %v925
      %v5362 = vpop.f32.mrf.mxu0
      %v5363 = vadd.f32 0.0, %v5362
      %v5364 = vpop.f32.mrf.mxu0
      %5365 = vmatprep.mubr.f32.mxu0 0.0
      %5366 = vmatmul.mubr.f32.gmra.mxu0 %v927
      %v5367 = vpop.f32.mrf.mxu0
      %v5368 = vadd.f32 0.0, %v5367
      %v5369 = vpop.f32.mrf.mxu0
      %5370 = vmatprep.mubr.f32.mxu0 0.0
      %5371 = vmatmul.mubr.f32.gmra.mxu0 %v929
      %v5372 = vpop.f32.mrf.mxu0
      %v5373 = vadd.f32 0.0, %v5372
      %v5374 = vpop.f32.mrf.mxu0
      %5375 = vmatprep.mubr.f32.mxu0 0.0
      %5376 = vmatmul.mubr.f32.gmra.mxu0 %v931
      %v5377 = vpop.f32.mrf.mxu0
      %v5378 = vadd.f32 0.0, %v5377
      %v5379 = vpop.f32.mrf.mxu0
      %5380 = vmatprep.mubr.f32.mxu0 0.0
      %5381 = vmatmul.mubr.f32.gmra.mxu0 %v933
      %v5382 = vpop.f32.mrf.mxu0
      %v5383 = vadd.f32 0.0, %v5382
      %v5384 = vpop.f32.mrf.mxu0
      %5385 = vmatprep.mubr.f32.mxu0 0.0
      %5386 = vmatmul.mubr.f32.gmra.mxu0 %v935
      %v5387 = vpop.f32.mrf.mxu0
      %v5388 = vadd.f32 0.0, %v5387
      %v5389 = vpop.f32.mrf.mxu0
      %5390 = vmatprep.mubr.f32.mxu0 0.0
      %5391 = vmatmul.mubr.f32.gmra.mxu0 %v937
      %v5392 = vpop.f32.mrf.mxu0
      %v5393 = vadd.f32 0.0, %v5392
      %v5394 = vpop.f32.mrf.mxu0
      %5395 = vmatprep.mubr.f32.mxu0 0.0
      %5396 = vmatmul.mubr.f32.gmra.mxu0 %v939
      %v5397 = vpop.f32.mrf.mxu0
      %v5398 = vadd.f32 0.0, %v5397
      %v5399 = vpop.f32.mrf.mxu0
      %5400 = vmatprep.mubr.f32.mxu0 0.0
      %5401 = vmatmul.mubr.f32.gmra.mxu0 %v941
      %v5402 = vpop.f32.mrf.mxu0
      %v5403 = vadd.f32 0.0, %v5402
      %v5404 = vpop.f32.mrf.mxu0
      %5405 = vmatprep.mubr.f32.mxu0 0.0
      %5406 = vmatmul.mubr.f32.gmra.mxu0 %v943
      %v5407 = vpop.f32.mrf.mxu0
      %v5408 = vadd.f32 0.0, %v5407
      %v5409 = vpop.f32.mrf.mxu0
      %5410 = vmatprep.mubr.f32.mxu0 0.0
      %5411 = vmatmul.mubr.f32.gmra.mxu0 %v945
      %v5412 = vpop.f32.mrf.mxu0
      %v5413 = vadd.f32 0.0, %v5412
      %v5414 = vpop.f32.mrf.mxu0
      %5415 = vmatprep.mubr.f32.mxu0 0.0
      %5416 = vmatmul.mubr.f32.gmra.mxu0 %v947
      %v5417 = vpop.f32.mrf.mxu0
      %v5418 = vadd.f32 0.0, %v5417
      %v5419 = vpop.f32.mrf.mxu0
      %5420 = vmatprep.mubr.f32.mxu0 0.0
      %5421 = vmatmul.mubr.f32.gmra.mxu0 %v949
      %v5422 = vpop.f32.mrf.mxu0
      %v5423 = vadd.f32 0.0, %v5422
      %v5424 = vpop.f32.mrf.mxu0
      %5425 = vmatprep.mubr.f32.mxu0 0.0
      %5426 = vmatmul.mubr.f32.gmra.mxu0 %v951
      %v5427 = vpop.f32.mrf.mxu0
      %v5428 = vadd.f32 0.0, %v5427
      %v5429 = vpop.f32.mrf.mxu0
      %5430 = vmatprep.mubr.f32.mxu0 0.0
      %5431 = vmatmul.mubr.f32.gmra.mxu0 %v953
      %v5432 = vpop.f32.mrf.mxu0
      %v5433 = vadd.f32 0.0, %v5432
      %v5434 = vpop.f32.mrf.mxu0
      %5435 = vmatprep.mubr.f32.mxu0 0.0
      %5436 = vmatmul.mubr.f32.gmra.mxu0 %v955
      %v5437 = vpop.f32.mrf.mxu0
      %v5438 = vadd.f32 0.0, %v5437
      %v5439 = vpop.f32.mrf.mxu0
      %5440 = vmatprep.mubr.f32.mxu0 0.0
      %5441 = vmatmul.mubr.f32.gmra.mxu0 %v957
      %v5442 = vpop.f32.mrf.mxu0
      %v5443 = vadd.f32 0.0, %v5442
      %v5444 = vpop.f32.mrf.mxu0
      %5445 = vmatprep.mubr.f32.mxu0 0.0
      %5446 = vmatmul.mubr.f32.gmra.mxu0 %v959
      %v5447 = vpop.f32.mrf.mxu0
      %v5448 = vadd.f32 0.0, %v5447
      %v5449 = vpop.f32.mrf.mxu0
      %5450 = vmatprep.mubr.f32.mxu0 0.0
      %5451 = vmatmul.mubr.f32.gmra.mxu0 %v961
      %v5452 = vpop.f32.mrf.mxu0
      %v5453 = vadd.f32 0.0, %v5452
      %v5454 = vpop.f32.mrf.mxu0
      %5455 = vmatprep.mubr.f32.mxu0 0.0
      %5456 = vmatmul.mubr.f32.gmra.mxu0 %v963
      %v5457 = vpop.f32.mrf.mxu0
      %v5458 = vadd.f32 0.0, %v5457
      %v5459 = vpop.f32.mrf.mxu0
      %5460 = vmatprep.mubr.f32.mxu0 0.0
      %5461 = vmatmul.mubr.f32.gmra.mxu0 %v965
      %v5462 = vpop.f32.mrf.mxu0
      %v5463 = vadd.f32 0.0, %v5462
      %v5464 = vpop.f32.mrf.mxu0
      %5465 = vmatprep.mubr.f32.mxu0 0.0
      %5466 = vmatmul.mubr.f32.gmra.mxu0 %v967
      %v5467 = vpop.f32.mrf.mxu0
      %v5468 = vadd.f32 0.0, %v5467
      %v5469 = vpop.f32.mrf.mxu0
      %5470 = vmatprep.mubr.f32.mxu0 0.0
      %5471 = vmatmul.mubr.f32.gmra.mxu0 %v969
      %v5472 = vpop.f32.mrf.mxu0
      %v5473 = vadd.f32 0.0, %v5472
      %v5474 = vpop.f32.mrf.mxu0
      %5475 = vmatprep.mubr.f32.mxu0 0.0
      %5476 = vmatmul.mubr.f32.gmra.mxu0 %v971
      %v5477 = vpop.f32.mrf.mxu0
      %v5478 = vadd.f32 0.0, %v5477
      %v5479 = vpop.f32.mrf.mxu0
      %5480 = vmatprep.mubr.f32.mxu0 0.0
      %5481 = vmatmul.mubr.f32.gmra.mxu0 %v973
      %v5482 = vpop.f32.mrf.mxu0
      %v5483 = vadd.f32 0.0, %v5482
      %v5484 = vpop.f32.mrf.mxu0
      %5485 = vmatprep.mubr.f32.mxu0 0.0
      %5486 = vmatmul.mubr.f32.gmra.mxu0 %v975
      %v5487 = vpop.f32.mrf.mxu0
      %v5488 = vadd.f32 0.0, %v5487
      %v5489 = vpop.f32.mrf.mxu0
      %5490 = vmatprep.mubr.f32.mxu0 0.0
      %5491 = vmatmul.mubr.f32.gmra.mxu0 %v977
      %v5492 = vpop.f32.mrf.mxu0
      %v5493 = vadd.f32 0.0, %v5492
      %v5494 = vpop.f32.mrf.mxu0
      %5495 = vmatprep.mubr.f32.mxu0 0.0
      %5496 = vmatmul.mubr.f32.gmra.mxu0 %v979
      %v5497 = vpop.f32.mrf.mxu0
      %v5498 = vadd.f32 0.0, %v5497
      %v5499 = vpop.f32.mrf.mxu0
      %5500 = vmatprep.mubr.f32.mxu0 0.0
      %5501 = vmatmul.mubr.f32.gmra.mxu0 %v981
      %v5502 = vpop.f32.mrf.mxu0
      %v5503 = vadd.f32 0.0, %v5502
      %v5504 = vpop.f32.mrf.mxu0
      %5505 = vmatprep.mubr.f32.mxu0 0.0
      %5506 = vmatmul.mubr.f32.gmra.mxu0 %v983
      %v5507 = vpop.f32.mrf.mxu0
      %v5508 = vadd.f32 0.0, %v5507
      %v5509 = vpop.f32.mrf.mxu0
      %5510 = vmatprep.mubr.f32.mxu0 0.0
      %5511 = vmatmul.mubr.f32.gmra.mxu0 %v985
      %v5512 = vpop.f32.mrf.mxu0
      %v5513 = vadd.f32 0.0, %v5512
      %v5514 = vpop.f32.mrf.mxu0
      %5515 = vmatprep.mubr.f32.mxu0 0.0
      %5516 = vmatmul.mubr.f32.gmra.mxu0 %v987
      %v5517 = vpop.f32.mrf.mxu0
      %v5518 = vadd.f32 0.0, %v5517
      %v5519 = vpop.f32.mrf.mxu0
      %5520 = vmatprep.mubr.f32.mxu0 0.0
      %5521 = vmatmul.mubr.f32.gmra.mxu0 %v989
      %v5522 = vpop.f32.mrf.mxu0
      %v5523 = vadd.f32 0.0, %v5522
      %v5524 = vpop.f32.mrf.mxu0
      %5525 = vmatprep.mubr.f32.mxu0 0.0
      %5526 = vmatmul.mubr.f32.gmra.mxu0 %v991
      %v5527 = vpop.f32.mrf.mxu0
      %v5528 = vadd.f32 0.0, %v5527
      %v5529 = vpop.f32.mrf.mxu0
      %5530 = vmatprep.mubr.f32.mxu0 0.0
      %5531 = vmatmul.mubr.f32.gmra.mxu0 %v993
      %v5532 = vpop.f32.mrf.mxu0
      %v5533 = vadd.f32 0.0, %v5532
      %v5534 = vpop.f32.mrf.mxu0
      %5535 = vmatprep.mubr.f32.mxu0 0.0
      %5536 = vmatmul.mubr.f32.gmra.mxu0 %v995
      %v5537 = vpop.f32.mrf.mxu0
      %v5538 = vadd.f32 0.0, %v5537
      %v5539 = vpop.f32.mrf.mxu0
      %5540 = vmatprep.mubr.f32.mxu0 0.0
      %5541 = vmatmul.mubr.f32.gmra.mxu0 %v997
      %v5542 = vpop.f32.mrf.mxu0
      %v5543 = vadd.f32 0.0, %v5542
      %v5544 = vpop.f32.mrf.mxu0
      %5545 = vmatprep.mubr.f32.mxu0 0.0
      %5546 = vmatmul.mubr.f32.gmra.mxu0 %v999
      %v5547 = vpop.f32.mrf.mxu0
      %v5548 = vadd.f32 0.0, %v5547
      %v5549 = vpop.f32.mrf.mxu0
      %5550 = vmatprep.mubr.f32.mxu0 0.0
      %5551 = vmatmul.mubr.f32.gmra.mxu0 %v1001
      %v5552 = vpop.f32.mrf.mxu0
      %v5553 = vadd.f32 0.0, %v5552
      %v5554 = vpop.f32.mrf.mxu0
      %5555 = vmatprep.mubr.f32.mxu0 0.0
      %5556 = vmatmul.mubr.f32.gmra.mxu0 %v1003
      %v5557 = vpop.f32.mrf.mxu0
      %v5558 = vadd.f32 0.0, %v5557
      %v5559 = vpop.f32.mrf.mxu0
      %5560 = vmatprep.mubr.f32.mxu0 0.0
      %5561 = vmatmul.mubr.f32.gmra.mxu0 %v1005
      %v5562 = vpop.f32.mrf.mxu0
      %v5563 = vadd.f32 0.0, %v5562
      %v5564 = vpop.f32.mrf.mxu0
      %5565 = vmatprep.mubr.f32.mxu0 0.0
      %5566 = vmatmul.mubr.f32.gmra.mxu0 %v1007
      %v5567 = vpop.f32.mrf.mxu0
      %v5568 = vadd.f32 0.0, %v5567
      %v5569 = vpop.f32.mrf.mxu0
      %5570 = vmatprep.mubr.f32.mxu0 0.0
      %5571 = vmatmul.mubr.f32.gmra.mxu0 %v1009
      %v5572 = vpop.f32.mrf.mxu0
      %v5573 = vadd.f32 0.0, %v5572
      %v5574 = vpop.f32.mrf.mxu0
      %5575 = vmatprep.mubr.f32.mxu0 0.0
      %5576 = vmatmul.mubr.f32.gmra.mxu0 %v1011
      %v5577 = vpop.f32.mrf.mxu0
      %v5578 = vadd.f32 0.0, %v5577
      %v5579 = vpop.f32.mrf.mxu0
      %5580 = vmatprep.mubr.f32.mxu0 0.0
      %5581 = vmatmul.mubr.f32.gmra.mxu0 %v1013
      %v5582 = vpop.f32.mrf.mxu0
      %v5583 = vadd.f32 0.0, %v5582
      %v5584 = vpop.f32.mrf.mxu0
      %5585 = vmatprep.mubr.f32.mxu0 0.0
      %5586 = vmatmul.mubr.f32.gmra.mxu0 %v1015
      %v5587 = vpop.f32.mrf.mxu0
      %v5588 = vadd.f32 0.0, %v5587
      %v5589 = vpop.f32.mrf.mxu0
      %5590 = vmatprep.mubr.f32.mxu0 0.0
      %5591 = vmatmul.mubr.f32.gmra.mxu0 %v1017
      %v5592 = vpop.f32.mrf.mxu0
      %v5593 = vadd.f32 0.0, %v5592
      %v5594 = vpop.f32.mrf.mxu0
      %5595 = vmatprep.mubr.f32.mxu0 0.0
      %5596 = vmatmul.mubr.f32.gmra.mxu0 %v1019
      %v5597 = vpop.f32.mrf.mxu0
      %v5598 = vadd.f32 0.0, %v5597
      %v5599 = vpop.f32.mrf.mxu0
      %5600 = vmatprep.mubr.f32.mxu0 0.0
      %5601 = vmatmul.mubr.f32.gmra.mxu0 %v1021
      %v5602 = vpop.f32.mrf.mxu0
      %v5603 = vadd.f32 0.0, %v5602
      %v5604 = vpop.f32.mrf.mxu0
      %5605 = vmatprep.mubr.f32.mxu0 0.0
      %5606 = vmatmul.mubr.f32.gmra.mxu0 %v1023
      %v5607 = vpop.f32.mrf.mxu0
      %v5608 = vadd.f32 0.0, %v5607
      %v5609 = vpop.f32.mrf.mxu0
      %5610 = vmatprep.mubr.f32.mxu0 0.0
      %5611 = vmatmul.mubr.f32.gmra.mxu0 %v1025
      %v5612 = vpop.f32.mrf.mxu0
      %v5613 = vadd.f32 0.0, %v5612
      %v5614 = vpop.f32.mrf.mxu0
      %5615 = vmatprep.mubr.f32.mxu0 0.0
      %5616 = vmatmul.mubr.f32.gmra.mxu0 %v1027
      %v5617 = vpop.f32.mrf.mxu0
      %v5618 = vadd.f32 0.0, %v5617
      %v5619 = vpop.f32.mrf.mxu0
      %5620 = vmatprep.mubr.f32.mxu0 0.0
      %5621 = vmatmul.mubr.f32.gmra.mxu0 %v4928
      %v5622 = vpop.f32.mrf.mxu0
      %v5623 = vadd.f32 0.0, %v5622
      %v5624 = vpop.f32.mrf.mxu0
      %5625 = vmatprep.mubr.f32.mxu0 0.0
      %5626 = vmatmul.mubr.f32.gmra.mxu0 %v4930
      %v5627 = vpop.f32.mrf.mxu0
      %v5628 = vadd.f32 0.0, %v5627
      %v5629 = vpop.f32.mrf.mxu0
      %5630 = vmatprep.mubr.f32.mxu0 0.0
      %5631 = vmatmul.mubr.f32.gmra.mxu0 %v4932
      %v5632 = vpop.f32.mrf.mxu0
      %v5633 = vadd.f32 0.0, %v5632
      %v5634 = vpop.f32.mrf.mxu0
      %5635 = vmatprep.mubr.f32.mxu0 0.0
      %5636 = vmatmul.mubr.f32.gmra.mxu0 %v4934
      %v5637 = vpop.f32.mrf.mxu0
      %v5638 = vadd.f32 0.0, %v5637
      %v5639 = vpop.f32.mrf.mxu0
      %5640 = vdwg.mxu0
      %v5641 = vadd.f32 %v4790, %v5003
      %v5642 = vadd.f32 %v4791, %v5008
      %v5643 = vadd.f32 %v4792, %v5013
      %v5644 = vadd.f32 %v4793, %v5018
      %v5645 = vadd.f32 %v4794, %v5023
      %v5646 = vadd.f32 %v4795, %v5028
      %v5647 = vadd.f32 %v4796, %v5033
      %v5648 = vadd.f32 %v4797, %v5038
      %v5649 = vadd.f32 %v4798, %v5043
      %v5650 = vadd.f32 %v4799, %v5048
      %v5651 = vadd.f32 %v4800, %v5053
      %v5652 = vadd.f32 %v4801, %v5058
      %v5653 = vadd.f32 %v4802, %v5063
      %v5654 = vadd.f32 %v4803, %v5068
      %v5655 = vadd.f32 %v4804, %v5073
      %v5656 = vadd.f32 %v4805, %v5078
      %v5657 = vadd.f32 %v4806, %v5083
      %v5658 = vadd.f32 %v4807, %v5088
      %v5659 = vadd.f32 %v4808, %v5093
      %v5660 = vadd.f32 %v4809, %v5098
      %v5661 = vadd.f32 %v4810, %v5103
      %v5662 = vadd.f32 %v4811, %v5108
      %v5663 = vadd.f32 %v4812, %v5113
      %v5664 = vadd.f32 %v4813, %v5118
      %v5665 = vadd.f32 %v4814, %v5123
      %v5666 = vadd.f32 %v4815, %v5128
      %v5667 = vadd.f32 %v4816, %v5133
      %v5668 = vadd.f32 %v4817, %v5138
      %v5669 = vadd.f32 %v4818, %v5143
      %v5670 = vadd.f32 %v4819, %v5148
      %v5671 = vadd.f32 %v4820, %v5153
      %v5672 = vadd.f32 %v4821, %v5158
      %v5673 = vadd.f32 %v4822, %v5163
      %v5674 = vadd.f32 %v4823, %v5168
      %v5675 = vadd.f32 %v4824, %v5173
      %v5676 = vadd.f32 %v4825, %v5178
      %v5677 = vadd.f32 %v4826, %v5183
      %v5678 = vadd.f32 %v4827, %v5188
      %v5679 = vadd.f32 %v4828, %v5193
      %v5680 = vadd.f32 %v4829, %v5198
      %v5681 = vadd.f32 %v4830, %v5203
      %v5682 = vadd.f32 %v4831, %v5208
      %v5683 = vadd.f32 %v4832, %v5213
      %v5684 = vadd.f32 %v4833, %v5218
      %v5685 = vadd.f32 %v4834, %v5223
      %v5686 = vadd.f32 %v4835, %v5228
      %v5687 = vadd.f32 %v4836, %v5233
      %v5688 = vadd.f32 %v4837, %v5238
      %v5689 = vadd.f32 %v4838, %v5243
      %v5690 = vadd.f32 %v4839, %v5248
      %v5691 = vadd.f32 %v4840, %v5253
      %v5692 = vadd.f32 %v4841, %v5258
      %v5693 = vadd.f32 %v4842, %v5263
      %v5694 = vadd.f32 %v4843, %v5268
      %v5695 = vadd.f32 %v4844, %v5273
      %v5696 = vadd.f32 %v4845, %v5278
      %v5697 = vadd.f32 %v4846, %v5283
      %v5698 = vadd.f32 %v4847, %v5288
      %v5699 = vadd.f32 %v4848, %v5293
      %v5700 = vadd.f32 %v4849, %v5298
      %v5701 = vadd.f32 %v4850, %v5303
      %v5702 = vadd.f32 %v4851, %v5308
      %v5703 = vadd.f32 %v4852, %v5313
      %v5704 = vadd.f32 %v4853, %v5318
      %v5705 = vadd.f32 %v4854, %v5323
      %v5706 = vadd.f32 %v4855, %v5328
      %v5707 = vadd.f32 %v4856, %v5333
      %v5708 = vadd.f32 %v4857, %v5338
      %v5709 = vadd.f32 %v4858, %v5343
      %v5710 = vadd.f32 %v4859, %v5348
      %v5711 = vadd.f32 %v4860, %v5353
      %v5712 = vadd.f32 %v4861, %v5358
      %v5713 = vadd.f32 %v4862, %v5363
      %v5714 = vadd.f32 %v4863, %v5368
      %v5715 = vadd.f32 %v4864, %v5373
      %v5716 = vadd.f32 %v4865, %v5378
      %v5717 = vadd.f32 %v4866, %v5383
      %v5718 = vadd.f32 %v4867, %v5388
      %v5719 = vadd.f32 %v4868, %v5393
      %v5720 = vadd.f32 %v4869, %v5398
      %v5721 = vadd.f32 %v4870, %v5403
      %v5722 = vadd.f32 %v4871, %v5408
      %v5723 = vadd.f32 %v4872, %v5413
      %v5724 = vadd.f32 %v4873, %v5418
      %v5725 = vadd.f32 %v4874, %v5423
      %v5726 = vadd.f32 %v4875, %v5428
      %v5727 = vadd.f32 %v4876, %v5433
      %v5728 = vadd.f32 %v4877, %v5438
      %v5729 = vadd.f32 %v4878, %v5443
      %v5730 = vadd.f32 %v4879, %v5448
      %v5731 = vadd.f32 %v4880, %v5453
      %v5732 = vadd.f32 %v4881, %v5458
      %v5733 = vadd.f32 %v4882, %v5463
      %v5734 = vadd.f32 %v4883, %v5468
      %v5735 = vadd.f32 %v4884, %v5473
      %v5736 = vadd.f32 %v4885, %v5478
      %v5737 = vadd.f32 %v4886, %v5483
      %v5738 = vadd.f32 %v4887, %v5488
      %v5739 = vadd.f32 %v4888, %v5493
      %v5740 = vadd.f32 %v4889, %v5498
      %v5741 = vadd.f32 %v4890, %v5503
      %v5742 = vadd.f32 %v4891, %v5508
      %v5743 = vadd.f32 %v4892, %v5513
      %v5744 = vadd.f32 %v4893, %v5518
      %v5745 = vadd.f32 %v4894, %v5523
      %v5746 = vadd.f32 %v4895, %v5528
      %v5747 = vadd.f32 %v4896, %v5533
      %v5748 = vadd.f32 %v4897, %v5538
      %v5749 = vadd.f32 %v4898, %v5543
      %v5750 = vadd.f32 %v4899, %v5548
      %v5751 = vadd.f32 %v4900, %v5553
      %v5752 = vadd.f32 %v4901, %v5558
      %v5753 = vadd.f32 %v4902, %v5563
      %v5754 = vadd.f32 %v4903, %v5568
      %v5755 = vadd.f32 %v4904, %v5573
      %v5756 = vadd.f32 %v4905, %v5578
      %v5757 = vadd.f32 %v4906, %v5583
      %v5758 = vadd.f32 %v4907, %v5588
      %v5759 = vadd.f32 %v4908, %v5593
      %v5760 = vadd.f32 %v4909, %v5598
      %v5761 = vadd.f32 %v4910, %v5603
      %v5762 = vadd.f32 %v4911, %v5608
      %v5763 = vadd.f32 %v4912, %v5613
      %v5764 = vadd.f32 %v4913, %v5618
      %v5765 = vadd.f32 %v4914, %v5623
      %v5766 = vadd.f32 %v4915, %v5628
      %v5767 = vadd.f32 %v4916, %v5633
      %v5768 = vadd.f32 %v4917, %v5638
      %v5769 = vrot.slane %v304, 2
      %v5770 = vrot.slane %v305, 2
      %v5771 = vsel %vm2695, %v5769, %v5770
      %v5772 = vrot.slane %v306, 2
      %v5773 = vsel %vm2695, %v5770, %v5772
      %v5774 = vrot.slane %v307, 2
      %v5775 = vsel %vm2695, %v5772, %v5774
      %v5776 = vrot.slane %v308, 2
      %v5777 = vsel %vm2695, %v5774, %v5776
      %v5778 = vsel %vm772, %v5771, 0
      %v5780 = vsel %vm772, %v5773, 0
      %v5782 = vsel %vm772, %v5775, 0
      %v5784 = vsel %vm772, %v5777, 0
      %5786 = vmatprep.subr.mxu0 0.0
      %5787 = vmatpush1.msra.mxu0 0.0
      %5788 = vmatprep.subr.mxu0 0.0
      %5789 = vmatpush1.msra.mxu0 0.0
      %5790 = vmatprep.subr.mxu0 0.0
      %5791 = vmatpush1.msra.mxu0 0.0
      %5792 = vmatprep.subr.mxu0 0.0
      %5793 = vmatpush1.msra.mxu0 0.0
      %5794 = vmatprep.subr.mxu0 0.0
      %5795 = vmatpush1.msra.mxu0 0.0
      %5796 = vmatprep.subr.mxu0 0.0
      %5797 = vmatpush1.msra.mxu0 0.0
      %5798 = vmatprep.subr.mxu0 0.0
      %5799 = vmatpush1.msra.mxu0 0.0
      %5800 = vmatprep.subr.mxu0 0.0
      %5801 = vmatpush1.msra.mxu0 0.0
      %5802 = vmatprep.subr.mxu0 0.0
      %5803 = vmatpush1.msra.mxu0 0.0
      %5804 = vmatprep.subr.mxu0 0.0
      %5805 = vmatpush1.msra.mxu0 0.0
      %5806 = vmatprep.subr.mxu0 0.0
      %5807 = vmatpush1.msra.mxu0 0.0
      %5808 = vmatprep.subr.mxu0 0.0
      %5809 = vmatpush1.msra.mxu0 0.0
      %5810 = vmatprep.subr.mxu0 0.0
      %5811 = vmatpush1.msra.mxu0 0.0
      %5812 = vmatprep.subr.mxu0 0.0
      %5813 = vmatpush1.msra.mxu0 0.0
      %5814 = vmatprep.subr.mxu0 0.0
      %5815 = vmatpush1.msra.mxu0 0.0
      %5816 = vmatprep.subr.mxu0 0.0
      %5817 = vmatpush1.msra.mxu0 %v319
      %5818 = vmatprep.subr.mxu0 0.0
      %5819 = vmatpush2.msra.mxu0 0.0
      %5820 = vmatprep.subr.mxu0 0.0
      %5821 = vmatpush2.msra.mxu0 0.0
      %5822 = vmatprep.subr.mxu0 0.0
      %5823 = vmatpush2.msra.mxu0 0.0
      %5824 = vmatprep.subr.mxu0 0.0
      %5825 = vmatpush2.msra.mxu0 0.0
      %5826 = vmatprep.subr.mxu0 0.0
      %5827 = vmatpush2.msra.mxu0 0.0
      %5828 = vmatprep.subr.mxu0 0.0
      %5829 = vmatpush2.msra.mxu0 0.0
      %5830 = vmatprep.subr.mxu0 0.0
      %5831 = vmatpush2.msra.mxu0 0.0
      %5832 = vmatprep.subr.mxu0 0.0
      %5833 = vmatpush2.msra.mxu0 0.0
      %5834 = vmatprep.subr.mxu0 0.0
      %5835 = vmatpush2.msra.mxu0 0.0
      %5836 = vmatprep.subr.mxu0 0.0
      %5837 = vmatpush2.msra.mxu0 0.0
      %5838 = vmatprep.subr.mxu0 0.0
      %5839 = vmatpush2.msra.mxu0 0.0
      %5840 = vmatprep.subr.mxu0 0.0
      %5841 = vmatpush2.msra.mxu0 0.0
      %5842 = vmatprep.subr.mxu0 0.0
      %5843 = vmatpush2.msra.mxu0 0.0
      %5844 = vmatprep.subr.mxu0 0.0
      %5845 = vmatpush2.msra.mxu0 0.0
      %5846 = vmatprep.subr.mxu0 0.0
      %5847 = vmatpush2.msra.mxu0 0.0
      %5848 = vmatprep.subr.mxu0 0.0
      %5849 = vmatpush2.msra.mxu0 0.0
      %5850 = vmatprep.mubr.f32.mxu0 0.0
      %5851 = vmatmul.mubr.f32.gmra.mxu0 %v2992
      %v5852 = vpop.f32.mrf.mxu0
      %v5853 = vadd.f32 0.0, %v5852
      %v5854 = vpop.f32.mrf.mxu0
      %5855 = vmatprep.mubr.f32.mxu0 0.0
      %5856 = vmatmul.mubr.f32.gmra.mxu0 %v2994
      %v5857 = vpop.f32.mrf.mxu0
      %v5858 = vadd.f32 0.0, %v5857
      %v5859 = vpop.f32.mrf.mxu0
      %5860 = vmatprep.mubr.f32.mxu0 0.0
      %5861 = vmatmul.mubr.f32.gmra.mxu0 %v2996
      %v5862 = vpop.f32.mrf.mxu0
      %v5863 = vadd.f32 0.0, %v5862
      %v5864 = vpop.f32.mrf.mxu0
      %5865 = vmatprep.mubr.f32.mxu0 0.0
      %5866 = vmatmul.mubr.f32.gmra.mxu0 %v2998
      %v5867 = vpop.f32.mrf.mxu0
      %v5868 = vadd.f32 0.0, %v5867
      %v5869 = vpop.f32.mrf.mxu0
      %5870 = vmatprep.mubr.f32.mxu0 0.0
      %5871 = vmatmul.mubr.f32.gmra.mxu0 %v3000
      %v5872 = vpop.f32.mrf.mxu0
      %v5873 = vadd.f32 0.0, %v5872
      %v5874 = vpop.f32.mrf.mxu0
      %5875 = vmatprep.mubr.f32.mxu0 0.0
      %5876 = vmatmul.mubr.f32.gmra.mxu0 %v3002
      %v5877 = vpop.f32.mrf.mxu0
      %v5878 = vadd.f32 0.0, %v5877
      %v5879 = vpop.f32.mrf.mxu0
      %5880 = vmatprep.mubr.f32.mxu0 0.0
      %5881 = vmatmul.mubr.f32.gmra.mxu0 %v3004
      %v5882 = vpop.f32.mrf.mxu0
      %v5883 = vadd.f32 0.0, %v5882
      %v5884 = vpop.f32.mrf.mxu0
      %5885 = vmatprep.mubr.f32.mxu0 0.0
      %5886 = vmatmul.mubr.f32.gmra.mxu0 %v3006
      %v5887 = vpop.f32.mrf.mxu0
      %v5888 = vadd.f32 0.0, %v5887
      %v5889 = vpop.f32.mrf.mxu0
      %5890 = vmatprep.mubr.f32.mxu0 0.0
      %5891 = vmatmul.mubr.f32.gmra.mxu0 %v3008
      %v5892 = vpop.f32.mrf.mxu0
      %v5893 = vadd.f32 0.0, %v5892
      %v5894 = vpop.f32.mrf.mxu0
      %5895 = vmatprep.mubr.f32.mxu0 0.0
      %5896 = vmatmul.mubr.f32.gmra.mxu0 %v3010
      %v5897 = vpop.f32.mrf.mxu0
      %v5898 = vadd.f32 0.0, %v5897
      %v5899 = vpop.f32.mrf.mxu0
      %5900 = vmatprep.mubr.f32.mxu0 0.0
      %5901 = vmatmul.mubr.f32.gmra.mxu0 %v3012
      %v5902 = vpop.f32.mrf.mxu0
      %v5903 = vadd.f32 0.0, %v5902
      %v5904 = vpop.f32.mrf.mxu0
      %5905 = vmatprep.mubr.f32.mxu0 0.0
      %5906 = vmatmul.mubr.f32.gmra.mxu0 %v3014
      %v5907 = vpop.f32.mrf.mxu0
      %v5908 = vadd.f32 0.0, %v5907
      %v5909 = vpop.f32.mrf.mxu0
      %5910 = vmatprep.mubr.f32.mxu0 0.0
      %5911 = vmatmul.mubr.f32.gmra.mxu0 %v3016
      %v5912 = vpop.f32.mrf.mxu0
      %v5913 = vadd.f32 0.0, %v5912
      %v5914 = vpop.f32.mrf.mxu0
      %5915 = vmatprep.mubr.f32.mxu0 0.0
      %5916 = vmatmul.mubr.f32.gmra.mxu0 %v3018
      %v5917 = vpop.f32.mrf.mxu0
      %v5918 = vadd.f32 0.0, %v5917
      %v5919 = vpop.f32.mrf.mxu0
      %5920 = vmatprep.mubr.f32.mxu0 0.0
      %5921 = vmatmul.mubr.f32.gmra.mxu0 %v3020
      %v5922 = vpop.f32.mrf.mxu0
      %v5923 = vadd.f32 0.0, %v5922
      %v5924 = vpop.f32.mrf.mxu0
      %5925 = vmatprep.mubr.f32.mxu0 0.0
      %5926 = vmatmul.mubr.f32.gmra.mxu0 %v3022
      %v5927 = vpop.f32.mrf.mxu0
      %v5928 = vadd.f32 0.0, %v5927
      %v5929 = vpop.f32.mrf.mxu0
      %5930 = vmatprep.mubr.f32.mxu0 0.0
      %5931 = vmatmul.mubr.f32.gmra.mxu0 %v3024
      %v5932 = vpop.f32.mrf.mxu0
      %v5933 = vadd.f32 0.0, %v5932
      %v5934 = vpop.f32.mrf.mxu0
      %5935 = vmatprep.mubr.f32.mxu0 0.0
      %5936 = vmatmul.mubr.f32.gmra.mxu0 %v3026
      %v5937 = vpop.f32.mrf.mxu0
      %v5938 = vadd.f32 0.0, %v5937
      %v5939 = vpop.f32.mrf.mxu0
      %5940 = vmatprep.mubr.f32.mxu0 0.0
      %5941 = vmatmul.mubr.f32.gmra.mxu0 %v3028
      %v5942 = vpop.f32.mrf.mxu0
      %v5943 = vadd.f32 0.0, %v5942
      %v5944 = vpop.f32.mrf.mxu0
      %5945 = vmatprep.mubr.f32.mxu0 0.0
      %5946 = vmatmul.mubr.f32.gmra.mxu0 %v3030
      %v5947 = vpop.f32.mrf.mxu0
      %v5948 = vadd.f32 0.0, %v5947
      %v5949 = vpop.f32.mrf.mxu0
      %5950 = vmatprep.mubr.f32.mxu0 0.0
      %5951 = vmatmul.mubr.f32.gmra.mxu0 %v3032
      %v5952 = vpop.f32.mrf.mxu0
      %v5953 = vadd.f32 0.0, %v5952
      %v5954 = vpop.f32.mrf.mxu0
      %5955 = vmatprep.mubr.f32.mxu0 0.0
      %5956 = vmatmul.mubr.f32.gmra.mxu0 %v3034
      %v5957 = vpop.f32.mrf.mxu0
      %v5958 = vadd.f32 0.0, %v5957
      %v5959 = vpop.f32.mrf.mxu0
      %5960 = vmatprep.mubr.f32.mxu0 0.0
      %5961 = vmatmul.mubr.f32.gmra.mxu0 %v3036
      %v5962 = vpop.f32.mrf.mxu0
      %v5963 = vadd.f32 0.0, %v5962
      %v5964 = vpop.f32.mrf.mxu0
      %5965 = vmatprep.mubr.f32.mxu0 0.0
      %5966 = vmatmul.mubr.f32.gmra.mxu0 %v3038
      %v5967 = vpop.f32.mrf.mxu0
      %v5968 = vadd.f32 0.0, %v5967
      %v5969 = vpop.f32.mrf.mxu0
      %5970 = vmatprep.mubr.f32.mxu0 0.0
      %5971 = vmatmul.mubr.f32.gmra.mxu0 %v3040
      %v5972 = vpop.f32.mrf.mxu0
      %v5973 = vadd.f32 0.0, %v5972
      %v5974 = vpop.f32.mrf.mxu0
      %5975 = vmatprep.mubr.f32.mxu0 0.0
      %5976 = vmatmul.mubr.f32.gmra.mxu0 %v3042
      %v5977 = vpop.f32.mrf.mxu0
      %v5978 = vadd.f32 0.0, %v5977
      %v5979 = vpop.f32.mrf.mxu0
      %5980 = vmatprep.mubr.f32.mxu0 0.0
      %5981 = vmatmul.mubr.f32.gmra.mxu0 %v3044
      %v5982 = vpop.f32.mrf.mxu0
      %v5983 = vadd.f32 0.0, %v5982
      %v5984 = vpop.f32.mrf.mxu0
      %5985 = vmatprep.mubr.f32.mxu0 0.0
      %5986 = vmatmul.mubr.f32.gmra.mxu0 %v3046
      %v5987 = vpop.f32.mrf.mxu0
      %v5988 = vadd.f32 0.0, %v5987
      %v5989 = vpop.f32.mrf.mxu0
      %5990 = vmatprep.mubr.f32.mxu0 0.0
      %5991 = vmatmul.mubr.f32.gmra.mxu0 %v3048
      %v5992 = vpop.f32.mrf.mxu0
      %v5993 = vadd.f32 0.0, %v5992
      %v5994 = vpop.f32.mrf.mxu0
      %5995 = vmatprep.mubr.f32.mxu0 0.0
      %5996 = vmatmul.mubr.f32.gmra.mxu0 %v3050
      %v5997 = vpop.f32.mrf.mxu0
      %v5998 = vadd.f32 0.0, %v5997
      %v5999 = vpop.f32.mrf.mxu0
      %6000 = vmatprep.mubr.f32.mxu0 0.0
      %6001 = vmatmul.mubr.f32.gmra.mxu0 %v3052
      %v6002 = vpop.f32.mrf.mxu0
      %v6003 = vadd.f32 0.0, %v6002
      %v6004 = vpop.f32.mrf.mxu0
      %6005 = vmatprep.mubr.f32.mxu0 0.0
      %6006 = vmatmul.mubr.f32.gmra.mxu0 %v3054
      %v6007 = vpop.f32.mrf.mxu0
      %v6008 = vadd.f32 0.0, %v6007
      %v6009 = vpop.f32.mrf.mxu0
      %6010 = vmatprep.mubr.f32.mxu0 0.0
      %6011 = vmatmul.mubr.f32.gmra.mxu0 %v3056
      %v6012 = vpop.f32.mrf.mxu0
      %v6013 = vadd.f32 0.0, %v6012
      %v6014 = vpop.f32.mrf.mxu0
      %6015 = vmatprep.mubr.f32.mxu0 0.0
      %6016 = vmatmul.mubr.f32.gmra.mxu0 %v3058
      %v6017 = vpop.f32.mrf.mxu0
      %v6018 = vadd.f32 0.0, %v6017
      %v6019 = vpop.f32.mrf.mxu0
      %6020 = vmatprep.mubr.f32.mxu0 0.0
      %6021 = vmatmul.mubr.f32.gmra.mxu0 %v3060
      %v6022 = vpop.f32.mrf.mxu0
      %v6023 = vadd.f32 0.0, %v6022
      %v6024 = vpop.f32.mrf.mxu0
      %6025 = vmatprep.mubr.f32.mxu0 0.0
      %6026 = vmatmul.mubr.f32.gmra.mxu0 %v3062
      %v6027 = vpop.f32.mrf.mxu0
      %v6028 = vadd.f32 0.0, %v6027
      %v6029 = vpop.f32.mrf.mxu0
      %6030 = vmatprep.mubr.f32.mxu0 0.0
      %6031 = vmatmul.mubr.f32.gmra.mxu0 %v3064
      %v6032 = vpop.f32.mrf.mxu0
      %v6033 = vadd.f32 0.0, %v6032
      %v6034 = vpop.f32.mrf.mxu0
      %6035 = vmatprep.mubr.f32.mxu0 0.0
      %6036 = vmatmul.mubr.f32.gmra.mxu0 %v3066
      %v6037 = vpop.f32.mrf.mxu0
      %v6038 = vadd.f32 0.0, %v6037
      %v6039 = vpop.f32.mrf.mxu0
      %6040 = vmatprep.mubr.f32.mxu0 0.0
      %6041 = vmatmul.mubr.f32.gmra.mxu0 %v3068
      %v6042 = vpop.f32.mrf.mxu0
      %v6043 = vadd.f32 0.0, %v6042
      %v6044 = vpop.f32.mrf.mxu0
      %6045 = vmatprep.mubr.f32.mxu0 0.0
      %6046 = vmatmul.mubr.f32.gmra.mxu0 %v3070
      %v6047 = vpop.f32.mrf.mxu0
      %v6048 = vadd.f32 0.0, %v6047
      %v6049 = vpop.f32.mrf.mxu0
      %6050 = vmatprep.mubr.f32.mxu0 0.0
      %6051 = vmatmul.mubr.f32.gmra.mxu0 %v3072
      %v6052 = vpop.f32.mrf.mxu0
      %v6053 = vadd.f32 0.0, %v6052
      %v6054 = vpop.f32.mrf.mxu0
      %6055 = vmatprep.mubr.f32.mxu0 0.0
      %6056 = vmatmul.mubr.f32.gmra.mxu0 %v3074
      %v6057 = vpop.f32.mrf.mxu0
      %v6058 = vadd.f32 0.0, %v6057
      %v6059 = vpop.f32.mrf.mxu0
      %6060 = vmatprep.mubr.f32.mxu0 0.0
      %6061 = vmatmul.mubr.f32.gmra.mxu0 %v3076
      %v6062 = vpop.f32.mrf.mxu0
      %v6063 = vadd.f32 0.0, %v6062
      %v6064 = vpop.f32.mrf.mxu0
      %6065 = vmatprep.mubr.f32.mxu0 0.0
      %6066 = vmatmul.mubr.f32.gmra.mxu0 %v3078
      %v6067 = vpop.f32.mrf.mxu0
      %v6068 = vadd.f32 0.0, %v6067
      %v6069 = vpop.f32.mrf.mxu0
      %6070 = vmatprep.mubr.f32.mxu0 0.0
      %6071 = vmatmul.mubr.f32.gmra.mxu0 %v3080
      %v6072 = vpop.f32.mrf.mxu0
      %v6073 = vadd.f32 0.0, %v6072
      %v6074 = vpop.f32.mrf.mxu0
      %6075 = vmatprep.mubr.f32.mxu0 0.0
      %6076 = vmatmul.mubr.f32.gmra.mxu0 %v3082
      %v6077 = vpop.f32.mrf.mxu0
      %v6078 = vadd.f32 0.0, %v6077
      %v6079 = vpop.f32.mrf.mxu0
      %6080 = vmatprep.mubr.f32.mxu0 0.0
      %6081 = vmatmul.mubr.f32.gmra.mxu0 %v3084
      %v6082 = vpop.f32.mrf.mxu0
      %v6083 = vadd.f32 0.0, %v6082
      %v6084 = vpop.f32.mrf.mxu0
      %6085 = vmatprep.mubr.f32.mxu0 0.0
      %6086 = vmatmul.mubr.f32.gmra.mxu0 %v3086
      %v6087 = vpop.f32.mrf.mxu0
      %v6088 = vadd.f32 0.0, %v6087
      %v6089 = vpop.f32.mrf.mxu0
      %6090 = vmatprep.mubr.f32.mxu0 0.0
      %6091 = vmatmul.mubr.f32.gmra.mxu0 %v3088
      %v6092 = vpop.f32.mrf.mxu0
      %v6093 = vadd.f32 0.0, %v6092
      %v6094 = vpop.f32.mrf.mxu0
      %6095 = vmatprep.mubr.f32.mxu0 0.0
      %6096 = vmatmul.mubr.f32.gmra.mxu0 %v3090
      %v6097 = vpop.f32.mrf.mxu0
      %v6098 = vadd.f32 0.0, %v6097
      %v6099 = vpop.f32.mrf.mxu0
      %6100 = vmatprep.mubr.f32.mxu0 0.0
      %6101 = vmatmul.mubr.f32.gmra.mxu0 %v3092
      %v6102 = vpop.f32.mrf.mxu0
      %v6103 = vadd.f32 0.0, %v6102
      %v6104 = vpop.f32.mrf.mxu0
      %6105 = vmatprep.mubr.f32.mxu0 0.0
      %6106 = vmatmul.mubr.f32.gmra.mxu0 %v3094
      %v6107 = vpop.f32.mrf.mxu0
      %v6108 = vadd.f32 0.0, %v6107
      %v6109 = vpop.f32.mrf.mxu0
      %6110 = vmatprep.mubr.f32.mxu0 0.0
      %6111 = vmatmul.mubr.f32.gmra.mxu0 %v3096
      %v6112 = vpop.f32.mrf.mxu0
      %v6113 = vadd.f32 0.0, %v6112
      %v6114 = vpop.f32.mrf.mxu0
      %6115 = vmatprep.mubr.f32.mxu0 0.0
      %6116 = vmatmul.mubr.f32.gmra.mxu0 %v3098
      %v6117 = vpop.f32.mrf.mxu0
      %v6118 = vadd.f32 0.0, %v6117
      %v6119 = vpop.f32.mrf.mxu0
      %6120 = vmatprep.mubr.f32.mxu0 0.0
      %6121 = vmatmul.mubr.f32.gmra.mxu0 %v3100
      %v6122 = vpop.f32.mrf.mxu0
      %v6123 = vadd.f32 0.0, %v6122
      %v6124 = vpop.f32.mrf.mxu0
      %6125 = vmatprep.mubr.f32.mxu0 0.0
      %6126 = vmatmul.mubr.f32.gmra.mxu0 %v3102
      %v6127 = vpop.f32.mrf.mxu0
      %v6128 = vadd.f32 0.0, %v6127
      %v6129 = vpop.f32.mrf.mxu0
      %6130 = vmatprep.mubr.f32.mxu0 0.0
      %6131 = vmatmul.mubr.f32.gmra.mxu0 %v3104
      %v6132 = vpop.f32.mrf.mxu0
      %v6133 = vadd.f32 0.0, %v6132
      %v6134 = vpop.f32.mrf.mxu0
      %6135 = vmatprep.mubr.f32.mxu0 0.0
      %6136 = vmatmul.mubr.f32.gmra.mxu0 %v3106
      %v6137 = vpop.f32.mrf.mxu0
      %v6138 = vadd.f32 0.0, %v6137
      %v6139 = vpop.f32.mrf.mxu0
      %6140 = vmatprep.mubr.f32.mxu0 0.0
      %6141 = vmatmul.mubr.f32.gmra.mxu0 %v3108
      %v6142 = vpop.f32.mrf.mxu0
      %v6143 = vadd.f32 0.0, %v6142
      %v6144 = vpop.f32.mrf.mxu0
      %6145 = vmatprep.mubr.f32.mxu0 0.0
      %6146 = vmatmul.mubr.f32.gmra.mxu0 %v3110
      %v6147 = vpop.f32.mrf.mxu0
      %v6148 = vadd.f32 0.0, %v6147
      %v6149 = vpop.f32.mrf.mxu0
      %6150 = vmatprep.mubr.f32.mxu0 0.0
      %6151 = vmatmul.mubr.f32.gmra.mxu0 %v3112
      %v6152 = vpop.f32.mrf.mxu0
      %v6153 = vadd.f32 0.0, %v6152
      %v6154 = vpop.f32.mrf.mxu0
      %6155 = vmatprep.mubr.f32.mxu0 0.0
      %6156 = vmatmul.mubr.f32.gmra.mxu0 %v3114
      %v6157 = vpop.f32.mrf.mxu0
      %v6158 = vadd.f32 0.0, %v6157
      %v6159 = vpop.f32.mrf.mxu0
      %6160 = vmatprep.mubr.f32.mxu0 0.0
      %6161 = vmatmul.mubr.f32.gmra.mxu0 %v3116
      %v6162 = vpop.f32.mrf.mxu0
      %v6163 = vadd.f32 0.0, %v6162
      %v6164 = vpop.f32.mrf.mxu0
      %6165 = vmatprep.mubr.f32.mxu0 0.0
      %6166 = vmatmul.mubr.f32.gmra.mxu0 %v3118
      %v6167 = vpop.f32.mrf.mxu0
      %v6168 = vadd.f32 0.0, %v6167
      %v6169 = vpop.f32.mrf.mxu0
      %6170 = vmatprep.mubr.f32.mxu0 0.0
      %6171 = vmatmul.mubr.f32.gmra.mxu0 %v3120
      %v6172 = vpop.f32.mrf.mxu0
      %v6173 = vadd.f32 0.0, %v6172
      %v6174 = vpop.f32.mrf.mxu0
      %6175 = vmatprep.mubr.f32.mxu0 0.0
      %6176 = vmatmul.mubr.f32.gmra.mxu0 %v3122
      %v6177 = vpop.f32.mrf.mxu0
      %v6178 = vadd.f32 0.0, %v6177
      %v6179 = vpop.f32.mrf.mxu0
      %6180 = vmatprep.mubr.f32.mxu0 0.0
      %6181 = vmatmul.mubr.f32.gmra.mxu0 %v3124
      %v6182 = vpop.f32.mrf.mxu0
      %v6183 = vadd.f32 0.0, %v6182
      %v6184 = vpop.f32.mrf.mxu0
      %6185 = vmatprep.mubr.f32.mxu0 0.0
      %6186 = vmatmul.mubr.f32.gmra.mxu0 %v3126
      %v6187 = vpop.f32.mrf.mxu0
      %v6188 = vadd.f32 0.0, %v6187
      %v6189 = vpop.f32.mrf.mxu0
      %6190 = vmatprep.mubr.f32.mxu0 0.0
      %6191 = vmatmul.mubr.f32.gmra.mxu0 %v3128
      %v6192 = vpop.f32.mrf.mxu0
      %v6193 = vadd.f32 0.0, %v6192
      %v6194 = vpop.f32.mrf.mxu0
      %6195 = vmatprep.mubr.f32.mxu0 0.0
      %6196 = vmatmul.mubr.f32.gmra.mxu0 %v3130
      %v6197 = vpop.f32.mrf.mxu0
      %v6198 = vadd.f32 0.0, %v6197
      %v6199 = vpop.f32.mrf.mxu0
      %6200 = vmatprep.mubr.f32.mxu0 0.0
      %6201 = vmatmul.mubr.f32.gmra.mxu0 %v3132
      %v6202 = vpop.f32.mrf.mxu0
      %v6203 = vadd.f32 0.0, %v6202
      %v6204 = vpop.f32.mrf.mxu0
      %6205 = vmatprep.mubr.f32.mxu0 0.0
      %6206 = vmatmul.mubr.f32.gmra.mxu0 %v3134
      %v6207 = vpop.f32.mrf.mxu0
      %v6208 = vadd.f32 0.0, %v6207
      %v6209 = vpop.f32.mrf.mxu0
      %6210 = vmatprep.mubr.f32.mxu0 0.0
      %6211 = vmatmul.mubr.f32.gmra.mxu0 %v3136
      %v6212 = vpop.f32.mrf.mxu0
      %v6213 = vadd.f32 0.0, %v6212
      %v6214 = vpop.f32.mrf.mxu0
      %6215 = vmatprep.mubr.f32.mxu0 0.0
      %6216 = vmatmul.mubr.f32.gmra.mxu0 %v3138
      %v6217 = vpop.f32.mrf.mxu0
      %v6218 = vadd.f32 0.0, %v6217
      %v6219 = vpop.f32.mrf.mxu0
      %6220 = vmatprep.mubr.f32.mxu0 0.0
      %6221 = vmatmul.mubr.f32.gmra.mxu0 %v3140
      %v6222 = vpop.f32.mrf.mxu0
      %v6223 = vadd.f32 0.0, %v6222
      %v6224 = vpop.f32.mrf.mxu0
      %6225 = vmatprep.mubr.f32.mxu0 0.0
      %6226 = vmatmul.mubr.f32.gmra.mxu0 %v3142
      %v6227 = vpop.f32.mrf.mxu0
      %v6228 = vadd.f32 0.0, %v6227
      %v6229 = vpop.f32.mrf.mxu0
      %6230 = vmatprep.mubr.f32.mxu0 0.0
      %6231 = vmatmul.mubr.f32.gmra.mxu0 %v3144
      %v6232 = vpop.f32.mrf.mxu0
      %v6233 = vadd.f32 0.0, %v6232
      %v6234 = vpop.f32.mrf.mxu0
      %6235 = vmatprep.mubr.f32.mxu0 0.0
      %6236 = vmatmul.mubr.f32.gmra.mxu0 %v3146
      %v6237 = vpop.f32.mrf.mxu0
      %v6238 = vadd.f32 0.0, %v6237
      %v6239 = vpop.f32.mrf.mxu0
      %6240 = vmatprep.mubr.f32.mxu0 0.0
      %6241 = vmatmul.mubr.f32.gmra.mxu0 %v3148
      %v6242 = vpop.f32.mrf.mxu0
      %v6243 = vadd.f32 0.0, %v6242
      %v6244 = vpop.f32.mrf.mxu0
      %6245 = vmatprep.mubr.f32.mxu0 0.0
      %6246 = vmatmul.mubr.f32.gmra.mxu0 %v3150
      %v6247 = vpop.f32.mrf.mxu0
      %v6248 = vadd.f32 0.0, %v6247
      %v6249 = vpop.f32.mrf.mxu0
      %6250 = vmatprep.mubr.f32.mxu0 0.0
      %6251 = vmatmul.mubr.f32.gmra.mxu0 %v3152
      %v6252 = vpop.f32.mrf.mxu0
      %v6253 = vadd.f32 0.0, %v6252
      %v6254 = vpop.f32.mrf.mxu0
      %6255 = vmatprep.mubr.f32.mxu0 0.0
      %6256 = vmatmul.mubr.f32.gmra.mxu0 %v3154
      %v6257 = vpop.f32.mrf.mxu0
      %v6258 = vadd.f32 0.0, %v6257
      %v6259 = vpop.f32.mrf.mxu0
      %6260 = vmatprep.mubr.f32.mxu0 0.0
      %6261 = vmatmul.mubr.f32.gmra.mxu0 %v3156
      %v6262 = vpop.f32.mrf.mxu0
      %v6263 = vadd.f32 0.0, %v6262
      %v6264 = vpop.f32.mrf.mxu0
      %6265 = vmatprep.mubr.f32.mxu0 0.0
      %6266 = vmatmul.mubr.f32.gmra.mxu0 %v3158
      %v6267 = vpop.f32.mrf.mxu0
      %v6268 = vadd.f32 0.0, %v6267
      %v6269 = vpop.f32.mrf.mxu0
      %6270 = vmatprep.mubr.f32.mxu0 0.0
      %6271 = vmatmul.mubr.f32.gmra.mxu0 %v3160
      %v6272 = vpop.f32.mrf.mxu0
      %v6273 = vadd.f32 0.0, %v6272
      %v6274 = vpop.f32.mrf.mxu0
      %6275 = vmatprep.mubr.f32.mxu0 0.0
      %6276 = vmatmul.mubr.f32.gmra.mxu0 %v3162
      %v6277 = vpop.f32.mrf.mxu0
      %v6278 = vadd.f32 0.0, %v6277
      %v6279 = vpop.f32.mrf.mxu0
      %6280 = vmatprep.mubr.f32.mxu0 0.0
      %6281 = vmatmul.mubr.f32.gmra.mxu0 %v3164
      %v6282 = vpop.f32.mrf.mxu0
      %v6283 = vadd.f32 0.0, %v6282
      %v6284 = vpop.f32.mrf.mxu0
      %6285 = vmatprep.mubr.f32.mxu0 0.0
      %6286 = vmatmul.mubr.f32.gmra.mxu0 %v3166
      %v6287 = vpop.f32.mrf.mxu0
      %v6288 = vadd.f32 0.0, %v6287
      %v6289 = vpop.f32.mrf.mxu0
      %6290 = vmatprep.mubr.f32.mxu0 0.0
      %6291 = vmatmul.mubr.f32.gmra.mxu0 %v3168
      %v6292 = vpop.f32.mrf.mxu0
      %v6293 = vadd.f32 0.0, %v6292
      %v6294 = vpop.f32.mrf.mxu0
      %6295 = vmatprep.mubr.f32.mxu0 0.0
      %6296 = vmatmul.mubr.f32.gmra.mxu0 %v3170
      %v6297 = vpop.f32.mrf.mxu0
      %v6298 = vadd.f32 0.0, %v6297
      %v6299 = vpop.f32.mrf.mxu0
      %6300 = vmatprep.mubr.f32.mxu0 0.0
      %6301 = vmatmul.mubr.f32.gmra.mxu0 %v3172
      %v6302 = vpop.f32.mrf.mxu0
      %v6303 = vadd.f32 0.0, %v6302
      %v6304 = vpop.f32.mrf.mxu0
      %6305 = vmatprep.mubr.f32.mxu0 0.0
      %6306 = vmatmul.mubr.f32.gmra.mxu0 %v3174
      %v6307 = vpop.f32.mrf.mxu0
      %v6308 = vadd.f32 0.0, %v6307
      %v6309 = vpop.f32.mrf.mxu0
      %6310 = vmatprep.mubr.f32.mxu0 0.0
      %6311 = vmatmul.mubr.f32.gmra.mxu0 %v3176
      %v6312 = vpop.f32.mrf.mxu0
      %v6313 = vadd.f32 0.0, %v6312
      %v6314 = vpop.f32.mrf.mxu0
      %6315 = vmatprep.mubr.f32.mxu0 0.0
      %6316 = vmatmul.mubr.f32.gmra.mxu0 %v3178
      %v6317 = vpop.f32.mrf.mxu0
      %v6318 = vadd.f32 0.0, %v6317
      %v6319 = vpop.f32.mrf.mxu0
      %6320 = vmatprep.mubr.f32.mxu0 0.0
      %6321 = vmatmul.mubr.f32.gmra.mxu0 %v3180
      %v6322 = vpop.f32.mrf.mxu0
      %v6323 = vadd.f32 0.0, %v6322
      %v6324 = vpop.f32.mrf.mxu0
      %6325 = vmatprep.mubr.f32.mxu0 0.0
      %6326 = vmatmul.mubr.f32.gmra.mxu0 %v3182
      %v6327 = vpop.f32.mrf.mxu0
      %v6328 = vadd.f32 0.0, %v6327
      %v6329 = vpop.f32.mrf.mxu0
      %6330 = vmatprep.mubr.f32.mxu0 0.0
      %6331 = vmatmul.mubr.f32.gmra.mxu0 %v3184
      %v6332 = vpop.f32.mrf.mxu0
      %v6333 = vadd.f32 0.0, %v6332
      %v6334 = vpop.f32.mrf.mxu0
      %6335 = vmatprep.mubr.f32.mxu0 0.0
      %6336 = vmatmul.mubr.f32.gmra.mxu0 %v3186
      %v6337 = vpop.f32.mrf.mxu0
      %v6338 = vadd.f32 0.0, %v6337
      %v6339 = vpop.f32.mrf.mxu0
      %6340 = vmatprep.mubr.f32.mxu0 0.0
      %6341 = vmatmul.mubr.f32.gmra.mxu0 %v3188
      %v6342 = vpop.f32.mrf.mxu0
      %v6343 = vadd.f32 0.0, %v6342
      %v6344 = vpop.f32.mrf.mxu0
      %6345 = vmatprep.mubr.f32.mxu0 0.0
      %6346 = vmatmul.mubr.f32.gmra.mxu0 %v3190
      %v6347 = vpop.f32.mrf.mxu0
      %v6348 = vadd.f32 0.0, %v6347
      %v6349 = vpop.f32.mrf.mxu0
      %6350 = vmatprep.mubr.f32.mxu0 0.0
      %6351 = vmatmul.mubr.f32.gmra.mxu0 %v3192
      %v6352 = vpop.f32.mrf.mxu0
      %v6353 = vadd.f32 0.0, %v6352
      %v6354 = vpop.f32.mrf.mxu0
      %6355 = vmatprep.mubr.f32.mxu0 0.0
      %6356 = vmatmul.mubr.f32.gmra.mxu0 %v3194
      %v6357 = vpop.f32.mrf.mxu0
      %v6358 = vadd.f32 0.0, %v6357
      %v6359 = vpop.f32.mrf.mxu0
      %6360 = vmatprep.mubr.f32.mxu0 0.0
      %6361 = vmatmul.mubr.f32.gmra.mxu0 %v3196
      %v6362 = vpop.f32.mrf.mxu0
      %v6363 = vadd.f32 0.0, %v6362
      %v6364 = vpop.f32.mrf.mxu0
      %6365 = vmatprep.mubr.f32.mxu0 0.0
      %6366 = vmatmul.mubr.f32.gmra.mxu0 %v3198
      %v6367 = vpop.f32.mrf.mxu0
      %v6368 = vadd.f32 0.0, %v6367
      %v6369 = vpop.f32.mrf.mxu0
      %6370 = vmatprep.mubr.f32.mxu0 0.0
      %6371 = vmatmul.mubr.f32.gmra.mxu0 %v3200
      %v6372 = vpop.f32.mrf.mxu0
      %v6373 = vadd.f32 0.0, %v6372
      %v6374 = vpop.f32.mrf.mxu0
      %6375 = vmatprep.mubr.f32.mxu0 0.0
      %6376 = vmatmul.mubr.f32.gmra.mxu0 %v3202
      %v6377 = vpop.f32.mrf.mxu0
      %v6378 = vadd.f32 0.0, %v6377
      %v6379 = vpop.f32.mrf.mxu0
      %6380 = vmatprep.mubr.f32.mxu0 0.0
      %6381 = vmatmul.mubr.f32.gmra.mxu0 %v3204
      %v6382 = vpop.f32.mrf.mxu0
      %v6383 = vadd.f32 0.0, %v6382
      %v6384 = vpop.f32.mrf.mxu0
      %6385 = vmatprep.mubr.f32.mxu0 0.0
      %6386 = vmatmul.mubr.f32.gmra.mxu0 %v3206
      %v6387 = vpop.f32.mrf.mxu0
      %v6388 = vadd.f32 0.0, %v6387
      %v6389 = vpop.f32.mrf.mxu0
      %6390 = vmatprep.mubr.f32.mxu0 0.0
      %6391 = vmatmul.mubr.f32.gmra.mxu0 %v3208
      %v6392 = vpop.f32.mrf.mxu0
      %v6393 = vadd.f32 0.0, %v6392
      %v6394 = vpop.f32.mrf.mxu0
      %6395 = vmatprep.mubr.f32.mxu0 0.0
      %6396 = vmatmul.mubr.f32.gmra.mxu0 %v3210
      %v6397 = vpop.f32.mrf.mxu0
      %v6398 = vadd.f32 0.0, %v6397
      %v6399 = vpop.f32.mrf.mxu0
      %6400 = vmatprep.mubr.f32.mxu0 0.0
      %6401 = vmatmul.mubr.f32.gmra.mxu0 %v3212
      %v6402 = vpop.f32.mrf.mxu0
      %v6403 = vadd.f32 0.0, %v6402
      %v6404 = vpop.f32.mrf.mxu0
      %6405 = vmatprep.mubr.f32.mxu0 0.0
      %6406 = vmatmul.mubr.f32.gmra.mxu0 %v3214
      %v6407 = vpop.f32.mrf.mxu0
      %v6408 = vadd.f32 0.0, %v6407
      %v6409 = vpop.f32.mrf.mxu0
      %6410 = vmatprep.mubr.f32.mxu0 0.0
      %6411 = vmatmul.mubr.f32.gmra.mxu0 %v3216
      %v6412 = vpop.f32.mrf.mxu0
      %v6413 = vadd.f32 0.0, %v6412
      %v6414 = vpop.f32.mrf.mxu0
      %6415 = vmatprep.mubr.f32.mxu0 0.0
      %6416 = vmatmul.mubr.f32.gmra.mxu0 %v3218
      %v6417 = vpop.f32.mrf.mxu0
      %v6418 = vadd.f32 0.0, %v6417
      %v6419 = vpop.f32.mrf.mxu0
      %6420 = vmatprep.mubr.f32.mxu0 0.0
      %6421 = vmatmul.mubr.f32.gmra.mxu0 %v3220
      %v6422 = vpop.f32.mrf.mxu0
      %v6423 = vadd.f32 0.0, %v6422
      %v6424 = vpop.f32.mrf.mxu0
      %6425 = vmatprep.mubr.f32.mxu0 0.0
      %6426 = vmatmul.mubr.f32.gmra.mxu0 %v3222
      %v6427 = vpop.f32.mrf.mxu0
      %v6428 = vadd.f32 0.0, %v6427
      %v6429 = vpop.f32.mrf.mxu0
      %6430 = vmatprep.mubr.f32.mxu0 0.0
      %6431 = vmatmul.mubr.f32.gmra.mxu0 %v3224
      %v6432 = vpop.f32.mrf.mxu0
      %v6433 = vadd.f32 0.0, %v6432
      %v6434 = vpop.f32.mrf.mxu0
      %6435 = vmatprep.mubr.f32.mxu0 0.0
      %6436 = vmatmul.mubr.f32.gmra.mxu0 %v3226
      %v6437 = vpop.f32.mrf.mxu0
      %v6438 = vadd.f32 0.0, %v6437
      %v6439 = vpop.f32.mrf.mxu0
      %6440 = vmatprep.mubr.f32.mxu0 0.0
      %6441 = vmatmul.mubr.f32.gmra.mxu0 %v3228
      %v6442 = vpop.f32.mrf.mxu0
      %v6443 = vadd.f32 0.0, %v6442
      %v6444 = vpop.f32.mrf.mxu0
      %6445 = vmatprep.mubr.f32.mxu0 0.0
      %6446 = vmatmul.mubr.f32.gmra.mxu0 %v3230
      %v6447 = vpop.f32.mrf.mxu0
      %v6448 = vadd.f32 0.0, %v6447
      %v6449 = vpop.f32.mrf.mxu0
      %6450 = vmatprep.mubr.f32.mxu0 0.0
      %6451 = vmatmul.mubr.f32.gmra.mxu0 %v3232
      %v6452 = vpop.f32.mrf.mxu0
      %v6453 = vadd.f32 0.0, %v6452
      %v6454 = vpop.f32.mrf.mxu0
      %6455 = vmatprep.mubr.f32.mxu0 0.0
      %6456 = vmatmul.mubr.f32.gmra.mxu0 %v3234
      %v6457 = vpop.f32.mrf.mxu0
      %v6458 = vadd.f32 0.0, %v6457
      %v6459 = vpop.f32.mrf.mxu0
      %6460 = vmatprep.mubr.f32.mxu0 0.0
      %6461 = vmatmul.mubr.f32.gmra.mxu0 %v3236
      %v6462 = vpop.f32.mrf.mxu0
      %v6463 = vadd.f32 0.0, %v6462
      %v6464 = vpop.f32.mrf.mxu0
      %6465 = vmatprep.mubr.f32.mxu0 0.0
      %6466 = vmatmul.mubr.f32.gmra.mxu0 %v3238
      %v6467 = vpop.f32.mrf.mxu0
      %v6468 = vadd.f32 0.0, %v6467
      %v6469 = vpop.f32.mrf.mxu0
      %6470 = vmatprep.mubr.f32.mxu0 0.0
      %6471 = vmatmul.mubr.f32.gmra.mxu0 %v5778
      %v6472 = vpop.f32.mrf.mxu0
      %v6473 = vadd.f32 0.0, %v6472
      %v6474 = vpop.f32.mrf.mxu0
      %6475 = vmatprep.mubr.f32.mxu0 0.0
      %6476 = vmatmul.mubr.f32.gmra.mxu0 %v5780
      %v6477 = vpop.f32.mrf.mxu0
      %v6478 = vadd.f32 0.0, %v6477
      %v6479 = vpop.f32.mrf.mxu0
      %6480 = vmatprep.mubr.f32.mxu0 0.0
      %6481 = vmatmul.mubr.f32.gmra.mxu0 %v5782
      %v6482 = vpop.f32.mrf.mxu0
      %v6483 = vadd.f32 0.0, %v6482
      %v6484 = vpop.f32.mrf.mxu0
      %6485 = vmatprep.mubr.f32.mxu0 0.0
      %6486 = vmatmul.mubr.f32.gmra.mxu0 %v5784
      %v6487 = vpop.f32.mrf.mxu0
      %v6488 = vadd.f32 0.0, %v6487
      %v6489 = vpop.f32.mrf.mxu0
      %6490 = vdwg.mxu0
      %v6491 = vadd.f32 %v5641, %v5853
      %v6492 = vadd.f32 %v5642, %v5858
      %v6493 = vadd.f32 %v5643, %v5863
      %v6494 = vadd.f32 %v5644, %v5868
      %v6495 = vadd.f32 %v5645, %v5873
      %v6496 = vadd.f32 %v5646, %v5878
      %v6497 = vadd.f32 %v5647, %v5883
      %v6498 = vadd.f32 %v5648, %v5888
      %v6499 = vadd.f32 %v5649, %v5893
      %v6500 = vadd.f32 %v5650, %v5898
      %v6501 = vadd.f32 %v5651, %v5903
      %v6502 = vadd.f32 %v5652, %v5908
      %v6503 = vadd.f32 %v5653, %v5913
      %v6504 = vadd.f32 %v5654, %v5918
      %v6505 = vadd.f32 %v5655, %v5923
      %v6506 = vadd.f32 %v5656, %v5928
      %v6507 = vadd.f32 %v5657, %v5933
      %v6508 = vadd.f32 %v5658, %v5938
      %v6509 = vadd.f32 %v5659, %v5943
      %v6510 = vadd.f32 %v5660, %v5948
      %v6511 = vadd.f32 %v5661, %v5953
      %v6512 = vadd.f32 %v5662, %v5958
      %v6513 = vadd.f32 %v5663, %v5963
      %v6514 = vadd.f32 %v5664, %v5968
      %v6515 = vadd.f32 %v5665, %v5973
      %v6516 = vadd.f32 %v5666, %v5978
      %v6517 = vadd.f32 %v5667, %v5983
      %v6518 = vadd.f32 %v5668, %v5988
      %v6519 = vadd.f32 %v5669, %v5993
      %v6520 = vadd.f32 %v5670, %v5998
      %v6521 = vadd.f32 %v5671, %v6003
      %v6522 = vadd.f32 %v5672, %v6008
      %v6523 = vadd.f32 %v5673, %v6013
      %v6524 = vadd.f32 %v5674, %v6018
      %v6525 = vadd.f32 %v5675, %v6023
      %v6526 = vadd.f32 %v5676, %v6028
      %v6527 = vadd.f32 %v5677, %v6033
      %v6528 = vadd.f32 %v5678, %v6038
      %v6529 = vadd.f32 %v5679, %v6043
      %v6530 = vadd.f32 %v5680, %v6048
      %v6531 = vadd.f32 %v5681, %v6053
      %v6532 = vadd.f32 %v5682, %v6058
      %v6533 = vadd.f32 %v5683, %v6063
      %v6534 = vadd.f32 %v5684, %v6068
      %v6535 = vadd.f32 %v5685, %v6073
      %v6536 = vadd.f32 %v5686, %v6078
      %v6537 = vadd.f32 %v5687, %v6083
      %v6538 = vadd.f32 %v5688, %v6088
      %v6539 = vadd.f32 %v5689, %v6093
      %v6540 = vadd.f32 %v5690, %v6098
      %v6541 = vadd.f32 %v5691, %v6103
      %v6542 = vadd.f32 %v5692, %v6108
      %v6543 = vadd.f32 %v5693, %v6113
      %v6544 = vadd.f32 %v5694, %v6118
      %v6545 = vadd.f32 %v5695, %v6123
      %v6546 = vadd.f32 %v5696, %v6128
      %v6547 = vadd.f32 %v5697, %v6133
      %v6548 = vadd.f32 %v5698, %v6138
      %v6549 = vadd.f32 %v5699, %v6143
      %v6550 = vadd.f32 %v5700, %v6148
      %v6551 = vadd.f32 %v5701, %v6153
      %v6552 = vadd.f32 %v5702, %v6158
      %v6553 = vadd.f32 %v5703, %v6163
      %v6554 = vadd.f32 %v5704, %v6168
      %v6555 = vadd.f32 %v5705, %v6173
      %v6556 = vadd.f32 %v5706, %v6178
      %v6557 = vadd.f32 %v5707, %v6183
      %v6558 = vadd.f32 %v5708, %v6188
      %v6559 = vadd.f32 %v5709, %v6193
      %v6560 = vadd.f32 %v5710, %v6198
      %v6561 = vadd.f32 %v5711, %v6203
      %v6562 = vadd.f32 %v5712, %v6208
      %v6563 = vadd.f32 %v5713, %v6213
      %v6564 = vadd.f32 %v5714, %v6218
      %v6565 = vadd.f32 %v5715, %v6223
      %v6566 = vadd.f32 %v5716, %v6228
      %v6567 = vadd.f32 %v5717, %v6233
      %v6568 = vadd.f32 %v5718, %v6238
      %v6569 = vadd.f32 %v5719, %v6243
      %v6570 = vadd.f32 %v5720, %v6248
      %v6571 = vadd.f32 %v5721, %v6253
      %v6572 = vadd.f32 %v5722, %v6258
      %v6573 = vadd.f32 %v5723, %v6263
      %v6574 = vadd.f32 %v5724, %v6268
      %v6575 = vadd.f32 %v5725, %v6273
      %v6576 = vadd.f32 %v5726, %v6278
      %v6577 = vadd.f32 %v5727, %v6283
      %v6578 = vadd.f32 %v5728, %v6288
      %v6579 = vadd.f32 %v5729, %v6293
      %v6580 = vadd.f32 %v5730, %v6298
      %v6581 = vadd.f32 %v5731, %v6303
      %v6582 = vadd.f32 %v5732, %v6308
      %v6583 = vadd.f32 %v5733, %v6313
      %v6584 = vadd.f32 %v5734, %v6318
      %v6585 = vadd.f32 %v5735, %v6323
      %v6586 = vadd.f32 %v5736, %v6328
      %v6587 = vadd.f32 %v5737, %v6333
      %v6588 = vadd.f32 %v5738, %v6338
      %v6589 = vadd.f32 %v5739, %v6343
      %v6590 = vadd.f32 %v5740, %v6348
      %v6591 = vadd.f32 %v5741, %v6353
      %v6592 = vadd.f32 %v5742, %v6358
      %v6593 = vadd.f32 %v5743, %v6363
      %v6594 = vadd.f32 %v5744, %v6368
      %v6595 = vadd.f32 %v5745, %v6373
      %v6596 = vadd.f32 %v5746, %v6378
      %v6597 = vadd.f32 %v5747, %v6383
      %v6598 = vadd.f32 %v5748, %v6388
      %v6599 = vadd.f32 %v5749, %v6393
      %v6600 = vadd.f32 %v5750, %v6398
      %v6601 = vadd.f32 %v5751, %v6403
      %v6602 = vadd.f32 %v5752, %v6408
      %v6603 = vadd.f32 %v5753, %v6413
      %v6604 = vadd.f32 %v5754, %v6418
      %v6605 = vadd.f32 %v5755, %v6423
      %v6606 = vadd.f32 %v5756, %v6428
      %v6607 = vadd.f32 %v5757, %v6433
      %v6608 = vadd.f32 %v5758, %v6438
      %v6609 = vadd.f32 %v5759, %v6443
      %v6610 = vadd.f32 %v5760, %v6448
      %v6611 = vadd.f32 %v5761, %v6453
      %v6612 = vadd.f32 %v5762, %v6458
      %v6613 = vadd.f32 %v5763, %v6463
      %v6614 = vadd.f32 %v5764, %v6468
      %v6615 = vadd.f32 %v5765, %v6473
      %v6616 = vadd.f32 %v5766, %v6478
      %v6617 = vadd.f32 %v5767, %v6483
      %v6618 = vadd.f32 %v5768, %v6488
      %v6620 = vsel %vm772, %v309, 0
      %v6623 = vsel %vm772, %v310, 0
      %v6626 = vsel %vm772, %v311, 0
      %v6629 = vsel %vm772, %v312, 0
      %6631 = vmatprep.subr.mxu0 0.0
      %6632 = vmatpush1.msra.mxu0 0.0
      %6633 = vmatprep.subr.mxu0 0.0
      %6634 = vmatpush1.msra.mxu0 0.0
      %6635 = vmatprep.subr.mxu0 0.0
      %6636 = vmatpush1.msra.mxu0 0.0
      %6637 = vmatprep.subr.mxu0 0.0
      %6638 = vmatpush1.msra.mxu0 0.0
      %6639 = vmatprep.subr.mxu0 0.0
      %6640 = vmatpush1.msra.mxu0 0.0
      %6641 = vmatprep.subr.mxu0 0.0
      %6642 = vmatpush1.msra.mxu0 0.0
      %6643 = vmatprep.subr.mxu0 0.0
      %6644 = vmatpush1.msra.mxu0 0.0
      %6645 = vmatprep.subr.mxu0 0.0
      %6646 = vmatpush1.msra.mxu0 0.0
      %6647 = vmatprep.subr.mxu0 0.0
      %6648 = vmatpush1.msra.mxu0 0.0
      %6649 = vmatprep.subr.mxu0 0.0
      %6650 = vmatpush1.msra.mxu0 0.0
      %6651 = vmatprep.subr.mxu0 0.0
      %6652 = vmatpush1.msra.mxu0 0.0
      %6653 = vmatprep.subr.mxu0 0.0
      %6654 = vmatpush1.msra.mxu0 0.0
      %6655 = vmatprep.subr.mxu0 0.0
      %6656 = vmatpush1.msra.mxu0 0.0
      %6657 = vmatprep.subr.mxu0 0.0
      %6658 = vmatpush1.msra.mxu0 0.0
      %6659 = vmatprep.subr.mxu0 0.0
      %6660 = vmatpush1.msra.mxu0 0.0
      %6661 = vmatprep.subr.mxu0 0.0
      %6662 = vmatpush1.msra.mxu0 %v320
      %6663 = vmatprep.subr.mxu0 0.0
      %6664 = vmatpush2.msra.mxu0 0.0
      %6665 = vmatprep.subr.mxu0 0.0
      %6666 = vmatpush2.msra.mxu0 0.0
      %6667 = vmatprep.subr.mxu0 0.0
      %6668 = vmatpush2.msra.mxu0 0.0
      %6669 = vmatprep.subr.mxu0 0.0
      %6670 = vmatpush2.msra.mxu0 0.0
      %6671 = vmatprep.subr.mxu0 0.0
      %6672 = vmatpush2.msra.mxu0 0.0
      %6673 = vmatprep.subr.mxu0 0.0
      %6674 = vmatpush2.msra.mxu0 0.0
      %6675 = vmatprep.subr.mxu0 0.0
      %6676 = vmatpush2.msra.mxu0 0.0
      %6677 = vmatprep.subr.mxu0 0.0
      %6678 = vmatpush2.msra.mxu0 0.0
      %6679 = vmatprep.subr.mxu0 0.0
      %6680 = vmatpush2.msra.mxu0 0.0
      %6681 = vmatprep.subr.mxu0 0.0
      %6682 = vmatpush2.msra.mxu0 0.0
      %6683 = vmatprep.subr.mxu0 0.0
      %6684 = vmatpush2.msra.mxu0 0.0
      %6685 = vmatprep.subr.mxu0 0.0
      %6686 = vmatpush2.msra.mxu0 0.0
      %6687 = vmatprep.subr.mxu0 0.0
      %6688 = vmatpush2.msra.mxu0 0.0
      %6689 = vmatprep.subr.mxu0 0.0
      %6690 = vmatpush2.msra.mxu0 0.0
      %6691 = vmatprep.subr.mxu0 0.0
      %6692 = vmatpush2.msra.mxu0 0.0
      %6693 = vmatprep.subr.mxu0 0.0
      %6694 = vmatpush2.msra.mxu0 0.0
      %6695 = vmatprep.mubr.f32.mxu0 0.0
      %6696 = vmatmul.mubr.f32.gmra.mxu0 %v1750
      %v6697 = vpop.f32.mrf.mxu0
      %v6698 = vadd.f32 0.0, %v6697
      %v6699 = vpop.f32.mrf.mxu0
      %6700 = vmatprep.mubr.f32.mxu0 0.0
      %6701 = vmatmul.mubr.f32.gmra.mxu0 %v1752
      %v6702 = vpop.f32.mrf.mxu0
      %v6703 = vadd.f32 0.0, %v6702
      %v6704 = vpop.f32.mrf.mxu0
      %6705 = vmatprep.mubr.f32.mxu0 0.0
      %6706 = vmatmul.mubr.f32.gmra.mxu0 %v1754
      %v6707 = vpop.f32.mrf.mxu0
      %v6708 = vadd.f32 0.0, %v6707
      %v6709 = vpop.f32.mrf.mxu0
      %6710 = vmatprep.mubr.f32.mxu0 0.0
      %6711 = vmatmul.mubr.f32.gmra.mxu0 %v1756
      %v6712 = vpop.f32.mrf.mxu0
      %v6713 = vadd.f32 0.0, %v6712
      %v6714 = vpop.f32.mrf.mxu0
      %6715 = vmatprep.mubr.f32.mxu0 0.0
      %6716 = vmatmul.mubr.f32.gmra.mxu0 %v1758
      %v6717 = vpop.f32.mrf.mxu0
      %v6718 = vadd.f32 0.0, %v6717
      %v6719 = vpop.f32.mrf.mxu0
      %6720 = vmatprep.mubr.f32.mxu0 0.0
      %6721 = vmatmul.mubr.f32.gmra.mxu0 %v1760
      %v6722 = vpop.f32.mrf.mxu0
      %v6723 = vadd.f32 0.0, %v6722
      %v6724 = vpop.f32.mrf.mxu0
      %6725 = vmatprep.mubr.f32.mxu0 0.0
      %6726 = vmatmul.mubr.f32.gmra.mxu0 %v1762
      %v6727 = vpop.f32.mrf.mxu0
      %v6728 = vadd.f32 0.0, %v6727
      %v6729 = vpop.f32.mrf.mxu0
      %6730 = vmatprep.mubr.f32.mxu0 0.0
      %6731 = vmatmul.mubr.f32.gmra.mxu0 %v1764
      %v6732 = vpop.f32.mrf.mxu0
      %v6733 = vadd.f32 0.0, %v6732
      %v6734 = vpop.f32.mrf.mxu0
      %6735 = vmatprep.mubr.f32.mxu0 0.0
      %6736 = vmatmul.mubr.f32.gmra.mxu0 %v1766
      %v6737 = vpop.f32.mrf.mxu0
      %v6738 = vadd.f32 0.0, %v6737
      %v6739 = vpop.f32.mrf.mxu0
      %6740 = vmatprep.mubr.f32.mxu0 0.0
      %6741 = vmatmul.mubr.f32.gmra.mxu0 %v1768
      %v6742 = vpop.f32.mrf.mxu0
      %v6743 = vadd.f32 0.0, %v6742
      %v6744 = vpop.f32.mrf.mxu0
      %6745 = vmatprep.mubr.f32.mxu0 0.0
      %6746 = vmatmul.mubr.f32.gmra.mxu0 %v1770
      %v6747 = vpop.f32.mrf.mxu0
      %v6748 = vadd.f32 0.0, %v6747
      %v6749 = vpop.f32.mrf.mxu0
      %6750 = vmatprep.mubr.f32.mxu0 0.0
      %6751 = vmatmul.mubr.f32.gmra.mxu0 %v1772
      %v6752 = vpop.f32.mrf.mxu0
      %v6753 = vadd.f32 0.0, %v6752
      %v6754 = vpop.f32.mrf.mxu0
      %6755 = vmatprep.mubr.f32.mxu0 0.0
      %6756 = vmatmul.mubr.f32.gmra.mxu0 %v1774
      %v6757 = vpop.f32.mrf.mxu0
      %v6758 = vadd.f32 0.0, %v6757
      %v6759 = vpop.f32.mrf.mxu0
      %6760 = vmatprep.mubr.f32.mxu0 0.0
      %6761 = vmatmul.mubr.f32.gmra.mxu0 %v1776
      %v6762 = vpop.f32.mrf.mxu0
      %v6763 = vadd.f32 0.0, %v6762
      %v6764 = vpop.f32.mrf.mxu0
      %6765 = vmatprep.mubr.f32.mxu0 0.0
      %6766 = vmatmul.mubr.f32.gmra.mxu0 %v1778
      %v6767 = vpop.f32.mrf.mxu0
      %v6768 = vadd.f32 0.0, %v6767
      %v6769 = vpop.f32.mrf.mxu0
      %6770 = vmatprep.mubr.f32.mxu0 0.0
      %6771 = vmatmul.mubr.f32.gmra.mxu0 %v1780
      %v6772 = vpop.f32.mrf.mxu0
      %v6773 = vadd.f32 0.0, %v6772
      %v6774 = vpop.f32.mrf.mxu0
      %6775 = vmatprep.mubr.f32.mxu0 0.0
      %6776 = vmatmul.mubr.f32.gmra.mxu0 %v1782
      %v6777 = vpop.f32.mrf.mxu0
      %v6778 = vadd.f32 0.0, %v6777
      %v6779 = vpop.f32.mrf.mxu0
      %6780 = vmatprep.mubr.f32.mxu0 0.0
      %6781 = vmatmul.mubr.f32.gmra.mxu0 %v1784
      %v6782 = vpop.f32.mrf.mxu0
      %v6783 = vadd.f32 0.0, %v6782
      %v6784 = vpop.f32.mrf.mxu0
      %6785 = vmatprep.mubr.f32.mxu0 0.0
      %6786 = vmatmul.mubr.f32.gmra.mxu0 %v1786
      %v6787 = vpop.f32.mrf.mxu0
      %v6788 = vadd.f32 0.0, %v6787
      %v6789 = vpop.f32.mrf.mxu0
      %6790 = vmatprep.mubr.f32.mxu0 0.0
      %6791 = vmatmul.mubr.f32.gmra.mxu0 %v1788
      %v6792 = vpop.f32.mrf.mxu0
      %v6793 = vadd.f32 0.0, %v6792
      %v6794 = vpop.f32.mrf.mxu0
      %6795 = vmatprep.mubr.f32.mxu0 0.0
      %6796 = vmatmul.mubr.f32.gmra.mxu0 %v1790
      %v6797 = vpop.f32.mrf.mxu0
      %v6798 = vadd.f32 0.0, %v6797
      %v6799 = vpop.f32.mrf.mxu0
      %6800 = vmatprep.mubr.f32.mxu0 0.0
      %6801 = vmatmul.mubr.f32.gmra.mxu0 %v1792
      %v6802 = vpop.f32.mrf.mxu0
      %v6803 = vadd.f32 0.0, %v6802
      %v6804 = vpop.f32.mrf.mxu0
      %6805 = vmatprep.mubr.f32.mxu0 0.0
      %6806 = vmatmul.mubr.f32.gmra.mxu0 %v1794
      %v6807 = vpop.f32.mrf.mxu0
      %v6808 = vadd.f32 0.0, %v6807
      %v6809 = vpop.f32.mrf.mxu0
      %6810 = vmatprep.mubr.f32.mxu0 0.0
      %6811 = vmatmul.mubr.f32.gmra.mxu0 %v1796
      %v6812 = vpop.f32.mrf.mxu0
      %v6813 = vadd.f32 0.0, %v6812
      %v6814 = vpop.f32.mrf.mxu0
      %6815 = vmatprep.mubr.f32.mxu0 0.0
      %6816 = vmatmul.mubr.f32.gmra.mxu0 %v1798
      %v6817 = vpop.f32.mrf.mxu0
      %v6818 = vadd.f32 0.0, %v6817
      %v6819 = vpop.f32.mrf.mxu0
      %6820 = vmatprep.mubr.f32.mxu0 0.0
      %6821 = vmatmul.mubr.f32.gmra.mxu0 %v1800
      %v6822 = vpop.f32.mrf.mxu0
      %v6823 = vadd.f32 0.0, %v6822
      %v6824 = vpop.f32.mrf.mxu0
      %6825 = vmatprep.mubr.f32.mxu0 0.0
      %6826 = vmatmul.mubr.f32.gmra.mxu0 %v1802
      %v6827 = vpop.f32.mrf.mxu0
      %v6828 = vadd.f32 0.0, %v6827
      %v6829 = vpop.f32.mrf.mxu0
      %6830 = vmatprep.mubr.f32.mxu0 0.0
      %6831 = vmatmul.mubr.f32.gmra.mxu0 %v1804
      %v6832 = vpop.f32.mrf.mxu0
      %v6833 = vadd.f32 0.0, %v6832
      %v6834 = vpop.f32.mrf.mxu0
      %6835 = vmatprep.mubr.f32.mxu0 0.0
      %6836 = vmatmul.mubr.f32.gmra.mxu0 %v1806
      %v6837 = vpop.f32.mrf.mxu0
      %v6838 = vadd.f32 0.0, %v6837
      %v6839 = vpop.f32.mrf.mxu0
      %6840 = vmatprep.mubr.f32.mxu0 0.0
      %6841 = vmatmul.mubr.f32.gmra.mxu0 %v1808
      %v6842 = vpop.f32.mrf.mxu0
      %v6843 = vadd.f32 0.0, %v6842
      %v6844 = vpop.f32.mrf.mxu0
      %6845 = vmatprep.mubr.f32.mxu0 0.0
      %6846 = vmatmul.mubr.f32.gmra.mxu0 %v1810
      %v6847 = vpop.f32.mrf.mxu0
      %v6848 = vadd.f32 0.0, %v6847
      %v6849 = vpop.f32.mrf.mxu0
      %6850 = vmatprep.mubr.f32.mxu0 0.0
      %6851 = vmatmul.mubr.f32.gmra.mxu0 %v1812
      %v6852 = vpop.f32.mrf.mxu0
      %v6853 = vadd.f32 0.0, %v6852
      %v6854 = vpop.f32.mrf.mxu0
      %6855 = vmatprep.mubr.f32.mxu0 0.0
      %6856 = vmatmul.mubr.f32.gmra.mxu0 %v1814
      %v6857 = vpop.f32.mrf.mxu0
      %v6858 = vadd.f32 0.0, %v6857
      %v6859 = vpop.f32.mrf.mxu0
      %6860 = vmatprep.mubr.f32.mxu0 0.0
      %6861 = vmatmul.mubr.f32.gmra.mxu0 %v1816
      %v6862 = vpop.f32.mrf.mxu0
      %v6863 = vadd.f32 0.0, %v6862
      %v6864 = vpop.f32.mrf.mxu0
      %6865 = vmatprep.mubr.f32.mxu0 0.0
      %6866 = vmatmul.mubr.f32.gmra.mxu0 %v1818
      %v6867 = vpop.f32.mrf.mxu0
      %v6868 = vadd.f32 0.0, %v6867
      %v6869 = vpop.f32.mrf.mxu0
      %6870 = vmatprep.mubr.f32.mxu0 0.0
      %6871 = vmatmul.mubr.f32.gmra.mxu0 %v1820
      %v6872 = vpop.f32.mrf.mxu0
      %v6873 = vadd.f32 0.0, %v6872
      %v6874 = vpop.f32.mrf.mxu0
      %6875 = vmatprep.mubr.f32.mxu0 0.0
      %6876 = vmatmul.mubr.f32.gmra.mxu0 %v1822
      %v6877 = vpop.f32.mrf.mxu0
      %v6878 = vadd.f32 0.0, %v6877
      %v6879 = vpop.f32.mrf.mxu0
      %6880 = vmatprep.mubr.f32.mxu0 0.0
      %6881 = vmatmul.mubr.f32.gmra.mxu0 %v1824
      %v6882 = vpop.f32.mrf.mxu0
      %v6883 = vadd.f32 0.0, %v6882
      %v6884 = vpop.f32.mrf.mxu0
      %6885 = vmatprep.mubr.f32.mxu0 0.0
      %6886 = vmatmul.mubr.f32.gmra.mxu0 %v1826
      %v6887 = vpop.f32.mrf.mxu0
      %v6888 = vadd.f32 0.0, %v6887
      %v6889 = vpop.f32.mrf.mxu0
      %6890 = vmatprep.mubr.f32.mxu0 0.0
      %6891 = vmatmul.mubr.f32.gmra.mxu0 %v1828
      %v6892 = vpop.f32.mrf.mxu0
      %v6893 = vadd.f32 0.0, %v6892
      %v6894 = vpop.f32.mrf.mxu0
      %6895 = vmatprep.mubr.f32.mxu0 0.0
      %6896 = vmatmul.mubr.f32.gmra.mxu0 %v1830
      %v6897 = vpop.f32.mrf.mxu0
      %v6898 = vadd.f32 0.0, %v6897
      %v6899 = vpop.f32.mrf.mxu0
      %6900 = vmatprep.mubr.f32.mxu0 0.0
      %6901 = vmatmul.mubr.f32.gmra.mxu0 %v1832
      %v6902 = vpop.f32.mrf.mxu0
      %v6903 = vadd.f32 0.0, %v6902
      %v6904 = vpop.f32.mrf.mxu0
      %6905 = vmatprep.mubr.f32.mxu0 0.0
      %6906 = vmatmul.mubr.f32.gmra.mxu0 %v1834
      %v6907 = vpop.f32.mrf.mxu0
      %v6908 = vadd.f32 0.0, %v6907
      %v6909 = vpop.f32.mrf.mxu0
      %6910 = vmatprep.mubr.f32.mxu0 0.0
      %6911 = vmatmul.mubr.f32.gmra.mxu0 %v1836
      %v6912 = vpop.f32.mrf.mxu0
      %v6913 = vadd.f32 0.0, %v6912
      %v6914 = vpop.f32.mrf.mxu0
      %6915 = vmatprep.mubr.f32.mxu0 0.0
      %6916 = vmatmul.mubr.f32.gmra.mxu0 %v1838
      %v6917 = vpop.f32.mrf.mxu0
      %v6918 = vadd.f32 0.0, %v6917
      %v6919 = vpop.f32.mrf.mxu0
      %6920 = vmatprep.mubr.f32.mxu0 0.0
      %6921 = vmatmul.mubr.f32.gmra.mxu0 %v1840
      %v6922 = vpop.f32.mrf.mxu0
      %v6923 = vadd.f32 0.0, %v6922
      %v6924 = vpop.f32.mrf.mxu0
      %6925 = vmatprep.mubr.f32.mxu0 0.0
      %6926 = vmatmul.mubr.f32.gmra.mxu0 %v1842
      %v6927 = vpop.f32.mrf.mxu0
      %v6928 = vadd.f32 0.0, %v6927
      %v6929 = vpop.f32.mrf.mxu0
      %6930 = vmatprep.mubr.f32.mxu0 0.0
      %6931 = vmatmul.mubr.f32.gmra.mxu0 %v1844
      %v6932 = vpop.f32.mrf.mxu0
      %v6933 = vadd.f32 0.0, %v6932
      %v6934 = vpop.f32.mrf.mxu0
      %6935 = vmatprep.mubr.f32.mxu0 0.0
      %6936 = vmatmul.mubr.f32.gmra.mxu0 %v1846
      %v6937 = vpop.f32.mrf.mxu0
      %v6938 = vadd.f32 0.0, %v6937
      %v6939 = vpop.f32.mrf.mxu0
      %6940 = vmatprep.mubr.f32.mxu0 0.0
      %6941 = vmatmul.mubr.f32.gmra.mxu0 %v1848
      %v6942 = vpop.f32.mrf.mxu0
      %v6943 = vadd.f32 0.0, %v6942
      %v6944 = vpop.f32.mrf.mxu0
      %6945 = vmatprep.mubr.f32.mxu0 0.0
      %6946 = vmatmul.mubr.f32.gmra.mxu0 %v1850
      %v6947 = vpop.f32.mrf.mxu0
      %v6948 = vadd.f32 0.0, %v6947
      %v6949 = vpop.f32.mrf.mxu0
      %6950 = vmatprep.mubr.f32.mxu0 0.0
      %6951 = vmatmul.mubr.f32.gmra.mxu0 %v1852
      %v6952 = vpop.f32.mrf.mxu0
      %v6953 = vadd.f32 0.0, %v6952
      %v6954 = vpop.f32.mrf.mxu0
      %6955 = vmatprep.mubr.f32.mxu0 0.0
      %6956 = vmatmul.mubr.f32.gmra.mxu0 %v1854
      %v6957 = vpop.f32.mrf.mxu0
      %v6958 = vadd.f32 0.0, %v6957
      %v6959 = vpop.f32.mrf.mxu0
      %6960 = vmatprep.mubr.f32.mxu0 0.0
      %6961 = vmatmul.mubr.f32.gmra.mxu0 %v1856
      %v6962 = vpop.f32.mrf.mxu0
      %v6963 = vadd.f32 0.0, %v6962
      %v6964 = vpop.f32.mrf.mxu0
      %6965 = vmatprep.mubr.f32.mxu0 0.0
      %6966 = vmatmul.mubr.f32.gmra.mxu0 %v1858
      %v6967 = vpop.f32.mrf.mxu0
      %v6968 = vadd.f32 0.0, %v6967
      %v6969 = vpop.f32.mrf.mxu0
      %6970 = vmatprep.mubr.f32.mxu0 0.0
      %6971 = vmatmul.mubr.f32.gmra.mxu0 %v1860
      %v6972 = vpop.f32.mrf.mxu0
      %v6973 = vadd.f32 0.0, %v6972
      %v6974 = vpop.f32.mrf.mxu0
      %6975 = vmatprep.mubr.f32.mxu0 0.0
      %6976 = vmatmul.mubr.f32.gmra.mxu0 %v1862
      %v6977 = vpop.f32.mrf.mxu0
      %v6978 = vadd.f32 0.0, %v6977
      %v6979 = vpop.f32.mrf.mxu0
      %6980 = vmatprep.mubr.f32.mxu0 0.0
      %6981 = vmatmul.mubr.f32.gmra.mxu0 %v1864
      %v6982 = vpop.f32.mrf.mxu0
      %v6983 = vadd.f32 0.0, %v6982
      %v6984 = vpop.f32.mrf.mxu0
      %6985 = vmatprep.mubr.f32.mxu0 0.0
      %6986 = vmatmul.mubr.f32.gmra.mxu0 %v1866
      %v6987 = vpop.f32.mrf.mxu0
      %v6988 = vadd.f32 0.0, %v6987
      %v6989 = vpop.f32.mrf.mxu0
      %6990 = vmatprep.mubr.f32.mxu0 0.0
      %6991 = vmatmul.mubr.f32.gmra.mxu0 %v1868
      %v6992 = vpop.f32.mrf.mxu0
      %v6993 = vadd.f32 0.0, %v6992
      %v6994 = vpop.f32.mrf.mxu0
      %6995 = vmatprep.mubr.f32.mxu0 0.0
      %6996 = vmatmul.mubr.f32.gmra.mxu0 %v1870
      %v6997 = vpop.f32.mrf.mxu0
      %v6998 = vadd.f32 0.0, %v6997
      %v6999 = vpop.f32.mrf.mxu0
      %7000 = vmatprep.mubr.f32.mxu0 0.0
      %7001 = vmatmul.mubr.f32.gmra.mxu0 %v1872
      %v7002 = vpop.f32.mrf.mxu0
      %v7003 = vadd.f32 0.0, %v7002
      %v7004 = vpop.f32.mrf.mxu0
      %7005 = vmatprep.mubr.f32.mxu0 0.0
      %7006 = vmatmul.mubr.f32.gmra.mxu0 %v1874
      %v7007 = vpop.f32.mrf.mxu0
      %v7008 = vadd.f32 0.0, %v7007
      %v7009 = vpop.f32.mrf.mxu0
      %7010 = vmatprep.mubr.f32.mxu0 0.0
      %7011 = vmatmul.mubr.f32.gmra.mxu0 %v1876
      %v7012 = vpop.f32.mrf.mxu0
      %v7013 = vadd.f32 0.0, %v7012
      %v7014 = vpop.f32.mrf.mxu0
      %7015 = vmatprep.mubr.f32.mxu0 0.0
      %7016 = vmatmul.mubr.f32.gmra.mxu0 %v1878
      %v7017 = vpop.f32.mrf.mxu0
      %v7018 = vadd.f32 0.0, %v7017
      %v7019 = vpop.f32.mrf.mxu0
      %7020 = vmatprep.mubr.f32.mxu0 0.0
      %7021 = vmatmul.mubr.f32.gmra.mxu0 %v1880
      %v7022 = vpop.f32.mrf.mxu0
      %v7023 = vadd.f32 0.0, %v7022
      %v7024 = vpop.f32.mrf.mxu0
      %7025 = vmatprep.mubr.f32.mxu0 0.0
      %7026 = vmatmul.mubr.f32.gmra.mxu0 %v1882
      %v7027 = vpop.f32.mrf.mxu0
      %v7028 = vadd.f32 0.0, %v7027
      %v7029 = vpop.f32.mrf.mxu0
      %7030 = vmatprep.mubr.f32.mxu0 0.0
      %7031 = vmatmul.mubr.f32.gmra.mxu0 %v1884
      %v7032 = vpop.f32.mrf.mxu0
      %v7033 = vadd.f32 0.0, %v7032
      %v7034 = vpop.f32.mrf.mxu0
      %7035 = vmatprep.mubr.f32.mxu0 0.0
      %7036 = vmatmul.mubr.f32.gmra.mxu0 %v1886
      %v7037 = vpop.f32.mrf.mxu0
      %v7038 = vadd.f32 0.0, %v7037
      %v7039 = vpop.f32.mrf.mxu0
      %7040 = vmatprep.mubr.f32.mxu0 0.0
      %7041 = vmatmul.mubr.f32.gmra.mxu0 %v1888
      %v7042 = vpop.f32.mrf.mxu0
      %v7043 = vadd.f32 0.0, %v7042
      %v7044 = vpop.f32.mrf.mxu0
      %7045 = vmatprep.mubr.f32.mxu0 0.0
      %7046 = vmatmul.mubr.f32.gmra.mxu0 %v1890
      %v7047 = vpop.f32.mrf.mxu0
      %v7048 = vadd.f32 0.0, %v7047
      %v7049 = vpop.f32.mrf.mxu0
      %7050 = vmatprep.mubr.f32.mxu0 0.0
      %7051 = vmatmul.mubr.f32.gmra.mxu0 %v1892
      %v7052 = vpop.f32.mrf.mxu0
      %v7053 = vadd.f32 0.0, %v7052
      %v7054 = vpop.f32.mrf.mxu0
      %7055 = vmatprep.mubr.f32.mxu0 0.0
      %7056 = vmatmul.mubr.f32.gmra.mxu0 %v1894
      %v7057 = vpop.f32.mrf.mxu0
      %v7058 = vadd.f32 0.0, %v7057
      %v7059 = vpop.f32.mrf.mxu0
      %7060 = vmatprep.mubr.f32.mxu0 0.0
      %7061 = vmatmul.mubr.f32.gmra.mxu0 %v1896
      %v7062 = vpop.f32.mrf.mxu0
      %v7063 = vadd.f32 0.0, %v7062
      %v7064 = vpop.f32.mrf.mxu0
      %7065 = vmatprep.mubr.f32.mxu0 0.0
      %7066 = vmatmul.mubr.f32.gmra.mxu0 %v1898
      %v7067 = vpop.f32.mrf.mxu0
      %v7068 = vadd.f32 0.0, %v7067
      %v7069 = vpop.f32.mrf.mxu0
      %7070 = vmatprep.mubr.f32.mxu0 0.0
      %7071 = vmatmul.mubr.f32.gmra.mxu0 %v1900
      %v7072 = vpop.f32.mrf.mxu0
      %v7073 = vadd.f32 0.0, %v7072
      %v7074 = vpop.f32.mrf.mxu0
      %7075 = vmatprep.mubr.f32.mxu0 0.0
      %7076 = vmatmul.mubr.f32.gmra.mxu0 %v1902
      %v7077 = vpop.f32.mrf.mxu0
      %v7078 = vadd.f32 0.0, %v7077
      %v7079 = vpop.f32.mrf.mxu0
      %7080 = vmatprep.mubr.f32.mxu0 0.0
      %7081 = vmatmul.mubr.f32.gmra.mxu0 %v1904
      %v7082 = vpop.f32.mrf.mxu0
      %v7083 = vadd.f32 0.0, %v7082
      %v7084 = vpop.f32.mrf.mxu0
      %7085 = vmatprep.mubr.f32.mxu0 0.0
      %7086 = vmatmul.mubr.f32.gmra.mxu0 %v1906
      %v7087 = vpop.f32.mrf.mxu0
      %v7088 = vadd.f32 0.0, %v7087
      %v7089 = vpop.f32.mrf.mxu0
      %7090 = vmatprep.mubr.f32.mxu0 0.0
      %7091 = vmatmul.mubr.f32.gmra.mxu0 %v1908
      %v7092 = vpop.f32.mrf.mxu0
      %v7093 = vadd.f32 0.0, %v7092
      %v7094 = vpop.f32.mrf.mxu0
      %7095 = vmatprep.mubr.f32.mxu0 0.0
      %7096 = vmatmul.mubr.f32.gmra.mxu0 %v1910
      %v7097 = vpop.f32.mrf.mxu0
      %v7098 = vadd.f32 0.0, %v7097
      %v7099 = vpop.f32.mrf.mxu0
      %7100 = vmatprep.mubr.f32.mxu0 0.0
      %7101 = vmatmul.mubr.f32.gmra.mxu0 %v1912
      %v7102 = vpop.f32.mrf.mxu0
      %v7103 = vadd.f32 0.0, %v7102
      %v7104 = vpop.f32.mrf.mxu0
      %7105 = vmatprep.mubr.f32.mxu0 0.0
      %7106 = vmatmul.mubr.f32.gmra.mxu0 %v1914
      %v7107 = vpop.f32.mrf.mxu0
      %v7108 = vadd.f32 0.0, %v7107
      %v7109 = vpop.f32.mrf.mxu0
      %7110 = vmatprep.mubr.f32.mxu0 0.0
      %7111 = vmatmul.mubr.f32.gmra.mxu0 %v1916
      %v7112 = vpop.f32.mrf.mxu0
      %v7113 = vadd.f32 0.0, %v7112
      %v7114 = vpop.f32.mrf.mxu0
      %7115 = vmatprep.mubr.f32.mxu0 0.0
      %7116 = vmatmul.mubr.f32.gmra.mxu0 %v1918
      %v7117 = vpop.f32.mrf.mxu0
      %v7118 = vadd.f32 0.0, %v7117
      %v7119 = vpop.f32.mrf.mxu0
      %7120 = vmatprep.mubr.f32.mxu0 0.0
      %7121 = vmatmul.mubr.f32.gmra.mxu0 %v1920
      %v7122 = vpop.f32.mrf.mxu0
      %v7123 = vadd.f32 0.0, %v7122
      %v7124 = vpop.f32.mrf.mxu0
      %7125 = vmatprep.mubr.f32.mxu0 0.0
      %7126 = vmatmul.mubr.f32.gmra.mxu0 %v1922
      %v7127 = vpop.f32.mrf.mxu0
      %v7128 = vadd.f32 0.0, %v7127
      %v7129 = vpop.f32.mrf.mxu0
      %7130 = vmatprep.mubr.f32.mxu0 0.0
      %7131 = vmatmul.mubr.f32.gmra.mxu0 %v1924
      %v7132 = vpop.f32.mrf.mxu0
      %v7133 = vadd.f32 0.0, %v7132
      %v7134 = vpop.f32.mrf.mxu0
      %7135 = vmatprep.mubr.f32.mxu0 0.0
      %7136 = vmatmul.mubr.f32.gmra.mxu0 %v1926
      %v7137 = vpop.f32.mrf.mxu0
      %v7138 = vadd.f32 0.0, %v7137
      %v7139 = vpop.f32.mrf.mxu0
      %7140 = vmatprep.mubr.f32.mxu0 0.0
      %7141 = vmatmul.mubr.f32.gmra.mxu0 %v1928
      %v7142 = vpop.f32.mrf.mxu0
      %v7143 = vadd.f32 0.0, %v7142
      %v7144 = vpop.f32.mrf.mxu0
      %7145 = vmatprep.mubr.f32.mxu0 0.0
      %7146 = vmatmul.mubr.f32.gmra.mxu0 %v1930
      %v7147 = vpop.f32.mrf.mxu0
      %v7148 = vadd.f32 0.0, %v7147
      %v7149 = vpop.f32.mrf.mxu0
      %7150 = vmatprep.mubr.f32.mxu0 0.0
      %7151 = vmatmul.mubr.f32.gmra.mxu0 %v1932
      %v7152 = vpop.f32.mrf.mxu0
      %v7153 = vadd.f32 0.0, %v7152
      %v7154 = vpop.f32.mrf.mxu0
      %7155 = vmatprep.mubr.f32.mxu0 0.0
      %7156 = vmatmul.mubr.f32.gmra.mxu0 %v1934
      %v7157 = vpop.f32.mrf.mxu0
      %v7158 = vadd.f32 0.0, %v7157
      %v7159 = vpop.f32.mrf.mxu0
      %7160 = vmatprep.mubr.f32.mxu0 0.0
      %7161 = vmatmul.mubr.f32.gmra.mxu0 %v1936
      %v7162 = vpop.f32.mrf.mxu0
      %v7163 = vadd.f32 0.0, %v7162
      %v7164 = vpop.f32.mrf.mxu0
      %7165 = vmatprep.mubr.f32.mxu0 0.0
      %7166 = vmatmul.mubr.f32.gmra.mxu0 %v1938
      %v7167 = vpop.f32.mrf.mxu0
      %v7168 = vadd.f32 0.0, %v7167
      %v7169 = vpop.f32.mrf.mxu0
      %7170 = vmatprep.mubr.f32.mxu0 0.0
      %7171 = vmatmul.mubr.f32.gmra.mxu0 %v1940
      %v7172 = vpop.f32.mrf.mxu0
      %v7173 = vadd.f32 0.0, %v7172
      %v7174 = vpop.f32.mrf.mxu0
      %7175 = vmatprep.mubr.f32.mxu0 0.0
      %7176 = vmatmul.mubr.f32.gmra.mxu0 %v1942
      %v7177 = vpop.f32.mrf.mxu0
      %v7178 = vadd.f32 0.0, %v7177
      %v7179 = vpop.f32.mrf.mxu0
      %7180 = vmatprep.mubr.f32.mxu0 0.0
      %7181 = vmatmul.mubr.f32.gmra.mxu0 %v1944
      %v7182 = vpop.f32.mrf.mxu0
      %v7183 = vadd.f32 0.0, %v7182
      %v7184 = vpop.f32.mrf.mxu0
      %7185 = vmatprep.mubr.f32.mxu0 0.0
      %7186 = vmatmul.mubr.f32.gmra.mxu0 %v1946
      %v7187 = vpop.f32.mrf.mxu0
      %v7188 = vadd.f32 0.0, %v7187
      %v7189 = vpop.f32.mrf.mxu0
      %7190 = vmatprep.mubr.f32.mxu0 0.0
      %7191 = vmatmul.mubr.f32.gmra.mxu0 %v1948
      %v7192 = vpop.f32.mrf.mxu0
      %v7193 = vadd.f32 0.0, %v7192
      %v7194 = vpop.f32.mrf.mxu0
      %7195 = vmatprep.mubr.f32.mxu0 0.0
      %7196 = vmatmul.mubr.f32.gmra.mxu0 %v1950
      %v7197 = vpop.f32.mrf.mxu0
      %v7198 = vadd.f32 0.0, %v7197
      %v7199 = vpop.f32.mrf.mxu0
      %7200 = vmatprep.mubr.f32.mxu0 0.0
      %7201 = vmatmul.mubr.f32.gmra.mxu0 %v1952
      %v7202 = vpop.f32.mrf.mxu0
      %v7203 = vadd.f32 0.0, %v7202
      %v7204 = vpop.f32.mrf.mxu0
      %7205 = vmatprep.mubr.f32.mxu0 0.0
      %7206 = vmatmul.mubr.f32.gmra.mxu0 %v1954
      %v7207 = vpop.f32.mrf.mxu0
      %v7208 = vadd.f32 0.0, %v7207
      %v7209 = vpop.f32.mrf.mxu0
      %7210 = vmatprep.mubr.f32.mxu0 0.0
      %7211 = vmatmul.mubr.f32.gmra.mxu0 %v1956
      %v7212 = vpop.f32.mrf.mxu0
      %v7213 = vadd.f32 0.0, %v7212
      %v7214 = vpop.f32.mrf.mxu0
      %7215 = vmatprep.mubr.f32.mxu0 0.0
      %7216 = vmatmul.mubr.f32.gmra.mxu0 %v1958
      %v7217 = vpop.f32.mrf.mxu0
      %v7218 = vadd.f32 0.0, %v7217
      %v7219 = vpop.f32.mrf.mxu0
      %7220 = vmatprep.mubr.f32.mxu0 0.0
      %7221 = vmatmul.mubr.f32.gmra.mxu0 %v1960
      %v7222 = vpop.f32.mrf.mxu0
      %v7223 = vadd.f32 0.0, %v7222
      %v7224 = vpop.f32.mrf.mxu0
      %7225 = vmatprep.mubr.f32.mxu0 0.0
      %7226 = vmatmul.mubr.f32.gmra.mxu0 %v1962
      %v7227 = vpop.f32.mrf.mxu0
      %v7228 = vadd.f32 0.0, %v7227
      %v7229 = vpop.f32.mrf.mxu0
      %7230 = vmatprep.mubr.f32.mxu0 0.0
      %7231 = vmatmul.mubr.f32.gmra.mxu0 %v1964
      %v7232 = vpop.f32.mrf.mxu0
      %v7233 = vadd.f32 0.0, %v7232
      %v7234 = vpop.f32.mrf.mxu0
      %7235 = vmatprep.mubr.f32.mxu0 0.0
      %7236 = vmatmul.mubr.f32.gmra.mxu0 %v1966
      %v7237 = vpop.f32.mrf.mxu0
      %v7238 = vadd.f32 0.0, %v7237
      %v7239 = vpop.f32.mrf.mxu0
      %7240 = vmatprep.mubr.f32.mxu0 0.0
      %7241 = vmatmul.mubr.f32.gmra.mxu0 %v1968
      %v7242 = vpop.f32.mrf.mxu0
      %v7243 = vadd.f32 0.0, %v7242
      %v7244 = vpop.f32.mrf.mxu0
      %7245 = vmatprep.mubr.f32.mxu0 0.0
      %7246 = vmatmul.mubr.f32.gmra.mxu0 %v1970
      %v7247 = vpop.f32.mrf.mxu0
      %v7248 = vadd.f32 0.0, %v7247
      %v7249 = vpop.f32.mrf.mxu0
      %7250 = vmatprep.mubr.f32.mxu0 0.0
      %7251 = vmatmul.mubr.f32.gmra.mxu0 %v1972
      %v7252 = vpop.f32.mrf.mxu0
      %v7253 = vadd.f32 0.0, %v7252
      %v7254 = vpop.f32.mrf.mxu0
      %7255 = vmatprep.mubr.f32.mxu0 0.0
      %7256 = vmatmul.mubr.f32.gmra.mxu0 %v1974
      %v7257 = vpop.f32.mrf.mxu0
      %v7258 = vadd.f32 0.0, %v7257
      %v7259 = vpop.f32.mrf.mxu0
      %7260 = vmatprep.mubr.f32.mxu0 0.0
      %7261 = vmatmul.mubr.f32.gmra.mxu0 %v1976
      %v7262 = vpop.f32.mrf.mxu0
      %v7263 = vadd.f32 0.0, %v7262
      %v7264 = vpop.f32.mrf.mxu0
      %7265 = vmatprep.mubr.f32.mxu0 0.0
      %7266 = vmatmul.mubr.f32.gmra.mxu0 %v1978
      %v7267 = vpop.f32.mrf.mxu0
      %v7268 = vadd.f32 0.0, %v7267
      %v7269 = vpop.f32.mrf.mxu0
      %7270 = vmatprep.mubr.f32.mxu0 0.0
      %7271 = vmatmul.mubr.f32.gmra.mxu0 %v1980
      %v7272 = vpop.f32.mrf.mxu0
      %v7273 = vadd.f32 0.0, %v7272
      %v7274 = vpop.f32.mrf.mxu0
      %7275 = vmatprep.mubr.f32.mxu0 0.0
      %7276 = vmatmul.mubr.f32.gmra.mxu0 %v1982
      %v7277 = vpop.f32.mrf.mxu0
      %v7278 = vadd.f32 0.0, %v7277
      %v7279 = vpop.f32.mrf.mxu0
      %7280 = vmatprep.mubr.f32.mxu0 0.0
      %7281 = vmatmul.mubr.f32.gmra.mxu0 %v1984
      %v7282 = vpop.f32.mrf.mxu0
      %v7283 = vadd.f32 0.0, %v7282
      %v7284 = vpop.f32.mrf.mxu0
      %7285 = vmatprep.mubr.f32.mxu0 0.0
      %7286 = vmatmul.mubr.f32.gmra.mxu0 %v1986
      %v7287 = vpop.f32.mrf.mxu0
      %v7288 = vadd.f32 0.0, %v7287
      %v7289 = vpop.f32.mrf.mxu0
      %7290 = vmatprep.mubr.f32.mxu0 0.0
      %7291 = vmatmul.mubr.f32.gmra.mxu0 %v1988
      %v7292 = vpop.f32.mrf.mxu0
      %v7293 = vadd.f32 0.0, %v7292
      %v7294 = vpop.f32.mrf.mxu0
      %7295 = vmatprep.mubr.f32.mxu0 0.0
      %7296 = vmatmul.mubr.f32.gmra.mxu0 %v4074
      %v7297 = vpop.f32.mrf.mxu0
      %v7298 = vadd.f32 0.0, %v7297
      %v7299 = vpop.f32.mrf.mxu0
      %7300 = vmatprep.mubr.f32.mxu0 0.0
      %7301 = vmatmul.mubr.f32.gmra.mxu0 %v4077
      %v7302 = vpop.f32.mrf.mxu0
      %v7303 = vadd.f32 0.0, %v7302
      %v7304 = vpop.f32.mrf.mxu0
      %7305 = vmatprep.mubr.f32.mxu0 0.0
      %7306 = vmatmul.mubr.f32.gmra.mxu0 %v4080
      %v7307 = vpop.f32.mrf.mxu0
      %v7308 = vadd.f32 0.0, %v7307
      %v7309 = vpop.f32.mrf.mxu0
      %7310 = vmatprep.mubr.f32.mxu0 0.0
      %7311 = vmatmul.mubr.f32.gmra.mxu0 %v4083
      %v7312 = vpop.f32.mrf.mxu0
      %v7313 = vadd.f32 0.0, %v7312
      %v7314 = vpop.f32.mrf.mxu0
      %7315 = vmatprep.mubr.f32.mxu0 0.0
      %7316 = vmatmul.mubr.f32.gmra.mxu0 %v6620
      %v7317 = vpop.f32.mrf.mxu0
      %v7318 = vadd.f32 0.0, %v7317
      %v7319 = vpop.f32.mrf.mxu0
      %7320 = vmatprep.mubr.f32.mxu0 0.0
      %7321 = vmatmul.mubr.f32.gmra.mxu0 %v6623
      %v7322 = vpop.f32.mrf.mxu0
      %v7323 = vadd.f32 0.0, %v7322
      %v7324 = vpop.f32.mrf.mxu0
      %7325 = vmatprep.mubr.f32.mxu0 0.0
      %7326 = vmatmul.mubr.f32.gmra.mxu0 %v6626
      %v7327 = vpop.f32.mrf.mxu0
      %v7328 = vadd.f32 0.0, %v7327
      %v7329 = vpop.f32.mrf.mxu0
      %7330 = vmatprep.mubr.f32.mxu0 0.0
      %7331 = vmatmul.mubr.f32.gmra.mxu0 %v6629
      %v7332 = vpop.f32.mrf.mxu0
      %v7333 = vadd.f32 0.0, %v7332
      %v7334 = vpop.f32.mrf.mxu0
      %7335 = vdwg.mxu0
      %v7336 = vadd.f32 %v6491, %v6698
      %v7337 = vadd.f32 %v6492, %v6703
      %v7338 = vadd.f32 %v6493, %v6708
      %v7339 = vadd.f32 %v6494, %v6713
      %v7340 = vadd.f32 %v6495, %v6718
      %v7341 = vadd.f32 %v6496, %v6723
      %v7342 = vadd.f32 %v6497, %v6728
      %v7343 = vadd.f32 %v6498, %v6733
      %v7344 = vadd.f32 %v6499, %v6738
      %v7345 = vadd.f32 %v6500, %v6743
      %v7346 = vadd.f32 %v6501, %v6748
      %v7347 = vadd.f32 %v6502, %v6753
      %v7348 = vadd.f32 %v6503, %v6758
      %v7349 = vadd.f32 %v6504, %v6763
      %v7350 = vadd.f32 %v6505, %v6768
      %v7351 = vadd.f32 %v6506, %v6773
      %v7352 = vadd.f32 %v6507, %v6778
      %v7353 = vadd.f32 %v6508, %v6783
      %v7354 = vadd.f32 %v6509, %v6788
      %v7355 = vadd.f32 %v6510, %v6793
      %v7356 = vadd.f32 %v6511, %v6798
      %v7357 = vadd.f32 %v6512, %v6803
      %v7358 = vadd.f32 %v6513, %v6808
      %v7359 = vadd.f32 %v6514, %v6813
      %v7360 = vadd.f32 %v6515, %v6818
      %v7361 = vadd.f32 %v6516, %v6823
      %v7362 = vadd.f32 %v6517, %v6828
      %v7363 = vadd.f32 %v6518, %v6833
      %v7364 = vadd.f32 %v6519, %v6838
      %v7365 = vadd.f32 %v6520, %v6843
      %v7366 = vadd.f32 %v6521, %v6848
      %v7367 = vadd.f32 %v6522, %v6853
      %v7368 = vadd.f32 %v6523, %v6858
      %v7369 = vadd.f32 %v6524, %v6863
      %v7370 = vadd.f32 %v6525, %v6868
      %v7371 = vadd.f32 %v6526, %v6873
      %v7372 = vadd.f32 %v6527, %v6878
      %v7373 = vadd.f32 %v6528, %v6883
      %v7374 = vadd.f32 %v6529, %v6888
      %v7375 = vadd.f32 %v6530, %v6893
      %v7376 = vadd.f32 %v6531, %v6898
      %v7377 = vadd.f32 %v6532, %v6903
      %v7378 = vadd.f32 %v6533, %v6908
      %v7379 = vadd.f32 %v6534, %v6913
      %v7380 = vadd.f32 %v6535, %v6918
      %v7381 = vadd.f32 %v6536, %v6923
      %v7382 = vadd.f32 %v6537, %v6928
      %v7383 = vadd.f32 %v6538, %v6933
      %v7384 = vadd.f32 %v6539, %v6938
      %v7385 = vadd.f32 %v6540, %v6943
      %v7386 = vadd.f32 %v6541, %v6948
      %v7387 = vadd.f32 %v6542, %v6953
      %v7388 = vadd.f32 %v6543, %v6958
      %v7389 = vadd.f32 %v6544, %v6963
      %v7390 = vadd.f32 %v6545, %v6968
      %v7391 = vadd.f32 %v6546, %v6973
      %v7392 = vadd.f32 %v6547, %v6978
      %v7393 = vadd.f32 %v6548, %v6983
      %v7394 = vadd.f32 %v6549, %v6988
      %v7395 = vadd.f32 %v6550, %v6993
      %v7396 = vadd.f32 %v6551, %v6998
      %v7397 = vadd.f32 %v6552, %v7003
      %v7398 = vadd.f32 %v6553, %v7008
      %v7399 = vadd.f32 %v6554, %v7013
      %v7400 = vadd.f32 %v6555, %v7018
      %v7401 = vadd.f32 %v6556, %v7023
      %v7402 = vadd.f32 %v6557, %v7028
      %v7403 = vadd.f32 %v6558, %v7033
      %v7404 = vadd.f32 %v6559, %v7038
      %v7405 = vadd.f32 %v6560, %v7043
      %v7406 = vadd.f32 %v6561, %v7048
      %v7407 = vadd.f32 %v6562, %v7053
      %v7408 = vadd.f32 %v6563, %v7058
      %v7409 = vadd.f32 %v6564, %v7063
      %v7410 = vadd.f32 %v6565, %v7068
      %v7411 = vadd.f32 %v6566, %v7073
      %v7412 = vadd.f32 %v6567, %v7078
      %v7413 = vadd.f32 %v6568, %v7083
      %v7414 = vadd.f32 %v6569, %v7088
      %v7415 = vadd.f32 %v6570, %v7093
      %v7416 = vadd.f32 %v6571, %v7098
      %v7417 = vadd.f32 %v6572, %v7103
      %v7418 = vadd.f32 %v6573, %v7108
      %v7419 = vadd.f32 %v6574, %v7113
      %v7420 = vadd.f32 %v6575, %v7118
      %v7421 = vadd.f32 %v6576, %v7123
      %v7422 = vadd.f32 %v6577, %v7128
      %v7423 = vadd.f32 %v6578, %v7133
      %v7424 = vadd.f32 %v6579, %v7138
      %v7425 = vadd.f32 %v6580, %v7143
      %v7426 = vadd.f32 %v6581, %v7148
      %v7427 = vadd.f32 %v6582, %v7153
      %v7428 = vadd.f32 %v6583, %v7158
      %v7429 = vadd.f32 %v6584, %v7163
      %v7430 = vadd.f32 %v6585, %v7168
      %v7431 = vadd.f32 %v6586, %v7173
      %v7432 = vadd.f32 %v6587, %v7178
      %v7433 = vadd.f32 %v6588, %v7183
      %v7434 = vadd.f32 %v6589, %v7188
      %v7435 = vadd.f32 %v6590, %v7193
      %v7436 = vadd.f32 %v6591, %v7198
      %v7437 = vadd.f32 %v6592, %v7203
      %v7438 = vadd.f32 %v6593, %v7208
      %v7439 = vadd.f32 %v6594, %v7213
      %v7440 = vadd.f32 %v6595, %v7218
      %v7441 = vadd.f32 %v6596, %v7223
      %v7442 = vadd.f32 %v6597, %v7228
      %v7443 = vadd.f32 %v6598, %v7233
      %v7444 = vadd.f32 %v6599, %v7238
      %v7445 = vadd.f32 %v6600, %v7243
      %v7446 = vadd.f32 %v6601, %v7248
      %v7447 = vadd.f32 %v6602, %v7253
      %v7448 = vadd.f32 %v6603, %v7258
      %v7449 = vadd.f32 %v6604, %v7263
      %v7450 = vadd.f32 %v6605, %v7268
      %v7451 = vadd.f32 %v6606, %v7273
      %v7452 = vadd.f32 %v6607, %v7278
      %v7453 = vadd.f32 %v6608, %v7283
      %v7454 = vadd.f32 %v6609, %v7288
      %v7455 = vadd.f32 %v6610, %v7293
      %v7456 = vadd.f32 %v6611, %v7298
      %v7457 = vadd.f32 %v6612, %v7303
      %v7458 = vadd.f32 %v6613, %v7308
      %v7459 = vadd.f32 %v6614, %v7313
      %v7460 = vadd.f32 %v6615, %v7318
      %v7461 = vadd.f32 %v6616, %v7323
      %v7462 = vadd.f32 %v6617, %v7328
      %v7463 = vadd.f32 %v6618, %v7333
      %v7465 = vrot.slane %v309, 1
      %v7466 = vrot.slane %v310, 1
      %v7467 = vsel %vm483, %v7465, %v7466
      %v7468 = vrot.slane %v311, 1
      %v7469 = vsel %vm483, %v7466, %v7468
      %v7470 = vrot.slane %v312, 1
      %v7471 = vsel %vm483, %v7468, %v7470
      %v7472 = vrot.slane %v313, 1
      %v7473 = vsel %vm483, %v7470, %v7472
      %v7474 = vsel %vm772, %v7467, 0
      %v7476 = vsel %vm772, %v7469, 0
      %v7478 = vsel %vm772, %v7471, 0
      %v7480 = vsel %vm772, %v7473, 0
      %7482 = vmatprep.subr.mxu0 0.0
      %7483 = vmatpush1.msra.mxu0 0.0
      %7484 = vmatprep.subr.mxu0 0.0
      %7485 = vmatpush1.msra.mxu0 0.0
      %7486 = vmatprep.subr.mxu0 0.0
      %7487 = vmatpush1.msra.mxu0 0.0
      %7488 = vmatprep.subr.mxu0 0.0
      %7489 = vmatpush1.msra.mxu0 0.0
      %7490 = vmatprep.subr.mxu0 0.0
      %7491 = vmatpush1.msra.mxu0 0.0
      %7492 = vmatprep.subr.mxu0 0.0
      %7493 = vmatpush1.msra.mxu0 0.0
      %7494 = vmatprep.subr.mxu0 0.0
      %7495 = vmatpush1.msra.mxu0 0.0
      %7496 = vmatprep.subr.mxu0 0.0
      %7497 = vmatpush1.msra.mxu0 0.0
      %7498 = vmatprep.subr.mxu0 0.0
      %7499 = vmatpush1.msra.mxu0 0.0
      %7500 = vmatprep.subr.mxu0 0.0
      %7501 = vmatpush1.msra.mxu0 0.0
      %7502 = vmatprep.subr.mxu0 0.0
      %7503 = vmatpush1.msra.mxu0 0.0
      %7504 = vmatprep.subr.mxu0 0.0
      %7505 = vmatpush1.msra.mxu0 0.0
      %7506 = vmatprep.subr.mxu0 0.0
      %7507 = vmatpush1.msra.mxu0 0.0
      %7508 = vmatprep.subr.mxu0 0.0
      %7509 = vmatpush1.msra.mxu0 0.0
      %7510 = vmatprep.subr.mxu0 0.0
      %7511 = vmatpush1.msra.mxu0 0.0
      %7512 = vmatprep.subr.mxu0 0.0
      %7513 = vmatpush1.msra.mxu0 %v321
      %7514 = vmatprep.subr.mxu0 0.0
      %7515 = vmatpush2.msra.mxu0 0.0
      %7516 = vmatprep.subr.mxu0 0.0
      %7517 = vmatpush2.msra.mxu0 0.0
      %7518 = vmatprep.subr.mxu0 0.0
      %7519 = vmatpush2.msra.mxu0 0.0
      %7520 = vmatprep.subr.mxu0 0.0
      %7521 = vmatpush2.msra.mxu0 0.0
      %7522 = vmatprep.subr.mxu0 0.0
      %7523 = vmatpush2.msra.mxu0 0.0
      %7524 = vmatprep.subr.mxu0 0.0
      %7525 = vmatpush2.msra.mxu0 0.0
      %7526 = vmatprep.subr.mxu0 0.0
      %7527 = vmatpush2.msra.mxu0 0.0
      %7528 = vmatprep.subr.mxu0 0.0
      %7529 = vmatpush2.msra.mxu0 0.0
      %7530 = vmatprep.subr.mxu0 0.0
      %7531 = vmatpush2.msra.mxu0 0.0
      %7532 = vmatprep.subr.mxu0 0.0
      %7533 = vmatpush2.msra.mxu0 0.0
      %7534 = vmatprep.subr.mxu0 0.0
      %7535 = vmatpush2.msra.mxu0 0.0
      %7536 = vmatprep.subr.mxu0 0.0
      %7537 = vmatpush2.msra.mxu0 0.0
      %7538 = vmatprep.subr.mxu0 0.0
      %7539 = vmatpush2.msra.mxu0 0.0
      %7540 = vmatprep.subr.mxu0 0.0
      %7541 = vmatpush2.msra.mxu0 0.0
      %7542 = vmatprep.subr.mxu0 0.0
      %7543 = vmatpush2.msra.mxu0 0.0
      %7544 = vmatprep.subr.mxu0 0.0
      %7545 = vmatpush2.msra.mxu0 0.0
      %7546 = vmatprep.mubr.f32.mxu0 0.0
      %7547 = vmatmul.mubr.f32.gmra.mxu0 %v789
      %v7548 = vpop.f32.mrf.mxu0
      %v7549 = vadd.f32 0.0, %v7548
      %v7550 = vpop.f32.mrf.mxu0
      %7551 = vmatprep.mubr.f32.mxu0 0.0
      %7552 = vmatmul.mubr.f32.gmra.mxu0 %v791
      %v7553 = vpop.f32.mrf.mxu0
      %v7554 = vadd.f32 0.0, %v7553
      %v7555 = vpop.f32.mrf.mxu0
      %7556 = vmatprep.mubr.f32.mxu0 0.0
      %7557 = vmatmul.mubr.f32.gmra.mxu0 %v793
      %v7558 = vpop.f32.mrf.mxu0
      %v7559 = vadd.f32 0.0, %v7558
      %v7560 = vpop.f32.mrf.mxu0
      %7561 = vmatprep.mubr.f32.mxu0 0.0
      %7562 = vmatmul.mubr.f32.gmra.mxu0 %v795
      %v7563 = vpop.f32.mrf.mxu0
      %v7564 = vadd.f32 0.0, %v7563
      %v7565 = vpop.f32.mrf.mxu0
      %7566 = vmatprep.mubr.f32.mxu0 0.0
      %7567 = vmatmul.mubr.f32.gmra.mxu0 %v797
      %v7568 = vpop.f32.mrf.mxu0
      %v7569 = vadd.f32 0.0, %v7568
      %v7570 = vpop.f32.mrf.mxu0
      %7571 = vmatprep.mubr.f32.mxu0 0.0
      %7572 = vmatmul.mubr.f32.gmra.mxu0 %v799
      %v7573 = vpop.f32.mrf.mxu0
      %v7574 = vadd.f32 0.0, %v7573
      %v7575 = vpop.f32.mrf.mxu0
      %7576 = vmatprep.mubr.f32.mxu0 0.0
      %7577 = vmatmul.mubr.f32.gmra.mxu0 %v801
      %v7578 = vpop.f32.mrf.mxu0
      %v7579 = vadd.f32 0.0, %v7578
      %v7580 = vpop.f32.mrf.mxu0
      %7581 = vmatprep.mubr.f32.mxu0 0.0
      %7582 = vmatmul.mubr.f32.gmra.mxu0 %v803
      %v7583 = vpop.f32.mrf.mxu0
      %v7584 = vadd.f32 0.0, %v7583
      %v7585 = vpop.f32.mrf.mxu0
      %7586 = vmatprep.mubr.f32.mxu0 0.0
      %7587 = vmatmul.mubr.f32.gmra.mxu0 %v805
      %v7588 = vpop.f32.mrf.mxu0
      %v7589 = vadd.f32 0.0, %v7588
      %v7590 = vpop.f32.mrf.mxu0
      %7591 = vmatprep.mubr.f32.mxu0 0.0
      %7592 = vmatmul.mubr.f32.gmra.mxu0 %v807
      %v7593 = vpop.f32.mrf.mxu0
      %v7594 = vadd.f32 0.0, %v7593
      %v7595 = vpop.f32.mrf.mxu0
      %7596 = vmatprep.mubr.f32.mxu0 0.0
      %7597 = vmatmul.mubr.f32.gmra.mxu0 %v809
      %v7598 = vpop.f32.mrf.mxu0
      %v7599 = vadd.f32 0.0, %v7598
      %v7600 = vpop.f32.mrf.mxu0
      %7601 = vmatprep.mubr.f32.mxu0 0.0
      %7602 = vmatmul.mubr.f32.gmra.mxu0 %v811
      %v7603 = vpop.f32.mrf.mxu0
      %v7604 = vadd.f32 0.0, %v7603
      %v7605 = vpop.f32.mrf.mxu0
      %7606 = vmatprep.mubr.f32.mxu0 0.0
      %7607 = vmatmul.mubr.f32.gmra.mxu0 %v813
      %v7608 = vpop.f32.mrf.mxu0
      %v7609 = vadd.f32 0.0, %v7608
      %v7610 = vpop.f32.mrf.mxu0
      %7611 = vmatprep.mubr.f32.mxu0 0.0
      %7612 = vmatmul.mubr.f32.gmra.mxu0 %v815
      %v7613 = vpop.f32.mrf.mxu0
      %v7614 = vadd.f32 0.0, %v7613
      %v7615 = vpop.f32.mrf.mxu0
      %7616 = vmatprep.mubr.f32.mxu0 0.0
      %7617 = vmatmul.mubr.f32.gmra.mxu0 %v817
      %v7618 = vpop.f32.mrf.mxu0
      %v7619 = vadd.f32 0.0, %v7618
      %v7620 = vpop.f32.mrf.mxu0
      %7621 = vmatprep.mubr.f32.mxu0 0.0
      %7622 = vmatmul.mubr.f32.gmra.mxu0 %v819
      %v7623 = vpop.f32.mrf.mxu0
      %v7624 = vadd.f32 0.0, %v7623
      %v7625 = vpop.f32.mrf.mxu0
      %7626 = vmatprep.mubr.f32.mxu0 0.0
      %7627 = vmatmul.mubr.f32.gmra.mxu0 %v821
      %v7628 = vpop.f32.mrf.mxu0
      %v7629 = vadd.f32 0.0, %v7628
      %v7630 = vpop.f32.mrf.mxu0
      %7631 = vmatprep.mubr.f32.mxu0 0.0
      %7632 = vmatmul.mubr.f32.gmra.mxu0 %v823
      %v7633 = vpop.f32.mrf.mxu0
      %v7634 = vadd.f32 0.0, %v7633
      %v7635 = vpop.f32.mrf.mxu0
      %7636 = vmatprep.mubr.f32.mxu0 0.0
      %7637 = vmatmul.mubr.f32.gmra.mxu0 %v825
      %v7638 = vpop.f32.mrf.mxu0
      %v7639 = vadd.f32 0.0, %v7638
      %v7640 = vpop.f32.mrf.mxu0
      %7641 = vmatprep.mubr.f32.mxu0 0.0
      %7642 = vmatmul.mubr.f32.gmra.mxu0 %v827
      %v7643 = vpop.f32.mrf.mxu0
      %v7644 = vadd.f32 0.0, %v7643
      %v7645 = vpop.f32.mrf.mxu0
      %7646 = vmatprep.mubr.f32.mxu0 0.0
      %7647 = vmatmul.mubr.f32.gmra.mxu0 %v829
      %v7648 = vpop.f32.mrf.mxu0
      %v7649 = vadd.f32 0.0, %v7648
      %v7650 = vpop.f32.mrf.mxu0
      %7651 = vmatprep.mubr.f32.mxu0 0.0
      %7652 = vmatmul.mubr.f32.gmra.mxu0 %v831
      %v7653 = vpop.f32.mrf.mxu0
      %v7654 = vadd.f32 0.0, %v7653
      %v7655 = vpop.f32.mrf.mxu0
      %7656 = vmatprep.mubr.f32.mxu0 0.0
      %7657 = vmatmul.mubr.f32.gmra.mxu0 %v833
      %v7658 = vpop.f32.mrf.mxu0
      %v7659 = vadd.f32 0.0, %v7658
      %v7660 = vpop.f32.mrf.mxu0
      %7661 = vmatprep.mubr.f32.mxu0 0.0
      %7662 = vmatmul.mubr.f32.gmra.mxu0 %v835
      %v7663 = vpop.f32.mrf.mxu0
      %v7664 = vadd.f32 0.0, %v7663
      %v7665 = vpop.f32.mrf.mxu0
      %7666 = vmatprep.mubr.f32.mxu0 0.0
      %7667 = vmatmul.mubr.f32.gmra.mxu0 %v837
      %v7668 = vpop.f32.mrf.mxu0
      %v7669 = vadd.f32 0.0, %v7668
      %v7670 = vpop.f32.mrf.mxu0
      %7671 = vmatprep.mubr.f32.mxu0 0.0
      %7672 = vmatmul.mubr.f32.gmra.mxu0 %v839
      %v7673 = vpop.f32.mrf.mxu0
      %v7674 = vadd.f32 0.0, %v7673
      %v7675 = vpop.f32.mrf.mxu0
      %7676 = vmatprep.mubr.f32.mxu0 0.0
      %7677 = vmatmul.mubr.f32.gmra.mxu0 %v841
      %v7678 = vpop.f32.mrf.mxu0
      %v7679 = vadd.f32 0.0, %v7678
      %v7680 = vpop.f32.mrf.mxu0
      %7681 = vmatprep.mubr.f32.mxu0 0.0
      %7682 = vmatmul.mubr.f32.gmra.mxu0 %v843
      %v7683 = vpop.f32.mrf.mxu0
      %v7684 = vadd.f32 0.0, %v7683
      %v7685 = vpop.f32.mrf.mxu0
      %7686 = vmatprep.mubr.f32.mxu0 0.0
      %7687 = vmatmul.mubr.f32.gmra.mxu0 %v845
      %v7688 = vpop.f32.mrf.mxu0
      %v7689 = vadd.f32 0.0, %v7688
      %v7690 = vpop.f32.mrf.mxu0
      %7691 = vmatprep.mubr.f32.mxu0 0.0
      %7692 = vmatmul.mubr.f32.gmra.mxu0 %v847
      %v7693 = vpop.f32.mrf.mxu0
      %v7694 = vadd.f32 0.0, %v7693
      %v7695 = vpop.f32.mrf.mxu0
      %7696 = vmatprep.mubr.f32.mxu0 0.0
      %7697 = vmatmul.mubr.f32.gmra.mxu0 %v849
      %v7698 = vpop.f32.mrf.mxu0
      %v7699 = vadd.f32 0.0, %v7698
      %v7700 = vpop.f32.mrf.mxu0
      %7701 = vmatprep.mubr.f32.mxu0 0.0
      %7702 = vmatmul.mubr.f32.gmra.mxu0 %v851
      %v7703 = vpop.f32.mrf.mxu0
      %v7704 = vadd.f32 0.0, %v7703
      %v7705 = vpop.f32.mrf.mxu0
      %7706 = vmatprep.mubr.f32.mxu0 0.0
      %7707 = vmatmul.mubr.f32.gmra.mxu0 %v853
      %v7708 = vpop.f32.mrf.mxu0
      %v7709 = vadd.f32 0.0, %v7708
      %v7710 = vpop.f32.mrf.mxu0
      %7711 = vmatprep.mubr.f32.mxu0 0.0
      %7712 = vmatmul.mubr.f32.gmra.mxu0 %v855
      %v7713 = vpop.f32.mrf.mxu0
      %v7714 = vadd.f32 0.0, %v7713
      %v7715 = vpop.f32.mrf.mxu0
      %7716 = vmatprep.mubr.f32.mxu0 0.0
      %7717 = vmatmul.mubr.f32.gmra.mxu0 %v857
      %v7718 = vpop.f32.mrf.mxu0
      %v7719 = vadd.f32 0.0, %v7718
      %v7720 = vpop.f32.mrf.mxu0
      %7721 = vmatprep.mubr.f32.mxu0 0.0
      %7722 = vmatmul.mubr.f32.gmra.mxu0 %v859
      %v7723 = vpop.f32.mrf.mxu0
      %v7724 = vadd.f32 0.0, %v7723
      %v7725 = vpop.f32.mrf.mxu0
      %7726 = vmatprep.mubr.f32.mxu0 0.0
      %7727 = vmatmul.mubr.f32.gmra.mxu0 %v861
      %v7728 = vpop.f32.mrf.mxu0
      %v7729 = vadd.f32 0.0, %v7728
      %v7730 = vpop.f32.mrf.mxu0
      %7731 = vmatprep.mubr.f32.mxu0 0.0
      %7732 = vmatmul.mubr.f32.gmra.mxu0 %v863
      %v7733 = vpop.f32.mrf.mxu0
      %v7734 = vadd.f32 0.0, %v7733
      %v7735 = vpop.f32.mrf.mxu0
      %7736 = vmatprep.mubr.f32.mxu0 0.0
      %7737 = vmatmul.mubr.f32.gmra.mxu0 %v865
      %v7738 = vpop.f32.mrf.mxu0
      %v7739 = vadd.f32 0.0, %v7738
      %v7740 = vpop.f32.mrf.mxu0
      %7741 = vmatprep.mubr.f32.mxu0 0.0
      %7742 = vmatmul.mubr.f32.gmra.mxu0 %v867
      %v7743 = vpop.f32.mrf.mxu0
      %v7744 = vadd.f32 0.0, %v7743
      %v7745 = vpop.f32.mrf.mxu0
      %7746 = vmatprep.mubr.f32.mxu0 0.0
      %7747 = vmatmul.mubr.f32.gmra.mxu0 %v869
      %v7748 = vpop.f32.mrf.mxu0
      %v7749 = vadd.f32 0.0, %v7748
      %v7750 = vpop.f32.mrf.mxu0
      %7751 = vmatprep.mubr.f32.mxu0 0.0
      %7752 = vmatmul.mubr.f32.gmra.mxu0 %v871
      %v7753 = vpop.f32.mrf.mxu0
      %v7754 = vadd.f32 0.0, %v7753
      %v7755 = vpop.f32.mrf.mxu0
      %7756 = vmatprep.mubr.f32.mxu0 0.0
      %7757 = vmatmul.mubr.f32.gmra.mxu0 %v873
      %v7758 = vpop.f32.mrf.mxu0
      %v7759 = vadd.f32 0.0, %v7758
      %v7760 = vpop.f32.mrf.mxu0
      %7761 = vmatprep.mubr.f32.mxu0 0.0
      %7762 = vmatmul.mubr.f32.gmra.mxu0 %v875
      %v7763 = vpop.f32.mrf.mxu0
      %v7764 = vadd.f32 0.0, %v7763
      %v7765 = vpop.f32.mrf.mxu0
      %7766 = vmatprep.mubr.f32.mxu0 0.0
      %7767 = vmatmul.mubr.f32.gmra.mxu0 %v877
      %v7768 = vpop.f32.mrf.mxu0
      %v7769 = vadd.f32 0.0, %v7768
      %v7770 = vpop.f32.mrf.mxu0
      %7771 = vmatprep.mubr.f32.mxu0 0.0
      %7772 = vmatmul.mubr.f32.gmra.mxu0 %v879
      %v7773 = vpop.f32.mrf.mxu0
      %v7774 = vadd.f32 0.0, %v7773
      %v7775 = vpop.f32.mrf.mxu0
      %7776 = vmatprep.mubr.f32.mxu0 0.0
      %7777 = vmatmul.mubr.f32.gmra.mxu0 %v881
      %v7778 = vpop.f32.mrf.mxu0
      %v7779 = vadd.f32 0.0, %v7778
      %v7780 = vpop.f32.mrf.mxu0
      %7781 = vmatprep.mubr.f32.mxu0 0.0
      %7782 = vmatmul.mubr.f32.gmra.mxu0 %v883
      %v7783 = vpop.f32.mrf.mxu0
      %v7784 = vadd.f32 0.0, %v7783
      %v7785 = vpop.f32.mrf.mxu0
      %7786 = vmatprep.mubr.f32.mxu0 0.0
      %7787 = vmatmul.mubr.f32.gmra.mxu0 %v885
      %v7788 = vpop.f32.mrf.mxu0
      %v7789 = vadd.f32 0.0, %v7788
      %v7790 = vpop.f32.mrf.mxu0
      %7791 = vmatprep.mubr.f32.mxu0 0.0
      %7792 = vmatmul.mubr.f32.gmra.mxu0 %v887
      %v7793 = vpop.f32.mrf.mxu0
      %v7794 = vadd.f32 0.0, %v7793
      %v7795 = vpop.f32.mrf.mxu0
      %7796 = vmatprep.mubr.f32.mxu0 0.0
      %7797 = vmatmul.mubr.f32.gmra.mxu0 %v889
      %v7798 = vpop.f32.mrf.mxu0
      %v7799 = vadd.f32 0.0, %v7798
      %v7800 = vpop.f32.mrf.mxu0
      %7801 = vmatprep.mubr.f32.mxu0 0.0
      %7802 = vmatmul.mubr.f32.gmra.mxu0 %v891
      %v7803 = vpop.f32.mrf.mxu0
      %v7804 = vadd.f32 0.0, %v7803
      %v7805 = vpop.f32.mrf.mxu0
      %7806 = vmatprep.mubr.f32.mxu0 0.0
      %7807 = vmatmul.mubr.f32.gmra.mxu0 %v893
      %v7808 = vpop.f32.mrf.mxu0
      %v7809 = vadd.f32 0.0, %v7808
      %v7810 = vpop.f32.mrf.mxu0
      %7811 = vmatprep.mubr.f32.mxu0 0.0
      %7812 = vmatmul.mubr.f32.gmra.mxu0 %v895
      %v7813 = vpop.f32.mrf.mxu0
      %v7814 = vadd.f32 0.0, %v7813
      %v7815 = vpop.f32.mrf.mxu0
      %7816 = vmatprep.mubr.f32.mxu0 0.0
      %7817 = vmatmul.mubr.f32.gmra.mxu0 %v897
      %v7818 = vpop.f32.mrf.mxu0
      %v7819 = vadd.f32 0.0, %v7818
      %v7820 = vpop.f32.mrf.mxu0
      %7821 = vmatprep.mubr.f32.mxu0 0.0
      %7822 = vmatmul.mubr.f32.gmra.mxu0 %v899
      %v7823 = vpop.f32.mrf.mxu0
      %v7824 = vadd.f32 0.0, %v7823
      %v7825 = vpop.f32.mrf.mxu0
      %7826 = vmatprep.mubr.f32.mxu0 0.0
      %7827 = vmatmul.mubr.f32.gmra.mxu0 %v901
      %v7828 = vpop.f32.mrf.mxu0
      %v7829 = vadd.f32 0.0, %v7828
      %v7830 = vpop.f32.mrf.mxu0
      %7831 = vmatprep.mubr.f32.mxu0 0.0
      %7832 = vmatmul.mubr.f32.gmra.mxu0 %v903
      %v7833 = vpop.f32.mrf.mxu0
      %v7834 = vadd.f32 0.0, %v7833
      %v7835 = vpop.f32.mrf.mxu0
      %7836 = vmatprep.mubr.f32.mxu0 0.0
      %7837 = vmatmul.mubr.f32.gmra.mxu0 %v905
      %v7838 = vpop.f32.mrf.mxu0
      %v7839 = vadd.f32 0.0, %v7838
      %v7840 = vpop.f32.mrf.mxu0
      %7841 = vmatprep.mubr.f32.mxu0 0.0
      %7842 = vmatmul.mubr.f32.gmra.mxu0 %v907
      %v7843 = vpop.f32.mrf.mxu0
      %v7844 = vadd.f32 0.0, %v7843
      %v7845 = vpop.f32.mrf.mxu0
      %7846 = vmatprep.mubr.f32.mxu0 0.0
      %7847 = vmatmul.mubr.f32.gmra.mxu0 %v909
      %v7848 = vpop.f32.mrf.mxu0
      %v7849 = vadd.f32 0.0, %v7848
      %v7850 = vpop.f32.mrf.mxu0
      %7851 = vmatprep.mubr.f32.mxu0 0.0
      %7852 = vmatmul.mubr.f32.gmra.mxu0 %v911
      %v7853 = vpop.f32.mrf.mxu0
      %v7854 = vadd.f32 0.0, %v7853
      %v7855 = vpop.f32.mrf.mxu0
      %7856 = vmatprep.mubr.f32.mxu0 0.0
      %7857 = vmatmul.mubr.f32.gmra.mxu0 %v913
      %v7858 = vpop.f32.mrf.mxu0
      %v7859 = vadd.f32 0.0, %v7858
      %v7860 = vpop.f32.mrf.mxu0
      %7861 = vmatprep.mubr.f32.mxu0 0.0
      %7862 = vmatmul.mubr.f32.gmra.mxu0 %v915
      %v7863 = vpop.f32.mrf.mxu0
      %v7864 = vadd.f32 0.0, %v7863
      %v7865 = vpop.f32.mrf.mxu0
      %7866 = vmatprep.mubr.f32.mxu0 0.0
      %7867 = vmatmul.mubr.f32.gmra.mxu0 %v917
      %v7868 = vpop.f32.mrf.mxu0
      %v7869 = vadd.f32 0.0, %v7868
      %v7870 = vpop.f32.mrf.mxu0
      %7871 = vmatprep.mubr.f32.mxu0 0.0
      %7872 = vmatmul.mubr.f32.gmra.mxu0 %v919
      %v7873 = vpop.f32.mrf.mxu0
      %v7874 = vadd.f32 0.0, %v7873
      %v7875 = vpop.f32.mrf.mxu0
      %7876 = vmatprep.mubr.f32.mxu0 0.0
      %7877 = vmatmul.mubr.f32.gmra.mxu0 %v921
      %v7878 = vpop.f32.mrf.mxu0
      %v7879 = vadd.f32 0.0, %v7878
      %v7880 = vpop.f32.mrf.mxu0
      %7881 = vmatprep.mubr.f32.mxu0 0.0
      %7882 = vmatmul.mubr.f32.gmra.mxu0 %v923
      %v7883 = vpop.f32.mrf.mxu0
      %v7884 = vadd.f32 0.0, %v7883
      %v7885 = vpop.f32.mrf.mxu0
      %7886 = vmatprep.mubr.f32.mxu0 0.0
      %7887 = vmatmul.mubr.f32.gmra.mxu0 %v925
      %v7888 = vpop.f32.mrf.mxu0
      %v7889 = vadd.f32 0.0, %v7888
      %v7890 = vpop.f32.mrf.mxu0
      %7891 = vmatprep.mubr.f32.mxu0 0.0
      %7892 = vmatmul.mubr.f32.gmra.mxu0 %v927
      %v7893 = vpop.f32.mrf.mxu0
      %v7894 = vadd.f32 0.0, %v7893
      %v7895 = vpop.f32.mrf.mxu0
      %7896 = vmatprep.mubr.f32.mxu0 0.0
      %7897 = vmatmul.mubr.f32.gmra.mxu0 %v929
      %v7898 = vpop.f32.mrf.mxu0
      %v7899 = vadd.f32 0.0, %v7898
      %v7900 = vpop.f32.mrf.mxu0
      %7901 = vmatprep.mubr.f32.mxu0 0.0
      %7902 = vmatmul.mubr.f32.gmra.mxu0 %v931
      %v7903 = vpop.f32.mrf.mxu0
      %v7904 = vadd.f32 0.0, %v7903
      %v7905 = vpop.f32.mrf.mxu0
      %7906 = vmatprep.mubr.f32.mxu0 0.0
      %7907 = vmatmul.mubr.f32.gmra.mxu0 %v933
      %v7908 = vpop.f32.mrf.mxu0
      %v7909 = vadd.f32 0.0, %v7908
      %v7910 = vpop.f32.mrf.mxu0
      %7911 = vmatprep.mubr.f32.mxu0 0.0
      %7912 = vmatmul.mubr.f32.gmra.mxu0 %v935
      %v7913 = vpop.f32.mrf.mxu0
      %v7914 = vadd.f32 0.0, %v7913
      %v7915 = vpop.f32.mrf.mxu0
      %7916 = vmatprep.mubr.f32.mxu0 0.0
      %7917 = vmatmul.mubr.f32.gmra.mxu0 %v937
      %v7918 = vpop.f32.mrf.mxu0
      %v7919 = vadd.f32 0.0, %v7918
      %v7920 = vpop.f32.mrf.mxu0
      %7921 = vmatprep.mubr.f32.mxu0 0.0
      %7922 = vmatmul.mubr.f32.gmra.mxu0 %v939
      %v7923 = vpop.f32.mrf.mxu0
      %v7924 = vadd.f32 0.0, %v7923
      %v7925 = vpop.f32.mrf.mxu0
      %7926 = vmatprep.mubr.f32.mxu0 0.0
      %7927 = vmatmul.mubr.f32.gmra.mxu0 %v941
      %v7928 = vpop.f32.mrf.mxu0
      %v7929 = vadd.f32 0.0, %v7928
      %v7930 = vpop.f32.mrf.mxu0
      %7931 = vmatprep.mubr.f32.mxu0 0.0
      %7932 = vmatmul.mubr.f32.gmra.mxu0 %v943
      %v7933 = vpop.f32.mrf.mxu0
      %v7934 = vadd.f32 0.0, %v7933
      %v7935 = vpop.f32.mrf.mxu0
      %7936 = vmatprep.mubr.f32.mxu0 0.0
      %7937 = vmatmul.mubr.f32.gmra.mxu0 %v945
      %v7938 = vpop.f32.mrf.mxu0
      %v7939 = vadd.f32 0.0, %v7938
      %v7940 = vpop.f32.mrf.mxu0
      %7941 = vmatprep.mubr.f32.mxu0 0.0
      %7942 = vmatmul.mubr.f32.gmra.mxu0 %v947
      %v7943 = vpop.f32.mrf.mxu0
      %v7944 = vadd.f32 0.0, %v7943
      %v7945 = vpop.f32.mrf.mxu0
      %7946 = vmatprep.mubr.f32.mxu0 0.0
      %7947 = vmatmul.mubr.f32.gmra.mxu0 %v949
      %v7948 = vpop.f32.mrf.mxu0
      %v7949 = vadd.f32 0.0, %v7948
      %v7950 = vpop.f32.mrf.mxu0
      %7951 = vmatprep.mubr.f32.mxu0 0.0
      %7952 = vmatmul.mubr.f32.gmra.mxu0 %v951
      %v7953 = vpop.f32.mrf.mxu0
      %v7954 = vadd.f32 0.0, %v7953
      %v7955 = vpop.f32.mrf.mxu0
      %7956 = vmatprep.mubr.f32.mxu0 0.0
      %7957 = vmatmul.mubr.f32.gmra.mxu0 %v953
      %v7958 = vpop.f32.mrf.mxu0
      %v7959 = vadd.f32 0.0, %v7958
      %v7960 = vpop.f32.mrf.mxu0
      %7961 = vmatprep.mubr.f32.mxu0 0.0
      %7962 = vmatmul.mubr.f32.gmra.mxu0 %v955
      %v7963 = vpop.f32.mrf.mxu0
      %v7964 = vadd.f32 0.0, %v7963
      %v7965 = vpop.f32.mrf.mxu0
      %7966 = vmatprep.mubr.f32.mxu0 0.0
      %7967 = vmatmul.mubr.f32.gmra.mxu0 %v957
      %v7968 = vpop.f32.mrf.mxu0
      %v7969 = vadd.f32 0.0, %v7968
      %v7970 = vpop.f32.mrf.mxu0
      %7971 = vmatprep.mubr.f32.mxu0 0.0
      %7972 = vmatmul.mubr.f32.gmra.mxu0 %v959
      %v7973 = vpop.f32.mrf.mxu0
      %v7974 = vadd.f32 0.0, %v7973
      %v7975 = vpop.f32.mrf.mxu0
      %7976 = vmatprep.mubr.f32.mxu0 0.0
      %7977 = vmatmul.mubr.f32.gmra.mxu0 %v961
      %v7978 = vpop.f32.mrf.mxu0
      %v7979 = vadd.f32 0.0, %v7978
      %v7980 = vpop.f32.mrf.mxu0
      %7981 = vmatprep.mubr.f32.mxu0 0.0
      %7982 = vmatmul.mubr.f32.gmra.mxu0 %v963
      %v7983 = vpop.f32.mrf.mxu0
      %v7984 = vadd.f32 0.0, %v7983
      %v7985 = vpop.f32.mrf.mxu0
      %7986 = vmatprep.mubr.f32.mxu0 0.0
      %7987 = vmatmul.mubr.f32.gmra.mxu0 %v965
      %v7988 = vpop.f32.mrf.mxu0
      %v7989 = vadd.f32 0.0, %v7988
      %v7990 = vpop.f32.mrf.mxu0
      %7991 = vmatprep.mubr.f32.mxu0 0.0
      %7992 = vmatmul.mubr.f32.gmra.mxu0 %v967
      %v7993 = vpop.f32.mrf.mxu0
      %v7994 = vadd.f32 0.0, %v7993
      %v7995 = vpop.f32.mrf.mxu0
      %7996 = vmatprep.mubr.f32.mxu0 0.0
      %7997 = vmatmul.mubr.f32.gmra.mxu0 %v969
      %v7998 = vpop.f32.mrf.mxu0
      %v7999 = vadd.f32 0.0, %v7998
      %v8000 = vpop.f32.mrf.mxu0
      %8001 = vmatprep.mubr.f32.mxu0 0.0
      %8002 = vmatmul.mubr.f32.gmra.mxu0 %v971
      %v8003 = vpop.f32.mrf.mxu0
      %v8004 = vadd.f32 0.0, %v8003
      %v8005 = vpop.f32.mrf.mxu0
      %8006 = vmatprep.mubr.f32.mxu0 0.0
      %8007 = vmatmul.mubr.f32.gmra.mxu0 %v973
      %v8008 = vpop.f32.mrf.mxu0
      %v8009 = vadd.f32 0.0, %v8008
      %v8010 = vpop.f32.mrf.mxu0
      %8011 = vmatprep.mubr.f32.mxu0 0.0
      %8012 = vmatmul.mubr.f32.gmra.mxu0 %v975
      %v8013 = vpop.f32.mrf.mxu0
      %v8014 = vadd.f32 0.0, %v8013
      %v8015 = vpop.f32.mrf.mxu0
      %8016 = vmatprep.mubr.f32.mxu0 0.0
      %8017 = vmatmul.mubr.f32.gmra.mxu0 %v977
      %v8018 = vpop.f32.mrf.mxu0
      %v8019 = vadd.f32 0.0, %v8018
      %v8020 = vpop.f32.mrf.mxu0
      %8021 = vmatprep.mubr.f32.mxu0 0.0
      %8022 = vmatmul.mubr.f32.gmra.mxu0 %v979
      %v8023 = vpop.f32.mrf.mxu0
      %v8024 = vadd.f32 0.0, %v8023
      %v8025 = vpop.f32.mrf.mxu0
      %8026 = vmatprep.mubr.f32.mxu0 0.0
      %8027 = vmatmul.mubr.f32.gmra.mxu0 %v981
      %v8028 = vpop.f32.mrf.mxu0
      %v8029 = vadd.f32 0.0, %v8028
      %v8030 = vpop.f32.mrf.mxu0
      %8031 = vmatprep.mubr.f32.mxu0 0.0
      %8032 = vmatmul.mubr.f32.gmra.mxu0 %v983
      %v8033 = vpop.f32.mrf.mxu0
      %v8034 = vadd.f32 0.0, %v8033
      %v8035 = vpop.f32.mrf.mxu0
      %8036 = vmatprep.mubr.f32.mxu0 0.0
      %8037 = vmatmul.mubr.f32.gmra.mxu0 %v985
      %v8038 = vpop.f32.mrf.mxu0
      %v8039 = vadd.f32 0.0, %v8038
      %v8040 = vpop.f32.mrf.mxu0
      %8041 = vmatprep.mubr.f32.mxu0 0.0
      %8042 = vmatmul.mubr.f32.gmra.mxu0 %v987
      %v8043 = vpop.f32.mrf.mxu0
      %v8044 = vadd.f32 0.0, %v8043
      %v8045 = vpop.f32.mrf.mxu0
      %8046 = vmatprep.mubr.f32.mxu0 0.0
      %8047 = vmatmul.mubr.f32.gmra.mxu0 %v989
      %v8048 = vpop.f32.mrf.mxu0
      %v8049 = vadd.f32 0.0, %v8048
      %v8050 = vpop.f32.mrf.mxu0
      %8051 = vmatprep.mubr.f32.mxu0 0.0
      %8052 = vmatmul.mubr.f32.gmra.mxu0 %v991
      %v8053 = vpop.f32.mrf.mxu0
      %v8054 = vadd.f32 0.0, %v8053
      %v8055 = vpop.f32.mrf.mxu0
      %8056 = vmatprep.mubr.f32.mxu0 0.0
      %8057 = vmatmul.mubr.f32.gmra.mxu0 %v993
      %v8058 = vpop.f32.mrf.mxu0
      %v8059 = vadd.f32 0.0, %v8058
      %v8060 = vpop.f32.mrf.mxu0
      %8061 = vmatprep.mubr.f32.mxu0 0.0
      %8062 = vmatmul.mubr.f32.gmra.mxu0 %v995
      %v8063 = vpop.f32.mrf.mxu0
      %v8064 = vadd.f32 0.0, %v8063
      %v8065 = vpop.f32.mrf.mxu0
      %8066 = vmatprep.mubr.f32.mxu0 0.0
      %8067 = vmatmul.mubr.f32.gmra.mxu0 %v997
      %v8068 = vpop.f32.mrf.mxu0
      %v8069 = vadd.f32 0.0, %v8068
      %v8070 = vpop.f32.mrf.mxu0
      %8071 = vmatprep.mubr.f32.mxu0 0.0
      %8072 = vmatmul.mubr.f32.gmra.mxu0 %v999
      %v8073 = vpop.f32.mrf.mxu0
      %v8074 = vadd.f32 0.0, %v8073
      %v8075 = vpop.f32.mrf.mxu0
      %8076 = vmatprep.mubr.f32.mxu0 0.0
      %8077 = vmatmul.mubr.f32.gmra.mxu0 %v1001
      %v8078 = vpop.f32.mrf.mxu0
      %v8079 = vadd.f32 0.0, %v8078
      %v8080 = vpop.f32.mrf.mxu0
      %8081 = vmatprep.mubr.f32.mxu0 0.0
      %8082 = vmatmul.mubr.f32.gmra.mxu0 %v1003
      %v8083 = vpop.f32.mrf.mxu0
      %v8084 = vadd.f32 0.0, %v8083
      %v8085 = vpop.f32.mrf.mxu0
      %8086 = vmatprep.mubr.f32.mxu0 0.0
      %8087 = vmatmul.mubr.f32.gmra.mxu0 %v1005
      %v8088 = vpop.f32.mrf.mxu0
      %v8089 = vadd.f32 0.0, %v8088
      %v8090 = vpop.f32.mrf.mxu0
      %8091 = vmatprep.mubr.f32.mxu0 0.0
      %8092 = vmatmul.mubr.f32.gmra.mxu0 %v1007
      %v8093 = vpop.f32.mrf.mxu0
      %v8094 = vadd.f32 0.0, %v8093
      %v8095 = vpop.f32.mrf.mxu0
      %8096 = vmatprep.mubr.f32.mxu0 0.0
      %8097 = vmatmul.mubr.f32.gmra.mxu0 %v1009
      %v8098 = vpop.f32.mrf.mxu0
      %v8099 = vadd.f32 0.0, %v8098
      %v8100 = vpop.f32.mrf.mxu0
      %8101 = vmatprep.mubr.f32.mxu0 0.0
      %8102 = vmatmul.mubr.f32.gmra.mxu0 %v1011
      %v8103 = vpop.f32.mrf.mxu0
      %v8104 = vadd.f32 0.0, %v8103
      %v8105 = vpop.f32.mrf.mxu0
      %8106 = vmatprep.mubr.f32.mxu0 0.0
      %8107 = vmatmul.mubr.f32.gmra.mxu0 %v1013
      %v8108 = vpop.f32.mrf.mxu0
      %v8109 = vadd.f32 0.0, %v8108
      %v8110 = vpop.f32.mrf.mxu0
      %8111 = vmatprep.mubr.f32.mxu0 0.0
      %8112 = vmatmul.mubr.f32.gmra.mxu0 %v1015
      %v8113 = vpop.f32.mrf.mxu0
      %v8114 = vadd.f32 0.0, %v8113
      %v8115 = vpop.f32.mrf.mxu0
      %8116 = vmatprep.mubr.f32.mxu0 0.0
      %8117 = vmatmul.mubr.f32.gmra.mxu0 %v1017
      %v8118 = vpop.f32.mrf.mxu0
      %v8119 = vadd.f32 0.0, %v8118
      %v8120 = vpop.f32.mrf.mxu0
      %8121 = vmatprep.mubr.f32.mxu0 0.0
      %8122 = vmatmul.mubr.f32.gmra.mxu0 %v1019
      %v8123 = vpop.f32.mrf.mxu0
      %v8124 = vadd.f32 0.0, %v8123
      %v8125 = vpop.f32.mrf.mxu0
      %8126 = vmatprep.mubr.f32.mxu0 0.0
      %8127 = vmatmul.mubr.f32.gmra.mxu0 %v1021
      %v8128 = vpop.f32.mrf.mxu0
      %v8129 = vadd.f32 0.0, %v8128
      %v8130 = vpop.f32.mrf.mxu0
      %8131 = vmatprep.mubr.f32.mxu0 0.0
      %8132 = vmatmul.mubr.f32.gmra.mxu0 %v1023
      %v8133 = vpop.f32.mrf.mxu0
      %v8134 = vadd.f32 0.0, %v8133
      %v8135 = vpop.f32.mrf.mxu0
      %8136 = vmatprep.mubr.f32.mxu0 0.0
      %8137 = vmatmul.mubr.f32.gmra.mxu0 %v1025
      %v8138 = vpop.f32.mrf.mxu0
      %v8139 = vadd.f32 0.0, %v8138
      %v8140 = vpop.f32.mrf.mxu0
      %8141 = vmatprep.mubr.f32.mxu0 0.0
      %8142 = vmatmul.mubr.f32.gmra.mxu0 %v1027
      %v8143 = vpop.f32.mrf.mxu0
      %v8144 = vadd.f32 0.0, %v8143
      %v8145 = vpop.f32.mrf.mxu0
      %8146 = vmatprep.mubr.f32.mxu0 0.0
      %8147 = vmatmul.mubr.f32.gmra.mxu0 %v4928
      %v8148 = vpop.f32.mrf.mxu0
      %v8149 = vadd.f32 0.0, %v8148
      %v8150 = vpop.f32.mrf.mxu0
      %8151 = vmatprep.mubr.f32.mxu0 0.0
      %8152 = vmatmul.mubr.f32.gmra.mxu0 %v4930
      %v8153 = vpop.f32.mrf.mxu0
      %v8154 = vadd.f32 0.0, %v8153
      %v8155 = vpop.f32.mrf.mxu0
      %8156 = vmatprep.mubr.f32.mxu0 0.0
      %8157 = vmatmul.mubr.f32.gmra.mxu0 %v4932
      %v8158 = vpop.f32.mrf.mxu0
      %v8159 = vadd.f32 0.0, %v8158
      %v8160 = vpop.f32.mrf.mxu0
      %8161 = vmatprep.mubr.f32.mxu0 0.0
      %8162 = vmatmul.mubr.f32.gmra.mxu0 %v4934
      %v8163 = vpop.f32.mrf.mxu0
      %v8164 = vadd.f32 0.0, %v8163
      %v8165 = vpop.f32.mrf.mxu0
      %8166 = vmatprep.mubr.f32.mxu0 0.0
      %8167 = vmatmul.mubr.f32.gmra.mxu0 %v7474
      %v8168 = vpop.f32.mrf.mxu0
      %v8169 = vadd.f32 0.0, %v8168
      %v8170 = vpop.f32.mrf.mxu0
      %8171 = vmatprep.mubr.f32.mxu0 0.0
      %8172 = vmatmul.mubr.f32.gmra.mxu0 %v7476
      %v8173 = vpop.f32.mrf.mxu0
      %v8174 = vadd.f32 0.0, %v8173
      %v8175 = vpop.f32.mrf.mxu0
      %8176 = vmatprep.mubr.f32.mxu0 0.0
      %8177 = vmatmul.mubr.f32.gmra.mxu0 %v7478
      %v8178 = vpop.f32.mrf.mxu0
      %v8179 = vadd.f32 0.0, %v8178
      %v8180 = vpop.f32.mrf.mxu0
      %8181 = vmatprep.mubr.f32.mxu0 0.0
      %8182 = vmatmul.mubr.f32.gmra.mxu0 %v7480
      %v8183 = vpop.f32.mrf.mxu0
      %v8184 = vadd.f32 0.0, %v8183
      %v8185 = vpop.f32.mrf.mxu0
      %8186 = vdwg.mxu0
      %v8187 = vadd.f32 %v7336, %v7549
      %v8188 = vadd.f32 %v7337, %v7554
      %v8189 = vadd.f32 %v7338, %v7559
      %v8190 = vadd.f32 %v7339, %v7564
      %v8191 = vadd.f32 %v7340, %v7569
      %v8192 = vadd.f32 %v7341, %v7574
      %v8193 = vadd.f32 %v7342, %v7579
      %v8194 = vadd.f32 %v7343, %v7584
      %v8195 = vadd.f32 %v7344, %v7589
      %v8196 = vadd.f32 %v7345, %v7594
      %v8197 = vadd.f32 %v7346, %v7599
      %v8198 = vadd.f32 %v7347, %v7604
      %v8199 = vadd.f32 %v7348, %v7609
      %v8200 = vadd.f32 %v7349, %v7614
      %v8201 = vadd.f32 %v7350, %v7619
      %v8202 = vadd.f32 %v7351, %v7624
      %v8203 = vadd.f32 %v7352, %v7629
      %v8204 = vadd.f32 %v7353, %v7634
      %v8205 = vadd.f32 %v7354, %v7639
      %v8206 = vadd.f32 %v7355, %v7644
      %v8207 = vadd.f32 %v7356, %v7649
      %v8208 = vadd.f32 %v7357, %v7654
      %v8209 = vadd.f32 %v7358, %v7659
      %v8210 = vadd.f32 %v7359, %v7664
      %v8211 = vadd.f32 %v7360, %v7669
      %v8212 = vadd.f32 %v7361, %v7674
      %v8213 = vadd.f32 %v7362, %v7679
      %v8214 = vadd.f32 %v7363, %v7684
      %v8215 = vadd.f32 %v7364, %v7689
      %v8216 = vadd.f32 %v7365, %v7694
      %v8217 = vadd.f32 %v7366, %v7699
      %v8218 = vadd.f32 %v7367, %v7704
      %v8219 = vadd.f32 %v7368, %v7709
      %v8220 = vadd.f32 %v7369, %v7714
      %v8221 = vadd.f32 %v7370, %v7719
      %v8222 = vadd.f32 %v7371, %v7724
      %v8223 = vadd.f32 %v7372, %v7729
      %v8224 = vadd.f32 %v7373, %v7734
      %v8225 = vadd.f32 %v7374, %v7739
      %v8226 = vadd.f32 %v7375, %v7744
      %v8227 = vadd.f32 %v7376, %v7749
      %v8228 = vadd.f32 %v7377, %v7754
      %v8229 = vadd.f32 %v7378, %v7759
      %v8230 = vadd.f32 %v7379, %v7764
      %v8231 = vadd.f32 %v7380, %v7769
      %v8232 = vadd.f32 %v7381, %v7774
      %v8233 = vadd.f32 %v7382, %v7779
      %v8234 = vadd.f32 %v7383, %v7784
      %v8235 = vadd.f32 %v7384, %v7789
      %v8236 = vadd.f32 %v7385, %v7794
      %v8237 = vadd.f32 %v7386, %v7799
      %v8238 = vadd.f32 %v7387, %v7804
      %v8239 = vadd.f32 %v7388, %v7809
      %v8240 = vadd.f32 %v7389, %v7814
      %v8241 = vadd.f32 %v7390, %v7819
      %v8242 = vadd.f32 %v7391, %v7824
      %v8243 = vadd.f32 %v7392, %v7829
      %v8244 = vadd.f32 %v7393, %v7834
      %v8245 = vadd.f32 %v7394, %v7839
      %v8246 = vadd.f32 %v7395, %v7844
      %v8247 = vadd.f32 %v7396, %v7849
      %v8248 = vadd.f32 %v7397, %v7854
      %v8249 = vadd.f32 %v7398, %v7859
      %v8250 = vadd.f32 %v7399, %v7864
      %v8251 = vadd.f32 %v7400, %v7869
      %v8252 = vadd.f32 %v7401, %v7874
      %v8253 = vadd.f32 %v7402, %v7879
      %v8254 = vadd.f32 %v7403, %v7884
      %v8255 = vadd.f32 %v7404, %v7889
      %v8256 = vadd.f32 %v7405, %v7894
      %v8257 = vadd.f32 %v7406, %v7899
      %v8258 = vadd.f32 %v7407, %v7904
      %v8259 = vadd.f32 %v7408, %v7909
      %v8260 = vadd.f32 %v7409, %v7914
      %v8261 = vadd.f32 %v7410, %v7919
      %v8262 = vadd.f32 %v7411, %v7924
      %v8263 = vadd.f32 %v7412, %v7929
      %v8264 = vadd.f32 %v7413, %v7934
      %v8265 = vadd.f32 %v7414, %v7939
      %v8266 = vadd.f32 %v7415, %v7944
      %v8267 = vadd.f32 %v7416, %v7949
      %v8268 = vadd.f32 %v7417, %v7954
      %v8269 = vadd.f32 %v7418, %v7959
      %v8270 = vadd.f32 %v7419, %v7964
      %v8271 = vadd.f32 %v7420, %v7969
      %v8272 = vadd.f32 %v7421, %v7974
      %v8273 = vadd.f32 %v7422, %v7979
      %v8274 = vadd.f32 %v7423, %v7984
      %v8275 = vadd.f32 %v7424, %v7989
      %v8276 = vadd.f32 %v7425, %v7994
      %v8277 = vadd.f32 %v7426, %v7999
      %v8278 = vadd.f32 %v7427, %v8004
      %v8279 = vadd.f32 %v7428, %v8009
      %v8280 = vadd.f32 %v7429, %v8014
      %v8281 = vadd.f32 %v7430, %v8019
      %v8282 = vadd.f32 %v7431, %v8024
      %v8283 = vadd.f32 %v7432, %v8029
      %v8284 = vadd.f32 %v7433, %v8034
      %v8285 = vadd.f32 %v7434, %v8039
      %v8286 = vadd.f32 %v7435, %v8044
      %v8287 = vadd.f32 %v7436, %v8049
      %v8288 = vadd.f32 %v7437, %v8054
      %v8289 = vadd.f32 %v7438, %v8059
      %v8290 = vadd.f32 %v7439, %v8064
      %v8291 = vadd.f32 %v7440, %v8069
      %v8292 = vadd.f32 %v7441, %v8074
      %v8293 = vadd.f32 %v7442, %v8079
      %v8294 = vadd.f32 %v7443, %v8084
      %v8295 = vadd.f32 %v7444, %v8089
      %v8296 = vadd.f32 %v7445, %v8094
      %v8297 = vadd.f32 %v7446, %v8099
      %v8298 = vadd.f32 %v7447, %v8104
      %v8299 = vadd.f32 %v7448, %v8109
      %v8300 = vadd.f32 %v7449, %v8114
      %v8301 = vadd.f32 %v7450, %v8119
      %v8302 = vadd.f32 %v7451, %v8124
      %v8303 = vadd.f32 %v7452, %v8129
      %v8304 = vadd.f32 %v7453, %v8134
      %v8305 = vadd.f32 %v7454, %v8139
      %v8306 = vadd.f32 %v7455, %v8144
      %v8307 = vadd.f32 %v7456, %v8149
      %v8308 = vadd.f32 %v7457, %v8154
      %v8309 = vadd.f32 %v7458, %v8159
      %v8310 = vadd.f32 %v7459, %v8164
      %v8311 = vadd.f32 %v7460, %v8169
      %v8312 = vadd.f32 %v7461, %v8174
      %v8313 = vadd.f32 %v7462, %v8179
      %v8314 = vadd.f32 %v7463, %v8184
      %v8315 = vrot.slane %v309, 2
      %v8316 = vrot.slane %v310, 2
      %v8317 = vsel %vm2695, %v8315, %v8316
      %v8318 = vrot.slane %v311, 2
      %v8319 = vsel %vm2695, %v8316, %v8318
      %v8320 = vrot.slane %v312, 2
      %v8321 = vsel %vm2695, %v8318, %v8320
      %v8322 = vrot.slane %v313, 2
      %v8323 = vsel %vm2695, %v8320, %v8322
      %v8324 = vsel %vm772, %v8317, 0
      %v8326 = vsel %vm772, %v8319, 0
      %v8328 = vsel %vm772, %v8321, 0
      %v8330 = vsel %vm772, %v8323, 0
      %8332 = vmatprep.subr.mxu0 0.0
      %8333 = vmatpush1.msra.mxu0 0.0
      %8334 = vmatprep.subr.mxu0 0.0
      %8335 = vmatpush1.msra.mxu0 0.0
      %8336 = vmatprep.subr.mxu0 0.0
      %8337 = vmatpush1.msra.mxu0 0.0
      %8338 = vmatprep.subr.mxu0 0.0
      %8339 = vmatpush1.msra.mxu0 0.0
      %8340 = vmatprep.subr.mxu0 0.0
      %8341 = vmatpush1.msra.mxu0 0.0
      %8342 = vmatprep.subr.mxu0 0.0
      %8343 = vmatpush1.msra.mxu0 0.0
      %8344 = vmatprep.subr.mxu0 0.0
      %8345 = vmatpush1.msra.mxu0 0.0
      %8346 = vmatprep.subr.mxu0 0.0
      %8347 = vmatpush1.msra.mxu0 0.0
      %8348 = vmatprep.subr.mxu0 0.0
      %8349 = vmatpush1.msra.mxu0 0.0
      %8350 = vmatprep.subr.mxu0 0.0
      %8351 = vmatpush1.msra.mxu0 0.0
      %8352 = vmatprep.subr.mxu0 0.0
      %8353 = vmatpush1.msra.mxu0 0.0
      %8354 = vmatprep.subr.mxu0 0.0
      %8355 = vmatpush1.msra.mxu0 0.0
      %8356 = vmatprep.subr.mxu0 0.0
      %8357 = vmatpush1.msra.mxu0 0.0
      %8358 = vmatprep.subr.mxu0 0.0
      %8359 = vmatpush1.msra.mxu0 0.0
      %8360 = vmatprep.subr.mxu0 0.0
      %8361 = vmatpush1.msra.mxu0 0.0
      %8362 = vmatprep.subr.mxu0 0.0
      %8363 = vmatpush1.msra.mxu0 %v322
      %8364 = vmatprep.subr.mxu0 0.0
      %8365 = vmatpush2.msra.mxu0 0.0
      %8366 = vmatprep.subr.mxu0 0.0
      %8367 = vmatpush2.msra.mxu0 0.0
      %8368 = vmatprep.subr.mxu0 0.0
      %8369 = vmatpush2.msra.mxu0 0.0
      %8370 = vmatprep.subr.mxu0 0.0
      %8371 = vmatpush2.msra.mxu0 0.0
      %8372 = vmatprep.subr.mxu0 0.0
      %8373 = vmatpush2.msra.mxu0 0.0
      %8374 = vmatprep.subr.mxu0 0.0
      %8375 = vmatpush2.msra.mxu0 0.0
      %8376 = vmatprep.subr.mxu0 0.0
      %8377 = vmatpush2.msra.mxu0 0.0
      %8378 = vmatprep.subr.mxu0 0.0
      %8379 = vmatpush2.msra.mxu0 0.0
      %8380 = vmatprep.subr.mxu0 0.0
      %8381 = vmatpush2.msra.mxu0 0.0
      %8382 = vmatprep.subr.mxu0 0.0
      %8383 = vmatpush2.msra.mxu0 0.0
      %8384 = vmatprep.subr.mxu0 0.0
      %8385 = vmatpush2.msra.mxu0 0.0
      %8386 = vmatprep.subr.mxu0 0.0
      %8387 = vmatpush2.msra.mxu0 0.0
      %8388 = vmatprep.subr.mxu0 0.0
      %8389 = vmatpush2.msra.mxu0 0.0
      %8390 = vmatprep.subr.mxu0 0.0
      %8391 = vmatpush2.msra.mxu0 0.0
      %8392 = vmatprep.subr.mxu0 0.0
      %8393 = vmatpush2.msra.mxu0 0.0
      %8394 = vmatprep.subr.mxu0 0.0
      %8395 = vmatpush2.msra.mxu0 0.0
      %8396 = vmatprep.mubr.f32.mxu0 0.0
      %8397 = vmatmul.mubr.f32.gmra.mxu0 %v3000
      %v8398 = vpop.f32.mrf.mxu0
      %v8399 = vadd.f32 0.0, %v8398
      %v8400 = vpop.f32.mrf.mxu0
      %8401 = vmatprep.mubr.f32.mxu0 0.0
      %8402 = vmatmul.mubr.f32.gmra.mxu0 %v3002
      %v8403 = vpop.f32.mrf.mxu0
      %v8404 = vadd.f32 0.0, %v8403
      %v8405 = vpop.f32.mrf.mxu0
      %8406 = vmatprep.mubr.f32.mxu0 0.0
      %8407 = vmatmul.mubr.f32.gmra.mxu0 %v3004
      %v8408 = vpop.f32.mrf.mxu0
      %v8409 = vadd.f32 0.0, %v8408
      %v8410 = vpop.f32.mrf.mxu0
      %8411 = vmatprep.mubr.f32.mxu0 0.0
      %8412 = vmatmul.mubr.f32.gmra.mxu0 %v3006
      %v8413 = vpop.f32.mrf.mxu0
      %v8414 = vadd.f32 0.0, %v8413
      %v8415 = vpop.f32.mrf.mxu0
      %8416 = vmatprep.mubr.f32.mxu0 0.0
      %8417 = vmatmul.mubr.f32.gmra.mxu0 %v3008
      %v8418 = vpop.f32.mrf.mxu0
      %v8419 = vadd.f32 0.0, %v8418
      %v8420 = vpop.f32.mrf.mxu0
      %8421 = vmatprep.mubr.f32.mxu0 0.0
      %8422 = vmatmul.mubr.f32.gmra.mxu0 %v3010
      %v8423 = vpop.f32.mrf.mxu0
      %v8424 = vadd.f32 0.0, %v8423
      %v8425 = vpop.f32.mrf.mxu0
      %8426 = vmatprep.mubr.f32.mxu0 0.0
      %8427 = vmatmul.mubr.f32.gmra.mxu0 %v3012
      %v8428 = vpop.f32.mrf.mxu0
      %v8429 = vadd.f32 0.0, %v8428
      %v8430 = vpop.f32.mrf.mxu0
      %8431 = vmatprep.mubr.f32.mxu0 0.0
      %8432 = vmatmul.mubr.f32.gmra.mxu0 %v3014
      %v8433 = vpop.f32.mrf.mxu0
      %v8434 = vadd.f32 0.0, %v8433
      %v8435 = vpop.f32.mrf.mxu0
      %8436 = vmatprep.mubr.f32.mxu0 0.0
      %8437 = vmatmul.mubr.f32.gmra.mxu0 %v3016
      %v8438 = vpop.f32.mrf.mxu0
      %v8439 = vadd.f32 0.0, %v8438
      %v8440 = vpop.f32.mrf.mxu0
      %8441 = vmatprep.mubr.f32.mxu0 0.0
      %8442 = vmatmul.mubr.f32.gmra.mxu0 %v3018
      %v8443 = vpop.f32.mrf.mxu0
      %v8444 = vadd.f32 0.0, %v8443
      %v8445 = vpop.f32.mrf.mxu0
      %8446 = vmatprep.mubr.f32.mxu0 0.0
      %8447 = vmatmul.mubr.f32.gmra.mxu0 %v3020
      %v8448 = vpop.f32.mrf.mxu0
      %v8449 = vadd.f32 0.0, %v8448
      %v8450 = vpop.f32.mrf.mxu0
      %8451 = vmatprep.mubr.f32.mxu0 0.0
      %8452 = vmatmul.mubr.f32.gmra.mxu0 %v3022
      %v8453 = vpop.f32.mrf.mxu0
      %v8454 = vadd.f32 0.0, %v8453
      %v8455 = vpop.f32.mrf.mxu0
      %8456 = vmatprep.mubr.f32.mxu0 0.0
      %8457 = vmatmul.mubr.f32.gmra.mxu0 %v3024
      %v8458 = vpop.f32.mrf.mxu0
      %v8459 = vadd.f32 0.0, %v8458
      %v8460 = vpop.f32.mrf.mxu0
      %8461 = vmatprep.mubr.f32.mxu0 0.0
      %8462 = vmatmul.mubr.f32.gmra.mxu0 %v3026
      %v8463 = vpop.f32.mrf.mxu0
      %v8464 = vadd.f32 0.0, %v8463
      %v8465 = vpop.f32.mrf.mxu0
      %8466 = vmatprep.mubr.f32.mxu0 0.0
      %8467 = vmatmul.mubr.f32.gmra.mxu0 %v3028
      %v8468 = vpop.f32.mrf.mxu0
      %v8469 = vadd.f32 0.0, %v8468
      %v8470 = vpop.f32.mrf.mxu0
      %8471 = vmatprep.mubr.f32.mxu0 0.0
      %8472 = vmatmul.mubr.f32.gmra.mxu0 %v3030
      %v8473 = vpop.f32.mrf.mxu0
      %v8474 = vadd.f32 0.0, %v8473
      %v8475 = vpop.f32.mrf.mxu0
      %8476 = vmatprep.mubr.f32.mxu0 0.0
      %8477 = vmatmul.mubr.f32.gmra.mxu0 %v3032
      %v8478 = vpop.f32.mrf.mxu0
      %v8479 = vadd.f32 0.0, %v8478
      %v8480 = vpop.f32.mrf.mxu0
      %8481 = vmatprep.mubr.f32.mxu0 0.0
      %8482 = vmatmul.mubr.f32.gmra.mxu0 %v3034
      %v8483 = vpop.f32.mrf.mxu0
      %v8484 = vadd.f32 0.0, %v8483
      %v8485 = vpop.f32.mrf.mxu0
      %8486 = vmatprep.mubr.f32.mxu0 0.0
      %8487 = vmatmul.mubr.f32.gmra.mxu0 %v3036
      %v8488 = vpop.f32.mrf.mxu0
      %v8489 = vadd.f32 0.0, %v8488
      %v8490 = vpop.f32.mrf.mxu0
      %8491 = vmatprep.mubr.f32.mxu0 0.0
      %8492 = vmatmul.mubr.f32.gmra.mxu0 %v3038
      %v8493 = vpop.f32.mrf.mxu0
      %v8494 = vadd.f32 0.0, %v8493
      %v8495 = vpop.f32.mrf.mxu0
      %8496 = vmatprep.mubr.f32.mxu0 0.0
      %8497 = vmatmul.mubr.f32.gmra.mxu0 %v3040
      %v8498 = vpop.f32.mrf.mxu0
      %v8499 = vadd.f32 0.0, %v8498
      %v8500 = vpop.f32.mrf.mxu0
      %8501 = vmatprep.mubr.f32.mxu0 0.0
      %8502 = vmatmul.mubr.f32.gmra.mxu0 %v3042
      %v8503 = vpop.f32.mrf.mxu0
      %v8504 = vadd.f32 0.0, %v8503
      %v8505 = vpop.f32.mrf.mxu0
      %8506 = vmatprep.mubr.f32.mxu0 0.0
      %8507 = vmatmul.mubr.f32.gmra.mxu0 %v3044
      %v8508 = vpop.f32.mrf.mxu0
      %v8509 = vadd.f32 0.0, %v8508
      %v8510 = vpop.f32.mrf.mxu0
      %8511 = vmatprep.mubr.f32.mxu0 0.0
      %8512 = vmatmul.mubr.f32.gmra.mxu0 %v3046
      %v8513 = vpop.f32.mrf.mxu0
      %v8514 = vadd.f32 0.0, %v8513
      %v8515 = vpop.f32.mrf.mxu0
      %8516 = vmatprep.mubr.f32.mxu0 0.0
      %8517 = vmatmul.mubr.f32.gmra.mxu0 %v3048
      %v8518 = vpop.f32.mrf.mxu0
      %v8519 = vadd.f32 0.0, %v8518
      %v8520 = vpop.f32.mrf.mxu0
      %8521 = vmatprep.mubr.f32.mxu0 0.0
      %8522 = vmatmul.mubr.f32.gmra.mxu0 %v3050
      %v8523 = vpop.f32.mrf.mxu0
      %v8524 = vadd.f32 0.0, %v8523
      %v8525 = vpop.f32.mrf.mxu0
      %8526 = vmatprep.mubr.f32.mxu0 0.0
      %8527 = vmatmul.mubr.f32.gmra.mxu0 %v3052
      %v8528 = vpop.f32.mrf.mxu0
      %v8529 = vadd.f32 0.0, %v8528
      %v8530 = vpop.f32.mrf.mxu0
      %8531 = vmatprep.mubr.f32.mxu0 0.0
      %8532 = vmatmul.mubr.f32.gmra.mxu0 %v3054
      %v8533 = vpop.f32.mrf.mxu0
      %v8534 = vadd.f32 0.0, %v8533
      %v8535 = vpop.f32.mrf.mxu0
      %8536 = vmatprep.mubr.f32.mxu0 0.0
      %8537 = vmatmul.mubr.f32.gmra.mxu0 %v3056
      %v8538 = vpop.f32.mrf.mxu0
      %v8539 = vadd.f32 0.0, %v8538
      %v8540 = vpop.f32.mrf.mxu0
      %8541 = vmatprep.mubr.f32.mxu0 0.0
      %8542 = vmatmul.mubr.f32.gmra.mxu0 %v3058
      %v8543 = vpop.f32.mrf.mxu0
      %v8544 = vadd.f32 0.0, %v8543
      %v8545 = vpop.f32.mrf.mxu0
      %8546 = vmatprep.mubr.f32.mxu0 0.0
      %8547 = vmatmul.mubr.f32.gmra.mxu0 %v3060
      %v8548 = vpop.f32.mrf.mxu0
      %v8549 = vadd.f32 0.0, %v8548
      %v8550 = vpop.f32.mrf.mxu0
      %8551 = vmatprep.mubr.f32.mxu0 0.0
      %8552 = vmatmul.mubr.f32.gmra.mxu0 %v3062
      %v8553 = vpop.f32.mrf.mxu0
      %v8554 = vadd.f32 0.0, %v8553
      %v8555 = vpop.f32.mrf.mxu0
      %8556 = vmatprep.mubr.f32.mxu0 0.0
      %8557 = vmatmul.mubr.f32.gmra.mxu0 %v3064
      %v8558 = vpop.f32.mrf.mxu0
      %v8559 = vadd.f32 0.0, %v8558
      %v8560 = vpop.f32.mrf.mxu0
      %8561 = vmatprep.mubr.f32.mxu0 0.0
      %8562 = vmatmul.mubr.f32.gmra.mxu0 %v3066
      %v8563 = vpop.f32.mrf.mxu0
      %v8564 = vadd.f32 0.0, %v8563
      %v8565 = vpop.f32.mrf.mxu0
      %8566 = vmatprep.mubr.f32.mxu0 0.0
      %8567 = vmatmul.mubr.f32.gmra.mxu0 %v3068
      %v8568 = vpop.f32.mrf.mxu0
      %v8569 = vadd.f32 0.0, %v8568
      %v8570 = vpop.f32.mrf.mxu0
      %8571 = vmatprep.mubr.f32.mxu0 0.0
      %8572 = vmatmul.mubr.f32.gmra.mxu0 %v3070
      %v8573 = vpop.f32.mrf.mxu0
      %v8574 = vadd.f32 0.0, %v8573
      %v8575 = vpop.f32.mrf.mxu0
      %8576 = vmatprep.mubr.f32.mxu0 0.0
      %8577 = vmatmul.mubr.f32.gmra.mxu0 %v3072
      %v8578 = vpop.f32.mrf.mxu0
      %v8579 = vadd.f32 0.0, %v8578
      %v8580 = vpop.f32.mrf.mxu0
      %8581 = vmatprep.mubr.f32.mxu0 0.0
      %8582 = vmatmul.mubr.f32.gmra.mxu0 %v3074
      %v8583 = vpop.f32.mrf.mxu0
      %v8584 = vadd.f32 0.0, %v8583
      %v8585 = vpop.f32.mrf.mxu0
      %8586 = vmatprep.mubr.f32.mxu0 0.0
      %8587 = vmatmul.mubr.f32.gmra.mxu0 %v3076
      %v8588 = vpop.f32.mrf.mxu0
      %v8589 = vadd.f32 0.0, %v8588
      %v8590 = vpop.f32.mrf.mxu0
      %8591 = vmatprep.mubr.f32.mxu0 0.0
      %8592 = vmatmul.mubr.f32.gmra.mxu0 %v3078
      %v8593 = vpop.f32.mrf.mxu0
      %v8594 = vadd.f32 0.0, %v8593
      %v8595 = vpop.f32.mrf.mxu0
      %8596 = vmatprep.mubr.f32.mxu0 0.0
      %8597 = vmatmul.mubr.f32.gmra.mxu0 %v3080
      %v8598 = vpop.f32.mrf.mxu0
      %v8599 = vadd.f32 0.0, %v8598
      %v8600 = vpop.f32.mrf.mxu0
      %8601 = vmatprep.mubr.f32.mxu0 0.0
      %8602 = vmatmul.mubr.f32.gmra.mxu0 %v3082
      %v8603 = vpop.f32.mrf.mxu0
      %v8604 = vadd.f32 0.0, %v8603
      %v8605 = vpop.f32.mrf.mxu0
      %8606 = vmatprep.mubr.f32.mxu0 0.0
      %8607 = vmatmul.mubr.f32.gmra.mxu0 %v3084
      %v8608 = vpop.f32.mrf.mxu0
      %v8609 = vadd.f32 0.0, %v8608
      %v8610 = vpop.f32.mrf.mxu0
      %8611 = vmatprep.mubr.f32.mxu0 0.0
      %8612 = vmatmul.mubr.f32.gmra.mxu0 %v3086
      %v8613 = vpop.f32.mrf.mxu0
      %v8614 = vadd.f32 0.0, %v8613
      %v8615 = vpop.f32.mrf.mxu0
      %8616 = vmatprep.mubr.f32.mxu0 0.0
      %8617 = vmatmul.mubr.f32.gmra.mxu0 %v3088
      %v8618 = vpop.f32.mrf.mxu0
      %v8619 = vadd.f32 0.0, %v8618
      %v8620 = vpop.f32.mrf.mxu0
      %8621 = vmatprep.mubr.f32.mxu0 0.0
      %8622 = vmatmul.mubr.f32.gmra.mxu0 %v3090
      %v8623 = vpop.f32.mrf.mxu0
      %v8624 = vadd.f32 0.0, %v8623
      %v8625 = vpop.f32.mrf.mxu0
      %8626 = vmatprep.mubr.f32.mxu0 0.0
      %8627 = vmatmul.mubr.f32.gmra.mxu0 %v3092
      %v8628 = vpop.f32.mrf.mxu0
      %v8629 = vadd.f32 0.0, %v8628
      %v8630 = vpop.f32.mrf.mxu0
      %8631 = vmatprep.mubr.f32.mxu0 0.0
      %8632 = vmatmul.mubr.f32.gmra.mxu0 %v3094
      %v8633 = vpop.f32.mrf.mxu0
      %v8634 = vadd.f32 0.0, %v8633
      %v8635 = vpop.f32.mrf.mxu0
      %8636 = vmatprep.mubr.f32.mxu0 0.0
      %8637 = vmatmul.mubr.f32.gmra.mxu0 %v3096
      %v8638 = vpop.f32.mrf.mxu0
      %v8639 = vadd.f32 0.0, %v8638
      %v8640 = vpop.f32.mrf.mxu0
      %8641 = vmatprep.mubr.f32.mxu0 0.0
      %8642 = vmatmul.mubr.f32.gmra.mxu0 %v3098
      %v8643 = vpop.f32.mrf.mxu0
      %v8644 = vadd.f32 0.0, %v8643
      %v8645 = vpop.f32.mrf.mxu0
      %8646 = vmatprep.mubr.f32.mxu0 0.0
      %8647 = vmatmul.mubr.f32.gmra.mxu0 %v3100
      %v8648 = vpop.f32.mrf.mxu0
      %v8649 = vadd.f32 0.0, %v8648
      %v8650 = vpop.f32.mrf.mxu0
      %8651 = vmatprep.mubr.f32.mxu0 0.0
      %8652 = vmatmul.mubr.f32.gmra.mxu0 %v3102
      %v8653 = vpop.f32.mrf.mxu0
      %v8654 = vadd.f32 0.0, %v8653
      %v8655 = vpop.f32.mrf.mxu0
      %8656 = vmatprep.mubr.f32.mxu0 0.0
      %8657 = vmatmul.mubr.f32.gmra.mxu0 %v3104
      %v8658 = vpop.f32.mrf.mxu0
      %v8659 = vadd.f32 0.0, %v8658
      %v8660 = vpop.f32.mrf.mxu0
      %8661 = vmatprep.mubr.f32.mxu0 0.0
      %8662 = vmatmul.mubr.f32.gmra.mxu0 %v3106
      %v8663 = vpop.f32.mrf.mxu0
      %v8664 = vadd.f32 0.0, %v8663
      %v8665 = vpop.f32.mrf.mxu0
      %8666 = vmatprep.mubr.f32.mxu0 0.0
      %8667 = vmatmul.mubr.f32.gmra.mxu0 %v3108
      %v8668 = vpop.f32.mrf.mxu0
      %v8669 = vadd.f32 0.0, %v8668
      %v8670 = vpop.f32.mrf.mxu0
      %8671 = vmatprep.mubr.f32.mxu0 0.0
      %8672 = vmatmul.mubr.f32.gmra.mxu0 %v3110
      %v8673 = vpop.f32.mrf.mxu0
      %v8674 = vadd.f32 0.0, %v8673
      %v8675 = vpop.f32.mrf.mxu0
      %8676 = vmatprep.mubr.f32.mxu0 0.0
      %8677 = vmatmul.mubr.f32.gmra.mxu0 %v3112
      %v8678 = vpop.f32.mrf.mxu0
      %v8679 = vadd.f32 0.0, %v8678
      %v8680 = vpop.f32.mrf.mxu0
      %8681 = vmatprep.mubr.f32.mxu0 0.0
      %8682 = vmatmul.mubr.f32.gmra.mxu0 %v3114
      %v8683 = vpop.f32.mrf.mxu0
      %v8684 = vadd.f32 0.0, %v8683
      %v8685 = vpop.f32.mrf.mxu0
      %8686 = vmatprep.mubr.f32.mxu0 0.0
      %8687 = vmatmul.mubr.f32.gmra.mxu0 %v3116
      %v8688 = vpop.f32.mrf.mxu0
      %v8689 = vadd.f32 0.0, %v8688
      %v8690 = vpop.f32.mrf.mxu0
      %8691 = vmatprep.mubr.f32.mxu0 0.0
      %8692 = vmatmul.mubr.f32.gmra.mxu0 %v3118
      %v8693 = vpop.f32.mrf.mxu0
      %v8694 = vadd.f32 0.0, %v8693
      %v8695 = vpop.f32.mrf.mxu0
      %8696 = vmatprep.mubr.f32.mxu0 0.0
      %8697 = vmatmul.mubr.f32.gmra.mxu0 %v3120
      %v8698 = vpop.f32.mrf.mxu0
      %v8699 = vadd.f32 0.0, %v8698
      %v8700 = vpop.f32.mrf.mxu0
      %8701 = vmatprep.mubr.f32.mxu0 0.0
      %8702 = vmatmul.mubr.f32.gmra.mxu0 %v3122
      %v8703 = vpop.f32.mrf.mxu0
      %v8704 = vadd.f32 0.0, %v8703
      %v8705 = vpop.f32.mrf.mxu0
      %8706 = vmatprep.mubr.f32.mxu0 0.0
      %8707 = vmatmul.mubr.f32.gmra.mxu0 %v3124
      %v8708 = vpop.f32.mrf.mxu0
      %v8709 = vadd.f32 0.0, %v8708
      %v8710 = vpop.f32.mrf.mxu0
      %8711 = vmatprep.mubr.f32.mxu0 0.0
      %8712 = vmatmul.mubr.f32.gmra.mxu0 %v3126
      %v8713 = vpop.f32.mrf.mxu0
      %v8714 = vadd.f32 0.0, %v8713
      %v8715 = vpop.f32.mrf.mxu0
      %8716 = vmatprep.mubr.f32.mxu0 0.0
      %8717 = vmatmul.mubr.f32.gmra.mxu0 %v3128
      %v8718 = vpop.f32.mrf.mxu0
      %v8719 = vadd.f32 0.0, %v8718
      %v8720 = vpop.f32.mrf.mxu0
      %8721 = vmatprep.mubr.f32.mxu0 0.0
      %8722 = vmatmul.mubr.f32.gmra.mxu0 %v3130
      %v8723 = vpop.f32.mrf.mxu0
      %v8724 = vadd.f32 0.0, %v8723
      %v8725 = vpop.f32.mrf.mxu0
      %8726 = vmatprep.mubr.f32.mxu0 0.0
      %8727 = vmatmul.mubr.f32.gmra.mxu0 %v3132
      %v8728 = vpop.f32.mrf.mxu0
      %v8729 = vadd.f32 0.0, %v8728
      %v8730 = vpop.f32.mrf.mxu0
      %8731 = vmatprep.mubr.f32.mxu0 0.0
      %8732 = vmatmul.mubr.f32.gmra.mxu0 %v3134
      %v8733 = vpop.f32.mrf.mxu0
      %v8734 = vadd.f32 0.0, %v8733
      %v8735 = vpop.f32.mrf.mxu0
      %8736 = vmatprep.mubr.f32.mxu0 0.0
      %8737 = vmatmul.mubr.f32.gmra.mxu0 %v3136
      %v8738 = vpop.f32.mrf.mxu0
      %v8739 = vadd.f32 0.0, %v8738
      %v8740 = vpop.f32.mrf.mxu0
      %8741 = vmatprep.mubr.f32.mxu0 0.0
      %8742 = vmatmul.mubr.f32.gmra.mxu0 %v3138
      %v8743 = vpop.f32.mrf.mxu0
      %v8744 = vadd.f32 0.0, %v8743
      %v8745 = vpop.f32.mrf.mxu0
      %8746 = vmatprep.mubr.f32.mxu0 0.0
      %8747 = vmatmul.mubr.f32.gmra.mxu0 %v3140
      %v8748 = vpop.f32.mrf.mxu0
      %v8749 = vadd.f32 0.0, %v8748
      %v8750 = vpop.f32.mrf.mxu0
      %8751 = vmatprep.mubr.f32.mxu0 0.0
      %8752 = vmatmul.mubr.f32.gmra.mxu0 %v3142
      %v8753 = vpop.f32.mrf.mxu0
      %v8754 = vadd.f32 0.0, %v8753
      %v8755 = vpop.f32.mrf.mxu0
      %8756 = vmatprep.mubr.f32.mxu0 0.0
      %8757 = vmatmul.mubr.f32.gmra.mxu0 %v3144
      %v8758 = vpop.f32.mrf.mxu0
      %v8759 = vadd.f32 0.0, %v8758
      %v8760 = vpop.f32.mrf.mxu0
      %8761 = vmatprep.mubr.f32.mxu0 0.0
      %8762 = vmatmul.mubr.f32.gmra.mxu0 %v3146
      %v8763 = vpop.f32.mrf.mxu0
      %v8764 = vadd.f32 0.0, %v8763
      %v8765 = vpop.f32.mrf.mxu0
      %8766 = vmatprep.mubr.f32.mxu0 0.0
      %8767 = vmatmul.mubr.f32.gmra.mxu0 %v3148
      %v8768 = vpop.f32.mrf.mxu0
      %v8769 = vadd.f32 0.0, %v8768
      %v8770 = vpop.f32.mrf.mxu0
      %8771 = vmatprep.mubr.f32.mxu0 0.0
      %8772 = vmatmul.mubr.f32.gmra.mxu0 %v3150
      %v8773 = vpop.f32.mrf.mxu0
      %v8774 = vadd.f32 0.0, %v8773
      %v8775 = vpop.f32.mrf.mxu0
      %8776 = vmatprep.mubr.f32.mxu0 0.0
      %8777 = vmatmul.mubr.f32.gmra.mxu0 %v3152
      %v8778 = vpop.f32.mrf.mxu0
      %v8779 = vadd.f32 0.0, %v8778
      %v8780 = vpop.f32.mrf.mxu0
      %8781 = vmatprep.mubr.f32.mxu0 0.0
      %8782 = vmatmul.mubr.f32.gmra.mxu0 %v3154
      %v8783 = vpop.f32.mrf.mxu0
      %v8784 = vadd.f32 0.0, %v8783
      %v8785 = vpop.f32.mrf.mxu0
      %8786 = vmatprep.mubr.f32.mxu0 0.0
      %8787 = vmatmul.mubr.f32.gmra.mxu0 %v3156
      %v8788 = vpop.f32.mrf.mxu0
      %v8789 = vadd.f32 0.0, %v8788
      %v8790 = vpop.f32.mrf.mxu0
      %8791 = vmatprep.mubr.f32.mxu0 0.0
      %8792 = vmatmul.mubr.f32.gmra.mxu0 %v3158
      %v8793 = vpop.f32.mrf.mxu0
      %v8794 = vadd.f32 0.0, %v8793
      %v8795 = vpop.f32.mrf.mxu0
      %8796 = vmatprep.mubr.f32.mxu0 0.0
      %8797 = vmatmul.mubr.f32.gmra.mxu0 %v3160
      %v8798 = vpop.f32.mrf.mxu0
      %v8799 = vadd.f32 0.0, %v8798
      %v8800 = vpop.f32.mrf.mxu0
      %8801 = vmatprep.mubr.f32.mxu0 0.0
      %8802 = vmatmul.mubr.f32.gmra.mxu0 %v3162
      %v8803 = vpop.f32.mrf.mxu0
      %v8804 = vadd.f32 0.0, %v8803
      %v8805 = vpop.f32.mrf.mxu0
      %8806 = vmatprep.mubr.f32.mxu0 0.0
      %8807 = vmatmul.mubr.f32.gmra.mxu0 %v3164
      %v8808 = vpop.f32.mrf.mxu0
      %v8809 = vadd.f32 0.0, %v8808
      %v8810 = vpop.f32.mrf.mxu0
      %8811 = vmatprep.mubr.f32.mxu0 0.0
      %8812 = vmatmul.mubr.f32.gmra.mxu0 %v3166
      %v8813 = vpop.f32.mrf.mxu0
      %v8814 = vadd.f32 0.0, %v8813
      %v8815 = vpop.f32.mrf.mxu0
      %8816 = vmatprep.mubr.f32.mxu0 0.0
      %8817 = vmatmul.mubr.f32.gmra.mxu0 %v3168
      %v8818 = vpop.f32.mrf.mxu0
      %v8819 = vadd.f32 0.0, %v8818
      %v8820 = vpop.f32.mrf.mxu0
      %8821 = vmatprep.mubr.f32.mxu0 0.0
      %8822 = vmatmul.mubr.f32.gmra.mxu0 %v3170
      %v8823 = vpop.f32.mrf.mxu0
      %v8824 = vadd.f32 0.0, %v8823
      %v8825 = vpop.f32.mrf.mxu0
      %8826 = vmatprep.mubr.f32.mxu0 0.0
      %8827 = vmatmul.mubr.f32.gmra.mxu0 %v3172
      %v8828 = vpop.f32.mrf.mxu0
      %v8829 = vadd.f32 0.0, %v8828
      %v8830 = vpop.f32.mrf.mxu0
      %8831 = vmatprep.mubr.f32.mxu0 0.0
      %8832 = vmatmul.mubr.f32.gmra.mxu0 %v3174
      %v8833 = vpop.f32.mrf.mxu0
      %v8834 = vadd.f32 0.0, %v8833
      %v8835 = vpop.f32.mrf.mxu0
      %8836 = vmatprep.mubr.f32.mxu0 0.0
      %8837 = vmatmul.mubr.f32.gmra.mxu0 %v3176
      %v8838 = vpop.f32.mrf.mxu0
      %v8839 = vadd.f32 0.0, %v8838
      %v8840 = vpop.f32.mrf.mxu0
      %8841 = vmatprep.mubr.f32.mxu0 0.0
      %8842 = vmatmul.mubr.f32.gmra.mxu0 %v3178
      %v8843 = vpop.f32.mrf.mxu0
      %v8844 = vadd.f32 0.0, %v8843
      %v8845 = vpop.f32.mrf.mxu0
      %8846 = vmatprep.mubr.f32.mxu0 0.0
      %8847 = vmatmul.mubr.f32.gmra.mxu0 %v3180
      %v8848 = vpop.f32.mrf.mxu0
      %v8849 = vadd.f32 0.0, %v8848
      %v8850 = vpop.f32.mrf.mxu0
      %8851 = vmatprep.mubr.f32.mxu0 0.0
      %8852 = vmatmul.mubr.f32.gmra.mxu0 %v3182
      %v8853 = vpop.f32.mrf.mxu0
      %v8854 = vadd.f32 0.0, %v8853
      %v8855 = vpop.f32.mrf.mxu0
      %8856 = vmatprep.mubr.f32.mxu0 0.0
      %8857 = vmatmul.mubr.f32.gmra.mxu0 %v3184
      %v8858 = vpop.f32.mrf.mxu0
      %v8859 = vadd.f32 0.0, %v8858
      %v8860 = vpop.f32.mrf.mxu0
      %8861 = vmatprep.mubr.f32.mxu0 0.0
      %8862 = vmatmul.mubr.f32.gmra.mxu0 %v3186
      %v8863 = vpop.f32.mrf.mxu0
      %v8864 = vadd.f32 0.0, %v8863
      %v8865 = vpop.f32.mrf.mxu0
      %8866 = vmatprep.mubr.f32.mxu0 0.0
      %8867 = vmatmul.mubr.f32.gmra.mxu0 %v3188
      %v8868 = vpop.f32.mrf.mxu0
      %v8869 = vadd.f32 0.0, %v8868
      %v8870 = vpop.f32.mrf.mxu0
      %8871 = vmatprep.mubr.f32.mxu0 0.0
      %8872 = vmatmul.mubr.f32.gmra.mxu0 %v3190
      %v8873 = vpop.f32.mrf.mxu0
      %v8874 = vadd.f32 0.0, %v8873
      %v8875 = vpop.f32.mrf.mxu0
      %8876 = vmatprep.mubr.f32.mxu0 0.0
      %8877 = vmatmul.mubr.f32.gmra.mxu0 %v3192
      %v8878 = vpop.f32.mrf.mxu0
      %v8879 = vadd.f32 0.0, %v8878
      %v8880 = vpop.f32.mrf.mxu0
      %8881 = vmatprep.mubr.f32.mxu0 0.0
      %8882 = vmatmul.mubr.f32.gmra.mxu0 %v3194
      %v8883 = vpop.f32.mrf.mxu0
      %v8884 = vadd.f32 0.0, %v8883
      %v8885 = vpop.f32.mrf.mxu0
      %8886 = vmatprep.mubr.f32.mxu0 0.0
      %8887 = vmatmul.mubr.f32.gmra.mxu0 %v3196
      %v8888 = vpop.f32.mrf.mxu0
      %v8889 = vadd.f32 0.0, %v8888
      %v8890 = vpop.f32.mrf.mxu0
      %8891 = vmatprep.mubr.f32.mxu0 0.0
      %8892 = vmatmul.mubr.f32.gmra.mxu0 %v3198
      %v8893 = vpop.f32.mrf.mxu0
      %v8894 = vadd.f32 0.0, %v8893
      %v8895 = vpop.f32.mrf.mxu0
      %8896 = vmatprep.mubr.f32.mxu0 0.0
      %8897 = vmatmul.mubr.f32.gmra.mxu0 %v3200
      %v8898 = vpop.f32.mrf.mxu0
      %v8899 = vadd.f32 0.0, %v8898
      %v8900 = vpop.f32.mrf.mxu0
      %8901 = vmatprep.mubr.f32.mxu0 0.0
      %8902 = vmatmul.mubr.f32.gmra.mxu0 %v3202
      %v8903 = vpop.f32.mrf.mxu0
      %v8904 = vadd.f32 0.0, %v8903
      %v8905 = vpop.f32.mrf.mxu0
      %8906 = vmatprep.mubr.f32.mxu0 0.0
      %8907 = vmatmul.mubr.f32.gmra.mxu0 %v3204
      %v8908 = vpop.f32.mrf.mxu0
      %v8909 = vadd.f32 0.0, %v8908
      %v8910 = vpop.f32.mrf.mxu0
      %8911 = vmatprep.mubr.f32.mxu0 0.0
      %8912 = vmatmul.mubr.f32.gmra.mxu0 %v3206
      %v8913 = vpop.f32.mrf.mxu0
      %v8914 = vadd.f32 0.0, %v8913
      %v8915 = vpop.f32.mrf.mxu0
      %8916 = vmatprep.mubr.f32.mxu0 0.0
      %8917 = vmatmul.mubr.f32.gmra.mxu0 %v3208
      %v8918 = vpop.f32.mrf.mxu0
      %v8919 = vadd.f32 0.0, %v8918
      %v8920 = vpop.f32.mrf.mxu0
      %8921 = vmatprep.mubr.f32.mxu0 0.0
      %8922 = vmatmul.mubr.f32.gmra.mxu0 %v3210
      %v8923 = vpop.f32.mrf.mxu0
      %v8924 = vadd.f32 0.0, %v8923
      %v8925 = vpop.f32.mrf.mxu0
      %8926 = vmatprep.mubr.f32.mxu0 0.0
      %8927 = vmatmul.mubr.f32.gmra.mxu0 %v3212
      %v8928 = vpop.f32.mrf.mxu0
      %v8929 = vadd.f32 0.0, %v8928
      %v8930 = vpop.f32.mrf.mxu0
      %8931 = vmatprep.mubr.f32.mxu0 0.0
      %8932 = vmatmul.mubr.f32.gmra.mxu0 %v3214
      %v8933 = vpop.f32.mrf.mxu0
      %v8934 = vadd.f32 0.0, %v8933
      %v8935 = vpop.f32.mrf.mxu0
      %8936 = vmatprep.mubr.f32.mxu0 0.0
      %8937 = vmatmul.mubr.f32.gmra.mxu0 %v3216
      %v8938 = vpop.f32.mrf.mxu0
      %v8939 = vadd.f32 0.0, %v8938
      %v8940 = vpop.f32.mrf.mxu0
      %8941 = vmatprep.mubr.f32.mxu0 0.0
      %8942 = vmatmul.mubr.f32.gmra.mxu0 %v3218
      %v8943 = vpop.f32.mrf.mxu0
      %v8944 = vadd.f32 0.0, %v8943
      %v8945 = vpop.f32.mrf.mxu0
      %8946 = vmatprep.mubr.f32.mxu0 0.0
      %8947 = vmatmul.mubr.f32.gmra.mxu0 %v3220
      %v8948 = vpop.f32.mrf.mxu0
      %v8949 = vadd.f32 0.0, %v8948
      %v8950 = vpop.f32.mrf.mxu0
      %8951 = vmatprep.mubr.f32.mxu0 0.0
      %8952 = vmatmul.mubr.f32.gmra.mxu0 %v3222
      %v8953 = vpop.f32.mrf.mxu0
      %v8954 = vadd.f32 0.0, %v8953
      %v8955 = vpop.f32.mrf.mxu0
      %8956 = vmatprep.mubr.f32.mxu0 0.0
      %8957 = vmatmul.mubr.f32.gmra.mxu0 %v3224
      %v8958 = vpop.f32.mrf.mxu0
      %v8959 = vadd.f32 0.0, %v8958
      %v8960 = vpop.f32.mrf.mxu0
      %8961 = vmatprep.mubr.f32.mxu0 0.0
      %8962 = vmatmul.mubr.f32.gmra.mxu0 %v3226
      %v8963 = vpop.f32.mrf.mxu0
      %v8964 = vadd.f32 0.0, %v8963
      %v8965 = vpop.f32.mrf.mxu0
      %8966 = vmatprep.mubr.f32.mxu0 0.0
      %8967 = vmatmul.mubr.f32.gmra.mxu0 %v3228
      %v8968 = vpop.f32.mrf.mxu0
      %v8969 = vadd.f32 0.0, %v8968
      %v8970 = vpop.f32.mrf.mxu0
      %8971 = vmatprep.mubr.f32.mxu0 0.0
      %8972 = vmatmul.mubr.f32.gmra.mxu0 %v3230
      %v8973 = vpop.f32.mrf.mxu0
      %v8974 = vadd.f32 0.0, %v8973
      %v8975 = vpop.f32.mrf.mxu0
      %8976 = vmatprep.mubr.f32.mxu0 0.0
      %8977 = vmatmul.mubr.f32.gmra.mxu0 %v3232
      %v8978 = vpop.f32.mrf.mxu0
      %v8979 = vadd.f32 0.0, %v8978
      %v8980 = vpop.f32.mrf.mxu0
      %8981 = vmatprep.mubr.f32.mxu0 0.0
      %8982 = vmatmul.mubr.f32.gmra.mxu0 %v3234
      %v8983 = vpop.f32.mrf.mxu0
      %v8984 = vadd.f32 0.0, %v8983
      %v8985 = vpop.f32.mrf.mxu0
      %8986 = vmatprep.mubr.f32.mxu0 0.0
      %8987 = vmatmul.mubr.f32.gmra.mxu0 %v3236
      %v8988 = vpop.f32.mrf.mxu0
      %v8989 = vadd.f32 0.0, %v8988
      %v8990 = vpop.f32.mrf.mxu0
      %8991 = vmatprep.mubr.f32.mxu0 0.0
      %8992 = vmatmul.mubr.f32.gmra.mxu0 %v3238
      %v8993 = vpop.f32.mrf.mxu0
      %v8994 = vadd.f32 0.0, %v8993
      %v8995 = vpop.f32.mrf.mxu0
      %8996 = vmatprep.mubr.f32.mxu0 0.0
      %8997 = vmatmul.mubr.f32.gmra.mxu0 %v5778
      %v8998 = vpop.f32.mrf.mxu0
      %v8999 = vadd.f32 0.0, %v8998
      %v9000 = vpop.f32.mrf.mxu0
      %9001 = vmatprep.mubr.f32.mxu0 0.0
      %9002 = vmatmul.mubr.f32.gmra.mxu0 %v5780
      %v9003 = vpop.f32.mrf.mxu0
      %v9004 = vadd.f32 0.0, %v9003
      %v9005 = vpop.f32.mrf.mxu0
      %9006 = vmatprep.mubr.f32.mxu0 0.0
      %9007 = vmatmul.mubr.f32.gmra.mxu0 %v5782
      %v9008 = vpop.f32.mrf.mxu0
      %v9009 = vadd.f32 0.0, %v9008
      %v9010 = vpop.f32.mrf.mxu0
      %9011 = vmatprep.mubr.f32.mxu0 0.0
      %9012 = vmatmul.mubr.f32.gmra.mxu0 %v5784
      %v9013 = vpop.f32.mrf.mxu0
      %v9014 = vadd.f32 0.0, %v9013
      %v9015 = vpop.f32.mrf.mxu0
      %9016 = vmatprep.mubr.f32.mxu0 0.0
      %9017 = vmatmul.mubr.f32.gmra.mxu0 %v8324
      %v9018 = vpop.f32.mrf.mxu0
      %v9019 = vadd.f32 0.0, %v9018
      %v9020 = vpop.f32.mrf.mxu0
      %9021 = vmatprep.mubr.f32.mxu0 0.0
      %9022 = vmatmul.mubr.f32.gmra.mxu0 %v8326
      %v9023 = vpop.f32.mrf.mxu0
      %v9024 = vadd.f32 0.0, %v9023
      %v9025 = vpop.f32.mrf.mxu0
      %9026 = vmatprep.mubr.f32.mxu0 0.0
      %9027 = vmatmul.mubr.f32.gmra.mxu0 %v8328
      %v9028 = vpop.f32.mrf.mxu0
      %v9029 = vadd.f32 0.0, %v9028
      %v9030 = vpop.f32.mrf.mxu0
      %9031 = vmatprep.mubr.f32.mxu0 0.0
      %9032 = vmatmul.mubr.f32.gmra.mxu0 %v8330
      %v9033 = vpop.f32.mrf.mxu0
      %v9034 = vadd.f32 0.0, %v9033
      %v9035 = vpop.f32.mrf.mxu0
      %9036 = vdwg.mxu0
      %v9037 = vadd.f32 %v8187, %v8399
      %v9038 = vadd.f32 %v8188, %v8404
      %v9039 = vadd.f32 %v8189, %v8409
      %v9040 = vadd.f32 %v8190, %v8414
      %v9041 = vadd.f32 %v8191, %v8419
      %v9042 = vadd.f32 %v8192, %v8424
      %v9043 = vadd.f32 %v8193, %v8429
      %v9044 = vadd.f32 %v8194, %v8434
      %v9045 = vadd.f32 %v8195, %v8439
      %v9046 = vadd.f32 %v8196, %v8444
      %v9047 = vadd.f32 %v8197, %v8449
      %v9048 = vadd.f32 %v8198, %v8454
      %v9049 = vadd.f32 %v8199, %v8459
      %v9050 = vadd.f32 %v8200, %v8464
      %v9051 = vadd.f32 %v8201, %v8469
      %v9052 = vadd.f32 %v8202, %v8474
      %v9053 = vadd.f32 %v8203, %v8479
      %v9054 = vadd.f32 %v8204, %v8484
      %v9055 = vadd.f32 %v8205, %v8489
      %v9056 = vadd.f32 %v8206, %v8494
      %v9057 = vadd.f32 %v8207, %v8499
      %v9058 = vadd.f32 %v8208, %v8504
      %v9059 = vadd.f32 %v8209, %v8509
      %v9060 = vadd.f32 %v8210, %v8514
      %v9061 = vadd.f32 %v8211, %v8519
      %v9062 = vadd.f32 %v8212, %v8524
      %v9063 = vadd.f32 %v8213, %v8529
      %v9064 = vadd.f32 %v8214, %v8534
      %v9065 = vadd.f32 %v8215, %v8539
      %v9066 = vadd.f32 %v8216, %v8544
      %v9067 = vadd.f32 %v8217, %v8549
      %v9068 = vadd.f32 %v8218, %v8554
      %v9069 = vadd.f32 %v8219, %v8559
      %v9070 = vadd.f32 %v8220, %v8564
      %v9071 = vadd.f32 %v8221, %v8569
      %v9072 = vadd.f32 %v8222, %v8574
      %v9073 = vadd.f32 %v8223, %v8579
      %v9074 = vadd.f32 %v8224, %v8584
      %v9075 = vadd.f32 %v8225, %v8589
      %v9076 = vadd.f32 %v8226, %v8594
      %v9077 = vadd.f32 %v8227, %v8599
      %v9078 = vadd.f32 %v8228, %v8604
      %v9079 = vadd.f32 %v8229, %v8609
      %v9080 = vadd.f32 %v8230, %v8614
      %v9081 = vadd.f32 %v8231, %v8619
      %v9082 = vadd.f32 %v8232, %v8624
      %v9083 = vadd.f32 %v8233, %v8629
      %v9084 = vadd.f32 %v8234, %v8634
      %v9085 = vadd.f32 %v8235, %v8639
      %v9086 = vadd.f32 %v8236, %v8644
      %v9087 = vadd.f32 %v8237, %v8649
      %v9088 = vadd.f32 %v8238, %v8654
      %v9089 = vadd.f32 %v8239, %v8659
      %v9090 = vadd.f32 %v8240, %v8664
      %v9091 = vadd.f32 %v8241, %v8669
      %v9092 = vadd.f32 %v8242, %v8674
      %v9093 = vadd.f32 %v8243, %v8679
      %v9094 = vadd.f32 %v8244, %v8684
      %v9095 = vadd.f32 %v8245, %v8689
      %v9096 = vadd.f32 %v8246, %v8694
      %v9097 = vadd.f32 %v8247, %v8699
      %v9098 = vadd.f32 %v8248, %v8704
      %v9099 = vadd.f32 %v8249, %v8709
      %v9100 = vadd.f32 %v8250, %v8714
      %v9101 = vadd.f32 %v8251, %v8719
      %v9102 = vadd.f32 %v8252, %v8724
      %v9103 = vadd.f32 %v8253, %v8729
      %v9104 = vadd.f32 %v8254, %v8734
      %v9105 = vadd.f32 %v8255, %v8739
      %v9106 = vadd.f32 %v8256, %v8744
      %v9107 = vadd.f32 %v8257, %v8749
      %v9108 = vadd.f32 %v8258, %v8754
      %v9109 = vadd.f32 %v8259, %v8759
      %v9110 = vadd.f32 %v8260, %v8764
      %v9111 = vadd.f32 %v8261, %v8769
      %v9112 = vadd.f32 %v8262, %v8774
      %v9113 = vadd.f32 %v8263, %v8779
      %v9114 = vadd.f32 %v8264, %v8784
      %v9115 = vadd.f32 %v8265, %v8789
      %v9116 = vadd.f32 %v8266, %v8794
      %v9117 = vadd.f32 %v8267, %v8799
      %v9118 = vadd.f32 %v8268, %v8804
      %v9119 = vadd.f32 %v8269, %v8809
      %v9120 = vadd.f32 %v8270, %v8814
      %v9121 = vadd.f32 %v8271, %v8819
      %v9122 = vadd.f32 %v8272, %v8824
      %v9123 = vadd.f32 %v8273, %v8829
      %v9124 = vadd.f32 %v8274, %v8834
      %v9125 = vadd.f32 %v8275, %v8839
      %v9126 = vadd.f32 %v8276, %v8844
      %v9127 = vadd.f32 %v8277, %v8849
      %v9128 = vadd.f32 %v8278, %v8854
      %v9129 = vadd.f32 %v8279, %v8859
      %v9130 = vadd.f32 %v8280, %v8864
      %v9131 = vadd.f32 %v8281, %v8869
      %v9132 = vadd.f32 %v8282, %v8874
      %v9133 = vadd.f32 %v8283, %v8879
      %v9134 = vadd.f32 %v8284, %v8884
      %v9135 = vadd.f32 %v8285, %v8889
      %v9136 = vadd.f32 %v8286, %v8894
      %v9137 = vadd.f32 %v8287, %v8899
      %v9138 = vadd.f32 %v8288, %v8904
      %v9139 = vadd.f32 %v8289, %v8909
      %v9140 = vadd.f32 %v8290, %v8914
      %v9141 = vadd.f32 %v8291, %v8919
      %v9142 = vadd.f32 %v8292, %v8924
      %v9143 = vadd.f32 %v8293, %v8929
      %v9144 = vadd.f32 %v8294, %v8934
      %v9145 = vadd.f32 %v8295, %v8939
      %v9146 = vadd.f32 %v8296, %v8944
      %v9147 = vadd.f32 %v8297, %v8949
      %v9148 = vadd.f32 %v8298, %v8954
      %v9149 = vadd.f32 %v8299, %v8959
      %v9150 = vadd.f32 %v8300, %v8964
      %v9151 = vadd.f32 %v8301, %v8969
      %v9152 = vadd.f32 %v8302, %v8974
      %v9153 = vadd.f32 %v8303, %v8979
      %v9154 = vadd.f32 %v8304, %v8984
      %v9155 = vadd.f32 %v8305, %v8989
      %v9156 = vadd.f32 %v8306, %v8994
      %v9157 = vadd.f32 %v8307, %v8999
      %v9158 = vadd.f32 %v8308, %v9004
      %v9159 = vadd.f32 %v8309, %v9009
      %v9160 = vadd.f32 %v8310, %v9014
      %v9161 = vadd.f32 %v8311, %v9019
      %v9162 = vadd.f32 %v8312, %v9024
      %v9163 = vadd.f32 %v8313, %v9029
      %v9164 = vadd.f32 %v8314, %v9034
      %v9165 = vsel %vm772, %v9037, 0.0
      %v9166 = vsel %vm772, %v9038, 0.0
      %v9167 = vadd.f32 %v9165, %v9166
      %v9168 = vsel %vm772, %v9039, 0.0
      %v9169 = vadd.f32 %v9167, %v9168
      %v9170 = vsel %vm772, %v9040, 0.0
      %v9171 = vadd.f32 %v9169, %v9170
      %v9172 = vsel %vm772, %v9041, 0.0
      %v9173 = vadd.f32 %v9171, %v9172
      %v9174 = vsel %vm772, %v9042, 0.0
      %v9175 = vadd.f32 %v9173, %v9174
      %v9176 = vsel %vm772, %v9043, 0.0
      %v9177 = vadd.f32 %v9175, %v9176
      %v9178 = vsel %vm772, %v9044, 0.0
      %v9179 = vadd.f32 %v9177, %v9178
      %v9180 = vsel %vm772, %v9045, 0.0
      %v9181 = vadd.f32 %v9179, %v9180
      %v9182 = vsel %vm772, %v9046, 0.0
      %v9183 = vadd.f32 %v9181, %v9182
      %v9184 = vsel %vm772, %v9047, 0.0
      %v9185 = vadd.f32 %v9183, %v9184
      %v9186 = vsel %vm772, %v9048, 0.0
      %v9187 = vadd.f32 %v9185, %v9186
      %v9188 = vsel %vm772, %v9049, 0.0
      %v9189 = vadd.f32 %v9187, %v9188
      %v9190 = vsel %vm772, %v9050, 0.0
      %v9191 = vadd.f32 %v9189, %v9190
      %v9192 = vsel %vm772, %v9051, 0.0
      %v9193 = vadd.f32 %v9191, %v9192
      %v9194 = vsel %vm772, %v9052, 0.0
      %v9195 = vadd.f32 %v9193, %v9194
      %v9196 = vsel %vm772, %v9053, 0.0
      %v9197 = vadd.f32 %v9195, %v9196
      %v9198 = vsel %vm772, %v9054, 0.0
      %v9199 = vadd.f32 %v9197, %v9198
      %v9200 = vsel %vm772, %v9055, 0.0
      %v9201 = vadd.f32 %v9199, %v9200
      %v9202 = vsel %vm772, %v9056, 0.0
      %v9203 = vadd.f32 %v9201, %v9202
      %v9204 = vsel %vm772, %v9057, 0.0
      %v9205 = vadd.f32 %v9203, %v9204
      %v9206 = vsel %vm772, %v9058, 0.0
      %v9207 = vadd.f32 %v9205, %v9206
      %v9208 = vsel %vm772, %v9059, 0.0
      %v9209 = vadd.f32 %v9207, %v9208
      %v9210 = vsel %vm772, %v9060, 0.0
      %v9211 = vadd.f32 %v9209, %v9210
      %v9212 = vsel %vm772, %v9061, 0.0
      %v9213 = vadd.f32 %v9211, %v9212
      %v9214 = vsel %vm772, %v9062, 0.0
      %v9215 = vadd.f32 %v9213, %v9214
      %v9216 = vsel %vm772, %v9063, 0.0
      %v9217 = vadd.f32 %v9215, %v9216
      %v9218 = vsel %vm772, %v9064, 0.0
      %v9219 = vadd.f32 %v9217, %v9218
      %v9220 = vsel %vm772, %v9065, 0.0
      %v9221 = vadd.f32 %v9219, %v9220
      %v9222 = vsel %vm772, %v9066, 0.0
      %v9223 = vadd.f32 %v9221, %v9222
      %v9224 = vsel %vm772, %v9067, 0.0
      %v9225 = vadd.f32 %v9223, %v9224
      %v9226 = vsel %vm772, %v9068, 0.0
      %v9227 = vadd.f32 %v9225, %v9226
      %v9228 = vsel %vm772, %v9069, 0.0
      %v9229 = vadd.f32 %v9227, %v9228
      %v9230 = vsel %vm772, %v9070, 0.0
      %v9231 = vadd.f32 %v9229, %v9230
      %v9232 = vsel %vm772, %v9071, 0.0
      %v9233 = vadd.f32 %v9231, %v9232
      %v9234 = vsel %vm772, %v9072, 0.0
      %v9235 = vadd.f32 %v9233, %v9234
      %v9236 = vsel %vm772, %v9073, 0.0
      %v9237 = vadd.f32 %v9235, %v9236
      %v9238 = vsel %vm772, %v9074, 0.0
      %v9239 = vadd.f32 %v9237, %v9238
      %v9240 = vsel %vm772, %v9075, 0.0
      %v9241 = vadd.f32 %v9239, %v9240
      %v9242 = vsel %vm772, %v9076, 0.0
      %v9243 = vadd.f32 %v9241, %v9242
      %v9244 = vsel %vm772, %v9077, 0.0
      %v9245 = vadd.f32 %v9243, %v9244
      %v9246 = vsel %vm772, %v9078, 0.0
      %v9247 = vadd.f32 %v9245, %v9246
      %v9248 = vsel %vm772, %v9079, 0.0
      %v9249 = vadd.f32 %v9247, %v9248
      %v9250 = vsel %vm772, %v9080, 0.0
      %v9251 = vadd.f32 %v9249, %v9250
      %v9252 = vsel %vm772, %v9081, 0.0
      %v9253 = vadd.f32 %v9251, %v9252
      %v9254 = vsel %vm772, %v9082, 0.0
      %v9255 = vadd.f32 %v9253, %v9254
      %v9256 = vsel %vm772, %v9083, 0.0
      %v9257 = vadd.f32 %v9255, %v9256
      %v9258 = vsel %vm772, %v9084, 0.0
      %v9259 = vadd.f32 %v9257, %v9258
      %v9260 = vsel %vm772, %v9085, 0.0
      %v9261 = vadd.f32 %v9259, %v9260
      %v9262 = vsel %vm772, %v9086, 0.0
      %v9263 = vadd.f32 %v9261, %v9262
      %v9264 = vsel %vm772, %v9087, 0.0
      %v9265 = vadd.f32 %v9263, %v9264
      %v9266 = vsel %vm772, %v9088, 0.0
      %v9267 = vadd.f32 %v9265, %v9266
      %v9268 = vsel %vm772, %v9089, 0.0
      %v9269 = vadd.f32 %v9267, %v9268
      %v9270 = vsel %vm772, %v9090, 0.0
      %v9271 = vadd.f32 %v9269, %v9270
      %v9272 = vsel %vm772, %v9091, 0.0
      %v9273 = vadd.f32 %v9271, %v9272
      %v9274 = vsel %vm772, %v9092, 0.0
      %v9275 = vadd.f32 %v9273, %v9274
      %v9276 = vsel %vm772, %v9093, 0.0
      %v9277 = vadd.f32 %v9275, %v9276
      %v9278 = vsel %vm772, %v9094, 0.0
      %v9279 = vadd.f32 %v9277, %v9278
      %v9280 = vsel %vm772, %v9095, 0.0
      %v9281 = vadd.f32 %v9279, %v9280
      %v9282 = vsel %vm772, %v9096, 0.0
      %v9283 = vadd.f32 %v9281, %v9282
      %v9284 = vsel %vm772, %v9097, 0.0
      %v9285 = vadd.f32 %v9283, %v9284
      %v9286 = vsel %vm772, %v9098, 0.0
      %v9287 = vadd.f32 %v9285, %v9286
      %v9288 = vsel %vm772, %v9099, 0.0
      %v9289 = vadd.f32 %v9287, %v9288
      %v9290 = vsel %vm772, %v9100, 0.0
      %v9291 = vadd.f32 %v9289, %v9290
      %v9292 = vsel %vm772, %v9101, 0.0
      %v9293 = vadd.f32 %v9291, %v9292
      %v9294 = vsel %vm772, %v9102, 0.0
      %v9295 = vadd.f32 %v9293, %v9294
      %v9296 = vsel %vm772, %v9103, 0.0
      %v9297 = vadd.f32 %v9295, %v9296
      %v9298 = vsel %vm772, %v9104, 0.0
      %v9299 = vadd.f32 %v9297, %v9298
      %v9300 = vsel %vm772, %v9105, 0.0
      %v9301 = vadd.f32 %v9299, %v9300
      %v9302 = vsel %vm772, %v9106, 0.0
      %v9303 = vadd.f32 %v9301, %v9302
      %v9304 = vsel %vm772, %v9107, 0.0
      %v9305 = vadd.f32 %v9303, %v9304
      %v9306 = vsel %vm772, %v9108, 0.0
      %v9307 = vadd.f32 %v9305, %v9306
      %v9308 = vsel %vm772, %v9109, 0.0
      %v9309 = vadd.f32 %v9307, %v9308
      %v9310 = vsel %vm772, %v9110, 0.0
      %v9311 = vadd.f32 %v9309, %v9310
      %v9312 = vsel %vm772, %v9111, 0.0
      %v9313 = vadd.f32 %v9311, %v9312
      %v9314 = vsel %vm772, %v9112, 0.0
      %v9315 = vadd.f32 %v9313, %v9314
      %v9316 = vsel %vm772, %v9113, 0.0
      %v9317 = vadd.f32 %v9315, %v9316
      %v9318 = vsel %vm772, %v9114, 0.0
      %v9319 = vadd.f32 %v9317, %v9318
      %v9320 = vsel %vm772, %v9115, 0.0
      %v9321 = vadd.f32 %v9319, %v9320
      %v9322 = vsel %vm772, %v9116, 0.0
      %v9323 = vadd.f32 %v9321, %v9322
      %v9324 = vsel %vm772, %v9117, 0.0
      %v9325 = vadd.f32 %v9323, %v9324
      %v9326 = vsel %vm772, %v9118, 0.0
      %v9327 = vadd.f32 %v9325, %v9326
      %v9328 = vsel %vm772, %v9119, 0.0
      %v9329 = vadd.f32 %v9327, %v9328
      %v9330 = vsel %vm772, %v9120, 0.0
      %v9331 = vadd.f32 %v9329, %v9330
      %v9332 = vsel %vm772, %v9121, 0.0
      %v9333 = vadd.f32 %v9331, %v9332
      %v9334 = vsel %vm772, %v9122, 0.0
      %v9335 = vadd.f32 %v9333, %v9334
      %v9336 = vsel %vm772, %v9123, 0.0
      %v9337 = vadd.f32 %v9335, %v9336
      %v9338 = vsel %vm772, %v9124, 0.0
      %v9339 = vadd.f32 %v9337, %v9338
      %v9340 = vsel %vm772, %v9125, 0.0
      %v9341 = vadd.f32 %v9339, %v9340
      %v9342 = vsel %vm772, %v9126, 0.0
      %v9343 = vadd.f32 %v9341, %v9342
      %v9344 = vsel %vm772, %v9127, 0.0
      %v9345 = vadd.f32 %v9343, %v9344
      %v9346 = vsel %vm772, %v9128, 0.0
      %v9347 = vadd.f32 %v9345, %v9346
      %v9348 = vsel %vm772, %v9129, 0.0
      %v9349 = vadd.f32 %v9347, %v9348
      %v9350 = vsel %vm772, %v9130, 0.0
      %v9351 = vadd.f32 %v9349, %v9350
      %v9352 = vsel %vm772, %v9131, 0.0
      %v9353 = vadd.f32 %v9351, %v9352
      %v9354 = vsel %vm772, %v9132, 0.0
      %v9355 = vadd.f32 %v9353, %v9354
      %v9356 = vsel %vm772, %v9133, 0.0
      %v9357 = vadd.f32 %v9355, %v9356
      %v9358 = vsel %vm772, %v9134, 0.0
      %v9359 = vadd.f32 %v9357, %v9358
      %v9360 = vsel %vm772, %v9135, 0.0
      %v9361 = vadd.f32 %v9359, %v9360
      %v9362 = vsel %vm772, %v9136, 0.0
      %v9363 = vadd.f32 %v9361, %v9362
      %v9364 = vsel %vm772, %v9137, 0.0
      %v9365 = vadd.f32 %v9363, %v9364
      %v9366 = vsel %vm772, %v9138, 0.0
      %v9367 = vadd.f32 %v9365, %v9366
      %v9368 = vsel %vm772, %v9139, 0.0
      %v9369 = vadd.f32 %v9367, %v9368
      %v9370 = vsel %vm772, %v9140, 0.0
      %v9371 = vadd.f32 %v9369, %v9370
      %v9372 = vsel %vm772, %v9141, 0.0
      %v9373 = vadd.f32 %v9371, %v9372
      %v9374 = vsel %vm772, %v9142, 0.0
      %v9375 = vadd.f32 %v9373, %v9374
      %v9376 = vsel %vm772, %v9143, 0.0
      %v9377 = vadd.f32 %v9375, %v9376
      %v9378 = vsel %vm772, %v9144, 0.0
      %v9379 = vadd.f32 %v9377, %v9378
      %v9380 = vsel %vm772, %v9145, 0.0
      %v9381 = vadd.f32 %v9379, %v9380
      %v9382 = vsel %vm772, %v9146, 0.0
      %v9383 = vadd.f32 %v9381, %v9382
      %v9384 = vsel %vm772, %v9147, 0.0
      %v9385 = vadd.f32 %v9383, %v9384
      %v9386 = vsel %vm772, %v9148, 0.0
      %v9387 = vadd.f32 %v9385, %v9386
      %v9388 = vsel %vm772, %v9149, 0.0
      %v9389 = vadd.f32 %v9387, %v9388
      %v9390 = vsel %vm772, %v9150, 0.0
      %v9391 = vadd.f32 %v9389, %v9390
      %v9392 = vsel %vm772, %v9151, 0.0
      %v9393 = vadd.f32 %v9391, %v9392
      %v9394 = vsel %vm772, %v9152, 0.0
      %v9395 = vadd.f32 %v9393, %v9394
      %v9396 = vsel %vm772, %v9153, 0.0
      %v9397 = vadd.f32 %v9395, %v9396
      %v9398 = vsel %vm772, %v9154, 0.0
      %v9399 = vadd.f32 %v9397, %v9398
      %v9400 = vsel %vm772, %v9155, 0.0
      %v9401 = vadd.f32 %v9399, %v9400
      %v9402 = vsel %vm772, %v9156, 0.0
      %v9403 = vadd.f32 %v9401, %v9402
      %v9404 = vsel %vm772, %v9157, 0.0
      %v9405 = vadd.f32 %v9403, %v9404
      %v9406 = vsel %vm772, %v9158, 0.0
      %v9407 = vadd.f32 %v9405, %v9406
      %v9408 = vsel %vm772, %v9159, 0.0
      %v9409 = vadd.f32 %v9407, %v9408
      %v9410 = vsel %vm772, %v9160, 0.0
      %v9411 = vadd.f32 %v9409, %v9410
      %v9412 = vsel %vm772, %v9161, 0.0
      %v9413 = vadd.f32 %v9411, %v9412
      %v9414 = vsel %vm772, %v9162, 0.0
      %v9415 = vadd.f32 %v9413, %v9414
      %v9416 = vsel %vm772, %v9163, 0.0
      %v9417 = vadd.f32 %v9415, %v9416
      %v9418 = vsel %vm772, %v9164, 0.0
      %v9419 = vadd.f32 %v9417, %v9418
      %v9420 = vrot.slane %v9419, 4
      %v9421 = vadd.f32 %v9419, %v9420
      %v9422 = vrot.slane %v9421, 2
      %v9423 = vadd.f32 %v9421, %v9422
      %v9424 = vrot.slane %v9423, 1
      %v9425 = vadd.f32 %v9423, %v9424
      %v9426 = vmul.f32 %v9425, 0.0009765625
      %v9427 = vmul.f32 %v9037, %v9037
      %v9428 = vmul.f32 %v9038, %v9038
      %v9429 = vmul.f32 %v9039, %v9039
      %v9430 = vmul.f32 %v9040, %v9040
      %v9431 = vmul.f32 %v9041, %v9041
      %v9432 = vmul.f32 %v9042, %v9042
      %v9433 = vmul.f32 %v9043, %v9043
      %v9434 = vmul.f32 %v9044, %v9044
      %v9435 = vmul.f32 %v9045, %v9045
      %v9436 = vmul.f32 %v9046, %v9046
      %v9437 = vmul.f32 %v9047, %v9047
      %v9438 = vmul.f32 %v9048, %v9048
      %v9439 = vmul.f32 %v9049, %v9049
      %v9440 = vmul.f32 %v9050, %v9050
      %v9441 = vmul.f32 %v9051, %v9051
      %v9442 = vmul.f32 %v9052, %v9052
      %v9443 = vmul.f32 %v9053, %v9053
      %v9444 = vmul.f32 %v9054, %v9054
      %v9445 = vmul.f32 %v9055, %v9055
      %v9446 = vmul.f32 %v9056, %v9056
      %v9447 = vmul.f32 %v9057, %v9057
      %v9448 = vmul.f32 %v9058, %v9058
      %v9449 = vmul.f32 %v9059, %v9059
      %v9450 = vmul.f32 %v9060, %v9060
      %v9451 = vmul.f32 %v9061, %v9061
      %v9452 = vmul.f32 %v9062, %v9062
      %v9453 = vmul.f32 %v9063, %v9063
      %v9454 = vmul.f32 %v9064, %v9064
      %v9455 = vmul.f32 %v9065, %v9065
      %v9456 = vmul.f32 %v9066, %v9066
      %v9457 = vmul.f32 %v9067, %v9067
      %v9458 = vmul.f32 %v9068, %v9068
      %v9459 = vmul.f32 %v9069, %v9069
      %v9460 = vmul.f32 %v9070, %v9070
      %v9461 = vmul.f32 %v9071, %v9071
      %v9462 = vmul.f32 %v9072, %v9072
      %v9463 = vmul.f32 %v9073, %v9073
      %v9464 = vmul.f32 %v9074, %v9074
      %v9465 = vmul.f32 %v9075, %v9075
      %v9466 = vmul.f32 %v9076, %v9076
      %v9467 = vmul.f32 %v9077, %v9077
      %v9468 = vmul.f32 %v9078, %v9078
      %v9469 = vmul.f32 %v9079, %v9079
      %v9470 = vmul.f32 %v9080, %v9080
      %v9471 = vmul.f32 %v9081, %v9081
      %v9472 = vmul.f32 %v9082, %v9082
      %v9473 = vmul.f32 %v9083, %v9083
      %v9474 = vmul.f32 %v9084, %v9084
      %v9475 = vmul.f32 %v9085, %v9085
      %v9476 = vmul.f32 %v9086, %v9086
      %v9477 = vmul.f32 %v9087, %v9087
      %v9478 = vmul.f32 %v9088, %v9088
      %v9479 = vmul.f32 %v9089, %v9089
      %v9480 = vmul.f32 %v9090, %v9090
      %v9481 = vmul.f32 %v9091, %v9091
      %v9482 = vmul.f32 %v9092, %v9092
      %v9483 = vmul.f32 %v9093, %v9093
      %v9484 = vmul.f32 %v9094, %v9094
      %v9485 = vmul.f32 %v9095, %v9095
      %v9486 = vmul.f32 %v9096, %v9096
      %v9487 = vmul.f32 %v9097, %v9097
      %v9488 = vmul.f32 %v9098, %v9098
      %v9489 = vmul.f32 %v9099, %v9099
      %v9490 = vmul.f32 %v9100, %v9100
      %v9491 = vmul.f32 %v9101, %v9101
      %v9492 = vmul.f32 %v9102, %v9102
      %v9493 = vmul.f32 %v9103, %v9103
      %v9494 = vmul.f32 %v9104, %v9104
      %v9495 = vmul.f32 %v9105, %v9105
      %v9496 = vmul.f32 %v9106, %v9106
      %v9497 = vmul.f32 %v9107, %v9107
      %v9498 = vmul.f32 %v9108, %v9108
      %v9499 = vmul.f32 %v9109, %v9109
      %v9500 = vmul.f32 %v9110, %v9110
      %v9501 = vmul.f32 %v9111, %v9111
      %v9502 = vmul.f32 %v9112, %v9112
      %v9503 = vmul.f32 %v9113, %v9113
      %v9504 = vmul.f32 %v9114, %v9114
      %v9505 = vmul.f32 %v9115, %v9115
      %v9506 = vmul.f32 %v9116, %v9116
      %v9507 = vmul.f32 %v9117, %v9117
      %v9508 = vmul.f32 %v9118, %v9118
      %v9509 = vmul.f32 %v9119, %v9119
      %v9510 = vmul.f32 %v9120, %v9120
      %v9511 = vmul.f32 %v9121, %v9121
      %v9512 = vmul.f32 %v9122, %v9122
      %v9513 = vmul.f32 %v9123, %v9123
      %v9514 = vmul.f32 %v9124, %v9124
      %v9515 = vmul.f32 %v9125, %v9125
      %v9516 = vmul.f32 %v9126, %v9126
      %v9517 = vmul.f32 %v9127, %v9127
      %v9518 = vmul.f32 %v9128, %v9128
      %v9519 = vmul.f32 %v9129, %v9129
      %v9520 = vmul.f32 %v9130, %v9130
      %v9521 = vmul.f32 %v9131, %v9131
      %v9522 = vmul.f32 %v9132, %v9132
      %v9523 = vmul.f32 %v9133, %v9133
      %v9524 = vmul.f32 %v9134, %v9134
      %v9525 = vmul.f32 %v9135, %v9135
      %v9526 = vmul.f32 %v9136, %v9136
      %v9527 = vmul.f32 %v9137, %v9137
      %v9528 = vmul.f32 %v9138, %v9138
      %v9529 = vmul.f32 %v9139, %v9139
      %v9530 = vmul.f32 %v9140, %v9140
      %v9531 = vmul.f32 %v9141, %v9141
      %v9532 = vmul.f32 %v9142, %v9142
      %v9533 = vmul.f32 %v9143, %v9143
      %v9534 = vmul.f32 %v9144, %v9144
      %v9535 = vmul.f32 %v9145, %v9145
      %v9536 = vmul.f32 %v9146, %v9146
      %v9537 = vmul.f32 %v9147, %v9147
      %v9538 = vmul.f32 %v9148, %v9148
      %v9539 = vmul.f32 %v9149, %v9149
      %v9540 = vmul.f32 %v9150, %v9150
      %v9541 = vmul.f32 %v9151, %v9151
      %v9542 = vmul.f32 %v9152, %v9152
      %v9543 = vmul.f32 %v9153, %v9153
      %v9544 = vmul.f32 %v9154, %v9154
      %v9545 = vmul.f32 %v9155, %v9155
      %v9546 = vmul.f32 %v9156, %v9156
      %v9547 = vmul.f32 %v9157, %v9157
      %v9548 = vmul.f32 %v9158, %v9158
      %v9549 = vmul.f32 %v9159, %v9159
      %v9550 = vmul.f32 %v9160, %v9160
      %v9551 = vmul.f32 %v9161, %v9161
      %v9552 = vmul.f32 %v9162, %v9162
      %v9553 = vmul.f32 %v9163, %v9163
      %v9554 = vmul.f32 %v9164, %v9164
      %v9555 = vsel %vm772, %v9427, 0.0
      %v9556 = vsel %vm772, %v9428, 0.0
      %v9557 = vadd.f32 %v9555, %v9556
      %v9558 = vsel %vm772, %v9429, 0.0
      %v9559 = vadd.f32 %v9557, %v9558
      %v9560 = vsel %vm772, %v9430, 0.0
      %v9561 = vadd.f32 %v9559, %v9560
      %v9562 = vsel %vm772, %v9431, 0.0
      %v9563 = vadd.f32 %v9561, %v9562
      %v9564 = vsel %vm772, %v9432, 0.0
      %v9565 = vadd.f32 %v9563, %v9564
      %v9566 = vsel %vm772, %v9433, 0.0
      %v9567 = vadd.f32 %v9565, %v9566
      %v9568 = vsel %vm772, %v9434, 0.0
      %v9569 = vadd.f32 %v9567, %v9568
      %v9570 = vsel %vm772, %v9435, 0.0
      %v9571 = vadd.f32 %v9569, %v9570
      %v9572 = vsel %vm772, %v9436, 0.0
      %v9573 = vadd.f32 %v9571, %v9572
      %v9574 = vsel %vm772, %v9437, 0.0
      %v9575 = vadd.f32 %v9573, %v9574
      %v9576 = vsel %vm772, %v9438, 0.0
      %v9577 = vadd.f32 %v9575, %v9576
      %v9578 = vsel %vm772, %v9439, 0.0
      %v9579 = vadd.f32 %v9577, %v9578
      %v9580 = vsel %vm772, %v9440, 0.0
      %v9581 = vadd.f32 %v9579, %v9580
      %v9582 = vsel %vm772, %v9441, 0.0
      %v9583 = vadd.f32 %v9581, %v9582
      %v9584 = vsel %vm772, %v9442, 0.0
      %v9585 = vadd.f32 %v9583, %v9584
      %v9586 = vsel %vm772, %v9443, 0.0
      %v9587 = vadd.f32 %v9585, %v9586
      %v9588 = vsel %vm772, %v9444, 0.0
      %v9589 = vadd.f32 %v9587, %v9588
      %v9590 = vsel %vm772, %v9445, 0.0
      %v9591 = vadd.f32 %v9589, %v9590
      %v9592 = vsel %vm772, %v9446, 0.0
      %v9593 = vadd.f32 %v9591, %v9592
      %v9594 = vsel %vm772, %v9447, 0.0
      %v9595 = vadd.f32 %v9593, %v9594
      %v9596 = vsel %vm772, %v9448, 0.0
      %v9597 = vadd.f32 %v9595, %v9596
      %v9598 = vsel %vm772, %v9449, 0.0
      %v9599 = vadd.f32 %v9597, %v9598
      %v9600 = vsel %vm772, %v9450, 0.0
      %v9601 = vadd.f32 %v9599, %v9600
      %v9602 = vsel %vm772, %v9451, 0.0
      %v9603 = vadd.f32 %v9601, %v9602
      %v9604 = vsel %vm772, %v9452, 0.0
      %v9605 = vadd.f32 %v9603, %v9604
      %v9606 = vsel %vm772, %v9453, 0.0
      %v9607 = vadd.f32 %v9605, %v9606
      %v9608 = vsel %vm772, %v9454, 0.0
      %v9609 = vadd.f32 %v9607, %v9608
      %v9610 = vsel %vm772, %v9455, 0.0
      %v9611 = vadd.f32 %v9609, %v9610
      %v9612 = vsel %vm772, %v9456, 0.0
      %v9613 = vadd.f32 %v9611, %v9612
      %v9614 = vsel %vm772, %v9457, 0.0
      %v9615 = vadd.f32 %v9613, %v9614
      %v9616 = vsel %vm772, %v9458, 0.0
      %v9617 = vadd.f32 %v9615, %v9616
      %v9618 = vsel %vm772, %v9459, 0.0
      %v9619 = vadd.f32 %v9617, %v9618
      %v9620 = vsel %vm772, %v9460, 0.0
      %v9621 = vadd.f32 %v9619, %v9620
      %v9622 = vsel %vm772, %v9461, 0.0
      %v9623 = vadd.f32 %v9621, %v9622
      %v9624 = vsel %vm772, %v9462, 0.0
      %v9625 = vadd.f32 %v9623, %v9624
      %v9626 = vsel %vm772, %v9463, 0.0
      %v9627 = vadd.f32 %v9625, %v9626
      %v9628 = vsel %vm772, %v9464, 0.0
      %v9629 = vadd.f32 %v9627, %v9628
      %v9630 = vsel %vm772, %v9465, 0.0
      %v9631 = vadd.f32 %v9629, %v9630
      %v9632 = vsel %vm772, %v9466, 0.0
      %v9633 = vadd.f32 %v9631, %v9632
      %v9634 = vsel %vm772, %v9467, 0.0
      %v9635 = vadd.f32 %v9633, %v9634
      %v9636 = vsel %vm772, %v9468, 0.0
      %v9637 = vadd.f32 %v9635, %v9636
      %v9638 = vsel %vm772, %v9469, 0.0
      %v9639 = vadd.f32 %v9637, %v9638
      %v9640 = vsel %vm772, %v9470, 0.0
      %v9641 = vadd.f32 %v9639, %v9640
      %v9642 = vsel %vm772, %v9471, 0.0
      %v9643 = vadd.f32 %v9641, %v9642
      %v9644 = vsel %vm772, %v9472, 0.0
      %v9645 = vadd.f32 %v9643, %v9644
      %v9646 = vsel %vm772, %v9473, 0.0
      %v9647 = vadd.f32 %v9645, %v9646
      %v9648 = vsel %vm772, %v9474, 0.0
      %v9649 = vadd.f32 %v9647, %v9648
      %v9650 = vsel %vm772, %v9475, 0.0
      %v9651 = vadd.f32 %v9649, %v9650
      %v9652 = vsel %vm772, %v9476, 0.0
      %v9653 = vadd.f32 %v9651, %v9652
      %v9654 = vsel %vm772, %v9477, 0.0
      %v9655 = vadd.f32 %v9653, %v9654
      %v9656 = vsel %vm772, %v9478, 0.0
      %v9657 = vadd.f32 %v9655, %v9656
      %v9658 = vsel %vm772, %v9479, 0.0
      %v9659 = vadd.f32 %v9657, %v9658
      %v9660 = vsel %vm772, %v9480, 0.0
      %v9661 = vadd.f32 %v9659, %v9660
      %v9662 = vsel %vm772, %v9481, 0.0
      %v9663 = vadd.f32 %v9661, %v9662
      %v9664 = vsel %vm772, %v9482, 0.0
      %v9665 = vadd.f32 %v9663, %v9664
      %v9666 = vsel %vm772, %v9483, 0.0
      %v9667 = vadd.f32 %v9665, %v9666
      %v9668 = vsel %vm772, %v9484, 0.0
      %v9669 = vadd.f32 %v9667, %v9668
      %v9670 = vsel %vm772, %v9485, 0.0
      %v9671 = vadd.f32 %v9669, %v9670
      %v9672 = vsel %vm772, %v9486, 0.0
      %v9673 = vadd.f32 %v9671, %v9672
      %v9674 = vsel %vm772, %v9487, 0.0
      %v9675 = vadd.f32 %v9673, %v9674
      %v9676 = vsel %vm772, %v9488, 0.0
      %v9677 = vadd.f32 %v9675, %v9676
      %v9678 = vsel %vm772, %v9489, 0.0
      %v9679 = vadd.f32 %v9677, %v9678
      %v9680 = vsel %vm772, %v9490, 0.0
      %v9681 = vadd.f32 %v9679, %v9680
      %v9682 = vsel %vm772, %v9491, 0.0
      %v9683 = vadd.f32 %v9681, %v9682
      %v9684 = vsel %vm772, %v9492, 0.0
      %v9685 = vadd.f32 %v9683, %v9684
      %v9686 = vsel %vm772, %v9493, 0.0
      %v9687 = vadd.f32 %v9685, %v9686
      %v9688 = vsel %vm772, %v9494, 0.0
      %v9689 = vadd.f32 %v9687, %v9688
      %v9690 = vsel %vm772, %v9495, 0.0
      %v9691 = vadd.f32 %v9689, %v9690
      %v9692 = vsel %vm772, %v9496, 0.0
      %v9693 = vadd.f32 %v9691, %v9692
      %v9694 = vsel %vm772, %v9497, 0.0
      %v9695 = vadd.f32 %v9693, %v9694
      %v9696 = vsel %vm772, %v9498, 0.0
      %v9697 = vadd.f32 %v9695, %v9696
      %v9698 = vsel %vm772, %v9499, 0.0
      %v9699 = vadd.f32 %v9697, %v9698
      %v9700 = vsel %vm772, %v9500, 0.0
      %v9701 = vadd.f32 %v9699, %v9700
      %v9702 = vsel %vm772, %v9501, 0.0
      %v9703 = vadd.f32 %v9701, %v9702
      %v9704 = vsel %vm772, %v9502, 0.0
      %v9705 = vadd.f32 %v9703, %v9704
      %v9706 = vsel %vm772, %v9503, 0.0
      %v9707 = vadd.f32 %v9705, %v9706
      %v9708 = vsel %vm772, %v9504, 0.0
      %v9709 = vadd.f32 %v9707, %v9708
      %v9710 = vsel %vm772, %v9505, 0.0
      %v9711 = vadd.f32 %v9709, %v9710
      %v9712 = vsel %vm772, %v9506, 0.0
      %v9713 = vadd.f32 %v9711, %v9712
      %v9714 = vsel %vm772, %v9507, 0.0
      %v9715 = vadd.f32 %v9713, %v9714
      %v9716 = vsel %vm772, %v9508, 0.0
      %v9717 = vadd.f32 %v9715, %v9716
      %v9718 = vsel %vm772, %v9509, 0.0
      %v9719 = vadd.f32 %v9717, %v9718
      %v9720 = vsel %vm772, %v9510, 0.0
      %v9721 = vadd.f32 %v9719, %v9720
      %v9722 = vsel %vm772, %v9511, 0.0
      %v9723 = vadd.f32 %v9721, %v9722
      %v9724 = vsel %vm772, %v9512, 0.0
      %v9725 = vadd.f32 %v9723, %v9724
      %v9726 = vsel %vm772, %v9513, 0.0
      %v9727 = vadd.f32 %v9725, %v9726
      %v9728 = vsel %vm772, %v9514, 0.0
      %v9729 = vadd.f32 %v9727, %v9728
      %v9730 = vsel %vm772, %v9515, 0.0
      %v9731 = vadd.f32 %v9729, %v9730
      %v9732 = vsel %vm772, %v9516, 0.0
      %v9733 = vadd.f32 %v9731, %v9732
      %v9734 = vsel %vm772, %v9517, 0.0
      %v9735 = vadd.f32 %v9733, %v9734
      %v9736 = vsel %vm772, %v9518, 0.0
      %v9737 = vadd.f32 %v9735, %v9736
      %v9738 = vsel %vm772, %v9519, 0.0
      %v9739 = vadd.f32 %v9737, %v9738
      %v9740 = vsel %vm772, %v9520, 0.0
      %v9741 = vadd.f32 %v9739, %v9740
      %v9742 = vsel %vm772, %v9521, 0.0
      %v9743 = vadd.f32 %v9741, %v9742
      %v9744 = vsel %vm772, %v9522, 0.0
      %v9745 = vadd.f32 %v9743, %v9744
      %v9746 = vsel %vm772, %v9523, 0.0
      %v9747 = vadd.f32 %v9745, %v9746
      %v9748 = vsel %vm772, %v9524, 0.0
      %v9749 = vadd.f32 %v9747, %v9748
      %v9750 = vsel %vm772, %v9525, 0.0
      %v9751 = vadd.f32 %v9749, %v9750
      %v9752 = vsel %vm772, %v9526, 0.0
      %v9753 = vadd.f32 %v9751, %v9752
      %v9754 = vsel %vm772, %v9527, 0.0
      %v9755 = vadd.f32 %v9753, %v9754
      %v9756 = vsel %vm772, %v9528, 0.0
      %v9757 = vadd.f32 %v9755, %v9756
      %v9758 = vsel %vm772, %v9529, 0.0
      %v9759 = vadd.f32 %v9757, %v9758
      %v9760 = vsel %vm772, %v9530, 0.0
      %v9761 = vadd.f32 %v9759, %v9760
      %v9762 = vsel %vm772, %v9531, 0.0
      %v9763 = vadd.f32 %v9761, %v9762
      %v9764 = vsel %vm772, %v9532, 0.0
      %v9765 = vadd.f32 %v9763, %v9764
      %v9766 = vsel %vm772, %v9533, 0.0
      %v9767 = vadd.f32 %v9765, %v9766
      %v9768 = vsel %vm772, %v9534, 0.0
      %v9769 = vadd.f32 %v9767, %v9768
      %v9770 = vsel %vm772, %v9535, 0.0
      %v9771 = vadd.f32 %v9769, %v9770
      %v9772 = vsel %vm772, %v9536, 0.0
      %v9773 = vadd.f32 %v9771, %v9772
      %v9774 = vsel %vm772, %v9537, 0.0
      %v9775 = vadd.f32 %v9773, %v9774
      %v9776 = vsel %vm772, %v9538, 0.0
      %v9777 = vadd.f32 %v9775, %v9776
      %v9778 = vsel %vm772, %v9539, 0.0
      %v9779 = vadd.f32 %v9777, %v9778
      %v9780 = vsel %vm772, %v9540, 0.0
      %v9781 = vadd.f32 %v9779, %v9780
      %v9782 = vsel %vm772, %v9541, 0.0
      %v9783 = vadd.f32 %v9781, %v9782
      %v9784 = vsel %vm772, %v9542, 0.0
      %v9785 = vadd.f32 %v9783, %v9784
      %v9786 = vsel %vm772, %v9543, 0.0
      %v9787 = vadd.f32 %v9785, %v9786
      %v9788 = vsel %vm772, %v9544, 0.0
      %v9789 = vadd.f32 %v9787, %v9788
      %v9790 = vsel %vm772, %v9545, 0.0
      %v9791 = vadd.f32 %v9789, %v9790
      %v9792 = vsel %vm772, %v9546, 0.0
      %v9793 = vadd.f32 %v9791, %v9792
      %v9794 = vsel %vm772, %v9547, 0.0
      %v9795 = vadd.f32 %v9793, %v9794
      %v9796 = vsel %vm772, %v9548, 0.0
      %v9797 = vadd.f32 %v9795, %v9796
      %v9798 = vsel %vm772, %v9549, 0.0
      %v9799 = vadd.f32 %v9797, %v9798
      %v9800 = vsel %vm772, %v9550, 0.0
      %v9801 = vadd.f32 %v9799, %v9800
      %v9802 = vsel %vm772, %v9551, 0.0
      %v9803 = vadd.f32 %v9801, %v9802
      %v9804 = vsel %vm772, %v9552, 0.0
      %v9805 = vadd.f32 %v9803, %v9804
      %v9806 = vsel %vm772, %v9553, 0.0
      %v9807 = vadd.f32 %v9805, %v9806
      %v9808 = vsel %vm772, %v9554, 0.0
      %v9809 = vadd.f32 %v9807, %v9808
      %v9810 = vrot.slane %v9809, 4
      %v9811 = vadd.f32 %v9809, %v9810
      %v9812 = vrot.slane %v9811, 2
      %v9813 = vadd.f32 %v9811, %v9812
      %v9814 = vrot.slane %v9813, 1
      %v9815 = vadd.f32 %v9813, %v9814
      %v9816 = vmul.f32 %v9815, 0.0009765625
      %v9817 = vmul.f32 %v9426, %v9426
      %v9818 = vsub.f32 %v9816, %v9817
      %v9819 = vmax.f32 %v9818, 0.0
      %v9820 = vsub.f32 %v9037, %v9426
      %v9821 = vsub.f32 %v9038, %v9426
      %v9822 = vsub.f32 %v9039, %v9426
      %v9823 = vsub.f32 %v9040, %v9426
      %v9824 = vsub.f32 %v9041, %v9426
      %v9825 = vsub.f32 %v9042, %v9426
      %v9826 = vsub.f32 %v9043, %v9426
      %v9827 = vsub.f32 %v9044, %v9426
      %v9828 = vsub.f32 %v9045, %v9426
      %v9829 = vsub.f32 %v9046, %v9426
      %v9830 = vsub.f32 %v9047, %v9426
      %v9831 = vsub.f32 %v9048, %v9426
      %v9832 = vsub.f32 %v9049, %v9426
      %v9833 = vsub.f32 %v9050, %v9426
      %v9834 = vsub.f32 %v9051, %v9426
      %v9835 = vsub.f32 %v9052, %v9426
      %v9836 = vsub.f32 %v9053, %v9426
      %v9837 = vsub.f32 %v9054, %v9426
      %v9838 = vsub.f32 %v9055, %v9426
      %v9839 = vsub.f32 %v9056, %v9426
      %v9840 = vsub.f32 %v9057, %v9426
      %v9841 = vsub.f32 %v9058, %v9426
      %v9842 = vsub.f32 %v9059, %v9426
      %v9843 = vsub.f32 %v9060, %v9426
      %v9844 = vsub.f32 %v9061, %v9426
      %v9845 = vsub.f32 %v9062, %v9426
      %v9846 = vsub.f32 %v9063, %v9426
      %v9847 = vsub.f32 %v9064, %v9426
      %v9848 = vsub.f32 %v9065, %v9426
      %v9849 = vsub.f32 %v9066, %v9426
      %v9850 = vsub.f32 %v9067, %v9426
      %v9851 = vsub.f32 %v9068, %v9426
      %v9852 = vsub.f32 %v9069, %v9426
      %v9853 = vsub.f32 %v9070, %v9426
      %v9854 = vsub.f32 %v9071, %v9426
      %v9855 = vsub.f32 %v9072, %v9426
      %v9856 = vsub.f32 %v9073, %v9426
      %v9857 = vsub.f32 %v9074, %v9426
      %v9858 = vsub.f32 %v9075, %v9426
      %v9859 = vsub.f32 %v9076, %v9426
      %v9860 = vsub.f32 %v9077, %v9426
      %v9861 = vsub.f32 %v9078, %v9426
      %v9862 = vsub.f32 %v9079, %v9426
      %v9863 = vsub.f32 %v9080, %v9426
      %v9864 = vsub.f32 %v9081, %v9426
      %v9865 = vsub.f32 %v9082, %v9426
      %v9866 = vsub.f32 %v9083, %v9426
      %v9867 = vsub.f32 %v9084, %v9426
      %v9868 = vsub.f32 %v9085, %v9426
      %v9869 = vsub.f32 %v9086, %v9426
      %v9870 = vsub.f32 %v9087, %v9426
      %v9871 = vsub.f32 %v9088, %v9426
      %v9872 = vsub.f32 %v9089, %v9426
      %v9873 = vsub.f32 %v9090, %v9426
      %v9874 = vsub.f32 %v9091, %v9426
      %v9875 = vsub.f32 %v9092, %v9426
      %v9876 = vsub.f32 %v9093, %v9426
      %v9877 = vsub.f32 %v9094, %v9426
      %v9878 = vsub.f32 %v9095, %v9426
      %v9879 = vsub.f32 %v9096, %v9426
      %v9880 = vsub.f32 %v9097, %v9426
      %v9881 = vsub.f32 %v9098, %v9426
      %v9882 = vsub.f32 %v9099, %v9426
      %v9883 = vsub.f32 %v9100, %v9426
      %v9884 = vsub.f32 %v9101, %v9426
      %v9885 = vsub.f32 %v9102, %v9426
      %v9886 = vsub.f32 %v9103, %v9426
      %v9887 = vsub.f32 %v9104, %v9426
      %v9888 = vsub.f32 %v9105, %v9426
      %v9889 = vsub.f32 %v9106, %v9426
      %v9890 = vsub.f32 %v9107, %v9426
      %v9891 = vsub.f32 %v9108, %v9426
      %v9892 = vsub.f32 %v9109, %v9426
      %v9893 = vsub.f32 %v9110, %v9426
      %v9894 = vsub.f32 %v9111, %v9426
      %v9895 = vsub.f32 %v9112, %v9426
      %v9896 = vsub.f32 %v9113, %v9426
      %v9897 = vsub.f32 %v9114, %v9426
      %v9898 = vsub.f32 %v9115, %v9426
      %v9899 = vsub.f32 %v9116, %v9426
      %v9900 = vsub.f32 %v9117, %v9426
      %v9901 = vsub.f32 %v9118, %v9426
      %v9902 = vsub.f32 %v9119, %v9426
      %v9903 = vsub.f32 %v9120, %v9426
      %v9904 = vsub.f32 %v9121, %v9426
      %v9905 = vsub.f32 %v9122, %v9426
      %v9906 = vsub.f32 %v9123, %v9426
      %v9907 = vsub.f32 %v9124, %v9426
      %v9908 = vsub.f32 %v9125, %v9426
      %v9909 = vsub.f32 %v9126, %v9426
      %v9910 = vsub.f32 %v9127, %v9426
      %v9911 = vsub.f32 %v9128, %v9426
      %v9912 = vsub.f32 %v9129, %v9426
      %v9913 = vsub.f32 %v9130, %v9426
      %v9914 = vsub.f32 %v9131, %v9426
      %v9915 = vsub.f32 %v9132, %v9426
      %v9916 = vsub.f32 %v9133, %v9426
      %v9917 = vsub.f32 %v9134, %v9426
      %v9918 = vsub.f32 %v9135, %v9426
      %v9919 = vsub.f32 %v9136, %v9426
      %v9920 = vsub.f32 %v9137, %v9426
      %v9921 = vsub.f32 %v9138, %v9426
      %v9922 = vsub.f32 %v9139, %v9426
      %v9923 = vsub.f32 %v9140, %v9426
      %v9924 = vsub.f32 %v9141, %v9426
      %v9925 = vsub.f32 %v9142, %v9426
      %v9926 = vsub.f32 %v9143, %v9426
      %v9927 = vsub.f32 %v9144, %v9426
      %v9928 = vsub.f32 %v9145, %v9426
      %v9929 = vsub.f32 %v9146, %v9426
      %v9930 = vsub.f32 %v9147, %v9426
      %v9931 = vsub.f32 %v9148, %v9426
      %v9932 = vsub.f32 %v9149, %v9426
      %v9933 = vsub.f32 %v9150, %v9426
      %v9934 = vsub.f32 %v9151, %v9426
      %v9935 = vsub.f32 %v9152, %v9426
      %v9936 = vsub.f32 %v9153, %v9426
      %v9937 = vsub.f32 %v9154, %v9426
      %v9938 = vsub.f32 %v9155, %v9426
      %v9939 = vsub.f32 %v9156, %v9426
      %v9940 = vsub.f32 %v9157, %v9426
      %v9941 = vsub.f32 %v9158, %v9426
      %v9942 = vsub.f32 %v9159, %v9426
      %v9943 = vsub.f32 %v9160, %v9426
      %v9944 = vsub.f32 %v9161, %v9426
      %v9945 = vsub.f32 %v9162, %v9426
      %v9946 = vsub.f32 %v9163, %v9426
      %v9947 = vsub.f32 %v9164, %v9426
      %v9948 = vadd.f32 %v9819, 1e-05
      %v9949 = vrsqrt.pop %v9948
      %v9950 = vmul.f32 %v9820, %v9949
      %v9951 = vmul.f32 %v9821, %v9949
      %v9952 = vmul.f32 %v9822, %v9949
      %v9953 = vmul.f32 %v9823, %v9949
      %v9954 = vmul.f32 %v9824, %v9949
      %v9955 = vmul.f32 %v9825, %v9949
      %v9956 = vmul.f32 %v9826, %v9949
      %v9957 = vmul.f32 %v9827, %v9949
      %v9958 = vmul.f32 %v9828, %v9949
      %v9959 = vmul.f32 %v9829, %v9949
      %v9960 = vmul.f32 %v9830, %v9949
      %v9961 = vmul.f32 %v9831, %v9949
      %v9962 = vmul.f32 %v9832, %v9949
      %v9963 = vmul.f32 %v9833, %v9949
      %v9964 = vmul.f32 %v9834, %v9949
      %v9965 = vmul.f32 %v9835, %v9949
      %v9966 = vmul.f32 %v9836, %v9949
      %v9967 = vmul.f32 %v9837, %v9949
      %v9968 = vmul.f32 %v9838, %v9949
      %v9969 = vmul.f32 %v9839, %v9949
      %v9970 = vmul.f32 %v9840, %v9949
      %v9971 = vmul.f32 %v9841, %v9949
      %v9972 = vmul.f32 %v9842, %v9949
      %v9973 = vmul.f32 %v9843, %v9949
      %v9974 = vmul.f32 %v9844, %v9949
      %v9975 = vmul.f32 %v9845, %v9949
      %v9976 = vmul.f32 %v9846, %v9949
      %v9977 = vmul.f32 %v9847, %v9949
      %v9978 = vmul.f32 %v9848, %v9949
      %v9979 = vmul.f32 %v9849, %v9949
      %v9980 = vmul.f32 %v9850, %v9949
      %v9981 = vmul.f32 %v9851, %v9949
      %v9982 = vmul.f32 %v9852, %v9949
      %v9983 = vmul.f32 %v9853, %v9949
      %v9984 = vmul.f32 %v9854, %v9949
      %v9985 = vmul.f32 %v9855, %v9949
      %v9986 = vmul.f32 %v9856, %v9949
      %v9987 = vmul.f32 %v9857, %v9949
      %v9988 = vmul.f32 %v9858, %v9949
      %v9989 = vmul.f32 %v9859, %v9949
      %v9990 = vmul.f32 %v9860, %v9949
      %v9991 = vmul.f32 %v9861, %v9949
      %v9992 = vmul.f32 %v9862, %v9949
      %v9993 = vmul.f32 %v9863, %v9949
      %v9994 = vmul.f32 %v9864, %v9949
      %v9995 = vmul.f32 %v9865, %v9949
      %v9996 = vmul.f32 %v9866, %v9949
      %v9997 = vmul.f32 %v9867, %v9949
      %v9998 = vmul.f32 %v9868, %v9949
      %v9999 = vmul.f32 %v9869, %v9949
      %v10000 = vmul.f32 %v9870, %v9949
      %v10001 = vmul.f32 %v9871, %v9949
      %v10002 = vmul.f32 %v9872, %v9949
      %v10003 = vmul.f32 %v9873, %v9949
      %v10004 = vmul.f32 %v9874, %v9949
      %v10005 = vmul.f32 %v9875, %v9949
      %v10006 = vmul.f32 %v9876, %v9949
      %v10007 = vmul.f32 %v9877, %v9949
      %v10008 = vmul.f32 %v9878, %v9949
      %v10009 = vmul.f32 %v9879, %v9949
      %v10010 = vmul.f32 %v9880, %v9949
      %v10011 = vmul.f32 %v9881, %v9949
      %v10012 = vmul.f32 %v9882, %v9949
      %v10013 = vmul.f32 %v9883, %v9949
      %v10014 = vmul.f32 %v9884, %v9949
      %v10015 = vmul.f32 %v9885, %v9949
      %v10016 = vmul.f32 %v9886, %v9949
      %v10017 = vmul.f32 %v9887, %v9949
      %v10018 = vmul.f32 %v9888, %v9949
      %v10019 = vmul.f32 %v9889, %v9949
      %v10020 = vmul.f32 %v9890, %v9949
      %v10021 = vmul.f32 %v9891, %v9949
      %v10022 = vmul.f32 %v9892, %v9949
      %v10023 = vmul.f32 %v9893, %v9949
      %v10024 = vmul.f32 %v9894, %v9949
      %v10025 = vmul.f32 %v9895, %v9949
      %v10026 = vmul.f32 %v9896, %v9949
      %v10027 = vmul.f32 %v9897, %v9949
      %v10028 = vmul.f32 %v9898, %v9949
      %v10029 = vmul.f32 %v9899, %v9949
      %v10030 = vmul.f32 %v9900, %v9949
      %v10031 = vmul.f32 %v9901, %v9949
      %v10032 = vmul.f32 %v9902, %v9949
      %v10033 = vmul.f32 %v9903, %v9949
      %v10034 = vmul.f32 %v9904, %v9949
      %v10035 = vmul.f32 %v9905, %v9949
      %v10036 = vmul.f32 %v9906, %v9949
      %v10037 = vmul.f32 %v9907, %v9949
      %v10038 = vmul.f32 %v9908, %v9949
      %v10039 = vmul.f32 %v9909, %v9949
      %v10040 = vmul.f32 %v9910, %v9949
      %v10041 = vmul.f32 %v9911, %v9949
      %v10042 = vmul.f32 %v9912, %v9949
      %v10043 = vmul.f32 %v9913, %v9949
      %v10044 = vmul.f32 %v9914, %v9949
      %v10045 = vmul.f32 %v9915, %v9949
      %v10046 = vmul.f32 %v9916, %v9949
      %v10047 = vmul.f32 %v9917, %v9949
      %v10048 = vmul.f32 %v9918, %v9949
      %v10049 = vmul.f32 %v9919, %v9949
      %v10050 = vmul.f32 %v9920, %v9949
      %v10051 = vmul.f32 %v9921, %v9949
      %v10052 = vmul.f32 %v9922, %v9949
      %v10053 = vmul.f32 %v9923, %v9949
      %v10054 = vmul.f32 %v9924, %v9949
      %v10055 = vmul.f32 %v9925, %v9949
      %v10056 = vmul.f32 %v9926, %v9949
      %v10057 = vmul.f32 %v9927, %v9949
      %v10058 = vmul.f32 %v9928, %v9949
      %v10059 = vmul.f32 %v9929, %v9949
      %v10060 = vmul.f32 %v9930, %v9949
      %v10061 = vmul.f32 %v9931, %v9949
      %v10062 = vmul.f32 %v9932, %v9949
      %v10063 = vmul.f32 %v9933, %v9949
      %v10064 = vmul.f32 %v9934, %v9949
      %v10065 = vmul.f32 %v9935, %v9949
      %v10066 = vmul.f32 %v9936, %v9949
      %v10067 = vmul.f32 %v9937, %v9949
      %v10068 = vmul.f32 %v9938, %v9949
      %v10069 = vmul.f32 %v9939, %v9949
      %v10070 = vmul.f32 %v9940, %v9949
      %v10071 = vmul.f32 %v9941, %v9949
      %v10072 = vmul.f32 %v9942, %v9949
      %v10073 = vmul.f32 %v9943, %v9949
      %v10074 = vmul.f32 %v9944, %v9949
      %v10075 = vmul.f32 %v9945, %v9949
      %v10076 = vmul.f32 %v9946, %v9949
      %v10077 = vmul.f32 %v9947, %v9949
      %10078 = vst.msk [vmem:[%s143] sm:$0xff] %vm772, %v9950
      %10079 = vst.msk [vmem:[%s143 + $0x8] sm:$0xff] %vm772, %v9951
      %10080 = vst.msk [vmem:[%s143 + $0x10] sm:$0xff] %vm772, %v9952
      %10081 = vst.msk [vmem:[%s143 + $0x18] sm:$0xff] %vm772, %v9953
      %10082 = vst.msk [vmem:[%s143 + $0x20] sm:$0xff] %vm772, %v9954
      %10083 = vst.msk [vmem:[%s143 + $0x28] sm:$0xff] %vm772, %v9955
      %10084 = vst.msk [vmem:[%s143 + $0x30] sm:$0xff] %vm772, %v9956
      %10085 = vst.msk [vmem:[%s143 + $0x38] sm:$0xff] %vm772, %v9957
      %10086 = vst.msk [vmem:[%s143 + $0x40] sm:$0xff] %vm772, %v9958
      %10087 = vst.msk [vmem:[%s143 + $0x48] sm:$0xff] %vm772, %v9959
      %10088 = vst.msk [vmem:[%s143 + $0x50] sm:$0xff] %vm772, %v9960
      %10089 = vst.msk [vmem:[%s143 + $0x58] sm:$0xff] %vm772, %v9961
      %10090 = vst.msk [vmem:[%s143 + $0x60] sm:$0xff] %vm772, %v9962
      %10091 = vst.msk [vmem:[%s143 + $0x68] sm:$0xff] %vm772, %v9963
      %10092 = vst.msk [vmem:[%s143 + $0x70] sm:$0xff] %vm772, %v9964
      %10093 = vst.msk [vmem:[%s143 + $0x78] sm:$0xff] %vm772, %v9965
      %10094 = vst.msk [vmem:[%s143 + $0x80] sm:$0xff] %vm772, %v9966
      %10095 = vst.msk [vmem:[%s143 + $0x88] sm:$0xff] %vm772, %v9967
      %10096 = vst.msk [vmem:[%s143 + $0x90] sm:$0xff] %vm772, %v9968
      %10097 = vst.msk [vmem:[%s143 + $0x98] sm:$0xff] %vm772, %v9969
      %10098 = vst.msk [vmem:[%s143 + $0xa0] sm:$0xff] %vm772, %v9970
      %10099 = vst.msk [vmem:[%s143 + $0xa8] sm:$0xff] %vm772, %v9971
      %10100 = vst.msk [vmem:[%s143 + $0xb0] sm:$0xff] %vm772, %v9972
      %10101 = vst.msk [vmem:[%s143 + $0xb8] sm:$0xff] %vm772, %v9973
      %10102 = vst.msk [vmem:[%s143 + $0xc0] sm:$0xff] %vm772, %v9974
      %10103 = vst.msk [vmem:[%s143 + $0xc8] sm:$0xff] %vm772, %v9975
      %10104 = vst.msk [vmem:[%s143 + $0xd0] sm:$0xff] %vm772, %v9976
      %10105 = vst.msk [vmem:[%s143 + $0xd8] sm:$0xff] %vm772, %v9977
      %10106 = vst.msk [vmem:[%s143 + $0xe0] sm:$0xff] %vm772, %v9978
      %10107 = vst.msk [vmem:[%s143 + $0xe8] sm:$0xff] %vm772, %v9979
      %10108 = vst.msk [vmem:[%s143 + $0xf0] sm:$0xff] %vm772, %v9980
      %10109 = vst.msk [vmem:[%s143 + $0xf8] sm:$0xff] %vm772, %v9981
      %10110 = vst.msk [vmem:[%s143 + $0x100] sm:$0xff] %vm772, %v9982
      %10111 = vst.msk [vmem:[%s143 + $0x108] sm:$0xff] %vm772, %v9983
      %10112 = vst.msk [vmem:[%s143 + $0x110] sm:$0xff] %vm772, %v9984
      %10113 = vst.msk [vmem:[%s143 + $0x118] sm:$0xff] %vm772, %v9985
      %10114 = vst.msk [vmem:[%s143 + $0x120] sm:$0xff] %vm772, %v9986
      %10115 = vst.msk [vmem:[%s143 + $0x128] sm:$0xff] %vm772, %v9987
      %10116 = vst.msk [vmem:[%s143 + $0x130] sm:$0xff] %vm772, %v9988
      %10117 = vst.msk [vmem:[%s143 + $0x138] sm:$0xff] %vm772, %v9989
      %10118 = vst.msk [vmem:[%s143 + $0x140] sm:$0xff] %vm772, %v9990
      %10119 = vst.msk [vmem:[%s143 + $0x148] sm:$0xff] %vm772, %v9991
      %10120 = vst.msk [vmem:[%s143 + $0x150] sm:$0xff] %vm772, %v9992
      %10121 = vst.msk [vmem:[%s143 + $0x158] sm:$0xff] %vm772, %v9993
      %10122 = vst.msk [vmem:[%s143 + $0x160] sm:$0xff] %vm772, %v9994
      %10123 = vst.msk [vmem:[%s143 + $0x168] sm:$0xff] %vm772, %v9995
      %10124 = vst.msk [vmem:[%s143 + $0x170] sm:$0xff] %vm772, %v9996
      %10125 = vst.msk [vmem:[%s143 + $0x178] sm:$0xff] %vm772, %v9997
      %10126 = vst.msk [vmem:[%s143 + $0x180] sm:$0xff] %vm772, %v9998
      %10127 = vst.msk [vmem:[%s143 + $0x188] sm:$0xff] %vm772, %v9999
      %10128 = vst.msk [vmem:[%s143 + $0x190] sm:$0xff] %vm772, %v10000
      %10129 = vst.msk [vmem:[%s143 + $0x198] sm:$0xff] %vm772, %v10001
      %10130 = vst.msk [vmem:[%s143 + $0x1a0] sm:$0xff] %vm772, %v10002
      %10131 = vst.msk [vmem:[%s143 + $0x1a8] sm:$0xff] %vm772, %v10003
      %10132 = vst.msk [vmem:[%s143 + $0x1b0] sm:$0xff] %vm772, %v10004
      %10133 = vst.msk [vmem:[%s143 + $0x1b8] sm:$0xff] %vm772, %v10005
      %10134 = vst.msk [vmem:[%s143 + $0x1c0] sm:$0xff] %vm772, %v10006
      %10135 = vst.msk [vmem:[%s143 + $0x1c8] sm:$0xff] %vm772, %v10007
      %10136 = vst.msk [vmem:[%s143 + $0x1d0] sm:$0xff] %vm772, %v10008
      %10137 = vst.msk [vmem:[%s143 + $0x1d8] sm:$0xff] %vm772, %v10009
      %10138 = vst.msk [vmem:[%s143 + $0x1e0] sm:$0xff] %vm772, %v10010
      %10139 = vst.msk [vmem:[%s143 + $0x1e8] sm:$0xff] %vm772, %v10011
      %10140 = vst.msk [vmem:[%s143 + $0x1f0] sm:$0xff] %vm772, %v10012
      %10141 = vst.msk [vmem:[%s143 + $0x1f8] sm:$0xff] %vm772, %v10013
      %10142 = vst.msk [vmem:[%s143 + $0x200] sm:$0xff] %vm772, %v10014
      %10143 = vst.msk [vmem:[%s143 + $0x208] sm:$0xff] %vm772, %v10015
      %10144 = vst.msk [vmem:[%s143 + $0x210] sm:$0xff] %vm772, %v10016
      %10145 = vst.msk [vmem:[%s143 + $0x218] sm:$0xff] %vm772, %v10017
      %10146 = vst.msk [vmem:[%s143 + $0x220] sm:$0xff] %vm772, %v10018
      %10147 = vst.msk [vmem:[%s143 + $0x228] sm:$0xff] %vm772, %v10019
      %10148 = vst.msk [vmem:[%s143 + $0x230] sm:$0xff] %vm772, %v10020
      %10149 = vst.msk [vmem:[%s143 + $0x238] sm:$0xff] %vm772, %v10021
      %10150 = vst.msk [vmem:[%s143 + $0x240] sm:$0xff] %vm772, %v10022
      %10151 = vst.msk [vmem:[%s143 + $0x248] sm:$0xff] %vm772, %v10023
      %10152 = vst.msk [vmem:[%s143 + $0x250] sm:$0xff] %vm772, %v10024
      %10153 = vst.msk [vmem:[%s143 + $0x258] sm:$0xff] %vm772, %v10025
      %10154 = vst.msk [vmem:[%s143 + $0x260] sm:$0xff] %vm772, %v10026
      %10155 = vst.msk [vmem:[%s143 + $0x268] sm:$0xff] %vm772, %v10027
      %10156 = vst.msk [vmem:[%s143 + $0x270] sm:$0xff] %vm772, %v10028
      %10157 = vst.msk [vmem:[%s143 + $0x278] sm:$0xff] %vm772, %v10029
      %10158 = vst.msk [vmem:[%s143 + $0x280] sm:$0xff] %vm772, %v10030
      %10159 = vst.msk [vmem:[%s143 + $0x288] sm:$0xff] %vm772, %v10031
      %10160 = vst.msk [vmem:[%s143 + $0x290] sm:$0xff] %vm772, %v10032
      %10161 = vst.msk [vmem:[%s143 + $0x298] sm:$0xff] %vm772, %v10033
      %10162 = vst.msk [vmem:[%s143 + $0x2a0] sm:$0xff] %vm772, %v10034
      %10163 = vst.msk [vmem:[%s143 + $0x2a8] sm:$0xff] %vm772, %v10035
      %10164 = vst.msk [vmem:[%s143 + $0x2b0] sm:$0xff] %vm772, %v10036
      %10165 = vst.msk [vmem:[%s143 + $0x2b8] sm:$0xff] %vm772, %v10037
      %10166 = vst.msk [vmem:[%s143 + $0x2c0] sm:$0xff] %vm772, %v10038
      %10167 = vst.msk [vmem:[%s143 + $0x2c8] sm:$0xff] %vm772, %v10039
      %10168 = vst.msk [vmem:[%s143 + $0x2d0] sm:$0xff] %vm772, %v10040
      %10169 = vst.msk [vmem:[%s143 + $0x2d8] sm:$0xff] %vm772, %v10041
      %10170 = vst.msk [vmem:[%s143 + $0x2e0] sm:$0xff] %vm772, %v10042
      %10171 = vst.msk [vmem:[%s143 + $0x2e8] sm:$0xff] %vm772, %v10043
      %10172 = vst.msk [vmem:[%s143 + $0x2f0] sm:$0xff] %vm772, %v10044
      %10173 = vst.msk [vmem:[%s143 + $0x2f8] sm:$0xff] %vm772, %v10045
      %10174 = vst.msk [vmem:[%s143 + $0x300] sm:$0xff] %vm772, %v10046
      %10175 = vst.msk [vmem:[%s143 + $0x308] sm:$0xff] %vm772, %v10047
      %10176 = vst.msk [vmem:[%s143 + $0x310] sm:$0xff] %vm772, %v10048
      %10177 = vst.msk [vmem:[%s143 + $0x318] sm:$0xff] %vm772, %v10049
      %10178 = vst.msk [vmem:[%s143 + $0x320] sm:$0xff] %vm772, %v10050
      %10179 = vst.msk [vmem:[%s143 + $0x328] sm:$0xff] %vm772, %v10051
      %10180 = vst.msk [vmem:[%s143 + $0x330] sm:$0xff] %vm772, %v10052
      %10181 = vst.msk [vmem:[%s143 + $0x338] sm:$0xff] %vm772, %v10053
      %10182 = vst.msk [vmem:[%s143 + $0x340] sm:$0xff] %vm772, %v10054
      %10183 = vst.msk [vmem:[%s143 + $0x348] sm:$0xff] %vm772, %v10055
      %10184 = vst.msk [vmem:[%s143 + $0x350] sm:$0xff] %vm772, %v10056
      %10185 = vst.msk [vmem:[%s143 + $0x358] sm:$0xff] %vm772, %v10057
      %10186 = vst.msk [vmem:[%s143 + $0x360] sm:$0xff] %vm772, %v10058
      %10187 = vst.msk [vmem:[%s143 + $0x368] sm:$0xff] %vm772, %v10059
      %10188 = vst.msk [vmem:[%s143 + $0x370] sm:$0xff] %vm772, %v10060
      %10189 = vst.msk [vmem:[%s143 + $0x378] sm:$0xff] %vm772, %v10061
      %10190 = vst.msk [vmem:[%s143 + $0x380] sm:$0xff] %vm772, %v10062
      %10191 = vst.msk [vmem:[%s143 + $0x388] sm:$0xff] %vm772, %v10063
      %10192 = vst.msk [vmem:[%s143 + $0x390] sm:$0xff] %vm772, %v10064
      %10193 = vst.msk [vmem:[%s143 + $0x398] sm:$0xff] %vm772, %v10065
      %10194 = vst.msk [vmem:[%s143 + $0x3a0] sm:$0xff] %vm772, %v10066
      %10195 = vst.msk [vmem:[%s143 + $0x3a8] sm:$0xff] %vm772, %v10067
      %10196 = vst.msk [vmem:[%s143 + $0x3b0] sm:$0xff] %vm772, %v10068
      %10197 = vst.msk [vmem:[%s143 + $0x3b8] sm:$0xff] %vm772, %v10069
      %10198 = vst.msk [vmem:[%s143 + $0x3c0] sm:$0xff] %vm772, %v10070
      %10199 = vst.msk [vmem:[%s143 + $0x3c8] sm:$0xff] %vm772, %v10071
      %10200 = vst.msk [vmem:[%s143 + $0x3d0] sm:$0xff] %vm772, %v10072
      %10201 = vst.msk [vmem:[%s143 + $0x3d8] sm:$0xff] %vm772, %v10073
      %10202 = vst.msk [vmem:[%s143 + $0x3e0] sm:$0xff] %vm772, %v10074
      %10203 = vst.msk [vmem:[%s143 + $0x3e8] sm:$0xff] %vm772, %v10075
      %10204 = vst.msk [vmem:[%s143 + $0x3f0] sm:$0xff] %vm772, %v10076
      %10205 = vst.msk [vmem:[%s143 + $0x3f8] sm:$0xff] %vm772, %v10077
      %p10206 = scmp.lt.s32.totalorder %s13, 1
      %s10207 = scalar_select %p10206, %s13, 1
      %s10208 = smul.addr %s10207, 128
      %s10209 = smul.addr %s10208, 8
      %s10210 = scalar_lea.vmem %s2, %s10209
      // Predicated region
      $region29: #{tpu_custom_call.1} parent=27 // pred_check
        %p10211 = pneg %p78
      $region30: #{tpu_custom_call.1} parent=27 // pred_check_branch
        %10213 = sbr.rel (%p10211) target = $region32
      $region31: #{tpu_custom_call.1} parent=27 // pred_region
        _
      $region32: #{tpu_custom_call.1} parent=27 // pred_fallthru
        _
    $region28: #{tpu_custom_call.1} parent=5 // pred_fallthru
      _
    %p10214 = scmp.le.s32.totalorder 2, %s8
    // Predicated region
    $region33: #{tpu_custom_call.1} parent=5 // pred_check
      %p10215 = pneg %p10214
    $region34: #{tpu_custom_call.1} parent=5 // pred_check_branch
      %10217 = sbr.rel (%p10215) target = $region36
    $region35: #{tpu_custom_call.1} parent=5 // pred_region
      %s10218 = ssub.s32 %s8, 2
      // Predicated region
      $region37: #{tpu_custom_call.1} parent=35 // pred_check
        %p10219 = pneg %p84
      $region38: #{tpu_custom_call.1} parent=35 // pred_check_branch
        %10221 = sbr.rel (%p10219) target = $region40
      $region39: #{tpu_custom_call.1} parent=35 // pred_region
        %p10222 = scmp.lt.s32.totalorder %s14, 1
        %s10223 = scalar_select %p10222, %s14, 1
        %s10224 = smul.addr %s10223, 128
        %s10225 = smul.addr %s10224, 8
        %s10226 = scalar_lea.vmem %s2, %s10225
      $region40: #{tpu_custom_call.1} parent=35 // pred_fallthru
        _
    $region36: #{tpu_custom_call.1} parent=5 // pred_fallthru
      _
  $region6: #{tpu_custom_call.1} parent=0 // loop_footer
    %s12 = sadd.s32 1, %s8
  $region7: #{tpu_custom_call.1} parent=0 // loop_footer_branch
    %7 = sbr.rel target = $region3
  $region8: #{tpu_custom_call.1} parent=0 // loop_exit
    _

</llo_original>
